<compile_context>
chip_gen: v7x
topology: tpu7x:2x2x1
jax: 0.10.0
libtpu: 0.0.40
codegen_flags: <defaults>
</compile_context>

<pallas_src>
import functools

import jax
import jax.numpy as jnp
from jax.experimental import pallas as pl
from jax.experimental.pallas import tpu as pltpu

# ----------------------------- synthetic config -----------------------------
X_BOUND = (-8.0, 8.0, 1.0)
Y_BOUND = (-8.0, 8.0, 1.0)
Z_BOUND = (-10.0, 10.0, 20.0)
D_BOUND = (2.0, 6.0, 1.0)
IMAGE_DIM = (16, 16)          # cfg.IMAGE.FINAL_DIM
DOWNSAMPLE = 4                # cfg.MODEL.ENCODER.DOWNSAMPLE
ENC_OUT_CH = 8                # cfg.MODEL.ENCODER.OUT_CHANNELS
LATENT_DIM = 8                # cfg.MODEL.DISTRIBUTION.LATENT_DIM
RECEPTIVE_FIELD = 2           # cfg.TIME_RECEPTIVE_FIELD
N_FUTURE = 1                  # cfg.N_FUTURE_FRAMES
MIN_LOG_SIGMA = -5.0
MAX_LOG_SIGMA = 5.0
N_CLASSES = 2                 # len(cfg.SEMANTIC_SEG.WEIGHTS)
FUTURE_DIST_CH = 6            # inf_z takes OUT_CHANNELS + 6
NUM_DEPTH = int((D_BOUND[1] - D_BOUND[0]) / D_BOUND[2])   # depth bins


# ------------------------------- BEV helpers --------------------------------
def calc_bev_params():
    bounds = [X_BOUND, Y_BOUND, Z_BOUND]
    res = jnp.array([b[2] for b in bounds], jnp.float32)
    start = jnp.array([b[0] + b[2] / 2.0 for b in bounds], jnp.float32)
    dim = tuple(int((b[1] - b[0]) / b[2]) for b in bounds)
    return res, start, dim


def create_frustum():
    h, w = IMAGE_DIM
    hd, wd = h // DOWNSAMPLE, w // DOWNSAMPLE
    depth = jnp.arange(D_BOUND[0], D_BOUND[1], D_BOUND[2], dtype=jnp.float32)
    d = depth.shape[0]
    depth_grid = jnp.broadcast_to(depth[:, None, None], (d, hd, wd))
    x_grid = jnp.broadcast_to(
        jnp.linspace(0.0, w - 1.0, wd, dtype=jnp.float32)[None, None, :], (d, hd, wd))
    y_grid = jnp.broadcast_to(
        jnp.linspace(0.0, h - 1.0, hd, dtype=jnp.float32)[None, :, None], (d, hd, wd))
    return jnp.stack([x_grid, y_grid, depth_grid], axis=-1)   # (D, hd, wd, 3)


def make_conv_mask(h, w):
    """(9, h*w) float mask: 1 where the 3x3 tap (di,dj) stays inside the image."""
    hw = h * w
    ii = jnp.arange(hw, dtype=jnp.int32) // w
    jj = jnp.arange(hw, dtype=jnp.int32) % w
    rows = []
    for di in range(3):
        for dj in range(3):
            ni, nj = ii + (di - 1), jj + (dj - 1)
            valid = (ni >= 0) & (ni < h) & (nj >= 0) & (nj < w)
            rows.append(valid.astype(jnp.float32))
    return jnp.stack(rows, axis=0)


# ------------------------- in-kernel building blocks -------------------------
def _apply_act(name, x):
    if name is None:
        return x
    if name == "relu":
        return jnp.maximum(x, 0.0)
    if name == "lrelu":
        return jnp.where(x > 0.0, x, 0.2 * x)
    raise ValueError(name)


def _rsample(params, noise, half):
    mu = params[:half, :]
    log_sigma = jnp.clip(params[half:, :], MIN_LOG_SIGMA, MAX_LOG_SIGMA)
    return mu + jnp.exp(log_sigma) * noise


# ------------------------------ BlockSpec helpers ----------------------------
def _bspec(shape):
    """Batch-blocked spec: leading dim split over the grid, rest whole."""
    nd = len(shape)
    return pl.BlockSpec((1,) + tuple(shape[1:]),
                        lambda i, _nd=nd: (i,) + (0,) * (_nd - 1))


def _fspec(shape):
    """Whole-array spec shared by every grid step (weights, masks)."""
    nd = len(shape)
    return pl.BlockSpec(tuple(shape), lambda i, _nd=nd: (0,) * _nd)


# --------------------- kernel 1: camera encode + lift + splat ----------------
def _lift_splat_kernel(patch_ref, idx_ref, stem_ref, head_ref, o_ref,
                       *, n_cam, n_depth, c_out, npix, n_cells):
    m = n_cam * npix
    ones_m = jnp.ones((1, m), jnp.float32)
    patches = jnp.concatenate([patch_ref[0], ones_m], axis=0)          # (Kin+1, m)
    f1 = jnp.maximum(
        jnp.dot(stem_ref[...], patches, preferred_element_type=jnp.float32), 0.0)
    f2 = jnp.dot(head_ref[...], jnp.concatenate([f1, ones_m], axis=0),
                 preferred_element_type=jnp.float32)                    # (D+C, m)
    logits = f2[:n_depth, :]
    mx = jnp.max(logits, axis=0, keepdims=True)
    e = jnp.exp(logits - mx)
    depth = e / jnp.sum(e, axis=0, keepdims=True)                       # (D, m)
    feat = f2[n_depth:, :]                                              # (C, m)

    # Order-independent splat: per (camera, depth-bin) one-hot matmul into all
    # n_cells BEV cells (invalid points carry cell index -1 and contribute 0).
    iota = jax.lax.broadcasted_iota(jnp.int32, (npix, n_cells), 1)
    acc = jnp.zeros((c_out, n_cells), jnp.float32)
    for cam in range(n_cam):
        cols = slice(cam * npix, (cam + 1) * npix)
        feat_n, depth_n = feat[:, cols], depth[:, cols]
        for d_i in range(n_depth):
            pts = depth_n[d_i:d_i + 1, :] * feat_n                      # (C, npix)
            onehot = (iota == idx_ref[0, cam * n_depth + d_i]).astype(jnp.float32)
            acc = acc + jnp.dot(pts, onehot, preferred_element_type=jnp.float32)
    o_ref[0] = acc
    # TODO(synk): at production scale (cells~40k, npts~100k) replace the one-hot
    # matmul with a scalar-prefetch sorted segment-sum.


def lift_splat(patches, cell_idx, stem_w, head_w, n_cells):
    """patches: (bs, Kin, n*npix); cell_idx: (bs, n*d, npix, 1) int32 (-1 invalid)."""
    bs, _, m = patches.shape
    n_cam_d, npix = cell_idx.shape[1], cell_idx.shape[2]
    n_cam = m // npix
    n_depth = n_cam_d // n_cam
    c_out = head_w.shape[0] - n_depth
    kern = functools.partial(_lift_splat_kernel, n_cam=n_cam, n_depth=n_depth,
                             c_out=c_out, npix=npix, n_cells=n_cells)
    return pl.pallas_call(
        kern,
        out_shape=jax.ShapeDtypeStruct((bs, c_out, n_cells), jnp.float32),
        grid=(bs,),
        in_specs=[_bspec(patches.shape), _bspec(cell_idx.shape),
                  _fspec(stem_w.shape), _fspec(head_w.shape)],
        out_specs=_bspec((bs, c_out, n_cells)),
        compiler_params=pltpu.CompilerParams(dimension_semantics=("parallel",)),
    )(patches, cell_idx, stem_w, head_w)


# --------------------- kernel 2: fused BEV / temporal pipeline ---------------
def _bev_pipeline_kernel(
        bev_ref, fut_ref, ny_ref, nz_ref, m_ref,
        enc1_ref, enc2_ref, qy1_ref, qy2_ref, dyn1_ref, dyn2_ref,
        qz_ref, pz_ref, sdec1_ref, sdec2_ref, seg1_ref, seg2_ref,
        g0_wx_ref, g0_wgh_ref, g0_wch_ref, g0_res_ref,
        g1_wx_ref, g1_wgh_ref, g1_wch_ref, g1_res_ref,
        qy0_out_ref, qz_out_ref, pz_out_ref, gen_out_ref, seg_out_ref,
        *, n_cond, n_total, c, lat, spatial_w, hw):

    ones_row = jnp.ones((1, hw), jnp.float32)
    mask_rows = [m_ref[t:t + 1, :] for t in range(9)]   # load border masks once

    def conv3(x, w_ref, act):
        """3x3 'same' conv as ONE stacked-K MXU matmul.

        x: (cin, hw).  Taps are lane rotations (pltpu.roll) masked at the image
        border, stacked along sublanes together with a ones row that folds the
        bias; contracted once against the packed (cout, 9*cin + 1) weight.
        """
        taps = []
        for t in range(9):
            di, dj = t // 3, t % 3
            off = (di - 1) * spatial_w + (dj - 1)
            if off == 0:
                taps.append(x)
            else:
                taps.append(pltpu.roll(x, shift=(-off) % hw, axis=1) * mask_rows[t])
        taps.append(ones_row)
        stacked = jnp.concatenate(taps, axis=0)
        return _apply_act(act, jnp.dot(w_ref[...], stacked,
                                       preferred_element_type=jnp.float32))

    # ---- srvp_encode: two 3x3 convs per conditioning frame ----
    srvp = []
    for t in range(n_cond):
        h = conv3(bev_ref[0, t], enc1_ref, "lrelu")
        srvp.append(conv3(h, enc2_ref, "lrelu"))

    # ---- infer_first_state: q_y conv stack + rsample ----
    h = conv3(jnp.concatenate(srvp, axis=0), qy1_ref, "lrelu")
    qy0 = conv3(h, qy2_ref, None)
    qy0_out_ref[0] = qy0
    y = _rsample(qy0, ny_ref[0], c)

    # ---- inf_z: two SpatialGRU blocks (merged 1x1 dots) + residual conv ----
    def gru_block(xs, wx_ref, wgh_ref, wch_ref, res_ref):
        wx, wgh, wch = wx_ref[...], wgh_ref[...], wch_ref[...]
        h_g = jnp.zeros((c, hw), jnp.float32)
        outs = []
        for x_t in xs:
            xg = jnp.dot(wx, jnp.concatenate([x_t, ones_row], axis=0),
                         preferred_element_type=jnp.float32)            # (3c, hw)
            gh = jnp.dot(wgh, h_g, preferred_element_type=jnp.float32)  # (2c, hw)
            u = jax.nn.sigmoid(xg[:c] + gh[:c])
            r = jax.nn.sigmoid(xg[c:2 * c] + gh[c:])
            cand = jnp.tanh(
                xg[2 * c:] + jnp.dot(wch, r * h_g, preferred_element_type=jnp.float32))
            h_g = (1.0 - u) * h_g + u * cand
            outs.append(h_g + conv3(h_g, res_ref, "relu"))
        return outs

    xs0 = [jnp.concatenate([srvp[t], fut_ref[0, t]], axis=0) for t in range(n_cond)]
    hx_z = gru_block(gru_block(xs0, g0_wx_ref, g0_wgh_ref, g0_wch_ref, g0_res_ref),
                     g1_wx_ref, g1_wgh_ref, g1_wch_ref, g1_res_ref)

    # ---- srvp_generate: residual latent rollout (all steps in-VMEM) ----
    ys = [y]
    for t in range(1, n_total):
        nz = nz_ref[0, t - 1]
        pz_params = conv3(y, pz_ref, None)
        pz_out_ref[0, t - 1] = pz_params
        if t < n_cond:
            qz_params = conv3(hx_z[t], qz_ref, None)
            qz_out_ref[0, t - 1] = qz_params
            z_t = _rsample(qz_params, nz, lat)
        else:
            z_t = _rsample(pz_params, nz, lat)       # eval mode: sample from prior
        hdyn = conv3(jnp.concatenate([y, z_t], axis=0), dyn1_ref, "lrelu")
        y = y + conv3(hdyn, dyn2_ref, None)
        ys.append(y)

    # ---- srvp_decode + BEV segmentation head ----
    for t in range(n_total):
        g = conv3(conv3(ys[t], sdec1_ref, "lrelu"), sdec2_ref, None)
        gen_out_ref[0, t] = g
        seg_out_ref[0, t] = conv3(conv3(g, seg1_ref, "relu"), seg2_ref, None)


def bev_pipeline(bev, fut, noise_y0, noise_z, mask, params, spatial_w):
    b, n_cond, c, hw = bev.shape
    n_total = noise_z.shape[1] + 1
    lat = noise_z.shape[2]
    assert n_cond >= 2, "q_z output requires TIME_RECEPTIVE_FIELD >= 2"
    weights = [
        params["srvp_enc"][0], params["srvp_enc"][1],
        params["q_y"][0], params["q_y"][1],
        params["dynamics"][0], params["dynamics"][1],
        params["q_z"], params["p_z"],
        params["srvp_dec"][0], params["srvp_dec"][1],
        params["dec1"], params["dec2"],
        params["inf_z"][0]["wx"], params["inf_z"][0]["wgh"],
        params["inf_z"][0]["wch"], params["inf_z"][0]["res"],
        params["inf_z"][1]["wx"], params["inf_z"][1]["wgh"],
        params["inf_z"][1]["wch"], params["inf_z"][1]["res"],
    ]
    kern = functools.partial(_bev_pipeline_kernel, n_cond=n_cond, n_total=n_total,
                             c=c, lat=lat, spatial_w=spatial_w, hw=hw)
    out_shape = (
        jax.ShapeDtypeStruct((b, 2 * c, hw), jnp.float32),                 # q_y0_params
        jax.ShapeDtypeStruct((b, n_cond - 1, 2 * lat, hw), jnp.float32),   # q_z_params
        jax.ShapeDtypeStruct((b, n_total - 1, 2 * lat, hw), jnp.float32),  # p_z_params
        jax.ShapeDtypeStruct((b, n_total, c, hw), jnp.float32),            # generated srvp
        jax.ShapeDtypeStruct((b, n_total, N_CLASSES, hw), jnp.float32),    # segmentation
    )
    return pl.pallas_call(
        kern,
        out_shape=out_shape,
        grid=(b,),
        in_specs=[_bspec(bev.shape), _bspec(fut.shape), _bspec(noise_y0.shape),
                  _bspec(noise_z.shape), _fspec(mask.shape)]
                 + [_fspec(w.shape) for w in weights],
        out_specs=tuple(_bspec(s.shape) for s in out_shape),
        compiler_params=pltpu.CompilerParams(dimension_semantics=("parallel",)),
    )(bev, fut, noise_y0, noise_z, mask, *weights)
    # TODO(synk): at production BEV resolutions the whole-HW-per-block design must
    # be re-tiled (128-lane HW tiles with halo index_maps) and vmem_limit_bytes set.


# ------------------------------ parameter init -------------------------------
def init_conv_packed(key, cin, cout):
    """Packed 3x3 conv weight: (cout, 9*cin + 1), bias folded as last column."""
    kw, kb = jax.random.split(key)
    w = jax.random.normal(kw, (cout, 9 * cin), jnp.float32) / jnp.sqrt(9.0 * cin)
    b = jax.random.normal(kb, (cout, 1), jnp.float32) * 0.01
    return jnp.concatenate([w, b], axis=1)


def init_affine_packed(key, cin, cout):
    """Packed 1x1 affine weight: (cout, cin + 1), bias folded as last column."""
    kw, kb = jax.random.split(key)
    w = jax.random.normal(kw, (cout, cin), jnp.float32) / jnp.sqrt(float(cin))
    b = jax.random.normal(kb, (cout, 1), jnp.float32) * 0.01
    return jnp.concatenate([w, b], axis=1)


def init_params(key):
    c, latent, d = ENC_OUT_CH, LATENT_DIM, NUM_DEPTH
    rf = RECEPTIVE_FIELD
    keys = jax.random.split(key, 12)
    p = {}
    p["enc_stem"] = init_affine_packed(keys[0], 3 * DOWNSAMPLE * DOWNSAMPLE, 16)
    p["enc_head"] = init_affine_packed(keys[1], 16, d + c)
    p["srvp_enc"] = [init_conv_packed(jax.random.fold_in(keys[2], i), c, c) for i in range(2)]
    p["srvp_dec"] = [init_conv_packed(jax.random.fold_in(keys[3], i), c, c) for i in range(2)]
    p["q_y"] = [init_conv_packed(jax.random.fold_in(keys[4], 0), rf * c, 2 * c),
                init_conv_packed(jax.random.fold_in(keys[4], 1), 2 * c, 2 * c)]
    p["dynamics"] = [init_conv_packed(jax.random.fold_in(keys[5], 0), c + latent, c),
                     init_conv_packed(jax.random.fold_in(keys[5], 1), c, c)]
    p["q_z"] = init_conv_packed(keys[6], c, 2 * latent)
    p["p_z"] = init_conv_packed(keys[7], c, 2 * latent)
    blocks, cin = [], c + FUTURE_DIST_CH
    for i in range(2):                                 # n_gru_blocks=2, n_res_layers=1
        ks = jax.random.split(jax.random.fold_in(keys[8], i), 7)
        scale = 1.0 / jnp.sqrt(float(cin + c))
        wgx = jax.random.normal(ks[0], (2 * c, cin), jnp.float32) * scale
        wgh = jax.random.normal(ks[1], (2 * c, c), jnp.float32) * scale
        bg = jax.random.normal(ks[2], (2 * c, 1), jnp.float32) * 0.01
        wcx = jax.random.normal(ks[3], (c, cin), jnp.float32) * scale
        wch = jax.random.normal(ks[4], (c, c), jnp.float32) * scale
        bc = jax.random.normal(ks[5], (c, 1), jnp.float32) * 0.01
        wx = jnp.concatenate([jnp.concatenate([wgx, wcx], axis=0),
                              jnp.concatenate([bg, bc], axis=0)], axis=1)   # (3c, cin+1)
        blocks.append({"wx": wx, "wgh": wgh, "wch": wch,
                       "res": init_conv_packed(ks[6], c, c)})
        cin = c
    p["inf_z"] = blocks
    p["dec1"] = init_conv_packed(keys[9], c, 16)
    p["dec2"] = init_conv_packed(keys[10], 16, N_CLASSES)
    return p


# --------------------------------- forward -----------------------------------
def fiery_forward(params, image, intrinsics, extrinsics, future_egomotion,
                  future_distribution_inputs, rng):
    b = image.shape[0]
    rf = RECEPTIVE_FIELD
    image = image[:, :rf]
    intrinsics = intrinsics[:, :rf]
    extrinsics = extrinsics[:, :rf]
    future_egomotion = future_egomotion[:, :rf]        # sliced but unused (as in reference)
    s = rf
    n, c_img, H, W = image.shape[2], image.shape[3], image.shape[4], image.shape[5]
    c, latent, d = ENC_OUT_CH, LATENT_DIM, NUM_DEPTH
    hd, wd = H // DOWNSAMPLE, W // DOWNSAMPLE

    bev_res, bev_start, (bev_x, bev_y, bev_z) = calc_bev_params()
    n_cells = bev_x * bev_y
    hw = n_cells
    mask_bev = make_conv_mask(bev_x, bev_y)            # (9, hw), shared by all 3x3 convs
    frustum = create_frustum()

    # ---- get_geometry (tiny 3x3 algebra -> XLA glue) ----
    intr = intrinsics.reshape(b * s, n, 3, 3)
    extr = extrinsics.reshape(b * s, n, 4, 4)
    rot, trans = extr[..., :3, :3], extr[..., :3, 3]
    pts = jnp.concatenate([frustum[..., :2] * frustum[..., 2:3], frustum[..., 2:3]], axis=-1)
    comb = jnp.einsum("bnij,bnjk->bnik", rot, jnp.linalg.inv(intr))
    geometry = jnp.einsum("bnij,dhwj->bndhwi", comb, pts) + trans[:, :, None, None, None, :]

    # BEV cell index per frustum point (truncating cast matches torch .long()).
    geom_idx = ((geometry - (bev_start - bev_res / 2.0)) / bev_res).astype(jnp.int32)
    gx, gy, gz = geom_idx[..., 0], geom_idx[..., 1], geom_idx[..., 2]
    valid = ((gx >= 0) & (gx < bev_x) & (gy >= 0) & (gy < bev_y)
             & (gz >= 0) & (gz < bev_z))
    cell = jnp.where(valid, gx * bev_y + gy, -1).astype(jnp.int32)
    cell = cell.reshape(b * s, n * d, hd * wd, 1)

    # ---- fused camera encoder + depth-softmax lift + BEV splat (kernel 1) ----
    patches = image.reshape(b * s, n, c_img, hd, DOWNSAMPLE, wd, DOWNSAMPLE)
    patches = patches.transpose(0, 2, 4, 6, 1, 3, 5).reshape(
        b * s, c_img * DOWNSAMPLE * DOWNSAMPLE, n * hd * wd)
    bev = lift_splat(patches, cell, params["enc_stem"], params["enc_head"], n_cells)
    lss_outs = bev.reshape(b, s, c, bev_x, bev_y)

    # ---- fused BEV pipeline: enc -> q_y -> GRU -> rollout -> dec -> seg (kernel 2) ----
    total_time = rf + N_FUTURE
    fut = future_distribution_inputs[:, :rf].reshape(b, s, FUTURE_DIST_CH, hw)
    k0, kz = jax.random.split(rng)
    noise_y0 = jax.random.normal(k0, (b, c, hw), jnp.float32)
    noise_z = jax.random.normal(kz, (b, total_time - 1, latent, hw), jnp.float32)

    qy0, qz_p, pz_p, gen, seg = bev_pipeline(
        bev.reshape(b, s, c, hw), fut, noise_y0, noise_z, mask_bev, params, bev_y)

    return {"bev_output": {"segmentation":
                           seg.reshape(b, total_time, N_CLASSES, bev_x, bev_y)},
            "generated_srvp_x": gen.reshape(b, total_time, c, bev_x, bev_y),
            "lss_outs": lss_outs,
            "q_z_params": qz_p.reshape(b, rf - 1, 2 * latent, bev_x, bev_y),
            "p_z_params": pz_p.reshape(b, total_time - 1, 2 * latent, bev_x, bev_y),
            "q_y0_params": qy0.reshape(b, 2 * c, bev_x, bev_y)}


# ----------------------------------- main ------------------------------------
if __name__ == "__main__":
    key = jax.random.PRNGKey(0)
    k_img, k_ego, k_fut, k_param, k_rng = jax.random.split(key, 5)

    b, s_total, n_cam = 1, 3, 1
    H, W = IMAGE_DIM
    _, _, (bev_x, bev_y, _) = calc_bev_params()

    image = jax.random.normal(k_img, (b, s_total, n_cam, 3, H, W), jnp.float32)
    intr = jnp.array([[8.0, 0.0, 8.0], [0.0, 8.0, 8.0], [0.0, 0.0, 1.0]], jnp.float32)
    intrinsics = jnp.broadcast_to(intr, (b, s_total, n_cam, 3, 3))
    extr = jnp.eye(4, dtype=jnp.float32).at[0, 3].set(0.5).at[1, 3].set(-0.5)
    extrinsics = jnp.broadcast_to(extr, (b, s_total, n_cam, 4, 4))
    future_egomotion = jax.random.normal(k_ego, (b, s_total, 6), jnp.float32)
    future_distribution_inputs = jax.random.normal(
        k_fut, (b, s_total, FUTURE_DIST_CH, bev_x, bev_y), jnp.float32)

    params = init_params(k_param)
    out = jax.jit(fiery_forward)(params, image, intrinsics, extrinsics,
                                 future_egomotion, future_distribution_inputs, k_rng)
    jax.block_until_ready(out)
    print("KERNEL_OK")
</pallas_src>

<mosaic_0001>
module attributes {stable_mosaic.version = 11 : i64} {
  func.func @_lift_splat_kernel(%arg0: i32, %arg1: memref<1x48x16xf32, #tpu.memory_space<vmem>>, %arg2: memref<1x4x16x1xi32, #tpu.memory_space<vmem>>, %arg3: memref<16x49xf32, #tpu.memory_space<vmem>>, %arg4: memref<12x17xf32, #tpu.memory_space<vmem>>, %arg5: memref<1x8x256xf32, #tpu.memory_space<vmem>>) attributes {dimension_semantics = [#tpu.dimension_semantics<parallel>], iteration_bounds = array<i64: 2>, scalar_prefetch = 0 : i64, scratch_operands = 0 : i64, tpu.core_type = #tpu.core_type<tc>, window_params = [{transform_indices = @transform_0, window_bounds = array<i64: 1, 48, 16>}, {transform_indices = @transform_1, window_bounds = array<i64: 1, 4, 16, 1>}, {pipeline_mode = #tpu.pipeline_mode<synchronous>, transform_indices = @transform_2, window_bounds = array<i64: 16, 49>}, {pipeline_mode = #tpu.pipeline_mode<synchronous>, transform_indices = @transform_3, window_bounds = array<i64: 12, 17>}, {transform_indices = @transform_4, window_bounds = array<i64: 1, 8, 256>}]} {
    %cst = arith.constant 1.000000e+00 : f32
    %0 = vector.broadcast %cst : f32 to vector<1x16xf32>
    %c0 = arith.constant 0 : index
    %c0_0 = arith.constant 0 : index
    %c0_1 = arith.constant 0 : index
    %1 = vector.load %arg1[%c0, %c0_0, %c0_1] : memref<1x48x16xf32, #tpu.memory_space<vmem>>, vector<1x48x16xf32>
    %2 = vector.shape_cast %1 : vector<1x48x16xf32> to vector<48x16xf32>
    %3 = tpu.concatenate %2, %0 in 0 : vector<48x16xf32>, vector<1x16xf32> -> vector<49x16xf32>
    %c0_2 = arith.constant 0 : index
    %c0_3 = arith.constant 0 : index
    %4 = vector.load %arg3[%c0_2, %c0_3] : memref<16x49xf32, #tpu.memory_space<vmem>>, vector<16x49xf32>
    %cst_4 = arith.constant dense<0.000000e+00> : vector<16x16xf32>
    %5 = tpu.matmul %4, %3, %cst_4 {dimension_numbers = #tpu.dot_dimension_numbers<[1], [0], [0], [1], [0, 0, 1, 1], [], []>} : vector<16x49xf32>, vector<49x16xf32>, vector<16x16xf32> -> vector<16x16xf32>
    %cst_5 = arith.constant 0.000000e+00 : f32
    %6 = vector.broadcast %cst_5 : f32 to vector<16x16xf32>
    %7 = arith.maximumf %5, %6 : vector<16x16xf32>
    %c0_6 = arith.constant 0 : index
    %c0_7 = arith.constant 0 : index
    %8 = vector.load %arg4[%c0_6, %c0_7] : memref<12x17xf32, #tpu.memory_space<vmem>>, vector<12x17xf32>
    %9 = tpu.concatenate %7, %0 in 0 : vector<16x16xf32>, vector<1x16xf32> -> vector<17x16xf32>
    %cst_8 = arith.constant dense<0.000000e+00> : vector<12x16xf32>
    %10 = tpu.matmul %8, %9, %cst_8 {dimension_numbers = #tpu.dot_dimension_numbers<[1], [0], [0], [1], [0, 0, 1, 1], [], []>} : vector<12x17xf32>, vector<17x16xf32>, vector<12x16xf32> -> vector<12x16xf32>
    %11 = vector.extract_strided_slice %10 {offsets = [0, 0], sizes = [4, 16], strides = [1, 1]} : vector<12x16xf32> to vector<4x16xf32>
    %cst_9 = arith.constant dense<0xFF800000> : vector<16xf32>
    %12 = vector.multi_reduction <maximumf>, %11, %cst_9 [0] : vector<4x16xf32> to vector<16xf32>
    %13 = vector.shape_cast %12 : vector<16xf32> to vector<1x16xf32>
    %14 = vector.broadcast %13 : vector<1x16xf32> to vector<4x16xf32>
    %15 = arith.subf %11, %14 : vector<4x16xf32>
    %16 = math.exp %15 : vector<4x16xf32>
    %cst_10 = arith.constant dense<0.000000e+00> : vector<16xf32>
    %17 = vector.multi_reduction <add>, %16, %cst_10 [0] : vector<4x16xf32> to vector<16xf32>
    %18 = vector.shape_cast %17 : vector<16xf32> to vector<1x16xf32>
    %19 = vector.broadcast %18 : vector<1x16xf32> to vector<4x16xf32>
    %20 = arith.divf %16, %19 : vector<4x16xf32>
    %21 = vector.extract_strided_slice %10 {offsets = [4, 0], sizes = [8, 16], strides = [1, 1]} : vector<12x16xf32> to vector<8x16xf32>
    %22 = tpu.iota {dimensions = array<i32: 1>} : vector<16x256xi32>
    %cst_11 = arith.constant 0.000000e+00 : f32
    %23 = vector.broadcast %cst_11 : f32 to vector<8x256xf32>
    %24 = vector.extract_strided_slice %20 {offsets = [0, 0], sizes = [1, 16], strides = [1, 1]} : vector<4x16xf32> to vector<1x16xf32>
    %25 = vector.broadcast %24 : vector<1x16xf32> to vector<8x16xf32>
    %26 = arith.mulf %25, %21 : vector<8x16xf32>
    %c0_12 = arith.constant 0 : index
    %c0_13 = arith.constant 0 : index
    %c0_14 = arith.constant 0 : index
    %c0_15 = arith.constant 0 : index
    %27 = vector.load %arg2[%c0_12, %c0_13, %c0_14, %c0_15] : memref<1x4x16x1xi32, #tpu.memory_space<vmem>>, vector<1x1x16x1xi32>
    %28 = vector.shape_cast %27 : vector<1x1x16x1xi32> to vector<16x1xi32>
    %29 = vector.broadcast %28 : vector<16x1xi32> to vector<16x256xi32>
    %30 = arith.cmpi eq, %22, %29 : vector<16x256xi32>
    %31 = arith.extui %30 : vector<16x256xi1> to vector<16x256xi32>
    %32 = arith.sitofp %31 : vector<16x256xi32> to vector<16x256xf32>
    %cst_16 = arith.constant dense<0.000000e+00> : vector<8x256xf32>
    %33 = tpu.matmul %26, %32, %cst_16 {dimension_numbers = #tpu.dot_dimension_numbers<[1], [0], [0], [1], [0, 0, 1, 1], [], []>} : vector<8x16xf32>, vector<16x256xf32>, vector<8x256xf32> -> vector<8x256xf32>
    %34 = arith.addf %23, %33 : vector<8x256xf32>
    %35 = vector.extract_strided_slice %20 {offsets = [1, 0], sizes = [1, 16], strides = [1, 1]} : vector<4x16xf32> to vector<1x16xf32>
    %36 = vector.broadcast %35 : vector<1x16xf32> to vector<8x16xf32>
    %37 = arith.mulf %36, %21 : vector<8x16xf32>
    %c0_17 = arith.constant 0 : index
    %c1 = arith.constant 1 : index
    %c0_18 = arith.constant 0 : index
    %c0_19 = arith.constant 0 : index
    %38 = vector.load %arg2[%c0_17, %c1, %c0_18, %c0_19] : memref<1x4x16x1xi32, #tpu.memory_space<vmem>>, vector<1x1x16x1xi32>
    %39 = vector.shape_cast %38 : vector<1x1x16x1xi32> to vector<16x1xi32>
    %40 = vector.broadcast %39 : vector<16x1xi32> to vector<16x256xi32>
    %41 = arith.cmpi eq, %22, %40 : vector<16x256xi32>
    %42 = arith.extui %41 : vector<16x256xi1> to vector<16x256xi32>
    %43 = arith.sitofp %42 : vector<16x256xi32> to vector<16x256xf32>
    %cst_20 = arith.constant dense<0.000000e+00> : vector<8x256xf32>
    %44 = tpu.matmul %37, %43, %cst_20 {dimension_numbers = #tpu.dot_dimension_numbers<[1], [0], [0], [1], [0, 0, 1, 1], [], []>} : vector<8x16xf32>, vector<16x256xf32>, vector<8x256xf32> -> vector<8x256xf32>
    %45 = arith.addf %34, %44 : vector<8x256xf32>
    %46 = vector.extract_strided_slice %20 {offsets = [2, 0], sizes = [1, 16], strides = [1, 1]} : vector<4x16xf32> to vector<1x16xf32>
    %47 = vector.broadcast %46 : vector<1x16xf32> to vector<8x16xf32>
    %48 = arith.mulf %47, %21 : vector<8x16xf32>
    %c0_21 = arith.constant 0 : index
    %c2 = arith.constant 2 : index
    %c0_22 = arith.constant 0 : index
    %c0_23 = arith.constant 0 : index
    %49 = vector.load %arg2[%c0_21, %c2, %c0_22, %c0_23] : memref<1x4x16x1xi32, #tpu.memory_space<vmem>>, vector<1x1x16x1xi32>
    %50 = vector.shape_cast %49 : vector<1x1x16x1xi32> to vector<16x1xi32>
    %51 = vector.broadcast %50 : vector<16x1xi32> to vector<16x256xi32>
    %52 = arith.cmpi eq, %22, %51 : vector<16x256xi32>
    %53 = arith.extui %52 : vector<16x256xi1> to vector<16x256xi32>
    %54 = arith.sitofp %53 : vector<16x256xi32> to vector<16x256xf32>
    %cst_24 = arith.constant dense<0.000000e+00> : vector<8x256xf32>
    %55 = tpu.matmul %48, %54, %cst_24 {dimension_numbers = #tpu.dot_dimension_numbers<[1], [0], [0], [1], [0, 0, 1, 1], [], []>} : vector<8x16xf32>, vector<16x256xf32>, vector<8x256xf32> -> vector<8x256xf32>
    %56 = arith.addf %45, %55 : vector<8x256xf32>
    %57 = vector.extract_strided_slice %20 {offsets = [3, 0], sizes = [1, 16], strides = [1, 1]} : vector<4x16xf32> to vector<1x16xf32>
    %58 = vector.broadcast %57 : vector<1x16xf32> to vector<8x16xf32>
    %59 = arith.mulf %58, %21 : vector<8x16xf32>
    %c0_25 = arith.constant 0 : index
    %c3 = arith.constant 3 : index
    %c0_26 = arith.constant 0 : index
    %c0_27 = arith.constant 0 : index
    %60 = vector.load %arg2[%c0_25, %c3, %c0_26, %c0_27] : memref<1x4x16x1xi32, #tpu.memory_space<vmem>>, vector<1x1x16x1xi32>
    %61 = vector.shape_cast %60 : vector<1x1x16x1xi32> to vector<16x1xi32>
    %62 = vector.broadcast %61 : vector<16x1xi32> to vector<16x256xi32>
    %63 = arith.cmpi eq, %22, %62 : vector<16x256xi32>
    %64 = arith.extui %63 : vector<16x256xi1> to vector<16x256xi32>
    %65 = arith.sitofp %64 : vector<16x256xi32> to vector<16x256xf32>
    %cst_28 = arith.constant dense<0.000000e+00> : vector<8x256xf32>
    %66 = tpu.matmul %59, %65, %cst_28 {dimension_numbers = #tpu.dot_dimension_numbers<[1], [0], [0], [1], [0, 0, 1, 1], [], []>} : vector<8x16xf32>, vector<16x256xf32>, vector<8x256xf32> -> vector<8x256xf32>
    %67 = arith.addf %56, %66 : vector<8x256xf32>
    %c0_29 = arith.constant 0 : index
    %c0_30 = arith.constant 0 : index
    %c0_31 = arith.constant 0 : index
    %68 = vector.load %arg5[%c0_29, %c0_30, %c0_31] : memref<1x8x256xf32, #tpu.memory_space<vmem>>, vector<1x8x256xf32>
    %69 = vector.shape_cast %68 : vector<1x8x256xf32> to vector<8x256xf32>
    %70 = vector.shape_cast %67 : vector<8x256xf32> to vector<1x8x256xf32>
    tpu.vector_store %arg5[%c0_29, %c0_30, %c0_31], %70 {strides = array<i32>} : memref<1x8x256xf32, #tpu.memory_space<vmem>>, vector<1x8x256xf32>,
    return
  }
  func.func @transform_0(%arg0: i32) -> (i32, i32, i32) {
    %c0_i32 = arith.constant 0 : i32
    %c0_i32_0 = arith.constant 0 : i32
    %c0_i32_1 = arith.constant 0 : i32
    return %arg0, %c0_i32, %c0_i32_0 : i32, i32, i32
  }
  func.func @transform_1(%arg0: i32) -> (i32, i32, i32, i32) {
    %c0_i32 = arith.constant 0 : i32
    %c0_i32_0 = arith.constant 0 : i32
    %c0_i32_1 = arith.constant 0 : i32
    %c0_i32_2 = arith.constant 0 : i32
    return %arg0, %c0_i32, %c0_i32_0, %c0_i32_1 : i32, i32, i32, i32
  }
  func.func @transform_2(%arg0: i32) -> (i32, i32) {
    %c0_i32 = arith.constant 0 : i32
    %c0_i32_0 = arith.constant 0 : i32
    %c0_i32_1 = arith.constant 0 : i32
    return %c0_i32, %c0_i32_0 : i32, i32
  }
  func.func @transform_3(%arg0: i32) -> (i32, i32) {
    %c0_i32 = arith.constant 0 : i32
    %c0_i32_0 = arith.constant 0 : i32
    %c0_i32_1 = arith.constant 0 : i32
    return %c0_i32, %c0_i32_0 : i32, i32
  }
  func.func @transform_4(%arg0: i32) -> (i32, i32, i32) {
    %c0_i32 = arith.constant 0 : i32
    %c0_i32_0 = arith.constant 0 : i32
    %c0_i32_1 = arith.constant 0 : i32
    return %arg0, %c0_i32, %c0_i32_0 : i32, i32, i32
  }
}

module attributes {stable_mosaic.version = 11 : i64} {
  func.func @_bev_pipeline_kernel(%arg0: i32, %arg1: memref<1x2x8x256xf32, #tpu.memory_space<vmem>>, %arg2: memref<1x2x6x256xf32, #tpu.memory_space<vmem>>, %arg3: memref<1x8x256xf32, #tpu.memory_space<vmem>>, %arg4: memref<1x2x8x256xf32, #tpu.memory_space<vmem>>, %arg5: memref<9x256xf32, #tpu.memory_space<vmem>>, %arg6: memref<8x73xf32, #tpu.memory_space<vmem>>, %arg7: memref<8x73xf32, #tpu.memory_space<vmem>>, %arg8: memref<16x145xf32, #tpu.memory_space<vmem>>, %arg9: memref<16x145xf32, #tpu.memory_space<vmem>>, %arg10: memref<8x145xf32, #tpu.memory_space<vmem>>, %arg11: memref<8x73xf32, #tpu.memory_space<vmem>>, %arg12: memref<16x73xf32, #tpu.memory_space<vmem>>, %arg13: memref<16x73xf32, #tpu.memory_space<vmem>>, %arg14: memref<8x73xf32, #tpu.memory_space<vmem>>, %arg15: memref<8x73xf32, #tpu.memory_space<vmem>>, %arg16: memref<16x73xf32, #tpu.memory_space<vmem>>, %arg17: memref<2x145xf32, #tpu.memory_space<vmem>>, %arg18: memref<24x15xf32, #tpu.memory_space<vmem>>, %arg19: memref<16x8xf32, #tpu.memory_space<vmem>>, %arg20: memref<8x8xf32, #tpu.memory_space<vmem>>, %arg21: memref<8x73xf32, #tpu.memory_space<vmem>>, %arg22: memref<24x9xf32, #tpu.memory_space<vmem>>, %arg23: memref<16x8xf32, #tpu.memory_space<vmem>>, %arg24: memref<8x8xf32, #tpu.memory_space<vmem>>, %arg25: memref<8x73xf32, #tpu.memory_space<vmem>>, %arg26: memref<1x16x256xf32, #tpu.memory_space<vmem>>, %arg27: memref<1x1x16x256xf32, #tpu.memory_space<vmem>>, %arg28: memref<1x2x16x256xf32, #tpu.memory_space<vmem>>, %arg29: memref<1x3x8x256xf32, #tpu.memory_space<vmem>>, %arg30: memref<1x3x2x256xf32, #tpu.memory_space<vmem>>) attributes {dimension_semantics = [#tpu.dimension_semantics<parallel>], iteration_bounds = array<i64: 1>, scalar_prefetch = 0 : i64, scratch_operands = 0 : i64, tpu.core_type = #tpu.core_type<tc>, window_params = [{transform_indices = @transform_0, window_bounds = array<i64: 1, 2, 8, 256>}, {transform_indices = @transform_1, window_bounds = array<i64: 1, 2, 6, 256>}, {transform_indices = @transform_2, window_bounds = array<i64: 1, 8, 256>}, {transform_indices = @transform_3, window_bounds = array<i64: 1, 2, 8, 256>}, {pipeline_mode = #tpu.pipeline_mode<synchronous>, transform_indices = @transform_4, window_bounds = array<i64: 9, 256>}, {pipeline_mode = #tpu.pipeline_mode<synchronous>, transform_indices = @transform_5, window_bounds = array<i64: 8, 73>}, {pipeline_mode = #tpu.pipeline_mode<synchronous>, transform_indices = @transform_6, window_bounds = array<i64: 8, 73>}, {pipeline_mode = #tpu.pipeline_mode<synchronous>, transform_indices = @transform_7, window_bounds = array<i64: 16, 145>}, {pipeline_mode = #tpu.pipeline_mode<synchronous>, transform_indices = @transform_8, window_bounds = array<i64: 16, 145>}, {pipeline_mode = #tpu.pipeline_mode<synchronous>, transform_indices = @transform_9, window_bounds = array<i64: 8, 145>}, {pipeline_mode = #tpu.pipeline_mode<synchronous>, transform_indices = @transform_10, window_bounds = array<i64: 8, 73>}, {pipeline_mode = #tpu.pipeline_mode<synchronous>, transform_indices = @transform_11, window_bounds = array<i64: 16, 73>}, {pipeline_mode = #tpu.pipeline_mode<synchronous>, transform_indices = @transform_12, window_bounds = array<i64: 16, 73>}, {pipeline_mode = #tpu.pipeline_mode<synchronous>, transform_indices = @transform_13, window_bounds = array<i64: 8, 73>}, {pipeline_mode = #tpu.pipeline_mode<synchronous>, transform_indices = @transform_14, window_bounds = array<i64: 8, 73>}, {pipeline_mode = #tpu.pipeline_mode<synchronous>, transform_indices = @transform_15, window_bounds = array<i64: 16, 73>}, {pipeline_mode = #tpu.pipeline_mode<synchronous>, transform_indices = @transform_16, window_bounds = array<i64: 2, 145>}, {pipeline_mode = #tpu.pipeline_mode<synchronous>, transform_indices = @transform_17, window_bounds = array<i64: 24, 15>}, {pipeline_mode = #tpu.pipeline_mode<synchronous>, transform_indices = @transform_18, window_bounds = array<i64: 16, 8>}, {pipeline_mode = #tpu.pipeline_mode<synchronous>, transform_indices = @transform_19, window_bounds = array<i64: 8, 8>}, {pipeline_mode = #tpu.pipeline_mode<synchronous>, transform_indices = @transform_20, window_bounds = array<i64: 8, 73>}, {pipeline_mode = #tpu.pipeline_mode<synchronous>, transform_indices = @transform_21, window_bounds = array<i64: 24, 9>}, {pipeline_mode = #tpu.pipeline_mode<synchronous>, transform_indices = @transform_22, window_bounds = array<i64: 16, 8>}, {pipeline_mode = #tpu.pipeline_mode<synchronous>, transform_indices = @transform_23, window_bounds = array<i64: 8, 8>}, {pipeline_mode = #tpu.pipeline_mode<synchronous>, transform_indices = @transform_24, window_bounds = array<i64: 8, 73>}, {transform_indices = @transform_25, window_bounds = array<i64: 1, 16, 256>}, {transform_indices = @transform_26, window_bounds = array<i64: 1, 1, 16, 256>}, {transform_indices = @transform_27, window_bounds = array<i64: 1, 2, 16, 256>}, {transform_indices = @transform_28, window_bounds = array<i64: 1, 3, 8, 256>}, {transform_indices = @transform_29, window_bounds = array<i64: 1, 3, 2, 256>}]} {
    %cst = arith.constant 1.000000e+00 : f32
    %0 = vector.broadcast %cst : f32 to vector<1x256xf32>
    %c0 = arith.constant 0 : index
    %c0_0 = arith.constant 0 : index
    %1 = vector.load %arg5[%c0, %c0_0] : memref<9x256xf32, #tpu.memory_space<vmem>>, vector<1x256xf32>
    %c1 = arith.constant 1 : index
    %c0_1 = arith.constant 0 : index
    %2 = vector.load %arg5[%c1, %c0_1] : memref<9x256xf32, #tpu.memory_space<vmem>>, vector<1x256xf32>
    %c2 = arith.constant 2 : index
    %c0_2 = arith.constant 0 : index
    %3 = vector.load %arg5[%c2, %c0_2] : memref<9x256xf32, #tpu.memory_space<vmem>>, vector<1x256xf32>
    %c3 = arith.constant 3 : index
    %c0_3 = arith.constant 0 : index
    %4 = vector.load %arg5[%c3, %c0_3] : memref<9x256xf32, #tpu.memory_space<vmem>>, vector<1x256xf32>
    %c5 = arith.constant 5 : index
    %c0_4 = arith.constant 0 : index
    %5 = vector.load %arg5[%c5, %c0_4] : memref<9x256xf32, #tpu.memory_space<vmem>>, vector<1x256xf32>
    %c6 = arith.constant 6 : index
    %c0_5 = arith.constant 0 : index
    %6 = vector.load %arg5[%c6, %c0_5] : memref<9x256xf32, #tpu.memory_space<vmem>>, vector<1x256xf32>
    %c7 = arith.constant 7 : index
    %c0_6 = arith.constant 0 : index
    %7 = vector.load %arg5[%c7, %c0_6] : memref<9x256xf32, #tpu.memory_space<vmem>>, vector<1x256xf32>
    %c8 = arith.constant 8 : index
    %c0_7 = arith.constant 0 : index
    %8 = vector.load %arg5[%c8, %c0_7] : memref<9x256xf32, #tpu.memory_space<vmem>>, vector<1x256xf32>
    %c0_8 = arith.constant 0 : index
    %c0_9 = arith.constant 0 : index
    %c0_10 = arith.constant 0 : index
    %c0_11 = arith.constant 0 : index
    %9 = vector.load %arg1[%c0_8, %c0_9, %c0_10, %c0_11] : memref<1x2x8x256xf32, #tpu.memory_space<vmem>>, vector<1x1x8x256xf32>
    %10 = vector.shape_cast %9 : vector<1x1x8x256xf32> to vector<8x256xf32>
    %c17_i32 = arith.constant 17 : i32
    %11 = tpu.dynamic_rotate %10 by %c17_i32 dim 1 : vector<8x256xf32>, i32 -> vector<8x256xf32>
    %12 = vector.broadcast %1 : vector<1x256xf32> to vector<8x256xf32>
    %13 = arith.mulf %11, %12 : vector<8x256xf32>
    %c16_i32 = arith.constant 16 : i32
    %14 = tpu.dynamic_rotate %10 by %c16_i32 dim 1 : vector<8x256xf32>, i32 -> vector<8x256xf32>
    %15 = vector.broadcast %2 : vector<1x256xf32> to vector<8x256xf32>
    %16 = arith.mulf %14, %15 : vector<8x256xf32>
    %c15_i32 = arith.constant 15 : i32
    %17 = tpu.dynamic_rotate %10 by %c15_i32 dim 1 : vector<8x256xf32>, i32 -> vector<8x256xf32>
    %18 = vector.broadcast %3 : vector<1x256xf32> to vector<8x256xf32>
    %19 = arith.mulf %17, %18 : vector<8x256xf32>
    %c1_i32 = arith.constant 1 : i32
    %20 = tpu.dynamic_rotate %10 by %c1_i32 dim 1 : vector<8x256xf32>, i32 -> vector<8x256xf32>
    %21 = vector.broadcast %4 : vector<1x256xf32> to vector<8x256xf32>
    %22 = arith.mulf %20, %21 : vector<8x256xf32>
    %c255_i32 = arith.constant 255 : i32
    %23 = tpu.dynamic_rotate %10 by %c255_i32 dim 1 : vector<8x256xf32>, i32 -> vector<8x256xf32>
    %24 = vector.broadcast %5 : vector<1x256xf32> to vector<8x256xf32>
    %25 = arith.mulf %23, %24 : vector<8x256xf32>
    %c241_i32 = arith.constant 241 : i32
    %26 = tpu.dynamic_rotate %10 by %c241_i32 dim 1 : vector<8x256xf32>, i32 -> vector<8x256xf32>
    %27 = vector.broadcast %6 : vector<1x256xf32> to vector<8x256xf32>
    %28 = arith.mulf %26, %27 : vector<8x256xf32>
    %c240_i32 = arith.constant 240 : i32
    %29 = tpu.dynamic_rotate %10 by %c240_i32 dim 1 : vector<8x256xf32>, i32 -> vector<8x256xf32>
    %30 = vector.broadcast %7 : vector<1x256xf32> to vector<8x256xf32>
    %31 = arith.mulf %29, %30 : vector<8x256xf32>
    %c239_i32 = arith.constant 239 : i32
    %32 = tpu.dynamic_rotate %10 by %c239_i32 dim 1 : vector<8x256xf32>, i32 -> vector<8x256xf32>
    %33 = vector.broadcast %8 : vector<1x256xf32> to vector<8x256xf32>
    %34 = arith.mulf %32, %33 : vector<8x256xf32>
    %35 = tpu.concatenate %13, %16, %19, %22, %10, %25, %28, %31, %34, %0 in 0 : vector<8x256xf32>, vector<8x256xf32>, vector<8x256xf32>, vector<8x256xf32>, vector<8x256xf32>, vector<8x256xf32>, vector<8x256xf32>, vector<8x256xf32>, vector<8x256xf32>, vector<1x256xf32> -> vector<73x256xf32>
    %c0_12 = arith.constant 0 : index
    %c0_13 = arith.constant 0 : index
    %36 = vector.load %arg6[%c0_12, %c0_13] : memref<8x73xf32, #tpu.memory_space<vmem>>, vector<8x73xf32>
    %cst_14 = arith.constant dense<0.000000e+00> : vector<8x256xf32>
    %37 = tpu.matmul %36, %35, %cst_14 {dimension_numbers = #tpu.dot_dimension_numbers<[1], [0], [0], [1], [0, 0, 1, 1], [], []>} : vector<8x73xf32>, vector<73x256xf32>, vector<8x256xf32> -> vector<8x256xf32>
    %cst_15 = arith.constant 0.000000e+00 : f32
    %38 = vector.broadcast %cst_15 : f32 to vector<8x256xf32>
    %39 = arith.cmpf ogt, %37, %38 : vector<8x256xf32>
    %cst_16 = arith.constant 2.000000e-01 : f32
    %40 = vector.broadcast %cst_16 : f32 to vector<8x256xf32>
    %41 = arith.mulf %40, %37 : vector<8x256xf32>
    %42 = arith.select %39, %37, %41 : vector<8x256xi1>, vector<8x256xf32>
    %c17_i32_17 = arith.constant 17 : i32
    %43 = tpu.dynamic_rotate %42 by %c17_i32_17 dim 1 : vector<8x256xf32>, i32 -> vector<8x256xf32>
    %44 = vector.broadcast %1 : vector<1x256xf32> to vector<8x256xf32>
    %45 = arith.mulf %43, %44 : vector<8x256xf32>
    %c16_i32_18 = arith.constant 16 : i32
    %46 = tpu.dynamic_rotate %42 by %c16_i32_18 dim 1 : vector<8x256xf32>, i32 -> vector<8x256xf32>
    %47 = vector.broadcast %2 : vector<1x256xf32> to vector<8x256xf32>
    %48 = arith.mulf %46, %47 : vector<8x256xf32>
    %c15_i32_19 = arith.constant 15 : i32
    %49 = tpu.dynamic_rotate %42 by %c15_i32_19 dim 1 : vector<8x256xf32>, i32 -> vector<8x256xf32>
    %50 = vector.broadcast %3 : vector<1x256xf32> to vector<8x256xf32>
    %51 = arith.mulf %49, %50 : vector<8x256xf32>
    %c1_i32_20 = arith.constant 1 : i32
    %52 = tpu.dynamic_rotate %42 by %c1_i32_20 dim 1 : vector<8x256xf32>, i32 -> vector<8x256xf32>
    %53 = vector.broadcast %4 : vector<1x256xf32> to vector<8x256xf32>
    %54 = arith.mulf %52, %53 : vector<8x256xf32>
    %c255_i32_21 = arith.constant 255 : i32
    %55 = tpu.dynamic_rotate %42 by %c255_i32_21 dim 1 : vector<8x256xf32>, i32 -> vector<8x256xf32>
    %56 = vector.broadcast %5 : vector<1x256xf32> to vector<8x256xf32>
    %57 = arith.mulf %55, %56 : vector<8x256xf32>
    %c241_i32_22 = arith.constant 241 : i32
    %58 = tpu.dynamic_rotate %42 by %c241_i32_22 dim 1 : vector<8x256xf32>, i32 -> vector<8x256xf32>
    %59 = vector.broadcast %6 : vector<1x256xf32> to vector<8x256xf32>
    %60 = arith.mulf %58, %59 : vector<8x256xf32>
    %c240_i32_23 = arith.constant 240 : i32
    %61 = tpu.dynamic_rotate %42 by %c240_i32_23 dim 1 : vector<8x256xf32>, i32 -> vector<8x256xf32>
    %62 = vector.broadcast %7 : vector<1x256xf32> to vector<8x256xf32>
    %63 = arith.mulf %61, %62 : vector<8x256xf32>
    %c239_i32_24 = arith.constant 239 : i32
    %64 = tpu.dynamic_rotate %42 by %c239_i32_24 dim 1 : vector<8x256xf32>, i32 -> vector<8x256xf32>
    %65 = vector.broadcast %8 : vector<1x256xf32> to vector<8x256xf32>
    %66 = arith.mulf %64, %65 : vector<8x256xf32>
    %67 = tpu.concatenate %45, %48, %51, %54, %42, %57, %60, %63, %66, %0 in 0 : vector<8x256xf32>, vector<8x256xf32>, vector<8x256xf32>, vector<8x256xf32>, vector<8x256xf32>, vector<8x256xf32>, vector<8x256xf32>, vector<8x256xf32>, vector<8x256xf32>, vector<1x256xf32> -> vector<73x256xf32>
    %c0_25 = arith.constant 0 : index
    %c0_26 = arith.constant 0 : index
    %68 = vector.load %arg7[%c0_25, %c0_26] : memref<8x73xf32, #tpu.memory_space<vmem>>, vector<8x73xf32>
    %cst_27 = arith.constant dense<0.000000e+00> : vector<8x256xf32>
    %69 = tpu.matmul %68, %67, %cst_27 {dimension_numbers = #tpu.dot_dimension_numbers<[1], [0], [0], [1], [0, 0, 1, 1], [], []>} : vector<8x73xf32>, vector<73x256xf32>, vector<8x256xf32> -> vector<8x256xf32>
    %cst_28 = arith.constant 0.000000e+00 : f32
    %70 = vector.broadcast %cst_28 : f32 to vector<8x256xf32>
    %71 = arith.cmpf ogt, %69, %70 : vector<8x256xf32>
    %cst_29 = arith.constant 2.000000e-01 : f32
    %72 = vector.broadcast %cst_29 : f32 to vector<8x256xf32>
    %73 = arith.mulf %72, %69 : vector<8x256xf32>
    %74 = arith.select %71, %69, %73 : vector<8x256xi1>, vector<8x256xf32>
    %c0_30 = arith.constant 0 : index
    %c1_31 = arith.constant 1 : index
    %c0_32 = arith.constant 0 : index
    %c0_33 = arith.constant 0 : index
    %75 = vector.load %arg1[%c0_30, %c1_31, %c0_32, %c0_33] : memref<1x2x8x256xf32, #tpu.memory_space<vmem>>, vector<1x1x8x256xf32>
    %76 = vector.shape_cast %75 : vector<1x1x8x256xf32> to vector<8x256xf32>
    %c17_i32_34 = arith.constant 17 : i32
    %77 = tpu.dynamic_rotate %76 by %c17_i32_34 dim 1 : vector<8x256xf32>, i32 -> vector<8x256xf32>
    %78 = vector.broadcast %1 : vector<1x256xf32> to vector<8x256xf32>
    %79 = arith.mulf %77, %78 : vector<8x256xf32>
    %c16_i32_35 = arith.constant 16 : i32
    %80 = tpu.dynamic_rotate %76 by %c16_i32_35 dim 1 : vector<8x256xf32>, i32 -> vector<8x256xf32>
    %81 = vector.broadcast %2 : vector<1x256xf32> to vector<8x256xf32>
    %82 = arith.mulf %80, %81 : vector<8x256xf32>
    %c15_i32_36 = arith.constant 15 : i32
    %83 = tpu.dynamic_rotate %76 by %c15_i32_36 dim 1 : vector<8x256xf32>, i32 -> vector<8x256xf32>
    %84 = vector.broadcast %3 : vector<1x256xf32> to vector<8x256xf32>
    %85 = arith.mulf %83, %84 : vector<8x256xf32>
    %c1_i32_37 = arith.constant 1 : i32
    %86 = tpu.dynamic_rotate %76 by %c1_i32_37 dim 1 : vector<8x256xf32>, i32 -> vector<8x256xf32>
    %87 = vector.broadcast %4 : vector<1x256xf32> to vector<8x256xf32>
    %88 = arith.mulf %86, %87 : vector<8x256xf32>
    %c255_i32_38 = arith.constant 255 : i32
    %89 = tpu.dynamic_rotate %76 by %c255_i32_38 dim 1 : vector<8x256xf32>, i32 -> vector<8x256xf32>
    %90 = vector.broadcast %5 : vector<1x256xf32> to vector<8x256xf32>
    %91 = arith.mulf %89, %90 : vector<8x256xf32>
    %c241_i32_39 = arith.constant 241 : i32
    %92 = tpu.dynamic_rotate %76 by %c241_i32_39 dim 1 : vector<8x256xf32>, i32 -> vector<8x256xf32>
    %93 = vector.broadcast %6 : vector<1x256xf32> to vector<8x256xf32>
    %94 = arith.mulf %92, %93 : vector<8x256xf32>
    %c240_i32_40 = arith.constant 240 : i32
    %95 = tpu.dynamic_rotate %76 by %c240_i32_40 dim 1 : vector<8x256xf32>, i32 -> vector<8x256xf32>
    %96 = vector.broadcast %7 : vector<1x256xf32> to vector<8x256xf32>
    %97 = arith.mulf %95, %96 : vector<8x256xf32>
    %c239_i32_41 = arith.constant 239 : i32
    %98 = tpu.dynamic_rotate %76 by %c239_i32_41 dim 1 : vector<8x256xf32>, i32 -> vector<8x256xf32>
    %99 = vector.broadcast %8 : vector<1x256xf32> to vector<8x256xf32>
    %100 = arith.mulf %98, %99 : vector<8x256xf32>
    %101 = tpu.concatenate %79, %82, %85, %88, %76, %91, %94, %97, %100, %0 in 0 : vector<8x256xf32>, vector<8x256xf32>, vector<8x256xf32>, vector<8x256xf32>, vector<8x256xf32>, vector<8x256xf32>, vector<8x256xf32>, vector<8x256xf32>, vector<8x256xf32>, vector<1x256xf32> -> vector<73x256xf32>
    %c0_42 = arith.constant 0 : index
    %c0_43 = arith.constant 0 : index
    %102 = vector.load %arg6[%c0_42, %c0_43] : memref<8x73xf32, #tpu.memory_space<vmem>>, vector<8x73xf32>
    %cst_44 = arith.constant dense<0.000000e+00> : vector<8x256xf32>
    %103 = tpu.matmul %102, %101, %cst_44 {dimension_numbers = #tpu.dot_dimension_numbers<[1], [0], [0], [1], [0, 0, 1, 1], [], []>} : vector<8x73xf32>, vector<73x256xf32>, vector<8x256xf32> -> vector<8x256xf32>
    %cst_45 = arith.constant 0.000000e+00 : f32
    %104 = vector.broadcast %cst_45 : f32 to vector<8x256xf32>
    %105 = arith.cmpf ogt, %103, %104 : vector<8x256xf32>
    %cst_46 = arith.constant 2.000000e-01 : f32
    %106 = vector.broadcast %cst_46 : f32 to vector<8x256xf32>
    %107 = arith.mulf %106, %103 : vector<8x256xf32>
    %108 = arith.select %105, %103, %107 : vector<8x256xi1>, vector<8x256xf32>
    %c17_i32_47 = arith.constant 17 : i32
    %109 = tpu.dynamic_rotate %108 by %c17_i32_47 dim 1 : vector<8x256xf32>, i32 -> vector<8x256xf32>
    %110 = vector.broadcast %1 : vector<1x256xf32> to vector<8x256xf32>
    %111 = arith.mulf %109, %110 : vector<8x256xf32>
    %c16_i32_48 = arith.constant 16 : i32
    %112 = tpu.dynamic_rotate %108 by %c16_i32_48 dim 1 : vector<8x256xf32>, i32 -> vector<8x256xf32>
    %113 = vector.broadcast %2 : vector<1x256xf32> to vector<8x256xf32>
    %114 = arith.mulf %112, %113 : vector<8x256xf32>
    %c15_i32_49 = arith.constant 15 : i32
    %115 = tpu.dynamic_rotate %108 by %c15_i32_49 dim 1 : vector<8x256xf32>, i32 -> vector<8x256xf32>
    %116 = vector.broadcast %3 : vector<1x256xf32> to vector<8x256xf32>
    %117 = arith.mulf %115, %116 : vector<8x256xf32>
    %c1_i32_50 = arith.constant 1 : i32
    %118 = tpu.dynamic_rotate %108 by %c1_i32_50 dim 1 : vector<8x256xf32>, i32 -> vector<8x256xf32>
    %119 = vector.broadcast %4 : vector<1x256xf32> to vector<8x256xf32>
    %120 = arith.mulf %118, %119 : vector<8x256xf32>
    %c255_i32_51 = arith.constant 255 : i32
    %121 = tpu.dynamic_rotate %108 by %c255_i32_51 dim 1 : vector<8x256xf32>, i32 -> vector<8x256xf32>
    %122 = vector.broadcast %5 : vector<1x256xf32> to vector<8x256xf32>
    %123 = arith.mulf %121, %122 : vector<8x256xf32>
    %c241_i32_52 = arith.constant 241 : i32
    %124 = tpu.dynamic_rotate %108 by %c241_i32_52 dim 1 : vector<8x256xf32>, i32 -> vector<8x256xf32>
    %125 = vector.broadcast %6 : vector<1x256xf32> to vector<8x256xf32>
    %126 = arith.mulf %124, %125 : vector<8x256xf32>
    %c240_i32_53 = arith.constant 240 : i32
    %127 = tpu.dynamic_rotate %108 by %c240_i32_53 dim 1 : vector<8x256xf32>, i32 -> vector<8x256xf32>
    %128 = vector.broadcast %7 : vector<1x256xf32> to vector<8x256xf32>
    %129 = arith.mulf %127, %128 : vector<8x256xf32>
    %c239_i32_54 = arith.constant 239 : i32
    %130 = tpu.dynamic_rotate %108 by %c239_i32_54 dim 1 : vector<8x256xf32>, i32 -> vector<8x256xf32>
    %131 = vector.broadcast %8 : vector<1x256xf32> to vector<8x256xf32>
    %132 = arith.mulf %130, %131 : vector<8x256xf32>
    %133 = tpu.concatenate %111, %114, %117, %120, %108, %123, %126, %129, %132, %0 in 0 : vector<8x256xf32>, vector<8x256xf32>, vector<8x256xf32>, vector<8x256xf32>, vector<8x256xf32>, vector<8x256xf32>, vector<8x256xf32>, vector<8x256xf32>, vector<8x256xf32>, vector<1x256xf32> -> vector<73x256xf32>
    %c0_55 = arith.constant 0 : index
    %c0_56 = arith.constant 0 : index
    %134 = vector.load %arg7[%c0_55, %c0_56] : memref<8x73xf32, #tpu.memory_space<vmem>>, vector<8x73xf32>
    %cst_57 = arith.constant dense<0.000000e+00> : vector<8x256xf32>
    %135 = tpu.matmul %134, %133, %cst_57 {dimension_numbers = #tpu.dot_dimension_numbers<[1], [0], [0], [1], [0, 0, 1, 1], [], []>} : vector<8x73xf32>, vector<73x256xf32>, vector<8x256xf32> -> vector<8x256xf32>
    %cst_58 = arith.constant 0.000000e+00 : f32
    %136 = vector.broadcast %cst_58 : f32 to vector<8x256xf32>
    %137 = arith.cmpf ogt, %135, %136 : vector<8x256xf32>
    %cst_59 = arith.constant 2.000000e-01 : f32
    %138 = vector.broadcast %cst_59 : f32 to vector<8x256xf32>
    %139 = arith.mulf %138, %135 : vector<8x256xf32>
    %140 = arith.select %137, %135, %139 : vector<8x256xi1>, vector<8x256xf32>
    %141 = tpu.concatenate %74, %140 in 0 : vector<8x256xf32>, vector<8x256xf32> -> vector<16x256xf32>
    %c17_i32_60 = arith.constant 17 : i32
    %142 = tpu.dynamic_rotate %141 by %c17_i32_60 dim 1 : vector<16x256xf32>, i32 -> vector<16x256xf32>
    %143 = vector.broadcast %1 : vector<1x256xf32> to vector<16x256xf32>
    %144 = arith.mulf %142, %143 : vector<16x256xf32>
    %c16_i32_61 = arith.constant 16 : i32
    %145 = tpu.dynamic_rotate %141 by %c16_i32_61 dim 1 : vector<16x256xf32>, i32 -> vector<16x256xf32>
    %146 = vector.broadcast %2 : vector<1x256xf32> to vector<16x256xf32>
    %147 = arith.mulf %145, %146 : vector<16x256xf32>
    %c15_i32_62 = arith.constant 15 : i32
    %148 = tpu.dynamic_rotate %141 by %c15_i32_62 dim 1 : vector<16x256xf32>, i32 -> vector<16x256xf32>
    %149 = vector.broadcast %3 : vector<1x256xf32> to vector<16x256xf32>
    %150 = arith.mulf %148, %149 : vector<16x256xf32>
    %c1_i32_63 = arith.constant 1 : i32
    %151 = tpu.dynamic_rotate %141 by %c1_i32_63 dim 1 : vector<16x256xf32>, i32 -> vector<16x256xf32>
    %152 = vector.broadcast %4 : vector<1x256xf32> to vector<16x256xf32>
    %153 = arith.mulf %151, %152 : vector<16x256xf32>
    %c255_i32_64 = arith.constant 255 : i32
    %154 = tpu.dynamic_rotate %141 by %c255_i32_64 dim 1 : vector<16x256xf32>, i32 -> vector<16x256xf32>
    %155 = vector.broadcast %5 : vector<1x256xf32> to vector<16x256xf32>
    %156 = arith.mulf %154, %155 : vector<16x256xf32>
    %c241_i32_65 = arith.constant 241 : i32
    %157 = tpu.dynamic_rotate %141 by %c241_i32_65 dim 1 : vector<16x256xf32>, i32 -> vector<16x256xf32>
    %158 = vector.broadcast %6 : vector<1x256xf32> to vector<16x256xf32>
    %159 = arith.mulf %157, %158 : vector<16x256xf32>
    %c240_i32_66 = arith.constant 240 : i32
    %160 = tpu.dynamic_rotate %141 by %c240_i32_66 dim 1 : vector<16x256xf32>, i32 -> vector<16x256xf32>
    %161 = vector.broadcast %7 : vector<1x256xf32> to vector<16x256xf32>
    %162 = arith.mulf %160, %161 : vector<16x256xf32>
    %c239_i32_67 = arith.constant 239 : i32
    %163 = tpu.dynamic_rotate %141 by %c239_i32_67 dim 1 : vector<16x256xf32>, i32 -> vector<16x256xf32>
    %164 = vector.broadcast %8 : vector<1x256xf32> to vector<16x256xf32>
    %165 = arith.mulf %163, %164 : vector<16x256xf32>
    %166 = tpu.concatenate %144, %147, %150, %153, %141, %156, %159, %162, %165, %0 in 0 : vector<16x256xf32>, vector<16x256xf32>, vector<16x256xf32>, vector<16x256xf32>, vector<16x256xf32>, vector<16x256xf32>, vector<16x256xf32>, vector<16x256xf32>, vector<16x256xf32>, vector<1x256xf32> -> vector<145x256xf32>
    %c0_68 = arith.constant 0 : index
    %c0_69 = arith.constant 0 : index
    %167 = vector.load %arg8[%c0_68, %c0_69] : memref<16x145xf32, #tpu.memory_space<vmem>>, vector<16x145xf32>
    %cst_70 = arith.constant dense<0.000000e+00> : vector<16x256xf32>
    %168 = tpu.matmul %167, %166, %cst_70 {dimension_numbers = #tpu.dot_dimension_numbers<[1], [0], [0], [1], [0, 0, 1, 1], [], []>} : vector<16x145xf32>, vector<145x256xf32>, vector<16x256xf32> -> vector<16x256xf32>
    %cst_71 = arith.constant 0.000000e+00 : f32
    %169 = vector.broadcast %cst_71 : f32 to vector<16x256xf32>
    %170 = arith.cmpf ogt, %168, %169 : vector<16x256xf32>
    %cst_72 = arith.constant 2.000000e-01 : f32
    %171 = vector.broadcast %cst_72 : f32 to vector<16x256xf32>
    %172 = arith.mulf %171, %168 : vector<16x256xf32>
    %173 = arith.select %170, %168, %172 : vector<16x256xi1>, vector<16x256xf32>
    %c17_i32_73 = arith.constant 17 : i32
    %174 = tpu.dynamic_rotate %173 by %c17_i32_73 dim 1 : vector<16x256xf32>, i32 -> vector<16x256xf32>
    %175 = vector.broadcast %1 : vector<1x256xf32> to vector<16x256xf32>
    %176 = arith.mulf %174, %175 : vector<16x256xf32>
    %c16_i32_74 = arith.constant 16 : i32
    %177 = tpu.dynamic_rotate %173 by %c16_i32_74 dim 1 : vector<16x256xf32>, i32 -> vector<16x256xf32>
    %178 = vector.broadcast %2 : vector<1x256xf32> to vector<16x256xf32>
    %179 = arith.mulf %177, %178 : vector<16x256xf32>
    %c15_i32_75 = arith.constant 15 : i32
    %180 = tpu.dynamic_rotate %173 by %c15_i32_75 dim 1 : vector<16x256xf32>, i32 -> vector<16x256xf32>
    %181 = vector.broadcast %3 : vector<1x256xf32> to vector<16x256xf32>
    %182 = arith.mulf %180, %181 : vector<16x256xf32>
    %c1_i32_76 = arith.constant 1 : i32
    %183 = tpu.dynamic_rotate %173 by %c1_i32_76 dim 1 : vector<16x256xf32>, i32 -> vector<16x256xf32>
    %184 = vector.broadcast %4 : vector<1x256xf32> to vector<16x256xf32>
    %185 = arith.mulf %183, %184 : vector<16x256xf32>
    %c255_i32_77 = arith.constant 255 : i32
    %186 = tpu.dynamic_rotate %173 by %c255_i32_77 dim 1 : vector<16x256xf32>, i32 -> vector<16x256xf32>
    %187 = vector.broadcast %5 : vector<1x256xf32> to vector<16x256xf32>
    %188 = arith.mulf %186, %187 : vector<16x256xf32>
    %c241_i32_78 = arith.constant 241 : i32
    %189 = tpu.dynamic_rotate %173 by %c241_i32_78 dim 1 : vector<16x256xf32>, i32 -> vector<16x256xf32>
    %190 = vector.broadcast %6 : vector<1x256xf32> to vector<16x256xf32>
    %191 = arith.mulf %189, %190 : vector<16x256xf32>
    %c240_i32_79 = arith.constant 240 : i32
    %192 = tpu.dynamic_rotate %173 by %c240_i32_79 dim 1 : vector<16x256xf32>, i32 -> vector<16x256xf32>
    %193 = vector.broadcast %7 : vector<1x256xf32> to vector<16x256xf32>
    %194 = arith.mulf %192, %193 : vector<16x256xf32>
    %c239_i32_80 = arith.constant 239 : i32
    %195 = tpu.dynamic_rotate %173 by %c239_i32_80 dim 1 : vector<16x256xf32>, i32 -> vector<16x256xf32>
    %196 = vector.broadcast %8 : vector<1x256xf32> to vector<16x256xf32>
    %197 = arith.mulf %195, %196 : vector<16x256xf32>
    %198 = tpu.concatenate %176, %179, %182, %185, %173, %188, %191, %194, %197, %0 in 0 : vector<16x256xf32>, vector<16x256xf32>, vector<16x256xf32>, vector<16x256xf32>, vector<16x256xf32>, vector<16x256xf32>, vector<16x256xf32>, vector<16x256xf32>, vector<16x256xf32>, vector<1x256xf32> -> vector<145x256xf32>
    %c0_81 = arith.constant 0 : index
    %c0_82 = arith.constant 0 : index
    %199 = vector.load %arg9[%c0_81, %c0_82] : memref<16x145xf32, #tpu.memory_space<vmem>>, vector<16x145xf32>
    %cst_83 = arith.constant dense<0.000000e+00> : vector<16x256xf32>
    %200 = tpu.matmul %199, %198, %cst_83 {dimension_numbers = #tpu.dot_dimension_numbers<[1], [0], [0], [1], [0, 0, 1, 1], [], []>} : vector<16x145xf32>, vector<145x256xf32>, vector<16x256xf32> -> vector<16x256xf32>
    %c0_84 = arith.constant 0 : index
    %c0_85 = arith.constant 0 : index
    %c0_86 = arith.constant 0 : index
    %201 = vector.load %arg26[%c0_84, %c0_85, %c0_86] : memref<1x16x256xf32, #tpu.memory_space<vmem>>, vector<1x16x256xf32>
    %202 = vector.shape_cast %201 : vector<1x16x256xf32> to vector<16x256xf32>
    %203 = vector.shape_cast %200 : vector<16x256xf32> to vector<1x16x256xf32>
    tpu.vector_store %arg26[%c0_84, %c0_85, %c0_86], %203 {strides = array<i32>} : memref<1x16x256xf32, #tpu.memory_space<vmem>>, vector<1x16x256xf32>,
    %c0_87 = arith.constant 0 : index
    %c0_88 = arith.constant 0 : index
    %c0_89 = arith.constant 0 : index
    %204 = vector.load %arg3[%c0_87, %c0_88, %c0_89] : memref<1x8x256xf32, #tpu.memory_space<vmem>>, vector<1x8x256xf32>
    %205 = vector.shape_cast %204 : vector<1x8x256xf32> to vector<8x256xf32>
    %206 = vector.extract_strided_slice %200 {offsets = [0, 0], sizes = [8, 256], strides = [1, 1]} : vector<16x256xf32> to vector<8x256xf32>
    %207 = vector.extract_strided_slice %200 {offsets = [8, 0], sizes = [8, 256], strides = [1, 1]} : vector<16x256xf32> to vector<8x256xf32>
    %cst_90 = arith.constant -5.000000e+00 : f32
    %cst_91 = arith.constant 5.000000e+00 : f32
    %208 = vector.broadcast %cst_90 : f32 to vector<8x256xf32>
    %209 = arith.maximumf %208, %207 : vector<8x256xf32>
    %210 = vector.broadcast %cst_91 : f32 to vector<8x256xf32>
    %211 = arith.minimumf %210, %209 : vector<8x256xf32>
    %212 = math.exp %211 : vector<8x256xf32>
    %213 = arith.mulf %212, %205 : vector<8x256xf32>
    %214 = arith.addf %206, %213 : vector<8x256xf32>
    %c0_92 = arith.constant 0 : index
    %c0_93 = arith.constant 0 : index
    %c0_94 = arith.constant 0 : index
    %c0_95 = arith.constant 0 : index
    %215 = vector.load %arg2[%c0_92, %c0_93, %c0_94, %c0_95] : memref<1x2x6x256xf32, #tpu.memory_space<vmem>>, vector<1x1x6x256xf32>
    %216 = vector.shape_cast %215 : vector<1x1x6x256xf32> to vector<6x256xf32>
    %217 = tpu.concatenate %74, %216 in 0 : vector<8x256xf32>, vector<6x256xf32> -> vector<14x256xf32>
    %c0_96 = arith.constant 0 : index
    %c1_97 = arith.constant 1 : index
    %c0_98 = arith.constant 0 : index
    %c0_99 = arith.constant 0 : index
    %218 = vector.load %arg2[%c0_96, %c1_97, %c0_98, %c0_99] : memref<1x2x6x256xf32, #tpu.memory_space<vmem>>, vector<1x1x6x256xf32>
    %219 = vector.shape_cast %218 : vector<1x1x6x256xf32> to vector<6x256xf32>
    %220 = tpu.concatenate %140, %219 in 0 : vector<8x256xf32>, vector<6x256xf32> -> vector<14x256xf32>
    %c0_100 = arith.constant 0 : index
    %c0_101 = arith.constant 0 : index
    %221 = vector.load %arg18[%c0_100, %c0_101] : memref<24x15xf32, #tpu.memory_space<vmem>>, vector<24x15xf32>
    %c0_102 = arith.constant 0 : index
    %c0_103 = arith.constant 0 : index
    %222 = vector.load %arg19[%c0_102, %c0_103] : memref<16x8xf32, #tpu.memory_space<vmem>>, vector<16x8xf32>
    %c0_104 = arith.constant 0 : index
    %c0_105 = arith.constant 0 : index
    %223 = vector.load %arg20[%c0_104, %c0_105] : memref<8x8xf32, #tpu.memory_space<vmem>>, vector<8x8xf32>
    %cst_106 = arith.constant 0.000000e+00 : f32
    %224 = vector.broadcast %cst_106 : f32 to vector<8x256xf32>
    %225 = tpu.concatenate %217, %0 in 0 : vector<14x256xf32>, vector<1x256xf32> -> vector<15x256xf32>
    %cst_107 = arith.constant dense<0.000000e+00> : vector<24x256xf32>
    %226 = tpu.matmul %221, %225, %cst_107 {dimension_numbers = #tpu.dot_dimension_numbers<[1], [0], [0], [1], [0, 0, 1, 1], [], []>} : vector<24x15xf32>, vector<15x256xf32>, vector<24x256xf32> -> vector<24x256xf32>
    %cst_108 = arith.constant dense<0.000000e+00> : vector<16x256xf32>
    %227 = tpu.matmul %222, %224, %cst_108 {dimension_numbers = #tpu.dot_dimension_numbers<[1], [0], [0], [1], [0, 0, 1, 1], [], []>} : vector<16x8xf32>, vector<8x256xf32>, vector<16x256xf32> -> vector<16x256xf32>
    %228 = vector.extract_strided_slice %226 {offsets = [0, 0], sizes = [8, 256], strides = [1, 1]} : vector<24x256xf32> to vector<8x256xf32>
    %229 = vector.extract_strided_slice %227 {offsets = [0, 0], sizes = [8, 256], strides = [1, 1]} : vector<16x256xf32> to vector<8x256xf32>
    %230 = arith.addf %228, %229 : vector<8x256xf32>
    %231 = arith.negf %230 : vector<8x256xf32>
    %232 = math.exp %231 : vector<8x256xf32>
    %cst_109 = arith.constant 1.000000e+00 : f32
    %233 = vector.broadcast %cst_109 : f32 to vector<8x256xf32>
    %234 = arith.addf %233, %232 : vector<8x256xf32>
    %235 = arith.divf %233, %234 : vector<8x256xf32>
    %236 = vector.extract_strided_slice %226 {offsets = [8, 0], sizes = [8, 256], strides = [1, 1]} : vector<24x256xf32> to vector<8x256xf32>
    %237 = vector.extract_strided_slice %227 {offsets = [8, 0], sizes = [8, 256], strides = [1, 1]} : vector<16x256xf32> to vector<8x256xf32>
    %238 = arith.addf %236, %237 : vector<8x256xf32>
    %239 = arith.negf %238 : vector<8x256xf32>
    %240 = math.exp %239 : vector<8x256xf32>
    %cst_110 = arith.constant 1.000000e+00 : f32
    %241 = vector.broadcast %cst_110 : f32 to vector<8x256xf32>
    %242 = arith.addf %241, %240 : vector<8x256xf32>
    %243 = arith.divf %241, %242 : vector<8x256xf32>
    %244 = vector.extract_strided_slice %226 {offsets = [16, 0], sizes = [8, 256], strides = [1, 1]} : vector<24x256xf32> to vector<8x256xf32>
    %245 = arith.mulf %243, %224 : vector<8x256xf32>
    %cst_111 = arith.constant dense<0.000000e+00> : vector<8x256xf32>
    %246 = tpu.matmul %223, %245, %cst_111 {dimension_numbers = #tpu.dot_dimension_numbers<[1], [0], [0], [1], [0, 0, 1, 1], [], []>} : vector<8x8xf32>, vector<8x256xf32>, vector<8x256xf32> -> vector<8x256xf32>
    %247 = arith.addf %244, %246 : vector<8x256xf32>
    %248 = math.tanh %247 : vector<8x256xf32>
    %cst_112 = arith.constant 1.000000e+00 : f32
    %249 = vector.broadcast %cst_112 : f32 to vector<8x256xf32>
    %250 = arith.subf %249, %235 : vector<8x256xf32>
    %251 = arith.mulf %250, %224 : vector<8x256xf32>
    %252 = arith.mulf %235, %248 : vector<8x256xf32>
    %253 = arith.addf %251, %252 : vector<8x256xf32>
    %c17_i32_113 = arith.constant 17 : i32
    %254 = tpu.dynamic_rotate %253 by %c17_i32_113 dim 1 : vector<8x256xf32>, i32 -> vector<8x256xf32>
    %255 = vector.broadcast %1 : vector<1x256xf32> to vector<8x256xf32>
    %256 = arith.mulf %254, %255 : vector<8x256xf32>
    %c16_i32_114 = arith.constant 16 : i32
    %257 = tpu.dynamic_rotate %253 by %c16_i32_114 dim 1 : vector<8x256xf32>, i32 -> vector<8x256xf32>
    %258 = vector.broadcast %2 : vector<1x256xf32> to vector<8x256xf32>
    %259 = arith.mulf %257, %258 : vector<8x256xf32>
    %c15_i32_115 = arith.constant 15 : i32
    %260 = tpu.dynamic_rotate %253 by %c15_i32_115 dim 1 : vector<8x256xf32>, i32 -> vector<8x256xf32>
    %261 = vector.broadcast %3 : vector<1x256xf32> to vector<8x256xf32>
    %262 = arith.mulf %260, %261 : vector<8x256xf32>
    %c1_i32_116 = arith.constant 1 : i32
    %263 = tpu.dynamic_rotate %253 by %c1_i32_116 dim 1 : vector<8x256xf32>, i32 -> vector<8x256xf32>
    %264 = vector.broadcast %4 : vector<1x256xf32> to vector<8x256xf32>
    %265 = arith.mulf %263, %264 : vector<8x256xf32>
    %c255_i32_117 = arith.constant 255 : i32
    %266 = tpu.dynamic_rotate %253 by %c255_i32_117 dim 1 : vector<8x256xf32>, i32 -> vector<8x256xf32>
    %267 = vector.broadcast %5 : vector<1x256xf32> to vector<8x256xf32>
    %268 = arith.mulf %266, %267 : vector<8x256xf32>
    %c241_i32_118 = arith.constant 241 : i32
    %269 = tpu.dynamic_rotate %253 by %c241_i32_118 dim 1 : vector<8x256xf32>, i32 -> vector<8x256xf32>
    %270 = vector.broadcast %6 : vector<1x256xf32> to vector<8x256xf32>
    %271 = arith.mulf %269, %270 : vector<8x256xf32>
    %c240_i32_119 = arith.constant 240 : i32
    %272 = tpu.dynamic_rotate %253 by %c240_i32_119 dim 1 : vector<8x256xf32>, i32 -> vector<8x256xf32>
    %273 = vector.broadcast %7 : vector<1x256xf32> to vector<8x256xf32>
    %274 = arith.mulf %272, %273 : vector<8x256xf32>
    %c239_i32_120 = arith.constant 239 : i32
    %275 = tpu.dynamic_rotate %253 by %c239_i32_120 dim 1 : vector<8x256xf32>, i32 -> vector<8x256xf32>
    %276 = vector.broadcast %8 : vector<1x256xf32> to vector<8x256xf32>
    %277 = arith.mulf %275, %276 : vector<8x256xf32>
    %278 = tpu.concatenate %256, %259, %262, %265, %253, %268, %271, %274, %277, %0 in 0 : vector<8x256xf32>, vector<8x256xf32>, vector<8x256xf32>, vector<8x256xf32>, vector<8x256xf32>, vector<8x256xf32>, vector<8x256xf32>, vector<8x256xf32>, vector<8x256xf32>, vector<1x256xf32> -> vector<73x256xf32>
    %c0_121 = arith.constant 0 : index
    %c0_122 = arith.constant 0 : index
    %279 = vector.load %arg21[%c0_121, %c0_122] : memref<8x73xf32, #tpu.memory_space<vmem>>, vector<8x73xf32>
    %cst_123 = arith.constant dense<0.000000e+00> : vector<8x256xf32>
    %280 = tpu.matmul %279, %278, %cst_123 {dimension_numbers = #tpu.dot_dimension_numbers<[1], [0], [0], [1], [0, 0, 1, 1], [], []>} : vector<8x73xf32>, vector<73x256xf32>, vector<8x256xf32> -> vector<8x256xf32>
    %cst_124 = arith.constant 0.000000e+00 : f32
    %281 = vector.broadcast %cst_124 : f32 to vector<8x256xf32>
    %282 = arith.maximumf %280, %281 : vector<8x256xf32>
    %283 = arith.addf %253, %282 : vector<8x256xf32>
    %284 = tpu.concatenate %220, %0 in 0 : vector<14x256xf32>, vector<1x256xf32> -> vector<15x256xf32>
    %cst_125 = arith.constant dense<0.000000e+00> : vector<24x256xf32>
    %285 = tpu.matmul %221, %284, %cst_125 {dimension_numbers = #tpu.dot_dimension_numbers<[1], [0], [0], [1], [0, 0, 1, 1], [], []>} : vector<24x15xf32>, vector<15x256xf32>, vector<24x256xf32> -> vector<24x256xf32>
    %cst_126 = arith.constant dense<0.000000e+00> : vector<16x256xf32>
    %286 = tpu.matmul %222, %253, %cst_126 {dimension_numbers = #tpu.dot_dimension_numbers<[1], [0], [0], [1], [0, 0, 1, 1], [], []>} : vector<16x8xf32>, vector<8x256xf32>, vector<16x256xf32> -> vector<16x256xf32>
    %287 = vector.extract_strided_slice %285 {offsets = [0, 0], sizes = [8, 256], strides = [1, 1]} : vector<24x256xf32> to vector<8x256xf32>
    %288 = vector.extract_strided_slice %286 {offsets = [0, 0], sizes = [8, 256], strides = [1, 1]} : vector<16x256xf32> to vector<8x256xf32>
    %289 = arith.addf %287, %288 : vector<8x256xf32>
    %290 = arith.negf %289 : vector<8x256xf32>
    %291 = math.exp %290 : vector<8x256xf32>
    %cst_127 = arith.constant 1.000000e+00 : f32
    %292 = vector.broadcast %cst_127 : f32 to vector<8x256xf32>
    %293 = arith.addf %292, %291 : vector<8x256xf32>
    %294 = arith.divf %292, %293 : vector<8x256xf32>
    %295 = vector.extract_strided_slice %285 {offsets = [8, 0], sizes = [8, 256], strides = [1, 1]} : vector<24x256xf32> to vector<8x256xf32>
    %296 = vector.extract_strided_slice %286 {offsets = [8, 0], sizes = [8, 256], strides = [1, 1]} : vector<16x256xf32> to vector<8x256xf32>
    %297 = arith.addf %295, %296 : vector<8x256xf32>
    %298 = arith.negf %297 : vector<8x256xf32>
    %299 = math.exp %298 : vector<8x256xf32>
    %cst_128 = arith.constant 1.000000e+00 : f32
    %300 = vector.broadcast %cst_128 : f32 to vector<8x256xf32>
    %301 = arith.addf %300, %299 : vector<8x256xf32>
    %302 = arith.divf %300, %301 : vector<8x256xf32>
    %303 = vector.extract_strided_slice %285 {offsets = [16, 0], sizes = [8, 256], strides = [1, 1]} : vector<24x256xf32> to vector<8x256xf32>
    %304 = arith.mulf %302, %253 : vector<8x256xf32>
    %cst_129 = arith.constant dense<0.000000e+00> : vector<8x256xf32>
    %305 = tpu.matmul %223, %304, %cst_129 {dimension_numbers = #tpu.dot_dimension_numbers<[1], [0], [0], [1], [0, 0, 1, 1], [], []>} : vector<8x8xf32>, vector<8x256xf32>, vector<8x256xf32> -> vector<8x256xf32>
    %306 = arith.addf %303, %305 : vector<8x256xf32>
    %307 = math.tanh %306 : vector<8x256xf32>
    %cst_130 = arith.constant 1.000000e+00 : f32
    %308 = vector.broadcast %cst_130 : f32 to vector<8x256xf32>
    %309 = arith.subf %308, %294 : vector<8x256xf32>
    %310 = arith.mulf %309, %253 : vector<8x256xf32>
    %311 = arith.mulf %294, %307 : vector<8x256xf32>
    %312 = arith.addf %310, %311 : vector<8x256xf32>
    %c17_i32_131 = arith.constant 17 : i32
    %313 = tpu.dynamic_rotate %312 by %c17_i32_131 dim 1 : vector<8x256xf32>, i32 -> vector<8x256xf32>
    %314 = vector.broadcast %1 : vector<1x256xf32> to vector<8x256xf32>
    %315 = arith.mulf %313, %314 : vector<8x256xf32>
    %c16_i32_132 = arith.constant 16 : i32
    %316 = tpu.dynamic_rotate %312 by %c16_i32_132 dim 1 : vector<8x256xf32>, i32 -> vector<8x256xf32>
    %317 = vector.broadcast %2 : vector<1x256xf32> to vector<8x256xf32>
    %318 = arith.mulf %316, %317 : vector<8x256xf32>
    %c15_i32_133 = arith.constant 15 : i32
    %319 = tpu.dynamic_rotate %312 by %c15_i32_133 dim 1 : vector<8x256xf32>, i32 -> vector<8x256xf32>
    %320 = vector.broadcast %3 : vector<1x256xf32> to vector<8x256xf32>
    %321 = arith.mulf %319, %320 : vector<8x256xf32>
    %c1_i32_134 = arith.constant 1 : i32
    %322 = tpu.dynamic_rotate %312 by %c1_i32_134 dim 1 : vector<8x256xf32>, i32 -> vector<8x256xf32>
    %323 = vector.broadcast %4 : vector<1x256xf32> to vector<8x256xf32>
    %324 = arith.mulf %322, %323 : vector<8x256xf32>
    %c255_i32_135 = arith.constant 255 : i32
    %325 = tpu.dynamic_rotate %312 by %c255_i32_135 dim 1 : vector<8x256xf32>, i32 -> vector<8x256xf32>
    %326 = vector.broadcast %5 : vector<1x256xf32> to vector<8x256xf32>
    %327 = arith.mulf %325, %326 : vector<8x256xf32>
    %c241_i32_136 = arith.constant 241 : i32
    %328 = tpu.dynamic_rotate %312 by %c241_i32_136 dim 1 : vector<8x256xf32>, i32 -> vector<8x256xf32>
    %329 = vector.broadcast %6 : vector<1x256xf32> to vector<8x256xf32>
    %330 = arith.mulf %328, %329 : vector<8x256xf32>
    %c240_i32_137 = arith.constant 240 : i32
    %331 = tpu.dynamic_rotate %312 by %c240_i32_137 dim 1 : vector<8x256xf32>, i32 -> vector<8x256xf32>
    %332 = vector.broadcast %7 : vector<1x256xf32> to vector<8x256xf32>
    %333 = arith.mulf %331, %332 : vector<8x256xf32>
    %c239_i32_138 = arith.constant 239 : i32
    %334 = tpu.dynamic_rotate %312 by %c239_i32_138 dim 1 : vector<8x256xf32>, i32 -> vector<8x256xf32>
    %335 = vector.broadcast %8 : vector<1x256xf32> to vector<8x256xf32>
    %336 = arith.mulf %334, %335 : vector<8x256xf32>
    %337 = tpu.concatenate %315, %318, %321, %324, %312, %327, %330, %333, %336, %0 in 0 : vector<8x256xf32>, vector<8x256xf32>, vector<8x256xf32>, vector<8x256xf32>, vector<8x256xf32>, vector<8x256xf32>, vector<8x256xf32>, vector<8x256xf32>, vector<8x256xf32>, vector<1x256xf32> -> vector<73x256xf32>
    %c0_139 = arith.constant 0 : index
    %c0_140 = arith.constant 0 : index
    %338 = vector.load %arg21[%c0_139, %c0_140] : memref<8x73xf32, #tpu.memory_space<vmem>>, vector<8x73xf32>
    %cst_141 = arith.constant dense<0.000000e+00> : vector<8x256xf32>
    %339 = tpu.matmul %338, %337, %cst_141 {dimension_numbers = #tpu.dot_dimension_numbers<[1], [0], [0], [1], [0, 0, 1, 1], [], []>} : vector<8x73xf32>, vector<73x256xf32>, vector<8x256xf32> -> vector<8x256xf32>
    %cst_142 = arith.constant 0.000000e+00 : f32
    %340 = vector.broadcast %cst_142 : f32 to vector<8x256xf32>
    %341 = arith.maximumf %339, %340 : vector<8x256xf32>
    %342 = arith.addf %312, %341 : vector<8x256xf32>
    %c0_143 = arith.constant 0 : index
    %c0_144 = arith.constant 0 : index
    %343 = vector.load %arg22[%c0_143, %c0_144] : memref<24x9xf32, #tpu.memory_space<vmem>>, vector<24x9xf32>
    %c0_145 = arith.constant 0 : index
    %c0_146 = arith.constant 0 : index
    %344 = vector.load %arg23[%c0_145, %c0_146] : memref<16x8xf32, #tpu.memory_space<vmem>>, vector<16x8xf32>
    %c0_147 = arith.constant 0 : index
    %c0_148 = arith.constant 0 : index
    %345 = vector.load %arg24[%c0_147, %c0_148] : memref<8x8xf32, #tpu.memory_space<vmem>>, vector<8x8xf32>
    %cst_149 = arith.constant 0.000000e+00 : f32
    %346 = vector.broadcast %cst_149 : f32 to vector<8x256xf32>
    %347 = tpu.concatenate %283, %0 in 0 : vector<8x256xf32>, vector<1x256xf32> -> vector<9x256xf32>
    %cst_150 = arith.constant dense<0.000000e+00> : vector<24x256xf32>
    %348 = tpu.matmul %343, %347, %cst_150 {dimension_numbers = #tpu.dot_dimension_numbers<[1], [0], [0], [1], [0, 0, 1, 1], [], []>} : vector<24x9xf32>, vector<9x256xf32>, vector<24x256xf32> -> vector<24x256xf32>
    %cst_151 = arith.constant dense<0.000000e+00> : vector<16x256xf32>
    %349 = tpu.matmul %344, %346, %cst_151 {dimension_numbers = #tpu.dot_dimension_numbers<[1], [0], [0], [1], [0, 0, 1, 1], [], []>} : vector<16x8xf32>, vector<8x256xf32>, vector<16x256xf32> -> vector<16x256xf32>
    %350 = vector.extract_strided_slice %348 {offsets = [0, 0], sizes = [8, 256], strides = [1, 1]} : vector<24x256xf32> to vector<8x256xf32>
    %351 = vector.extract_strided_slice %349 {offsets = [0, 0], sizes = [8, 256], strides = [1, 1]} : vector<16x256xf32> to vector<8x256xf32>
    %352 = arith.addf %350, %351 : vector<8x256xf32>
    %353 = arith.negf %352 : vector<8x256xf32>
    %354 = math.exp %353 : vector<8x256xf32>
    %cst_152 = arith.constant 1.000000e+00 : f32
    %355 = vector.broadcast %cst_152 : f32 to vector<8x256xf32>
    %356 = arith.addf %355, %354 : vector<8x256xf32>
    %357 = arith.divf %355, %356 : vector<8x256xf32>
    %358 = vector.extract_strided_slice %348 {offsets = [8, 0], sizes = [8, 256], strides = [1, 1]} : vector<24x256xf32> to vector<8x256xf32>
    %359 = vector.extract_strided_slice %349 {offsets = [8, 0], sizes = [8, 256], strides = [1, 1]} : vector<16x256xf32> to vector<8x256xf32>
    %360 = arith.addf %358, %359 : vector<8x256xf32>
    %361 = arith.negf %360 : vector<8x256xf32>
    %362 = math.exp %361 : vector<8x256xf32>
    %cst_153 = arith.constant 1.000000e+00 : f32
    %363 = vector.broadcast %cst_153 : f32 to vector<8x256xf32>
    %364 = arith.addf %363, %362 : vector<8x256xf32>
    %365 = arith.divf %363, %364 : vector<8x256xf32>
    %366 = vector.extract_strided_slice %348 {offsets = [16, 0], sizes = [8, 256], strides = [1, 1]} : vector<24x256xf32> to vector<8x256xf32>
    %367 = arith.mulf %365, %346 : vector<8x256xf32>
    %cst_154 = arith.constant dense<0.000000e+00> : vector<8x256xf32>
    %368 = tpu.matmul %345, %367, %cst_154 {dimension_numbers = #tpu.dot_dimension_numbers<[1], [0], [0], [1], [0, 0, 1, 1], [], []>} : vector<8x8xf32>, vector<8x256xf32>, vector<8x256xf32> -> vector<8x256xf32>
    %369 = arith.addf %366, %368 : vector<8x256xf32>
    %370 = math.tanh %369 : vector<8x256xf32>
    %cst_155 = arith.constant 1.000000e+00 : f32
    %371 = vector.broadcast %cst_155 : f32 to vector<8x256xf32>
    %372 = arith.subf %371, %357 : vector<8x256xf32>
    %373 = arith.mulf %372, %346 : vector<8x256xf32>
    %374 = arith.mulf %357, %370 : vector<8x256xf32>
    %375 = arith.addf %373, %374 : vector<8x256xf32>
    %376 = tpu.concatenate %342, %0 in 0 : vector<8x256xf32>, vector<1x256xf32> -> vector<9x256xf32>
    %cst_156 = arith.constant dense<0.000000e+00> : vector<24x256xf32>
    %377 = tpu.matmul %343, %376, %cst_156 {dimension_numbers = #tpu.dot_dimension_numbers<[1], [0], [0], [1], [0, 0, 1, 1], [], []>} : vector<24x9xf32>, vector<9x256xf32>, vector<24x256xf32> -> vector<24x256xf32>
    %cst_157 = arith.constant dense<0.000000e+00> : vector<16x256xf32>
    %378 = tpu.matmul %344, %375, %cst_157 {dimension_numbers = #tpu.dot_dimension_numbers<[1], [0], [0], [1], [0, 0, 1, 1], [], []>} : vector<16x8xf32>, vector<8x256xf32>, vector<16x256xf32> -> vector<16x256xf32>
    %379 = vector.extract_strided_slice %377 {offsets = [0, 0], sizes = [8, 256], strides = [1, 1]} : vector<24x256xf32> to vector<8x256xf32>
    %380 = vector.extract_strided_slice %378 {offsets = [0, 0], sizes = [8, 256], strides = [1, 1]} : vector<16x256xf32> to vector<8x256xf32>
    %381 = arith.addf %379, %380 : vector<8x256xf32>
    %382 = arith.negf %381 : vector<8x256xf32>
    %383 = math.exp %382 : vector<8x256xf32>
    %cst_158 = arith.constant 1.000000e+00 : f32
    %384 = vector.broadcast %cst_158 : f32 to vector<8x256xf32>
    %385 = arith.addf %384, %383 : vector<8x256xf32>
    %386 = arith.divf %384, %385 : vector<8x256xf32>
    %387 = vector.extract_strided_slice %377 {offsets = [8, 0], sizes = [8, 256], strides = [1, 1]} : vector<24x256xf32> to vector<8x256xf32>
    %388 = vector.extract_strided_slice %378 {offsets = [8, 0], sizes = [8, 256], strides = [1, 1]} : vector<16x256xf32> to vector<8x256xf32>
    %389 = arith.addf %387, %388 : vector<8x256xf32>
    %390 = arith.negf %389 : vector<8x256xf32>
    %391 = math.exp %390 : vector<8x256xf32>
    %cst_159 = arith.constant 1.000000e+00 : f32
    %392 = vector.broadcast %cst_159 : f32 to vector<8x256xf32>
    %393 = arith.addf %392, %391 : vector<8x256xf32>
    %394 = arith.divf %392, %393 : vector<8x256xf32>
    %395 = vector.extract_strided_slice %377 {offsets = [16, 0], sizes = [8, 256], strides = [1, 1]} : vector<24x256xf32> to vector<8x256xf32>
    %396 = arith.mulf %394, %375 : vector<8x256xf32>
    %cst_160 = arith.constant dense<0.000000e+00> : vector<8x256xf32>
    %397 = tpu.matmul %345, %396, %cst_160 {dimension_numbers = #tpu.dot_dimension_numbers<[1], [0], [0], [1], [0, 0, 1, 1], [], []>} : vector<8x8xf32>, vector<8x256xf32>, vector<8x256xf32> -> vector<8x256xf32>
    %398 = arith.addf %395, %397 : vector<8x256xf32>
    %399 = math.tanh %398 : vector<8x256xf32>
    %cst_161 = arith.constant 1.000000e+00 : f32
    %400 = vector.broadcast %cst_161 : f32 to vector<8x256xf32>
    %401 = arith.subf %400, %386 : vector<8x256xf32>
    %402 = arith.mulf %401, %375 : vector<8x256xf32>
    %403 = arith.mulf %386, %399 : vector<8x256xf32>
    %404 = arith.addf %402, %403 : vector<8x256xf32>
    %c17_i32_162 = arith.constant 17 : i32
    %405 = tpu.dynamic_rotate %404 by %c17_i32_162 dim 1 : vector<8x256xf32>, i32 -> vector<8x256xf32>
    %406 = vector.broadcast %1 : vector<1x256xf32> to vector<8x256xf32>
    %407 = arith.mulf %405, %406 : vector<8x256xf32>
    %c16_i32_163 = arith.constant 16 : i32
    %408 = tpu.dynamic_rotate %404 by %c16_i32_163 dim 1 : vector<8x256xf32>, i32 -> vector<8x256xf32>
    %409 = vector.broadcast %2 : vector<1x256xf32> to vector<8x256xf32>
    %410 = arith.mulf %408, %409 : vector<8x256xf32>
    %c15_i32_164 = arith.constant 15 : i32
    %411 = tpu.dynamic_rotate %404 by %c15_i32_164 dim 1 : vector<8x256xf32>, i32 -> vector<8x256xf32>
    %412 = vector.broadcast %3 : vector<1x256xf32> to vector<8x256xf32>
    %413 = arith.mulf %411, %412 : vector<8x256xf32>
    %c1_i32_165 = arith.constant 1 : i32
    %414 = tpu.dynamic_rotate %404 by %c1_i32_165 dim 1 : vector<8x256xf32>, i32 -> vector<8x256xf32>
    %415 = vector.broadcast %4 : vector<1x256xf32> to vector<8x256xf32>
    %416 = arith.mulf %414, %415 : vector<8x256xf32>
    %c255_i32_166 = arith.constant 255 : i32
    %417 = tpu.dynamic_rotate %404 by %c255_i32_166 dim 1 : vector<8x256xf32>, i32 -> vector<8x256xf32>
    %418 = vector.broadcast %5 : vector<1x256xf32> to vector<8x256xf32>
    %419 = arith.mulf %417, %418 : vector<8x256xf32>
    %c241_i32_167 = arith.constant 241 : i32
    %420 = tpu.dynamic_rotate %404 by %c241_i32_167 dim 1 : vector<8x256xf32>, i32 -> vector<8x256xf32>
    %421 = vector.broadcast %6 : vector<1x256xf32> to vector<8x256xf32>
    %422 = arith.mulf %420, %421 : vector<8x256xf32>
    %c240_i32_168 = arith.constant 240 : i32
    %423 = tpu.dynamic_rotate %404 by %c240_i32_168 dim 1 : vector<8x256xf32>, i32 -> vector<8x256xf32>
    %424 = vector.broadcast %7 : vector<1x256xf32> to vector<8x256xf32>
    %425 = arith.mulf %423, %424 : vector<8x256xf32>
    %c239_i32_169 = arith.constant 239 : i32
    %426 = tpu.dynamic_rotate %404 by %c239_i32_169 dim 1 : vector<8x256xf32>, i32 -> vector<8x256xf32>
    %427 = vector.broadcast %8 : vector<1x256xf32> to vector<8x256xf32>
    %428 = arith.mulf %426, %427 : vector<8x256xf32>
    %429 = tpu.concatenate %407, %410, %413, %416, %404, %419, %422, %425, %428, %0 in 0 : vector<8x256xf32>, vector<8x256xf32>, vector<8x256xf32>, vector<8x256xf32>, vector<8x256xf32>, vector<8x256xf32>, vector<8x256xf32>, vector<8x256xf32>, vector<8x256xf32>, vector<1x256xf32> -> vector<73x256xf32>
    %c0_170 = arith.constant 0 : index
    %c0_171 = arith.constant 0 : index
    %430 = vector.load %arg25[%c0_170, %c0_171] : memref<8x73xf32, #tpu.memory_space<vmem>>, vector<8x73xf32>
    %cst_172 = arith.constant dense<0.000000e+00> : vector<8x256xf32>
    %431 = tpu.matmul %430, %429, %cst_172 {dimension_numbers = #tpu.dot_dimension_numbers<[1], [0], [0], [1], [0, 0, 1, 1], [], []>} : vector<8x73xf32>, vector<73x256xf32>, vector<8x256xf32> -> vector<8x256xf32>
    %cst_173 = arith.constant 0.000000e+00 : f32
    %432 = vector.broadcast %cst_173 : f32 to vector<8x256xf32>
    %433 = arith.maximumf %431, %432 : vector<8x256xf32>
    %434 = arith.addf %404, %433 : vector<8x256xf32>
    %c0_174 = arith.constant 0 : index
    %c0_175 = arith.constant 0 : index
    %c0_176 = arith.constant 0 : index
    %c0_177 = arith.constant 0 : index
    %435 = vector.load %arg4[%c0_174, %c0_175, %c0_176, %c0_177] : memref<1x2x8x256xf32, #tpu.memory_space<vmem>>, vector<1x1x8x256xf32>
    %436 = vector.shape_cast %435 : vector<1x1x8x256xf32> to vector<8x256xf32>
    %c17_i32_178 = arith.constant 17 : i32
    %437 = tpu.dynamic_rotate %214 by %c17_i32_178 dim 1 : vector<8x256xf32>, i32 -> vector<8x256xf32>
    %438 = vector.broadcast %1 : vector<1x256xf32> to vector<8x256xf32>
    %439 = arith.mulf %437, %438 : vector<8x256xf32>
    %c16_i32_179 = arith.constant 16 : i32
    %440 = tpu.dynamic_rotate %214 by %c16_i32_179 dim 1 : vector<8x256xf32>, i32 -> vector<8x256xf32>
    %441 = vector.broadcast %2 : vector<1x256xf32> to vector<8x256xf32>
    %442 = arith.mulf %440, %441 : vector<8x256xf32>
    %c15_i32_180 = arith.constant 15 : i32
    %443 = tpu.dynamic_rotate %214 by %c15_i32_180 dim 1 : vector<8x256xf32>, i32 -> vector<8x256xf32>
    %444 = vector.broadcast %3 : vector<1x256xf32> to vector<8x256xf32>
    %445 = arith.mulf %443, %444 : vector<8x256xf32>
    %c1_i32_181 = arith.constant 1 : i32
    %446 = tpu.dynamic_rotate %214 by %c1_i32_181 dim 1 : vector<8x256xf32>, i32 -> vector<8x256xf32>
    %447 = vector.broadcast %4 : vector<1x256xf32> to vector<8x256xf32>
    %448 = arith.mulf %446, %447 : vector<8x256xf32>
    %c255_i32_182 = arith.constant 255 : i32
    %449 = tpu.dynamic_rotate %214 by %c255_i32_182 dim 1 : vector<8x256xf32>, i32 -> vector<8x256xf32>
    %450 = vector.broadcast %5 : vector<1x256xf32> to vector<8x256xf32>
    %451 = arith.mulf %449, %450 : vector<8x256xf32>
    %c241_i32_183 = arith.constant 241 : i32
    %452 = tpu.dynamic_rotate %214 by %c241_i32_183 dim 1 : vector<8x256xf32>, i32 -> vector<8x256xf32>
    %453 = vector.broadcast %6 : vector<1x256xf32> to vector<8x256xf32>
    %454 = arith.mulf %452, %453 : vector<8x256xf32>
    %c240_i32_184 = arith.constant 240 : i32
    %455 = tpu.dynamic_rotate %214 by %c240_i32_184 dim 1 : vector<8x256xf32>, i32 -> vector<8x256xf32>
    %456 = vector.broadcast %7 : vector<1x256xf32> to vector<8x256xf32>
    %457 = arith.mulf %455, %456 : vector<8x256xf32>
    %c239_i32_185 = arith.constant 239 : i32
    %458 = tpu.dynamic_rotate %214 by %c239_i32_185 dim 1 : vector<8x256xf32>, i32 -> vector<8x256xf32>
    %459 = vector.broadcast %8 : vector<1x256xf32> to vector<8x256xf32>
    %460 = arith.mulf %458, %459 : vector<8x256xf32>
    %461 = tpu.concatenate %439, %442, %445, %448, %214, %451, %454, %457, %460, %0 in 0 : vector<8x256xf32>, vector<8x256xf32>, vector<8x256xf32>, vector<8x256xf32>, vector<8x256xf32>, vector<8x256xf32>, vector<8x256xf32>, vector<8x256xf32>, vector<8x256xf32>, vector<1x256xf32> -> vector<73x256xf32>
    %c0_186 = arith.constant 0 : index
    %c0_187 = arith.constant 0 : index
    %462 = vector.load %arg13[%c0_186, %c0_187] : memref<16x73xf32, #tpu.memory_space<vmem>>, vector<16x73xf32>
    %cst_188 = arith.constant dense<0.000000e+00> : vector<16x256xf32>
    %463 = tpu.matmul %462, %461, %cst_188 {dimension_numbers = #tpu.dot_dimension_numbers<[1], [0], [0], [1], [0, 0, 1, 1], [], []>} : vector<16x73xf32>, vector<73x256xf32>, vector<16x256xf32> -> vector<16x256xf32>
    %c0_189 = arith.constant 0 : index
    %c0_190 = arith.constant 0 : index
    %c0_191 = arith.constant 0 : index
    %c0_192 = arith.constant 0 : index
    %464 = vector.load %arg28[%c0_189, %c0_190, %c0_191, %c0_192] : memref<1x2x16x256xf32, #tpu.memory_space<vmem>>, vector<1x1x16x256xf32>
    %465 = vector.shape_cast %464 : vector<1x1x16x256xf32> to vector<16x256xf32>
    %466 = vector.shape_cast %463 : vector<16x256xf32> to vector<1x1x16x256xf32>
    tpu.vector_store %arg28[%c0_189, %c0_190, %c0_191, %c0_192], %466 {strides = array<i32>} : memref<1x2x16x256xf32, #tpu.memory_space<vmem>>, vector<1x1x16x256xf32>,
    %c17_i32_193 = arith.constant 17 : i32
    %467 = tpu.dynamic_rotate %434 by %c17_i32_193 dim 1 : vector<8x256xf32>, i32 -> vector<8x256xf32>
    %468 = vector.broadcast %1 : vector<1x256xf32> to vector<8x256xf32>
    %469 = arith.mulf %467, %468 : vector<8x256xf32>
    %c16_i32_194 = arith.constant 16 : i32
    %470 = tpu.dynamic_rotate %434 by %c16_i32_194 dim 1 : vector<8x256xf32>, i32 -> vector<8x256xf32>
    %471 = vector.broadcast %2 : vector<1x256xf32> to vector<8x256xf32>
    %472 = arith.mulf %470, %471 : vector<8x256xf32>
    %c15_i32_195 = arith.constant 15 : i32
    %473 = tpu.dynamic_rotate %434 by %c15_i32_195 dim 1 : vector<8x256xf32>, i32 -> vector<8x256xf32>
    %474 = vector.broadcast %3 : vector<1x256xf32> to vector<8x256xf32>
    %475 = arith.mulf %473, %474 : vector<8x256xf32>
    %c1_i32_196 = arith.constant 1 : i32
    %476 = tpu.dynamic_rotate %434 by %c1_i32_196 dim 1 : vector<8x256xf32>, i32 -> vector<8x256xf32>
    %477 = vector.broadcast %4 : vector<1x256xf32> to vector<8x256xf32>
    %478 = arith.mulf %476, %477 : vector<8x256xf32>
    %c255_i32_197 = arith.constant 255 : i32
    %479 = tpu.dynamic_rotate %434 by %c255_i32_197 dim 1 : vector<8x256xf32>, i32 -> vector<8x256xf32>
    %480 = vector.broadcast %5 : vector<1x256xf32> to vector<8x256xf32>
    %481 = arith.mulf %479, %480 : vector<8x256xf32>
    %c241_i32_198 = arith.constant 241 : i32
    %482 = tpu.dynamic_rotate %434 by %c241_i32_198 dim 1 : vector<8x256xf32>, i32 -> vector<8x256xf32>
    %483 = vector.broadcast %6 : vector<1x256xf32> to vector<8x256xf32>
    %484 = arith.mulf %482, %483 : vector<8x256xf32>
    %c240_i32_199 = arith.constant 240 : i32
    %485 = tpu.dynamic_rotate %434 by %c240_i32_199 dim 1 : vector<8x256xf32>, i32 -> vector<8x256xf32>
    %486 = vector.broadcast %7 : vector<1x256xf32> to vector<8x256xf32>
    %487 = arith.mulf %485, %486 : vector<8x256xf32>
    %c239_i32_200 = arith.constant 239 : i32
    %488 = tpu.dynamic_rotate %434 by %c239_i32_200 dim 1 : vector<8x256xf32>, i32 -> vector<8x256xf32>
    %489 = vector.broadcast %8 : vector<1x256xf32> to vector<8x256xf32>
    %490 = arith.mulf %488, %489 : vector<8x256xf32>
    %491 = tpu.concatenate %469, %472, %475, %478, %434, %481, %484, %487, %490, %0 in 0 : vector<8x256xf32>, vector<8x256xf32>, vector<8x256xf32>, vector<8x256xf32>, vector<8x256xf32>, vector<8x256xf32>, vector<8x256xf32>, vector<8x256xf32>, vector<8x256xf32>, vector<1x256xf32> -> vector<73x256xf32>
    %c0_201 = arith.constant 0 : index
    %c0_202 = arith.constant 0 : index
    %492 = vector.load %arg12[%c0_201, %c0_202] : memref<16x73xf32, #tpu.memory_space<vmem>>, vector<16x73xf32>
    %cst_203 = arith.constant dense<0.000000e+00> : vector<16x256xf32>
    %493 = tpu.matmul %492, %491, %cst_203 {dimension_numbers = #tpu.dot_dimension_numbers<[1], [0], [0], [1], [0, 0, 1, 1], [], []>} : vector<16x73xf32>, vector<73x256xf32>, vector<16x256xf32> -> vector<16x256xf32>
    %c0_204 = arith.constant 0 : index
    %c0_205 = arith.constant 0 : index
    %c0_206 = arith.constant 0 : index
    %c0_207 = arith.constant 0 : index
    %494 = vector.load %arg27[%c0_204, %c0_205, %c0_206, %c0_207] : memref<1x1x16x256xf32, #tpu.memory_space<vmem>>, vector<1x1x16x256xf32>
    %495 = vector.shape_cast %494 : vector<1x1x16x256xf32> to vector<16x256xf32>
    %496 = vector.shape_cast %493 : vector<16x256xf32> to vector<1x1x16x256xf32>
    tpu.vector_store %arg27[%c0_204, %c0_205, %c0_206, %c0_207], %496 {strides = array<i32>} : memref<1x1x16x256xf32, #tpu.memory_space<vmem>>, vector<1x1x16x256xf32>,
    %497 = vector.extract_strided_slice %493 {offsets = [0, 0], sizes = [8, 256], strides = [1, 1]} : vector<16x256xf32> to vector<8x256xf32>
    %498 = vector.extract_strided_slice %493 {offsets = [8, 0], sizes = [8, 256], strides = [1, 1]} : vector<16x256xf32> to vector<8x256xf32>
    %cst_208 = arith.constant -5.000000e+00 : f32
    %cst_209 = arith.constant 5.000000e+00 : f32
    %499 = vector.broadcast %cst_208 : f32 to vector<8x256xf32>
    %500 = arith.maximumf %499, %498 : vector<8x256xf32>
    %501 = vector.broadcast %cst_209 : f32 to vector<8x256xf32>
    %502 = arith.minimumf %501, %500 : vector<8x256xf32>
    %503 = math.exp %502 : vector<8x256xf32>
    %504 = arith.mulf %503, %436 : vector<8x256xf32>
    %505 = arith.addf %497, %504 : vector<8x256xf32>
    %506 = tpu.concatenate %214, %505 in 0 : vector<8x256xf32>, vector<8x256xf32> -> vector<16x256xf32>
    %c17_i32_210 = arith.constant 17 : i32
    %507 = tpu.dynamic_rotate %506 by %c17_i32_210 dim 1 : vector<16x256xf32>, i32 -> vector<16x256xf32>
    %508 = vector.broadcast %1 : vector<1x256xf32> to vector<16x256xf32>
    %509 = arith.mulf %507, %508 : vector<16x256xf32>
    %c16_i32_211 = arith.constant 16 : i32
    %510 = tpu.dynamic_rotate %506 by %c16_i32_211 dim 1 : vector<16x256xf32>, i32 -> vector<16x256xf32>
    %511 = vector.broadcast %2 : vector<1x256xf32> to vector<16x256xf32>
    %512 = arith.mulf %510, %511 : vector<16x256xf32>
    %c15_i32_212 = arith.constant 15 : i32
    %513 = tpu.dynamic_rotate %506 by %c15_i32_212 dim 1 : vector<16x256xf32>, i32 -> vector<16x256xf32>
    %514 = vector.broadcast %3 : vector<1x256xf32> to vector<16x256xf32>
    %515 = arith.mulf %513, %514 : vector<16x256xf32>
    %c1_i32_213 = arith.constant 1 : i32
    %516 = tpu.dynamic_rotate %506 by %c1_i32_213 dim 1 : vector<16x256xf32>, i32 -> vector<16x256xf32>
    %517 = vector.broadcast %4 : vector<1x256xf32> to vector<16x256xf32>
    %518 = arith.mulf %516, %517 : vector<16x256xf32>
    %c255_i32_214 = arith.constant 255 : i32
    %519 = tpu.dynamic_rotate %506 by %c255_i32_214 dim 1 : vector<16x256xf32>, i32 -> vector<16x256xf32>
    %520 = vector.broadcast %5 : vector<1x256xf32> to vector<16x256xf32>
    %521 = arith.mulf %519, %520 : vector<16x256xf32>
    %c241_i32_215 = arith.constant 241 : i32
    %522 = tpu.dynamic_rotate %506 by %c241_i32_215 dim 1 : vector<16x256xf32>, i32 -> vector<16x256xf32>
    %523 = vector.broadcast %6 : vector<1x256xf32> to vector<16x256xf32>
    %524 = arith.mulf %522, %523 : vector<16x256xf32>
    %c240_i32_216 = arith.constant 240 : i32
    %525 = tpu.dynamic_rotate %506 by %c240_i32_216 dim 1 : vector<16x256xf32>, i32 -> vector<16x256xf32>
    %526 = vector.broadcast %7 : vector<1x256xf32> to vector<16x256xf32>
    %527 = arith.mulf %525, %526 : vector<16x256xf32>
    %c239_i32_217 = arith.constant 239 : i32
    %528 = tpu.dynamic_rotate %506 by %c239_i32_217 dim 1 : vector<16x256xf32>, i32 -> vector<16x256xf32>
    %529 = vector.broadcast %8 : vector<1x256xf32> to vector<16x256xf32>
    %530 = arith.mulf %528, %529 : vector<16x256xf32>
    %531 = tpu.concatenate %509, %512, %515, %518, %506, %521, %524, %527, %530, %0 in 0 : vector<16x256xf32>, vector<16x256xf32>, vector<16x256xf32>, vector<16x256xf32>, vector<16x256xf32>, vector<16x256xf32>, vector<16x256xf32>, vector<16x256xf32>, vector<16x256xf32>, vector<1x256xf32> -> vector<145x256xf32>
    %c0_218 = arith.constant 0 : index
    %c0_219 = arith.constant 0 : index
    %532 = vector.load %arg10[%c0_218, %c0_219] : memref<8x145xf32, #tpu.memory_space<vmem>>, vector<8x145xf32>
    %cst_220 = arith.constant dense<0.000000e+00> : vector<8x256xf32>
    %533 = tpu.matmul %532, %531, %cst_220 {dimension_numbers = #tpu.dot_dimension_numbers<[1], [0], [0], [1], [0, 0, 1, 1], [], []>} : vector<8x145xf32>, vector<145x256xf32>, vector<8x256xf32> -> vector<8x256xf32>
    %cst_221 = arith.constant 0.000000e+00 : f32
    %534 = vector.broadcast %cst_221 : f32 to vector<8x256xf32>
    %535 = arith.cmpf ogt, %533, %534 : vector<8x256xf32>
    %cst_222 = arith.constant 2.000000e-01 : f32
    %536 = vector.broadcast %cst_222 : f32 to vector<8x256xf32>
    %537 = arith.mulf %536, %533 : vector<8x256xf32>
    %538 = arith.select %535, %533, %537 : vector<8x256xi1>, vector<8x256xf32>
    %c17_i32_223 = arith.constant 17 : i32
    %539 = tpu.dynamic_rotate %538 by %c17_i32_223 dim 1 : vector<8x256xf32>, i32 -> vector<8x256xf32>
    %540 = vector.broadcast %1 : vector<1x256xf32> to vector<8x256xf32>
    %541 = arith.mulf %539, %540 : vector<8x256xf32>
    %c16_i32_224 = arith.constant 16 : i32
    %542 = tpu.dynamic_rotate %538 by %c16_i32_224 dim 1 : vector<8x256xf32>, i32 -> vector<8x256xf32>
    %543 = vector.broadcast %2 : vector<1x256xf32> to vector<8x256xf32>
    %544 = arith.mulf %542, %543 : vector<8x256xf32>
    %c15_i32_225 = arith.constant 15 : i32
    %545 = tpu.dynamic_rotate %538 by %c15_i32_225 dim 1 : vector<8x256xf32>, i32 -> vector<8x256xf32>
    %546 = vector.broadcast %3 : vector<1x256xf32> to vector<8x256xf32>
    %547 = arith.mulf %545, %546 : vector<8x256xf32>
    %c1_i32_226 = arith.constant 1 : i32
    %548 = tpu.dynamic_rotate %538 by %c1_i32_226 dim 1 : vector<8x256xf32>, i32 -> vector<8x256xf32>
    %549 = vector.broadcast %4 : vector<1x256xf32> to vector<8x256xf32>
    %550 = arith.mulf %548, %549 : vector<8x256xf32>
    %c255_i32_227 = arith.constant 255 : i32
    %551 = tpu.dynamic_rotate %538 by %c255_i32_227 dim 1 : vector<8x256xf32>, i32 -> vector<8x256xf32>
    %552 = vector.broadcast %5 : vector<1x256xf32> to vector<8x256xf32>
    %553 = arith.mulf %551, %552 : vector<8x256xf32>
    %c241_i32_228 = arith.constant 241 : i32
    %554 = tpu.dynamic_rotate %538 by %c241_i32_228 dim 1 : vector<8x256xf32>, i32 -> vector<8x256xf32>
    %555 = vector.broadcast %6 : vector<1x256xf32> to vector<8x256xf32>
    %556 = arith.mulf %554, %555 : vector<8x256xf32>
    %c240_i32_229 = arith.constant 240 : i32
    %557 = tpu.dynamic_rotate %538 by %c240_i32_229 dim 1 : vector<8x256xf32>, i32 -> vector<8x256xf32>
    %558 = vector.broadcast %7 : vector<1x256xf32> to vector<8x256xf32>
    %559 = arith.mulf %557, %558 : vector<8x256xf32>
    %c239_i32_230 = arith.constant 239 : i32
    %560 = tpu.dynamic_rotate %538 by %c239_i32_230 dim 1 : vector<8x256xf32>, i32 -> vector<8x256xf32>
    %561 = vector.broadcast %8 : vector<1x256xf32> to vector<8x256xf32>
    %562 = arith.mulf %560, %561 : vector<8x256xf32>
    %563 = tpu.concatenate %541, %544, %547, %550, %538, %553, %556, %559, %562, %0 in 0 : vector<8x256xf32>, vector<8x256xf32>, vector<8x256xf32>, vector<8x256xf32>, vector<8x256xf32>, vector<8x256xf32>, vector<8x256xf32>, vector<8x256xf32>, vector<8x256xf32>, vector<1x256xf32> -> vector<73x256xf32>
    %c0_231 = arith.constant 0 : index
    %c0_232 = arith.constant 0 : index
    %564 = vector.load %arg11[%c0_231, %c0_232] : memref<8x73xf32, #tpu.memory_space<vmem>>, vector<8x73xf32>
    %cst_233 = arith.constant dense<0.000000e+00> : vector<8x256xf32>
    %565 = tpu.matmul %564, %563, %cst_233 {dimension_numbers = #tpu.dot_dimension_numbers<[1], [0], [0], [1], [0, 0, 1, 1], [], []>} : vector<8x73xf32>, vector<73x256xf32>, vector<8x256xf32> -> vector<8x256xf32>
    %566 = arith.addf %214, %565 : vector<8x256xf32>
    %c0_234 = arith.constant 0 : index
    %c1_235 = arith.constant 1 : index
    %c0_236 = arith.constant 0 : index
    %c0_237 = arith.constant 0 : index
    %567 = vector.load %arg4[%c0_234, %c1_235, %c0_236, %c0_237] : memref<1x2x8x256xf32, #tpu.memory_space<vmem>>, vector<1x1x8x256xf32>
    %568 = vector.shape_cast %567 : vector<1x1x8x256xf32> to vector<8x256xf32>
    %c17_i32_238 = arith.constant 17 : i32
    %569 = tpu.dynamic_rotate %566 by %c17_i32_238 dim 1 : vector<8x256xf32>, i32 -> vector<8x256xf32>
    %570 = vector.broadcast %1 : vector<1x256xf32> to vector<8x256xf32>
    %571 = arith.mulf %569, %570 : vector<8x256xf32>
    %c16_i32_239 = arith.constant 16 : i32
    %572 = tpu.dynamic_rotate %566 by %c16_i32_239 dim 1 : vector<8x256xf32>, i32 -> vector<8x256xf32>
    %573 = vector.broadcast %2 : vector<1x256xf32> to vector<8x256xf32>
    %574 = arith.mulf %572, %573 : vector<8x256xf32>
    %c15_i32_240 = arith.constant 15 : i32
    %575 = tpu.dynamic_rotate %566 by %c15_i32_240 dim 1 : vector<8x256xf32>, i32 -> vector<8x256xf32>
    %576 = vector.broadcast %3 : vector<1x256xf32> to vector<8x256xf32>
    %577 = arith.mulf %575, %576 : vector<8x256xf32>
    %c1_i32_241 = arith.constant 1 : i32
    %578 = tpu.dynamic_rotate %566 by %c1_i32_241 dim 1 : vector<8x256xf32>, i32 -> vector<8x256xf32>
    %579 = vector.broadcast %4 : vector<1x256xf32> to vector<8x256xf32>
    %580 = arith.mulf %578, %579 : vector<8x256xf32>
    %c255_i32_242 = arith.constant 255 : i32
    %581 = tpu.dynamic_rotate %566 by %c255_i32_242 dim 1 : vector<8x256xf32>, i32 -> vector<8x256xf32>
    %582 = vector.broadcast %5 : vector<1x256xf32> to vector<8x256xf32>
    %583 = arith.mulf %581, %582 : vector<8x256xf32>
    %c241_i32_243 = arith.constant 241 : i32
    %584 = tpu.dynamic_rotate %566 by %c241_i32_243 dim 1 : vector<8x256xf32>, i32 -> vector<8x256xf32>
    %585 = vector.broadcast %6 : vector<1x256xf32> to vector<8x256xf32>
    %586 = arith.mulf %584, %585 : vector<8x256xf32>
    %c240_i32_244 = arith.constant 240 : i32
    %587 = tpu.dynamic_rotate %566 by %c240_i32_244 dim 1 : vector<8x256xf32>, i32 -> vector<8x256xf32>
    %588 = vector.broadcast %7 : vector<1x256xf32> to vector<8x256xf32>
    %589 = arith.mulf %587, %588 : vector<8x256xf32>
    %c239_i32_245 = arith.constant 239 : i32
    %590 = tpu.dynamic_rotate %566 by %c239_i32_245 dim 1 : vector<8x256xf32>, i32 -> vector<8x256xf32>
    %591 = vector.broadcast %8 : vector<1x256xf32> to vector<8x256xf32>
    %592 = arith.mulf %590, %591 : vector<8x256xf32>
    %593 = tpu.concatenate %571, %574, %577, %580, %566, %583, %586, %589, %592, %0 in 0 : vector<8x256xf32>, vector<8x256xf32>, vector<8x256xf32>, vector<8x256xf32>, vector<8x256xf32>, vector<8x256xf32>, vector<8x256xf32>, vector<8x256xf32>, vector<8x256xf32>, vector<1x256xf32> -> vector<73x256xf32>
    %c0_246 = arith.constant 0 : index
    %c0_247 = arith.constant 0 : index
    %594 = vector.load %arg13[%c0_246, %c0_247] : memref<16x73xf32, #tpu.memory_space<vmem>>, vector<16x73xf32>
    %cst_248 = arith.constant dense<0.000000e+00> : vector<16x256xf32>
    %595 = tpu.matmul %594, %593, %cst_248 {dimension_numbers = #tpu.dot_dimension_numbers<[1], [0], [0], [1], [0, 0, 1, 1], [], []>} : vector<16x73xf32>, vector<73x256xf32>, vector<16x256xf32> -> vector<16x256xf32>
    %c0_249 = arith.constant 0 : index
    %c1_250 = arith.constant 1 : index
    %c0_251 = arith.constant 0 : index
    %c0_252 = arith.constant 0 : index
    %596 = vector.load %arg28[%c0_249, %c1_250, %c0_251, %c0_252] : memref<1x2x16x256xf32, #tpu.memory_space<vmem>>, vector<1x1x16x256xf32>
    %597 = vector.shape_cast %596 : vector<1x1x16x256xf32> to vector<16x256xf32>
    %598 = vector.shape_cast %595 : vector<16x256xf32> to vector<1x1x16x256xf32>
    tpu.vector_store %arg28[%c0_249, %c1_250, %c0_251, %c0_252], %598 {strides = array<i32>} : memref<1x2x16x256xf32, #tpu.memory_space<vmem>>, vector<1x1x16x256xf32>,
    %599 = vector.extract_strided_slice %595 {offsets = [0, 0], sizes = [8, 256], strides = [1, 1]} : vector<16x256xf32> to vector<8x256xf32>
    %600 = vector.extract_strided_slice %595 {offsets = [8, 0], sizes = [8, 256], strides = [1, 1]} : vector<16x256xf32> to vector<8x256xf32>
    %cst_253 = arith.constant -5.000000e+00 : f32
    %cst_254 = arith.constant 5.000000e+00 : f32
    %601 = vector.broadcast %cst_253 : f32 to vector<8x256xf32>
    %602 = arith.maximumf %601, %600 : vector<8x256xf32>
    %603 = vector.broadcast %cst_254 : f32 to vector<8x256xf32>
    %604 = arith.minimumf %603, %602 : vector<8x256xf32>
    %605 = math.exp %604 : vector<8x256xf32>
    %606 = arith.mulf %605, %568 : vector<8x256xf32>
    %607 = arith.addf %599, %606 : vector<8x256xf32>
    %608 = tpu.concatenate %566, %607 in 0 : vector<8x256xf32>, vector<8x256xf32> -> vector<16x256xf32>
    %c17_i32_255 = arith.constant 17 : i32
    %609 = tpu.dynamic_rotate %608 by %c17_i32_255 dim 1 : vector<16x256xf32>, i32 -> vector<16x256xf32>
    %610 = vector.broadcast %1 : vector<1x256xf32> to vector<16x256xf32>
    %611 = arith.mulf %609, %610 : vector<16x256xf32>
    %c16_i32_256 = arith.constant 16 : i32
    %612 = tpu.dynamic_rotate %608 by %c16_i32_256 dim 1 : vector<16x256xf32>, i32 -> vector<16x256xf32>
    %613 = vector.broadcast %2 : vector<1x256xf32> to vector<16x256xf32>
    %614 = arith.mulf %612, %613 : vector<16x256xf32>
    %c15_i32_257 = arith.constant 15 : i32
    %615 = tpu.dynamic_rotate %608 by %c15_i32_257 dim 1 : vector<16x256xf32>, i32 -> vector<16x256xf32>
    %616 = vector.broadcast %3 : vector<1x256xf32> to vector<16x256xf32>
    %617 = arith.mulf %615, %616 : vector<16x256xf32>
    %c1_i32_258 = arith.constant 1 : i32
    %618 = tpu.dynamic_rotate %608 by %c1_i32_258 dim 1 : vector<16x256xf32>, i32 -> vector<16x256xf32>
    %619 = vector.broadcast %4 : vector<1x256xf32> to vector<16x256xf32>
    %620 = arith.mulf %618, %619 : vector<16x256xf32>
    %c255_i32_259 = arith.constant 255 : i32
    %621 = tpu.dynamic_rotate %608 by %c255_i32_259 dim 1 : vector<16x256xf32>, i32 -> vector<16x256xf32>
    %622 = vector.broadcast %5 : vector<1x256xf32> to vector<16x256xf32>
    %623 = arith.mulf %621, %622 : vector<16x256xf32>
    %c241_i32_260 = arith.constant 241 : i32
    %624 = tpu.dynamic_rotate %608 by %c241_i32_260 dim 1 : vector<16x256xf32>, i32 -> vector<16x256xf32>
    %625 = vector.broadcast %6 : vector<1x256xf32> to vector<16x256xf32>
    %626 = arith.mulf %624, %625 : vector<16x256xf32>
    %c240_i32_261 = arith.constant 240 : i32
    %627 = tpu.dynamic_rotate %608 by %c240_i32_261 dim 1 : vector<16x256xf32>, i32 -> vector<16x256xf32>
    %628 = vector.broadcast %7 : vector<1x256xf32> to vector<16x256xf32>
    %629 = arith.mulf %627, %628 : vector<16x256xf32>
    %c239_i32_262 = arith.constant 239 : i32
    %630 = tpu.dynamic_rotate %608 by %c239_i32_262 dim 1 : vector<16x256xf32>, i32 -> vector<16x256xf32>
    %631 = vector.broadcast %8 : vector<1x256xf32> to vector<16x256xf32>
    %632 = arith.mulf %630, %631 : vector<16x256xf32>
    %633 = tpu.concatenate %611, %614, %617, %620, %608, %623, %626, %629, %632, %0 in 0 : vector<16x256xf32>, vector<16x256xf32>, vector<16x256xf32>, vector<16x256xf32>, vector<16x256xf32>, vector<16x256xf32>, vector<16x256xf32>, vector<16x256xf32>, vector<16x256xf32>, vector<1x256xf32> -> vector<145x256xf32>
    %c0_263 = arith.constant 0 : index
    %c0_264 = arith.constant 0 : index
    %634 = vector.load %arg10[%c0_263, %c0_264] : memref<8x145xf32, #tpu.memory_space<vmem>>, vector<8x145xf32>
    %cst_265 = arith.constant dense<0.000000e+00> : vector<8x256xf32>
    %635 = tpu.matmul %634, %633, %cst_265 {dimension_numbers = #tpu.dot_dimension_numbers<[1], [0], [0], [1], [0, 0, 1, 1], [], []>} : vector<8x145xf32>, vector<145x256xf32>, vector<8x256xf32> -> vector<8x256xf32>
    %cst_266 = arith.constant 0.000000e+00 : f32
    %636 = vector.broadcast %cst_266 : f32 to vector<8x256xf32>
    %637 = arith.cmpf ogt, %635, %636 : vector<8x256xf32>
    %cst_267 = arith.constant 2.000000e-01 : f32
    %638 = vector.broadcast %cst_267 : f32 to vector<8x256xf32>
    %639 = arith.mulf %638, %635 : vector<8x256xf32>
    %640 = arith.select %637, %635, %639 : vector<8x256xi1>, vector<8x256xf32>
    %c17_i32_268 = arith.constant 17 : i32
    %641 = tpu.dynamic_rotate %640 by %c17_i32_268 dim 1 : vector<8x256xf32>, i32 -> vector<8x256xf32>
    %642 = vector.broadcast %1 : vector<1x256xf32> to vector<8x256xf32>
    %643 = arith.mulf %641, %642 : vector<8x256xf32>
    %c16_i32_269 = arith.constant 16 : i32
    %644 = tpu.dynamic_rotate %640 by %c16_i32_269 dim 1 : vector<8x256xf32>, i32 -> vector<8x256xf32>
    %645 = vector.broadcast %2 : vector<1x256xf32> to vector<8x256xf32>
    %646 = arith.mulf %644, %645 : vector<8x256xf32>
    %c15_i32_270 = arith.constant 15 : i32
    %647 = tpu.dynamic_rotate %640 by %c15_i32_270 dim 1 : vector<8x256xf32>, i32 -> vector<8x256xf32>
    %648 = vector.broadcast %3 : vector<1x256xf32> to vector<8x256xf32>
    %649 = arith.mulf %647, %648 : vector<8x256xf32>
    %c1_i32_271 = arith.constant 1 : i32
    %650 = tpu.dynamic_rotate %640 by %c1_i32_271 dim 1 : vector<8x256xf32>, i32 -> vector<8x256xf32>
    %651 = vector.broadcast %4 : vector<1x256xf32> to vector<8x256xf32>
    %652 = arith.mulf %650, %651 : vector<8x256xf32>
    %c255_i32_272 = arith.constant 255 : i32
    %653 = tpu.dynamic_rotate %640 by %c255_i32_272 dim 1 : vector<8x256xf32>, i32 -> vector<8x256xf32>
    %654 = vector.broadcast %5 : vector<1x256xf32> to vector<8x256xf32>
    %655 = arith.mulf %653, %654 : vector<8x256xf32>
    %c241_i32_273 = arith.constant 241 : i32
    %656 = tpu.dynamic_rotate %640 by %c241_i32_273 dim 1 : vector<8x256xf32>, i32 -> vector<8x256xf32>
    %657 = vector.broadcast %6 : vector<1x256xf32> to vector<8x256xf32>
    %658 = arith.mulf %656, %657 : vector<8x256xf32>
    %c240_i32_274 = arith.constant 240 : i32
    %659 = tpu.dynamic_rotate %640 by %c240_i32_274 dim 1 : vector<8x256xf32>, i32 -> vector<8x256xf32>
    %660 = vector.broadcast %7 : vector<1x256xf32> to vector<8x256xf32>
    %661 = arith.mulf %659, %660 : vector<8x256xf32>
    %c239_i32_275 = arith.constant 239 : i32
    %662 = tpu.dynamic_rotate %640 by %c239_i32_275 dim 1 : vector<8x256xf32>, i32 -> vector<8x256xf32>
    %663 = vector.broadcast %8 : vector<1x256xf32> to vector<8x256xf32>
    %664 = arith.mulf %662, %663 : vector<8x256xf32>
    %665 = tpu.concatenate %643, %646, %649, %652, %640, %655, %658, %661, %664, %0 in 0 : vector<8x256xf32>, vector<8x256xf32>, vector<8x256xf32>, vector<8x256xf32>, vector<8x256xf32>, vector<8x256xf32>, vector<8x256xf32>, vector<8x256xf32>, vector<8x256xf32>, vector<1x256xf32> -> vector<73x256xf32>
    %c0_276 = arith.constant 0 : index
    %c0_277 = arith.constant 0 : index
    %666 = vector.load %arg11[%c0_276, %c0_277] : memref<8x73xf32, #tpu.memory_space<vmem>>, vector<8x73xf32>
    %cst_278 = arith.constant dense<0.000000e+00> : vector<8x256xf32>
    %667 = tpu.matmul %666, %665, %cst_278 {dimension_numbers = #tpu.dot_dimension_numbers<[1], [0], [0], [1], [0, 0, 1, 1], [], []>} : vector<8x73xf32>, vector<73x256xf32>, vector<8x256xf32> -> vector<8x256xf32>
    %668 = arith.addf %566, %667 : vector<8x256xf32>
    %c17_i32_279 = arith.constant 17 : i32
    %669 = tpu.dynamic_rotate %214 by %c17_i32_279 dim 1 : vector<8x256xf32>, i32 -> vector<8x256xf32>
    %670 = vector.broadcast %1 : vector<1x256xf32> to vector<8x256xf32>
    %671 = arith.mulf %669, %670 : vector<8x256xf32>
    %c16_i32_280 = arith.constant 16 : i32
    %672 = tpu.dynamic_rotate %214 by %c16_i32_280 dim 1 : vector<8x256xf32>, i32 -> vector<8x256xf32>
    %673 = vector.broadcast %2 : vector<1x256xf32> to vector<8x256xf32>
    %674 = arith.mulf %672, %673 : vector<8x256xf32>
    %c15_i32_281 = arith.constant 15 : i32
    %675 = tpu.dynamic_rotate %214 by %c15_i32_281 dim 1 : vector<8x256xf32>, i32 -> vector<8x256xf32>
    %676 = vector.broadcast %3 : vector<1x256xf32> to vector<8x256xf32>
    %677 = arith.mulf %675, %676 : vector<8x256xf32>
    %c1_i32_282 = arith.constant 1 : i32
    %678 = tpu.dynamic_rotate %214 by %c1_i32_282 dim 1 : vector<8x256xf32>, i32 -> vector<8x256xf32>
    %679 = vector.broadcast %4 : vector<1x256xf32> to vector<8x256xf32>
    %680 = arith.mulf %678, %679 : vector<8x256xf32>
    %c255_i32_283 = arith.constant 255 : i32
    %681 = tpu.dynamic_rotate %214 by %c255_i32_283 dim 1 : vector<8x256xf32>, i32 -> vector<8x256xf32>
    %682 = vector.broadcast %5 : vector<1x256xf32> to vector<8x256xf32>
    %683 = arith.mulf %681, %682 : vector<8x256xf32>
    %c241_i32_284 = arith.constant 241 : i32
    %684 = tpu.dynamic_rotate %214 by %c241_i32_284 dim 1 : vector<8x256xf32>, i32 -> vector<8x256xf32>
    %685 = vector.broadcast %6 : vector<1x256xf32> to vector<8x256xf32>
    %686 = arith.mulf %684, %685 : vector<8x256xf32>
    %c240_i32_285 = arith.constant 240 : i32
    %687 = tpu.dynamic_rotate %214 by %c240_i32_285 dim 1 : vector<8x256xf32>, i32 -> vector<8x256xf32>
    %688 = vector.broadcast %7 : vector<1x256xf32> to vector<8x256xf32>
    %689 = arith.mulf %687, %688 : vector<8x256xf32>
    %c239_i32_286 = arith.constant 239 : i32
    %690 = tpu.dynamic_rotate %214 by %c239_i32_286 dim 1 : vector<8x256xf32>, i32 -> vector<8x256xf32>
    %691 = vector.broadcast %8 : vector<1x256xf32> to vector<8x256xf32>
    %692 = arith.mulf %690, %691 : vector<8x256xf32>
    %693 = tpu.concatenate %671, %674, %677, %680, %214, %683, %686, %689, %692, %0 in 0 : vector<8x256xf32>, vector<8x256xf32>, vector<8x256xf32>, vector<8x256xf32>, vector<8x256xf32>, vector<8x256xf32>, vector<8x256xf32>, vector<8x256xf32>, vector<8x256xf32>, vector<1x256xf32> -> vector<73x256xf32>
    %c0_287 = arith.constant 0 : index
    %c0_288 = arith.constant 0 : index
    %694 = vector.load %arg14[%c0_287, %c0_288] : memref<8x73xf32, #tpu.memory_space<vmem>>, vector<8x73xf32>
    %cst_289 = arith.constant dense<0.000000e+00> : vector<8x256xf32>
    %695 = tpu.matmul %694, %693, %cst_289 {dimension_numbers = #tpu.dot_dimension_numbers<[1], [0], [0], [1], [0, 0, 1, 1], [], []>} : vector<8x73xf32>, vector<73x256xf32>, vector<8x256xf32> -> vector<8x256xf32>
    %cst_290 = arith.constant 0.000000e+00 : f32
    %696 = vector.broadcast %cst_290 : f32 to vector<8x256xf32>
    %697 = arith.cmpf ogt, %695, %696 : vector<8x256xf32>
    %cst_291 = arith.constant 2.000000e-01 : f32
    %698 = vector.broadcast %cst_291 : f32 to vector<8x256xf32>
    %699 = arith.mulf %698, %695 : vector<8x256xf32>
    %700 = arith.select %697, %695, %699 : vector<8x256xi1>, vector<8x256xf32>
    %c17_i32_292 = arith.constant 17 : i32
    %701 = tpu.dynamic_rotate %700 by %c17_i32_292 dim 1 : vector<8x256xf32>, i32 -> vector<8x256xf32>
    %702 = vector.broadcast %1 : vector<1x256xf32> to vector<8x256xf32>
    %703 = arith.mulf %701, %702 : vector<8x256xf32>
    %c16_i32_293 = arith.constant 16 : i32
    %704 = tpu.dynamic_rotate %700 by %c16_i32_293 dim 1 : vector<8x256xf32>, i32 -> vector<8x256xf32>
    %705 = vector.broadcast %2 : vector<1x256xf32> to vector<8x256xf32>
    %706 = arith.mulf %704, %705 : vector<8x256xf32>
    %c15_i32_294 = arith.constant 15 : i32
    %707 = tpu.dynamic_rotate %700 by %c15_i32_294 dim 1 : vector<8x256xf32>, i32 -> vector<8x256xf32>
    %708 = vector.broadcast %3 : vector<1x256xf32> to vector<8x256xf32>
    %709 = arith.mulf %707, %708 : vector<8x256xf32>
    %c1_i32_295 = arith.constant 1 : i32
    %710 = tpu.dynamic_rotate %700 by %c1_i32_295 dim 1 : vector<8x256xf32>, i32 -> vector<8x256xf32>
    %711 = vector.broadcast %4 : vector<1x256xf32> to vector<8x256xf32>
    %712 = arith.mulf %710, %711 : vector<8x256xf32>
    %c255_i32_296 = arith.constant 255 : i32
    %713 = tpu.dynamic_rotate %700 by %c255_i32_296 dim 1 : vector<8x256xf32>, i32 -> vector<8x256xf32>
    %714 = vector.broadcast %5 : vector<1x256xf32> to vector<8x256xf32>
    %715 = arith.mulf %713, %714 : vector<8x256xf32>
    %c241_i32_297 = arith.constant 241 : i32
    %716 = tpu.dynamic_rotate %700 by %c241_i32_297 dim 1 : vector<8x256xf32>, i32 -> vector<8x256xf32>
    %717 = vector.broadcast %6 : vector<1x256xf32> to vector<8x256xf32>
    %718 = arith.mulf %716, %717 : vector<8x256xf32>
    %c240_i32_298 = arith.constant 240 : i32
    %719 = tpu.dynamic_rotate %700 by %c240_i32_298 dim 1 : vector<8x256xf32>, i32 -> vector<8x256xf32>
    %720 = vector.broadcast %7 : vector<1x256xf32> to vector<8x256xf32>
    %721 = arith.mulf %719, %720 : vector<8x256xf32>
    %c239_i32_299 = arith.constant 239 : i32
    %722 = tpu.dynamic_rotate %700 by %c239_i32_299 dim 1 : vector<8x256xf32>, i32 -> vector<8x256xf32>
    %723 = vector.broadcast %8 : vector<1x256xf32> to vector<8x256xf32>
    %724 = arith.mulf %722, %723 : vector<8x256xf32>
    %725 = tpu.concatenate %703, %706, %709, %712, %700, %715, %718, %721, %724, %0 in 0 : vector<8x256xf32>, vector<8x256xf32>, vector<8x256xf32>, vector<8x256xf32>, vector<8x256xf32>, vector<8x256xf32>, vector<8x256xf32>, vector<8x256xf32>, vector<8x256xf32>, vector<1x256xf32> -> vector<73x256xf32>
    %c0_300 = arith.constant 0 : index
    %c0_301 = arith.constant 0 : index
    %726 = vector.load %arg15[%c0_300, %c0_301] : memref<8x73xf32, #tpu.memory_space<vmem>>, vector<8x73xf32>
    %cst_302 = arith.constant dense<0.000000e+00> : vector<8x256xf32>
    %727 = tpu.matmul %726, %725, %cst_302 {dimension_numbers = #tpu.dot_dimension_numbers<[1], [0], [0], [1], [0, 0, 1, 1], [], []>} : vector<8x73xf32>, vector<73x256xf32>, vector<8x256xf32> -> vector<8x256xf32>
    %c0_303 = arith.constant 0 : index
    %c0_304 = arith.constant 0 : index
    %c0_305 = arith.constant 0 : index
    %c0_306 = arith.constant 0 : index
    %728 = vector.load %arg29[%c0_303, %c0_304, %c0_305, %c0_306] : memref<1x3x8x256xf32, #tpu.memory_space<vmem>>, vector<1x1x8x256xf32>
    %729 = vector.shape_cast %728 : vector<1x1x8x256xf32> to vector<8x256xf32>
    %730 = vector.shape_cast %727 : vector<8x256xf32> to vector<1x1x8x256xf32>
    tpu.vector_store %arg29[%c0_303, %c0_304, %c0_305, %c0_306], %730 {strides = array<i32>} : memref<1x3x8x256xf32, #tpu.memory_space<vmem>>, vector<1x1x8x256xf32>,
    %c17_i32_307 = arith.constant 17 : i32
    %731 = tpu.dynamic_rotate %727 by %c17_i32_307 dim 1 : vector<8x256xf32>, i32 -> vector<8x256xf32>
    %732 = vector.broadcast %1 : vector<1x256xf32> to vector<8x256xf32>
    %733 = arith.mulf %731, %732 : vector<8x256xf32>
    %c16_i32_308 = arith.constant 16 : i32
    %734 = tpu.dynamic_rotate %727 by %c16_i32_308 dim 1 : vector<8x256xf32>, i32 -> vector<8x256xf32>
    %735 = vector.broadcast %2 : vector<1x256xf32> to vector<8x256xf32>
    %736 = arith.mulf %734, %735 : vector<8x256xf32>
    %c15_i32_309 = arith.constant 15 : i32
    %737 = tpu.dynamic_rotate %727 by %c15_i32_309 dim 1 : vector<8x256xf32>, i32 -> vector<8x256xf32>
    %738 = vector.broadcast %3 : vector<1x256xf32> to vector<8x256xf32>
    %739 = arith.mulf %737, %738 : vector<8x256xf32>
    %c1_i32_310 = arith.constant 1 : i32
    %740 = tpu.dynamic_rotate %727 by %c1_i32_310 dim 1 : vector<8x256xf32>, i32 -> vector<8x256xf32>
    %741 = vector.broadcast %4 : vector<1x256xf32> to vector<8x256xf32>
    %742 = arith.mulf %740, %741 : vector<8x256xf32>
    %c255_i32_311 = arith.constant 255 : i32
    %743 = tpu.dynamic_rotate %727 by %c255_i32_311 dim 1 : vector<8x256xf32>, i32 -> vector<8x256xf32>
    %744 = vector.broadcast %5 : vector<1x256xf32> to vector<8x256xf32>
    %745 = arith.mulf %743, %744 : vector<8x256xf32>
    %c241_i32_312 = arith.constant 241 : i32
    %746 = tpu.dynamic_rotate %727 by %c241_i32_312 dim 1 : vector<8x256xf32>, i32 -> vector<8x256xf32>
    %747 = vector.broadcast %6 : vector<1x256xf32> to vector<8x256xf32>
    %748 = arith.mulf %746, %747 : vector<8x256xf32>
    %c240_i32_313 = arith.constant 240 : i32
    %749 = tpu.dynamic_rotate %727 by %c240_i32_313 dim 1 : vector<8x256xf32>, i32 -> vector<8x256xf32>
    %750 = vector.broadcast %7 : vector<1x256xf32> to vector<8x256xf32>
    %751 = arith.mulf %749, %750 : vector<8x256xf32>
    %c239_i32_314 = arith.constant 239 : i32
    %752 = tpu.dynamic_rotate %727 by %c239_i32_314 dim 1 : vector<8x256xf32>, i32 -> vector<8x256xf32>
    %753 = vector.broadcast %8 : vector<1x256xf32> to vector<8x256xf32>
    %754 = arith.mulf %752, %753 : vector<8x256xf32>
    %755 = tpu.concatenate %733, %736, %739, %742, %727, %745, %748, %751, %754, %0 in 0 : vector<8x256xf32>, vector<8x256xf32>, vector<8x256xf32>, vector<8x256xf32>, vector<8x256xf32>, vector<8x256xf32>, vector<8x256xf32>, vector<8x256xf32>, vector<8x256xf32>, vector<1x256xf32> -> vector<73x256xf32>
    %c0_315 = arith.constant 0 : index
    %c0_316 = arith.constant 0 : index
    %756 = vector.load %arg16[%c0_315, %c0_316] : memref<16x73xf32, #tpu.memory_space<vmem>>, vector<16x73xf32>
    %cst_317 = arith.constant dense<0.000000e+00> : vector<16x256xf32>
    %757 = tpu.matmul %756, %755, %cst_317 {dimension_numbers = #tpu.dot_dimension_numbers<[1], [0], [0], [1], [0, 0, 1, 1], [], []>} : vector<16x73xf32>, vector<73x256xf32>, vector<16x256xf32> -> vector<16x256xf32>
    %cst_318 = arith.constant 0.000000e+00 : f32
    %758 = vector.broadcast %cst_318 : f32 to vector<16x256xf32>
    %759 = arith.maximumf %757, %758 : vector<16x256xf32>
    %c17_i32_319 = arith.constant 17 : i32
    %760 = tpu.dynamic_rotate %759 by %c17_i32_319 dim 1 : vector<16x256xf32>, i32 -> vector<16x256xf32>
    %761 = vector.broadcast %1 : vector<1x256xf32> to vector<16x256xf32>
    %762 = arith.mulf %760, %761 : vector<16x256xf32>
    %c16_i32_320 = arith.constant 16 : i32
    %763 = tpu.dynamic_rotate %759 by %c16_i32_320 dim 1 : vector<16x256xf32>, i32 -> vector<16x256xf32>
    %764 = vector.broadcast %2 : vector<1x256xf32> to vector<16x256xf32>
    %765 = arith.mulf %763, %764 : vector<16x256xf32>
    %c15_i32_321 = arith.constant 15 : i32
    %766 = tpu.dynamic_rotate %759 by %c15_i32_321 dim 1 : vector<16x256xf32>, i32 -> vector<16x256xf32>
    %767 = vector.broadcast %3 : vector<1x256xf32> to vector<16x256xf32>
    %768 = arith.mulf %766, %767 : vector<16x256xf32>
    %c1_i32_322 = arith.constant 1 : i32
    %769 = tpu.dynamic_rotate %759 by %c1_i32_322 dim 1 : vector<16x256xf32>, i32 -> vector<16x256xf32>
    %770 = vector.broadcast %4 : vector<1x256xf32> to vector<16x256xf32>
    %771 = arith.mulf %769, %770 : vector<16x256xf32>
    %c255_i32_323 = arith.constant 255 : i32
    %772 = tpu.dynamic_rotate %759 by %c255_i32_323 dim 1 : vector<16x256xf32>, i32 -> vector<16x256xf32>
    %773 = vector.broadcast %5 : vector<1x256xf32> to vector<16x256xf32>
    %774 = arith.mulf %772, %773 : vector<16x256xf32>
    %c241_i32_324 = arith.constant 241 : i32
    %775 = tpu.dynamic_rotate %759 by %c241_i32_324 dim 1 : vector<16x256xf32>, i32 -> vector<16x256xf32>
    %776 = vector.broadcast %6 : vector<1x256xf32> to vector<16x256xf32>
    %777 = arith.mulf %775, %776 : vector<16x256xf32>
    %c240_i32_325 = arith.constant 240 : i32
    %778 = tpu.dynamic_rotate %759 by %c240_i32_325 dim 1 : vector<16x256xf32>, i32 -> vector<16x256xf32>
    %779 = vector.broadcast %7 : vector<1x256xf32> to vector<16x256xf32>
    %780 = arith.mulf %778, %779 : vector<16x256xf32>
    %c239_i32_326 = arith.constant 239 : i32
    %781 = tpu.dynamic_rotate %759 by %c239_i32_326 dim 1 : vector<16x256xf32>, i32 -> vector<16x256xf32>
    %782 = vector.broadcast %8 : vector<1x256xf32> to vector<16x256xf32>
    %783 = arith.mulf %781, %782 : vector<16x256xf32>
    %784 = tpu.concatenate %762, %765, %768, %771, %759, %774, %777, %780, %783, %0 in 0 : vector<16x256xf32>, vector<16x256xf32>, vector<16x256xf32>, vector<16x256xf32>, vector<16x256xf32>, vector<16x256xf32>, vector<16x256xf32>, vector<16x256xf32>, vector<16x256xf32>, vector<1x256xf32> -> vector<145x256xf32>
    %c0_327 = arith.constant 0 : index
    %c0_328 = arith.constant 0 : index
    %785 = vector.load %arg17[%c0_327, %c0_328] : memref<2x145xf32, #tpu.memory_space<vmem>>, vector<2x145xf32>
    %cst_329 = arith.constant dense<0.000000e+00> : vector<2x256xf32>
    %786 = tpu.matmul %785, %784, %cst_329 {dimension_numbers = #tpu.dot_dimension_numbers<[1], [0], [0], [1], [0, 0, 1, 1], [], []>} : vector<2x145xf32>, vector<145x256xf32>, vector<2x256xf32> -> vector<2x256xf32>
    %c0_330 = arith.constant 0 : index
    %c0_331 = arith.constant 0 : index
    %c0_332 = arith.constant 0 : index
    %c0_333 = arith.constant 0 : index
    %787 = vector.load %arg30[%c0_330, %c0_331, %c0_332, %c0_333] : memref<1x3x2x256xf32, #tpu.memory_space<vmem>>, vector<1x1x2x256xf32>
    %788 = vector.shape_cast %787 : vector<1x1x2x256xf32> to vector<2x256xf32>
    %789 = vector.shape_cast %786 : vector<2x256xf32> to vector<1x1x2x256xf32>
    tpu.vector_store %arg30[%c0_330, %c0_331, %c0_332, %c0_333], %789 {strides = array<i32>} : memref<1x3x2x256xf32, #tpu.memory_space<vmem>>, vector<1x1x2x256xf32>,
    %c17_i32_334 = arith.constant 17 : i32
    %790 = tpu.dynamic_rotate %566 by %c17_i32_334 dim 1 : vector<8x256xf32>, i32 -> vector<8x256xf32>
    %791 = vector.broadcast %1 : vector<1x256xf32> to vector<8x256xf32>
    %792 = arith.mulf %790, %791 : vector<8x256xf32>
    %c16_i32_335 = arith.constant 16 : i32
    %793 = tpu.dynamic_rotate %566 by %c16_i32_335 dim 1 : vector<8x256xf32>, i32 -> vector<8x256xf32>
    %794 = vector.broadcast %2 : vector<1x256xf32> to vector<8x256xf32>
    %795 = arith.mulf %793, %794 : vector<8x256xf32>
    %c15_i32_336 = arith.constant 15 : i32
    %796 = tpu.dynamic_rotate %566 by %c15_i32_336 dim 1 : vector<8x256xf32>, i32 -> vector<8x256xf32>
    %797 = vector.broadcast %3 : vector<1x256xf32> to vector<8x256xf32>
    %798 = arith.mulf %796, %797 : vector<8x256xf32>
    %c1_i32_337 = arith.constant 1 : i32
    %799 = tpu.dynamic_rotate %566 by %c1_i32_337 dim 1 : vector<8x256xf32>, i32 -> vector<8x256xf32>
    %800 = vector.broadcast %4 : vector<1x256xf32> to vector<8x256xf32>
    %801 = arith.mulf %799, %800 : vector<8x256xf32>
    %c255_i32_338 = arith.constant 255 : i32
    %802 = tpu.dynamic_rotate %566 by %c255_i32_338 dim 1 : vector<8x256xf32>, i32 -> vector<8x256xf32>
    %803 = vector.broadcast %5 : vector<1x256xf32> to vector<8x256xf32>
    %804 = arith.mulf %802, %803 : vector<8x256xf32>
    %c241_i32_339 = arith.constant 241 : i32
    %805 = tpu.dynamic_rotate %566 by %c241_i32_339 dim 1 : vector<8x256xf32>, i32 -> vector<8x256xf32>
    %806 = vector.broadcast %6 : vector<1x256xf32> to vector<8x256xf32>
    %807 = arith.mulf %805, %806 : vector<8x256xf32>
    %c240_i32_340 = arith.constant 240 : i32
    %808 = tpu.dynamic_rotate %566 by %c240_i32_340 dim 1 : vector<8x256xf32>, i32 -> vector<8x256xf32>
    %809 = vector.broadcast %7 : vector<1x256xf32> to vector<8x256xf32>
    %810 = arith.mulf %808, %809 : vector<8x256xf32>
    %c239_i32_341 = arith.constant 239 : i32
    %811 = tpu.dynamic_rotate %566 by %c239_i32_341 dim 1 : vector<8x256xf32>, i32 -> vector<8x256xf32>
    %812 = vector.broadcast %8 : vector<1x256xf32> to vector<8x256xf32>
    %813 = arith.mulf %811, %812 : vector<8x256xf32>
    %814 = tpu.concatenate %792, %795, %798, %801, %566, %804, %807, %810, %813, %0 in 0 : vector<8x256xf32>, vector<8x256xf32>, vector<8x256xf32>, vector<8x256xf32>, vector<8x256xf32>, vector<8x256xf32>, vector<8x256xf32>, vector<8x256xf32>, vector<8x256xf32>, vector<1x256xf32> -> vector<73x256xf32>
    %c0_342 = arith.constant 0 : index
    %c0_343 = arith.constant 0 : index
    %815 = vector.load %arg14[%c0_342, %c0_343] : memref<8x73xf32, #tpu.memory_space<vmem>>, vector<8x73xf32>
    %cst_344 = arith.constant dense<0.000000e+00> : vector<8x256xf32>
    %816 = tpu.matmul %815, %814, %cst_344 {dimension_numbers = #tpu.dot_dimension_numbers<[1], [0], [0], [1], [0, 0, 1, 1], [], []>} : vector<8x73xf32>, vector<73x256xf32>, vector<8x256xf32> -> vector<8x256xf32>
    %cst_345 = arith.constant 0.000000e+00 : f32
    %817 = vector.broadcast %cst_345 : f32 to vector<8x256xf32>
    %818 = arith.cmpf ogt, %816, %817 : vector<8x256xf32>
    %cst_346 = arith.constant 2.000000e-01 : f32
    %819 = vector.broadcast %cst_346 : f32 to vector<8x256xf32>
    %820 = arith.mulf %819, %816 : vector<8x256xf32>
    %821 = arith.select %818, %816, %820 : vector<8x256xi1>, vector<8x256xf32>
    %c17_i32_347 = arith.constant 17 : i32
    %822 = tpu.dynamic_rotate %821 by %c17_i32_347 dim 1 : vector<8x256xf32>, i32 -> vector<8x256xf32>
    %823 = vector.broadcast %1 : vector<1x256xf32> to vector<8x256xf32>
    %824 = arith.mulf %822, %823 : vector<8x256xf32>
    %c16_i32_348 = arith.constant 16 : i32
    %825 = tpu.dynamic_rotate %821 by %c16_i32_348 dim 1 : vector<8x256xf32>, i32 -> vector<8x256xf32>
    %826 = vector.broadcast %2 : vector<1x256xf32> to vector<8x256xf32>
    %827 = arith.mulf %825, %826 : vector<8x256xf32>
    %c15_i32_349 = arith.constant 15 : i32
    %828 = tpu.dynamic_rotate %821 by %c15_i32_349 dim 1 : vector<8x256xf32>, i32 -> vector<8x256xf32>
    %829 = vector.broadcast %3 : vector<1x256xf32> to vector<8x256xf32>
    %830 = arith.mulf %828, %829 : vector<8x256xf32>
    %c1_i32_350 = arith.constant 1 : i32
    %831 = tpu.dynamic_rotate %821 by %c1_i32_350 dim 1 : vector<8x256xf32>, i32 -> vector<8x256xf32>
    %832 = vector.broadcast %4 : vector<1x256xf32> to vector<8x256xf32>
    %833 = arith.mulf %831, %832 : vector<8x256xf32>
    %c255_i32_351 = arith.constant 255 : i32
    %834 = tpu.dynamic_rotate %821 by %c255_i32_351 dim 1 : vector<8x256xf32>, i32 -> vector<8x256xf32>
    %835 = vector.broadcast %5 : vector<1x256xf32> to vector<8x256xf32>
    %836 = arith.mulf %834, %835 : vector<8x256xf32>
    %c241_i32_352 = arith.constant 241 : i32
    %837 = tpu.dynamic_rotate %821 by %c241_i32_352 dim 1 : vector<8x256xf32>, i32 -> vector<8x256xf32>
    %838 = vector.broadcast %6 : vector<1x256xf32> to vector<8x256xf32>
    %839 = arith.mulf %837, %838 : vector<8x256xf32>
    %c240_i32_353 = arith.constant 240 : i32
    %840 = tpu.dynamic_rotate %821 by %c240_i32_353 dim 1 : vector<8x256xf32>, i32 -> vector<8x256xf32>
    %841 = vector.broadcast %7 : vector<1x256xf32> to vector<8x256xf32>
    %842 = arith.mulf %840, %841 : vector<8x256xf32>
    %c239_i32_354 = arith.constant 239 : i32
    %843 = tpu.dynamic_rotate %821 by %c239_i32_354 dim 1 : vector<8x256xf32>, i32 -> vector<8x256xf32>
    %844 = vector.broadcast %8 : vector<1x256xf32> to vector<8x256xf32>
    %845 = arith.mulf %843, %844 : vector<8x256xf32>
    %846 = tpu.concatenate %824, %827, %830, %833, %821, %836, %839, %842, %845, %0 in 0 : vector<8x256xf32>, vector<8x256xf32>, vector<8x256xf32>, vector<8x256xf32>, vector<8x256xf32>, vector<8x256xf32>, vector<8x256xf32>, vector<8x256xf32>, vector<8x256xf32>, vector<1x256xf32> -> vector<73x256xf32>
    %c0_355 = arith.constant 0 : index
    %c0_356 = arith.constant 0 : index
    %847 = vector.load %arg15[%c0_355, %c0_356] : memref<8x73xf32, #tpu.memory_space<vmem>>, vector<8x73xf32>
    %cst_357 = arith.constant dense<0.000000e+00> : vector<8x256xf32>
    %848 = tpu.matmul %847, %846, %cst_357 {dimension_numbers = #tpu.dot_dimension_numbers<[1], [0], [0], [1], [0, 0, 1, 1], [], []>} : vector<8x73xf32>, vector<73x256xf32>, vector<8x256xf32> -> vector<8x256xf32>
    %c0_358 = arith.constant 0 : index
    %c1_359 = arith.constant 1 : index
    %c0_360 = arith.constant 0 : index
    %c0_361 = arith.constant 0 : index
    %849 = vector.load %arg29[%c0_358, %c1_359, %c0_360, %c0_361] : memref<1x3x8x256xf32, #tpu.memory_space<vmem>>, vector<1x1x8x256xf32>
    %850 = vector.shape_cast %849 : vector<1x1x8x256xf32> to vector<8x256xf32>
    %851 = vector.shape_cast %848 : vector<8x256xf32> to vector<1x1x8x256xf32>
    tpu.vector_store %arg29[%c0_358, %c1_359, %c0_360, %c0_361], %851 {strides = array<i32>} : memref<1x3x8x256xf32, #tpu.memory_space<vmem>>, vector<1x1x8x256xf32>,
    %c17_i32_362 = arith.constant 17 : i32
    %852 = tpu.dynamic_rotate %848 by %c17_i32_362 dim 1 : vector<8x256xf32>, i32 -> vector<8x256xf32>
    %853 = vector.broadcast %1 : vector<1x256xf32> to vector<8x256xf32>
    %854 = arith.mulf %852, %853 : vector<8x256xf32>
    %c16_i32_363 = arith.constant 16 : i32
    %855 = tpu.dynamic_rotate %848 by %c16_i32_363 dim 1 : vector<8x256xf32>, i32 -> vector<8x256xf32>
    %856 = vector.broadcast %2 : vector<1x256xf32> to vector<8x256xf32>
    %857 = arith.mulf %855, %856 : vector<8x256xf32>
    %c15_i32_364 = arith.constant 15 : i32
    %858 = tpu.dynamic_rotate %848 by %c15_i32_364 dim 1 : vector<8x256xf32>, i32 -> vector<8x256xf32>
    %859 = vector.broadcast %3 : vector<1x256xf32> to vector<8x256xf32>
    %860 = arith.mulf %858, %859 : vector<8x256xf32>
    %c1_i32_365 = arith.constant 1 : i32
    %861 = tpu.dynamic_rotate %848 by %c1_i32_365 dim 1 : vector<8x256xf32>, i32 -> vector<8x256xf32>
    %862 = vector.broadcast %4 : vector<1x256xf32> to vector<8x256xf32>
    %863 = arith.mulf %861, %862 : vector<8x256xf32>
    %c255_i32_366 = arith.constant 255 : i32
    %864 = tpu.dynamic_rotate %848 by %c255_i32_366 dim 1 : vector<8x256xf32>, i32 -> vector<8x256xf32>
    %865 = vector.broadcast %5 : vector<1x256xf32> to vector<8x256xf32>
    %866 = arith.mulf %864, %865 : vector<8x256xf32>
    %c241_i32_367 = arith.constant 241 : i32
    %867 = tpu.dynamic_rotate %848 by %c241_i32_367 dim 1 : vector<8x256xf32>, i32 -> vector<8x256xf32>
    %868 = vector.broadcast %6 : vector<1x256xf32> to vector<8x256xf32>
    %869 = arith.mulf %867, %868 : vector<8x256xf32>
    %c240_i32_368 = arith.constant 240 : i32
    %870 = tpu.dynamic_rotate %848 by %c240_i32_368 dim 1 : vector<8x256xf32>, i32 -> vector<8x256xf32>
    %871 = vector.broadcast %7 : vector<1x256xf32> to vector<8x256xf32>
    %872 = arith.mulf %870, %871 : vector<8x256xf32>
    %c239_i32_369 = arith.constant 239 : i32
    %873 = tpu.dynamic_rotate %848 by %c239_i32_369 dim 1 : vector<8x256xf32>, i32 -> vector<8x256xf32>
    %874 = vector.broadcast %8 : vector<1x256xf32> to vector<8x256xf32>
    %875 = arith.mulf %873, %874 : vector<8x256xf32>
    %876 = tpu.concatenate %854, %857, %860, %863, %848, %866, %869, %872, %875, %0 in 0 : vector<8x256xf32>, vector<8x256xf32>, vector<8x256xf32>, vector<8x256xf32>, vector<8x256xf32>, vector<8x256xf32>, vector<8x256xf32>, vector<8x256xf32>, vector<8x256xf32>, vector<1x256xf32> -> vector<73x256xf32>
    %c0_370 = arith.constant 0 : index
    %c0_371 = arith.constant 0 : index
    %877 = vector.load %arg16[%c0_370, %c0_371] : memref<16x73xf32, #tpu.memory_space<vmem>>, vector<16x73xf32>
    %cst_372 = arith.constant dense<0.000000e+00> : vector<16x256xf32>
    %878 = tpu.matmul %877, %876, %cst_372 {dimension_numbers = #tpu.dot_dimension_numbers<[1], [0], [0], [1], [0, 0, 1, 1], [], []>} : vector<16x73xf32>, vector<73x256xf32>, vector<16x256xf32> -> vector<16x256xf32>
    %cst_373 = arith.constant 0.000000e+00 : f32
    %879 = vector.broadcast %cst_373 : f32 to vector<16x256xf32>
    %880 = arith.maximumf %878, %879 : vector<16x256xf32>
    %c17_i32_374 = arith.constant 17 : i32
    %881 = tpu.dynamic_rotate %880 by %c17_i32_374 dim 1 : vector<16x256xf32>, i32 -> vector<16x256xf32>
    %882 = vector.broadcast %1 : vector<1x256xf32> to vector<16x256xf32>
    %883 = arith.mulf %881, %882 : vector<16x256xf32>
    %c16_i32_375 = arith.constant 16 : i32
    %884 = tpu.dynamic_rotate %880 by %c16_i32_375 dim 1 : vector<16x256xf32>, i32 -> vector<16x256xf32>
    %885 = vector.broadcast %2 : vector<1x256xf32> to vector<16x256xf32>
    %886 = arith.mulf %884, %885 : vector<16x256xf32>
    %c15_i32_376 = arith.constant 15 : i32
    %887 = tpu.dynamic_rotate %880 by %c15_i32_376 dim 1 : vector<16x256xf32>, i32 -> vector<16x256xf32>
    %888 = vector.broadcast %3 : vector<1x256xf32> to vector<16x256xf32>
    %889 = arith.mulf %887, %888 : vector<16x256xf32>
    %c1_i32_377 = arith.constant 1 : i32
    %890 = tpu.dynamic_rotate %880 by %c1_i32_377 dim 1 : vector<16x256xf32>, i32 -> vector<16x256xf32>
    %891 = vector.broadcast %4 : vector<1x256xf32> to vector<16x256xf32>
    %892 = arith.mulf %890, %891 : vector<16x256xf32>
    %c255_i32_378 = arith.constant 255 : i32
    %893 = tpu.dynamic_rotate %880 by %c255_i32_378 dim 1 : vector<16x256xf32>, i32 -> vector<16x256xf32>
    %894 = vector.broadcast %5 : vector<1x256xf32> to vector<16x256xf32>
    %895 = arith.mulf %893, %894 : vector<16x256xf32>
    %c241_i32_379 = arith.constant 241 : i32
    %896 = tpu.dynamic_rotate %880 by %c241_i32_379 dim 1 : vector<16x256xf32>, i32 -> vector<16x256xf32>
    %897 = vector.broadcast %6 : vector<1x256xf32> to vector<16x256xf32>
    %898 = arith.mulf %896, %897 : vector<16x256xf32>
    %c240_i32_380 = arith.constant 240 : i32
    %899 = tpu.dynamic_rotate %880 by %c240_i32_380 dim 1 : vector<16x256xf32>, i32 -> vector<16x256xf32>
    %900 = vector.broadcast %7 : vector<1x256xf32> to vector<16x256xf32>
    %901 = arith.mulf %899, %900 : vector<16x256xf32>
    %c239_i32_381 = arith.constant 239 : i32
    %902 = tpu.dynamic_rotate %880 by %c239_i32_381 dim 1 : vector<16x256xf32>, i32 -> vector<16x256xf32>
    %903 = vector.broadcast %8 : vector<1x256xf32> to vector<16x256xf32>
    %904 = arith.mulf %902, %903 : vector<16x256xf32>
    %905 = tpu.concatenate %883, %886, %889, %892, %880, %895, %898, %901, %904, %0 in 0 : vector<16x256xf32>, vector<16x256xf32>, vector<16x256xf32>, vector<16x256xf32>, vector<16x256xf32>, vector<16x256xf32>, vector<16x256xf32>, vector<16x256xf32>, vector<16x256xf32>, vector<1x256xf32> -> vector<145x256xf32>
    %c0_382 = arith.constant 0 : index
    %c0_383 = arith.constant 0 : index
    %906 = vector.load %arg17[%c0_382, %c0_383] : memref<2x145xf32, #tpu.memory_space<vmem>>, vector<2x145xf32>
    %cst_384 = arith.constant dense<0.000000e+00> : vector<2x256xf32>
    %907 = tpu.matmul %906, %905, %cst_384 {dimension_numbers = #tpu.dot_dimension_numbers<[1], [0], [0], [1], [0, 0, 1, 1], [], []>} : vector<2x145xf32>, vector<145x256xf32>, vector<2x256xf32> -> vector<2x256xf32>
    %c0_385 = arith.constant 0 : index
    %c1_386 = arith.constant 1 : index
    %c0_387 = arith.constant 0 : index
    %c0_388 = arith.constant 0 : index
    %908 = vector.load %arg30[%c0_385, %c1_386, %c0_387, %c0_388] : memref<1x3x2x256xf32, #tpu.memory_space<vmem>>, vector<1x1x2x256xf32>
    %909 = vector.shape_cast %908 : vector<1x1x2x256xf32> to vector<2x256xf32>
    %910 = vector.shape_cast %907 : vector<2x256xf32> to vector<1x1x2x256xf32>
    tpu.vector_store %arg30[%c0_385, %c1_386, %c0_387, %c0_388], %910 {strides = array<i32>} : memref<1x3x2x256xf32, #tpu.memory_space<vmem>>, vector<1x1x2x256xf32>,
    %c17_i32_389 = arith.constant 17 : i32
    %911 = tpu.dynamic_rotate %668 by %c17_i32_389 dim 1 : vector<8x256xf32>, i32 -> vector<8x256xf32>
    %912 = vector.broadcast %1 : vector<1x256xf32> to vector<8x256xf32>
    %913 = arith.mulf %911, %912 : vector<8x256xf32>
    %c16_i32_390 = arith.constant 16 : i32
    %914 = tpu.dynamic_rotate %668 by %c16_i32_390 dim 1 : vector<8x256xf32>, i32 -> vector<8x256xf32>
    %915 = vector.broadcast %2 : vector<1x256xf32> to vector<8x256xf32>
    %916 = arith.mulf %914, %915 : vector<8x256xf32>
    %c15_i32_391 = arith.constant 15 : i32
    %917 = tpu.dynamic_rotate %668 by %c15_i32_391 dim 1 : vector<8x256xf32>, i32 -> vector<8x256xf32>
    %918 = vector.broadcast %3 : vector<1x256xf32> to vector<8x256xf32>
    %919 = arith.mulf %917, %918 : vector<8x256xf32>
    %c1_i32_392 = arith.constant 1 : i32
    %920 = tpu.dynamic_rotate %668 by %c1_i32_392 dim 1 : vector<8x256xf32>, i32 -> vector<8x256xf32>
    %921 = vector.broadcast %4 : vector<1x256xf32> to vector<8x256xf32>
    %922 = arith.mulf %920, %921 : vector<8x256xf32>
    %c255_i32_393 = arith.constant 255 : i32
    %923 = tpu.dynamic_rotate %668 by %c255_i32_393 dim 1 : vector<8x256xf32>, i32 -> vector<8x256xf32>
    %924 = vector.broadcast %5 : vector<1x256xf32> to vector<8x256xf32>
    %925 = arith.mulf %923, %924 : vector<8x256xf32>
    %c241_i32_394 = arith.constant 241 : i32
    %926 = tpu.dynamic_rotate %668 by %c241_i32_394 dim 1 : vector<8x256xf32>, i32 -> vector<8x256xf32>
    %927 = vector.broadcast %6 : vector<1x256xf32> to vector<8x256xf32>
    %928 = arith.mulf %926, %927 : vector<8x256xf32>
    %c240_i32_395 = arith.constant 240 : i32
    %929 = tpu.dynamic_rotate %668 by %c240_i32_395 dim 1 : vector<8x256xf32>, i32 -> vector<8x256xf32>
    %930 = vector.broadcast %7 : vector<1x256xf32> to vector<8x256xf32>
    %931 = arith.mulf %929, %930 : vector<8x256xf32>
    %c239_i32_396 = arith.constant 239 : i32
    %932 = tpu.dynamic_rotate %668 by %c239_i32_396 dim 1 : vector<8x256xf32>, i32 -> vector<8x256xf32>
    %933 = vector.broadcast %8 : vector<1x256xf32> to vector<8x256xf32>
    %934 = arith.mulf %932, %933 : vector<8x256xf32>
    %935 = tpu.concatenate %913, %916, %919, %922, %668, %925, %928, %931, %934, %0 in 0 : vector<8x256xf32>, vector<8x256xf32>, vector<8x256xf32>, vector<8x256xf32>, vector<8x256xf32>, vector<8x256xf32>, vector<8x256xf32>, vector<8x256xf32>, vector<8x256xf32>, vector<1x256xf32> -> vector<73x256xf32>
    %c0_397 = arith.constant 0 : index
    %c0_398 = arith.constant 0 : index
    %936 = vector.load %arg14[%c0_397, %c0_398] : memref<8x73xf32, #tpu.memory_space<vmem>>, vector<8x73xf32>
    %cst_399 = arith.constant dense<0.000000e+00> : vector<8x256xf32>
    %937 = tpu.matmul %936, %935, %cst_399 {dimension_numbers = #tpu.dot_dimension_numbers<[1], [0], [0], [1], [0, 0, 1, 1], [], []>} : vector<8x73xf32>, vector<73x256xf32>, vector<8x256xf32> -> vector<8x256xf32>
    %cst_400 = arith.constant 0.000000e+00 : f32
    %938 = vector.broadcast %cst_400 : f32 to vector<8x256xf32>
    %939 = arith.cmpf ogt, %937, %938 : vector<8x256xf32>
    %cst_401 = arith.constant 2.000000e-01 : f32
    %940 = vector.broadcast %cst_401 : f32 to vector<8x256xf32>
    %941 = arith.mulf %940, %937 : vector<8x256xf32>
    %942 = arith.select %939, %937, %941 : vector<8x256xi1>, vector<8x256xf32>
    %c17_i32_402 = arith.constant 17 : i32
    %943 = tpu.dynamic_rotate %942 by %c17_i32_402 dim 1 : vector<8x256xf32>, i32 -> vector<8x256xf32>
    %944 = vector.broadcast %1 : vector<1x256xf32> to vector<8x256xf32>
    %945 = arith.mulf %943, %944 : vector<8x256xf32>
    %c16_i32_403 = arith.constant 16 : i32
    %946 = tpu.dynamic_rotate %942 by %c16_i32_403 dim 1 : vector<8x256xf32>, i32 -> vector<8x256xf32>
    %947 = vector.broadcast %2 : vector<1x256xf32> to vector<8x256xf32>
    %948 = arith.mulf %946, %947 : vector<8x256xf32>
    %c15_i32_404 = arith.constant 15 : i32
    %949 = tpu.dynamic_rotate %942 by %c15_i32_404 dim 1 : vector<8x256xf32>, i32 -> vector<8x256xf32>
    %950 = vector.broadcast %3 : vector<1x256xf32> to vector<8x256xf32>
    %951 = arith.mulf %949, %950 : vector<8x256xf32>
    %c1_i32_405 = arith.constant 1 : i32
    %952 = tpu.dynamic_rotate %942 by %c1_i32_405 dim 1 : vector<8x256xf32>, i32 -> vector<8x256xf32>
    %953 = vector.broadcast %4 : vector<1x256xf32> to vector<8x256xf32>
    %954 = arith.mulf %952, %953 : vector<8x256xf32>
    %c255_i32_406 = arith.constant 255 : i32
    %955 = tpu.dynamic_rotate %942 by %c255_i32_406 dim 1 : vector<8x256xf32>, i32 -> vector<8x256xf32>
    %956 = vector.broadcast %5 : vector<1x256xf32> to vector<8x256xf32>
    %957 = arith.mulf %955, %956 : vector<8x256xf32>
    %c241_i32_407 = arith.constant 241 : i32
    %958 = tpu.dynamic_rotate %942 by %c241_i32_407 dim 1 : vector<8x256xf32>, i32 -> vector<8x256xf32>
    %959 = vector.broadcast %6 : vector<1x256xf32> to vector<8x256xf32>
    %960 = arith.mulf %958, %959 : vector<8x256xf32>
    %c240_i32_408 = arith.constant 240 : i32
    %961 = tpu.dynamic_rotate %942 by %c240_i32_408 dim 1 : vector<8x256xf32>, i32 -> vector<8x256xf32>
    %962 = vector.broadcast %7 : vector<1x256xf32> to vector<8x256xf32>
    %963 = arith.mulf %961, %962 : vector<8x256xf32>
    %c239_i32_409 = arith.constant 239 : i32
    %964 = tpu.dynamic_rotate %942 by %c239_i32_409 dim 1 : vector<8x256xf32>, i32 -> vector<8x256xf32>
    %965 = vector.broadcast %8 : vector<1x256xf32> to vector<8x256xf32>
    %966 = arith.mulf %964, %965 : vector<8x256xf32>
    %967 = tpu.concatenate %945, %948, %951, %954, %942, %957, %960, %963, %966, %0 in 0 : vector<8x256xf32>, vector<8x256xf32>, vector<8x256xf32>, vector<8x256xf32>, vector<8x256xf32>, vector<8x256xf32>, vector<8x256xf32>, vector<8x256xf32>, vector<8x256xf32>, vector<1x256xf32> -> vector<73x256xf32>
    %c0_410 = arith.constant 0 : index
    %c0_411 = arith.constant 0 : index
    %968 = vector.load %arg15[%c0_410, %c0_411] : memref<8x73xf32, #tpu.memory_space<vmem>>, vector<8x73xf32>
    %cst_412 = arith.constant dense<0.000000e+00> : vector<8x256xf32>
    %969 = tpu.matmul %968, %967, %cst_412 {dimension_numbers = #tpu.dot_dimension_numbers<[1], [0], [0], [1], [0, 0, 1, 1], [], []>} : vector<8x73xf32>, vector<73x256xf32>, vector<8x256xf32> -> vector<8x256xf32>
    %c0_413 = arith.constant 0 : index
    %c2_414 = arith.constant 2 : index
    %c0_415 = arith.constant 0 : index
    %c0_416 = arith.constant 0 : index
    %970 = vector.load %arg29[%c0_413, %c2_414, %c0_415, %c0_416] : memref<1x3x8x256xf32, #tpu.memory_space<vmem>>, vector<1x1x8x256xf32>
    %971 = vector.shape_cast %970 : vector<1x1x8x256xf32> to vector<8x256xf32>
    %972 = vector.shape_cast %969 : vector<8x256xf32> to vector<1x1x8x256xf32>
    tpu.vector_store %arg29[%c0_413, %c2_414, %c0_415, %c0_416], %972 {strides = array<i32>} : memref<1x3x8x256xf32, #tpu.memory_space<vmem>>, vector<1x1x8x256xf32>,
    %c17_i32_417 = arith.constant 17 : i32
    %973 = tpu.dynamic_rotate %969 by %c17_i32_417 dim 1 : vector<8x256xf32>, i32 -> vector<8x256xf32>
    %974 = vector.broadcast %1 : vector<1x256xf32> to vector<8x256xf32>
    %975 = arith.mulf %973, %974 : vector<8x256xf32>
    %c16_i32_418 = arith.constant 16 : i32
    %976 = tpu.dynamic_rotate %969 by %c16_i32_418 dim 1 : vector<8x256xf32>, i32 -> vector<8x256xf32>
    %977 = vector.broadcast %2 : vector<1x256xf32> to vector<8x256xf32>
    %978 = arith.mulf %976, %977 : vector<8x256xf32>
    %c15_i32_419 = arith.constant 15 : i32
    %979 = tpu.dynamic_rotate %969 by %c15_i32_419 dim 1 : vector<8x256xf32>, i32 -> vector<8x256xf32>
    %980 = vector.broadcast %3 : vector<1x256xf32> to vector<8x256xf32>
    %981 = arith.mulf %979, %980 : vector<8x256xf32>
    %c1_i32_420 = arith.constant 1 : i32
    %982 = tpu.dynamic_rotate %969 by %c1_i32_420 dim 1 : vector<8x256xf32>, i32 -> vector<8x256xf32>
    %983 = vector.broadcast %4 : vector<1x256xf32> to vector<8x256xf32>
    %984 = arith.mulf %982, %983 : vector<8x256xf32>
    %c255_i32_421 = arith.constant 255 : i32
    %985 = tpu.dynamic_rotate %969 by %c255_i32_421 dim 1 : vector<8x256xf32>, i32 -> vector<8x256xf32>
    %986 = vector.broadcast %5 : vector<1x256xf32> to vector<8x256xf32>
    %987 = arith.mulf %985, %986 : vector<8x256xf32>
    %c241_i32_422 = arith.constant 241 : i32
    %988 = tpu.dynamic_rotate %969 by %c241_i32_422 dim 1 : vector<8x256xf32>, i32 -> vector<8x256xf32>
    %989 = vector.broadcast %6 : vector<1x256xf32> to vector<8x256xf32>
    %990 = arith.mulf %988, %989 : vector<8x256xf32>
    %c240_i32_423 = arith.constant 240 : i32
    %991 = tpu.dynamic_rotate %969 by %c240_i32_423 dim 1 : vector<8x256xf32>, i32 -> vector<8x256xf32>
    %992 = vector.broadcast %7 : vector<1x256xf32> to vector<8x256xf32>
    %993 = arith.mulf %991, %992 : vector<8x256xf32>
    %c239_i32_424 = arith.constant 239 : i32
    %994 = tpu.dynamic_rotate %969 by %c239_i32_424 dim 1 : vector<8x256xf32>, i32 -> vector<8x256xf32>
    %995 = vector.broadcast %8 : vector<1x256xf32> to vector<8x256xf32>
    %996 = arith.mulf %994, %995 : vector<8x256xf32>
    %997 = tpu.concatenate %975, %978, %981, %984, %969, %987, %990, %993, %996, %0 in 0 : vector<8x256xf32>, vector<8x256xf32>, vector<8x256xf32>, vector<8x256xf32>, vector<8x256xf32>, vector<8x256xf32>, vector<8x256xf32>, vector<8x256xf32>, vector<8x256xf32>, vector<1x256xf32> -> vector<73x256xf32>
    %c0_425 = arith.constant 0 : index
    %c0_426 = arith.constant 0 : index
    %998 = vector.load %arg16[%c0_425, %c0_426] : memref<16x73xf32, #tpu.memory_space<vmem>>, vector<16x73xf32>
    %cst_427 = arith.constant dense<0.000000e+00> : vector<16x256xf32>
    %999 = tpu.matmul %998, %997, %cst_427 {dimension_numbers = #tpu.dot_dimension_numbers<[1], [0], [0], [1], [0, 0, 1, 1], [], []>} : vector<16x73xf32>, vector<73x256xf32>, vector<16x256xf32> -> vector<16x256xf32>
    %cst_428 = arith.constant 0.000000e+00 : f32
    %1000 = vector.broadcast %cst_428 : f32 to vector<16x256xf32>
    %1001 = arith.maximumf %999, %1000 : vector<16x256xf32>
    %c17_i32_429 = arith.constant 17 : i32
    %1002 = tpu.dynamic_rotate %1001 by %c17_i32_429 dim 1 : vector<16x256xf32>, i32 -> vector<16x256xf32>
    %1003 = vector.broadcast %1 : vector<1x256xf32> to vector<16x256xf32>
    %1004 = arith.mulf %1002, %1003 : vector<16x256xf32>
    %c16_i32_430 = arith.constant 16 : i32
    %1005 = tpu.dynamic_rotate %1001 by %c16_i32_430 dim 1 : vector<16x256xf32>, i32 -> vector<16x256xf32>
    %1006 = vector.broadcast %2 : vector<1x256xf32> to vector<16x256xf32>
    %1007 = arith.mulf %1005, %1006 : vector<16x256xf32>
    %c15_i32_431 = arith.constant 15 : i32
    %1008 = tpu.dynamic_rotate %1001 by %c15_i32_431 dim 1 : vector<16x256xf32>, i32 -> vector<16x256xf32>
    %1009 = vector.broadcast %3 : vector<1x256xf32> to vector<16x256xf32>
    %1010 = arith.mulf %1008, %1009 : vector<16x256xf32>
    %c1_i32_432 = arith.constant 1 : i32
    %1011 = tpu.dynamic_rotate %1001 by %c1_i32_432 dim 1 : vector<16x256xf32>, i32 -> vector<16x256xf32>
    %1012 = vector.broadcast %4 : vector<1x256xf32> to vector<16x256xf32>
    %1013 = arith.mulf %1011, %1012 : vector<16x256xf32>
    %c255_i32_433 = arith.constant 255 : i32
    %1014 = tpu.dynamic_rotate %1001 by %c255_i32_433 dim 1 : vector<16x256xf32>, i32 -> vector<16x256xf32>
    %1015 = vector.broadcast %5 : vector<1x256xf32> to vector<16x256xf32>
    %1016 = arith.mulf %1014, %1015 : vector<16x256xf32>
    %c241_i32_434 = arith.constant 241 : i32
    %1017 = tpu.dynamic_rotate %1001 by %c241_i32_434 dim 1 : vector<16x256xf32>, i32 -> vector<16x256xf32>
    %1018 = vector.broadcast %6 : vector<1x256xf32> to vector<16x256xf32>
    %1019 = arith.mulf %1017, %1018 : vector<16x256xf32>
    %c240_i32_435 = arith.constant 240 : i32
    %1020 = tpu.dynamic_rotate %1001 by %c240_i32_435 dim 1 : vector<16x256xf32>, i32 -> vector<16x256xf32>
    %1021 = vector.broadcast %7 : vector<1x256xf32> to vector<16x256xf32>
    %1022 = arith.mulf %1020, %1021 : vector<16x256xf32>
    %c239_i32_436 = arith.constant 239 : i32
    %1023 = tpu.dynamic_rotate %1001 by %c239_i32_436 dim 1 : vector<16x256xf32>, i32 -> vector<16x256xf32>
    %1024 = vector.broadcast %8 : vector<1x256xf32> to vector<16x256xf32>
    %1025 = arith.mulf %1023, %1024 : vector<16x256xf32>
    %1026 = tpu.concatenate %1004, %1007, %1010, %1013, %1001, %1016, %1019, %1022, %1025, %0 in 0 : vector<16x256xf32>, vector<16x256xf32>, vector<16x256xf32>, vector<16x256xf32>, vector<16x256xf32>, vector<16x256xf32>, vector<16x256xf32>, vector<16x256xf32>, vector<16x256xf32>, vector<1x256xf32> -> vector<145x256xf32>
    %c0_437 = arith.constant 0 : index
    %c0_438 = arith.constant 0 : index
    %1027 = vector.load %arg17[%c0_437, %c0_438] : memref<2x145xf32, #tpu.memory_space<vmem>>, vector<2x145xf32>
    %cst_439 = arith.constant dense<0.000000e+00> : vector<2x256xf32>
    %1028 = tpu.matmul %1027, %1026, %cst_439 {dimension_numbers = #tpu.dot_dimension_numbers<[1], [0], [0], [1], [0, 0, 1, 1], [], []>} : vector<2x145xf32>, vector<145x256xf32>, vector<2x256xf32> -> vector<2x256xf32>
    %c0_440 = arith.constant 0 : index
    %c2_441 = arith.constant 2 : index
    %c0_442 = arith.constant 0 : index
    %c0_443 = arith.constant 0 : index
    %1029 = vector.load %arg30[%c0_440, %c2_441, %c0_442, %c0_443] : memref<1x3x2x256xf32, #tpu.memory_space<vmem>>, vector<1x1x2x256xf32>
    %1030 = vector.shape_cast %1029 : vector<1x1x2x256xf32> to vector<2x256xf32>
    %1031 = vector.shape_cast %1028 : vector<2x256xf32> to vector<1x1x2x256xf32>
    tpu.vector_store %arg30[%c0_440, %c2_441, %c0_442, %c0_443], %1031 {strides = array<i32>} : memref<1x3x2x256xf32, #tpu.memory_space<vmem>>, vector<1x1x2x256xf32>,
    return
  }
  func.func @transform_0(%arg0: i32) -> (i32, i32, i32, i32) {
    %c0_i32 = arith.constant 0 : i32
    %c0_i32_0 = arith.constant 0 : i32
    %c0_i32_1 = arith.constant 0 : i32
    %c0_i32_2 = arith.constant 0 : i32
    return %arg0, %c0_i32, %c0_i32_0, %c0_i32_1 : i32, i32, i32, i32
  }
  func.func @transform_1(%arg0: i32) -> (i32, i32, i32, i32) {
    %c0_i32 = arith.constant 0 : i32
    %c0_i32_0 = arith.constant 0 : i32
    %c0_i32_1 = arith.constant 0 : i32
    %c0_i32_2 = arith.constant 0 : i32
    return %arg0, %c0_i32, %c0_i32_0, %c0_i32_1 : i32, i32, i32, i32
  }
  func.func @transform_2(%arg0: i32) -> (i32, i32, i32) {
    %c0_i32 = arith.constant 0 : i32
    %c0_i32_0 = arith.constant 0 : i32
    %c0_i32_1 = arith.constant 0 : i32
    return %arg0, %c0_i32, %c0_i32_0 : i32, i32, i32
  }
  func.func @transform_3(%arg0: i32) -> (i32, i32, i32, i32) {
    %c0_i32 = arith.constant 0 : i32
    %c0_i32_0 = arith.constant 0 : i32
    %c0_i32_1 = arith.constant 0 : i32
    %c0_i32_2 = arith.constant 0 : i32
    return %arg0, %c0_i32, %c0_i32_0, %c0_i32_1 : i32, i32, i32, i32
  }
  func.func @transform_4(%arg0: i32) -> (i32, i32) {
    %c0_i32 = arith.constant 0 : i32
    %c0_i32_0 = arith.constant 0 : i32
    %c0_i32_1 = arith.constant 0 : i32
    return %c0_i32, %c0_i32_0 : i32, i32
  }
  func.func @transform_5(%arg0: i32) -> (i32, i32) {
    %c0_i32 = arith.constant 0 : i32
    %c0_i32_0 = arith.constant 0 : i32
    %c0_i32_1 = arith.constant 0 : i32
    return %c0_i32, %c0_i32_0 : i32, i32
  }
  func.func @transform_6(%arg0: i32) -> (i32, i32) {
    %c0_i32 = arith.constant 0 : i32
    %c0_i32_0 = arith.constant 0 : i32
    %c0_i32_1 = arith.constant 0 : i32
    return %c0_i32, %c0_i32_0 : i32, i32
  }
  func.func @transform_7(%arg0: i32) -> (i32, i32) {
    %c0_i32 = arith.constant 0 : i32
    %c0_i32_0 = arith.constant 0 : i32
    %c0_i32_1 = arith.constant 0 : i32
    return %c0_i32, %c0_i32_0 : i32, i32
  }
  func.func @transform_8(%arg0: i32) -> (i32, i32) {
    %c0_i32 = arith.constant 0 : i32
    %c0_i32_0 = arith.constant 0 : i32
    %c0_i32_1 = arith.constant 0 : i32
    return %c0_i32, %c0_i32_0 : i32, i32
  }
  func.func @transform_9(%arg0: i32) -> (i32, i32) {
    %c0_i32 = arith.constant 0 : i32
    %c0_i32_0 = arith.constant 0 : i32
    %c0_i32_1 = arith.constant 0 : i32
    return %c0_i32, %c0_i32_0 : i32, i32
  }
  func.func @transform_10(%arg0: i32) -> (i32, i32) {
    %c0_i32 = arith.constant 0 : i32
    %c0_i32_0 = arith.constant 0 : i32
    %c0_i32_1 = arith.constant 0 : i32
    return %c0_i32, %c0_i32_0 : i32, i32
  }
  func.func @transform_11(%arg0: i32) -> (i32, i32) {
    %c0_i32 = arith.constant 0 : i32
    %c0_i32_0 = arith.constant 0 : i32
    %c0_i32_1 = arith.constant 0 : i32
    return %c0_i32, %c0_i32_0 : i32, i32
  }
  func.func @transform_12(%arg0: i32) -> (i32, i32) {
    %c0_i32 = arith.constant 0 : i32
    %c0_i32_0 = arith.constant 0 : i32
    %c0_i32_1 = arith.constant 0 : i32
    return %c0_i32, %c0_i32_0 : i32, i32
  }
  func.func @transform_13(%arg0: i32) -> (i32, i32) {
    %c0_i32 = arith.constant 0 : i32
    %c0_i32_0 = arith.constant 0 : i32
    %c0_i32_1 = arith.constant 0 : i32
    return %c0_i32, %c0_i32_0 : i32, i32
  }
  func.func @transform_14(%arg0: i32) -> (i32, i32) {
    %c0_i32 = arith.constant 0 : i32
    %c0_i32_0 = arith.constant 0 : i32
    %c0_i32_1 = arith.constant 0 : i32
    return %c0_i32, %c0_i32_0 : i32, i32
  }
  func.func @transform_15(%arg0: i32) -> (i32, i32) {
    %c0_i32 = arith.constant 0 : i32
    %c0_i32_0 = arith.constant 0 : i32
    %c0_i32_1 = arith.constant 0 : i32
    return %c0_i32, %c0_i32_0 : i32, i32
  }
  func.func @transform_16(%arg0: i32) -> (i32, i32) {
    %c0_i32 = arith.constant 0 : i32
    %c0_i32_0 = arith.constant 0 : i32
    %c0_i32_1 = arith.constant 0 : i32
    return %c0_i32, %c0_i32_0 : i32, i32
  }
  func.func @transform_17(%arg0: i32) -> (i32, i32) {
    %c0_i32 = arith.constant 0 : i32
    %c0_i32_0 = arith.constant 0 : i32
    %c0_i32_1 = arith.constant 0 : i32
    return %c0_i32, %c0_i32_0 : i32, i32
  }
  func.func @transform_18(%arg0: i32) -> (i32, i32) {
    %c0_i32 = arith.constant 0 : i32
    %c0_i32_0 = arith.constant 0 : i32
    %c0_i32_1 = arith.constant 0 : i32
    return %c0_i32, %c0_i32_0 : i32, i32
  }
  func.func @transform_19(%arg0: i32) -> (i32, i32) {
    %c0_i32 = arith.constant 0 : i32
    %c0_i32_0 = arith.constant 0 : i32
    %c0_i32_1 = arith.constant 0 : i32
    return %c0_i32, %c0_i32_0 : i32, i32
  }
  func.func @transform_20(%arg0: i32) -> (i32, i32) {
    %c0_i32 = arith.constant 0 : i32
    %c0_i32_0 = arith.constant 0 : i32
    %c0_i32_1 = arith.constant 0 : i32
    return %c0_i32, %c0_i32_0 : i32, i32
  }
  func.func @transform_21(%arg0: i32) -> (i32, i32) {
    %c0_i32 = arith.constant 0 : i32
    %c0_i32_0 = arith.constant 0 : i32
    %c0_i32_1 = arith.constant 0 : i32
    return %c0_i32, %c0_i32_0 : i32, i32
  }
  func.func @transform_22(%arg0: i32) -> (i32, i32) {
    %c0_i32 = arith.constant 0 : i32
    %c0_i32_0 = arith.constant 0 : i32
    %c0_i32_1 = arith.constant 0 : i32
    return %c0_i32, %c0_i32_0 : i32, i32
  }
  func.func @transform_23(%arg0: i32) -> (i32, i32) {
    %c0_i32 = arith.constant 0 : i32
    %c0_i32_0 = arith.constant 0 : i32
    %c0_i32_1 = arith.constant 0 : i32
    return %c0_i32, %c0_i32_0 : i32, i32
  }
  func.func @transform_24(%arg0: i32) -> (i32, i32) {
    %c0_i32 = arith.constant 0 : i32
    %c0_i32_0 = arith.constant 0 : i32
    %c0_i32_1 = arith.constant 0 : i32
    return %c0_i32, %c0_i32_0 : i32, i32
  }
  func.func @transform_25(%arg0: i32) -> (i32, i32, i32) {
    %c0_i32 = arith.constant 0 : i32
    %c0_i32_0 = arith.constant 0 : i32
    %c0_i32_1 = arith.constant 0 : i32
    return %arg0, %c0_i32, %c0_i32_0 : i32, i32, i32
  }
  func.func @transform_26(%arg0: i32) -> (i32, i32, i32, i32) {
    %c0_i32 = arith.constant 0 : i32
    %c0_i32_0 = arith.constant 0 : i32
    %c0_i32_1 = arith.constant 0 : i32
    %c0_i32_2 = arith.constant 0 : i32
    return %arg0, %c0_i32, %c0_i32_0, %c0_i32_1 : i32, i32, i32, i32
  }
  func.func @transform_27(%arg0: i32) -> (i32, i32, i32, i32) {
    %c0_i32 = arith.constant 0 : i32
    %c0_i32_0 = arith.constant 0 : i32
    %c0_i32_1 = arith.constant 0 : i32
    %c0_i32_2 = arith.constant 0 : i32
    return %arg0, %c0_i32, %c0_i32_0, %c0_i32_1 : i32, i32, i32, i32
  }
  func.func @transform_28(%arg0: i32) -> (i32, i32, i32, i32) {
    %c0_i32 = arith.constant 0 : i32
    %c0_i32_0 = arith.constant 0 : i32
    %c0_i32_1 = arith.constant 0 : i32
    %c0_i32_2 = arith.constant 0 : i32
    return %arg0, %c0_i32, %c0_i32_0, %c0_i32_1 : i32, i32, i32, i32
  }
  func.func @transform_29(%arg0: i32) -> (i32, i32, i32, i32) {
    %c0_i32 = arith.constant 0 : i32
    %c0_i32_0 = arith.constant 0 : i32
    %c0_i32_1 = arith.constant 0 : i32
    %c0_i32_2 = arith.constant 0 : i32
    return %arg0, %c0_i32, %c0_i32_0, %c0_i32_1 : i32, i32, i32, i32
  }
}

</mosaic_0001>

<llo_original>
// kernel: custom-call.11
$region0: #{custom-call.11}
  %s0 = inlined_call_operand.vmem [shape: f32[2,3,3], index: 0, kind: input, shape index: {}]
  %s1 = inlined_call_operand.vmem [shape: f32[2,3,3], index: 1, kind: output, shape index: {0}]
  %s2 = inlined_call_operand.hbm [shape: s32[2,3], index: 2, kind: output, shape index: {1}]
  %s3 = inlined_call_operand.vmem [shape: s32[2,3], index: 3, kind: output, shape index: {2}]
  %4 = xla_tuple %s1, %s2, %s3
  $region1: #{custom-call.11} parent=0
    #allocation0 [shape = 'u8[4096]{0}', space=vmem, size = 0x1000, scoped, tag = 'operand span for operand 0']
    #allocation1 [shape = 'u8[4096]{0}', space=vmem, size = 0x1000, scoped, tag = 'packed  for operand 0']
    #allocation2 [shape = 'u8[4096]{0}', space=vmem, size = 0x1000, scoped, tag = 'operand span for operand 1']
    #allocation3 [shape = 'u8[4096]{0}', space=vmem, size = 0x1000, scoped, tag = 'packed  for operand 1']
    #allocation4 [shape = 'u8[4096]{0}', space=vmem, size = 0x1000, scoped, tag = 'operand span for operand 2']
    #allocation5 [shape = 'u8[2048]{0}', space=vmem, size = 0x800, scoped, tag = 'packed  for operand 2']
    #allocation6 [shape = 's32[2]{0}', space=sflag, size = 0x8, scoped, tag = 'scoped memory for custom-call.11']
    #allocation7 [shape = 'u8[4096]{0}', space=vmem, size = 0x1000, scoped, tag = 'operand span for operand 3']
    #allocation8 [shape = 'u8[2048]{0}', space=vmem, size = 0x800, scoped, tag = 'packed  for operand 3']
    %5 = vsyncpa [#allocation6], 0
    %s6 = scalar_lea.sflag [#allocation6], 1
    %7 = vsyncpa %s6, 0
    loop: start=0, step=1, limit=4
    $region2: #{custom-call.11} parent=1 // loop_pre_header
      _
    $region3: #{custom-call.11} parent=1 // loop_header
      %s9 = sphi 0, %s13
      %p10 = scmp.ge.s32.totalorder %s9, 4
      %s21 = sphi 0, %s23
      %s24 = sphi 0, %s21
      %s25 = sphi 0, %s24
      %s41 = sphi 0, %s25
      %s49 = sphi 0, %s51
      %s52 = sphi 0, %s49
      %s53 = sphi 0, %s52
      %s69 = sphi 0, %s53
    $region4: #{custom-call.11} parent=1 // loop_header_branch
      %12 = sbr.rel (%p10) target = $region8
    $region5: #{custom-call.11} parent=1 // loop_body
      %s14 = ssub.s32 %s9, 1
      %s15 = ssub.s32 %s9, 2
      %s16 = sadd.s32 %s9, 1
      %s17 = sshrl.u32 %s9, 3
      %s18 = sshrl.u32 %s16, 3
      %s19 = ssub.s32 %s17, %s18
      %p20 = scmp.eq.s32.totalorder %s19, 0
      %s22 = sadd.s32 %s21, 1
      %s23 = scalar_select %p20, %s21, %s22
      %p26 = pneg %p20
      %p27 = scmp.eq.s32.totalorder %s9, 1
      %p28 = por %p26, %p27
      %p29 = scmp.ne.s32.totalorder %s21, %s24
      %p30 = scmp.eq.s32.totalorder %s9, 0
      %p31 = por %p29, %p30
      %p32 = scmp.ne.s32.totalorder %s21, %s24
      %p33 = scmp.eq.s32.totalorder %s14, 1
      %p34 = por %p32, %p33
      %p35 = scmp.ne.s32.totalorder %s24, %s25
      %p36 = scmp.eq.s32.totalorder %s14, 0
      %p37 = por %p35, %p36
      %p38 = scmp.ne.s32.totalorder %s24, %s25
      %p39 = scmp.eq.s32.totalorder %s15, 1
      %p40 = por %p38, %p39
      %p42 = scmp.ne.s32.totalorder %s25, %s41
      %p43 = scmp.eq.s32.totalorder %s15, 0
      %p44 = por %p42, %p43
      %s45 = sshrl.u32 %s9, 3
      %s46 = sshrl.u32 %s16, 3
      %s47 = ssub.s32 %s45, %s46
      %p48 = scmp.eq.s32.totalorder %s47, 0
      %s50 = sadd.s32 %s49, 1
      %s51 = scalar_select %p48, %s49, %s50
      %p54 = pneg %p48
      %p55 = scmp.eq.s32.totalorder %s9, 1
      %p56 = por %p54, %p55
      %p57 = scmp.ne.s32.totalorder %s49, %s52
      %p58 = scmp.eq.s32.totalorder %s9, 0
      %p59 = por %p57, %p58
      %p60 = scmp.ne.s32.totalorder %s49, %s52
      %p61 = scmp.eq.s32.totalorder %s14, 1
      %p62 = por %p60, %p61
      %p63 = scmp.ne.s32.totalorder %s52, %s53
      %p64 = scmp.eq.s32.totalorder %s14, 0
      %p65 = por %p63, %p64
      %p66 = scmp.ne.s32.totalorder %s52, %s53
      %p67 = scmp.eq.s32.totalorder %s15, 1
      %p68 = por %p66, %p67
      %p70 = scmp.ne.s32.totalorder %s53, %s69
      %p71 = scmp.eq.s32.totalorder %s15, 0
      %p72 = por %p70, %p71
      %p73 = scmp.le.s32.totalorder 1, %s9
      %p74 = scmp.lt.s32.totalorder %s9, 3
      %p75 = pnand %p73, %p74
      %p76 = pneg %p75
      // Predicated region
      $region9: #{custom-call.11} parent=5 // pred_check
        _
      $region10: #{custom-call.11} parent=5 // pred_check_branch
        %78 = sbr.rel (%p75) target = $region12
      $region11: #{custom-call.11} parent=5 // pred_region
        %s79 = ssub.s32 %s9, 1
      $region12: #{custom-call.11} parent=5 // pred_fallthru
        _
      %p80 = scmp.lt.s32.totalorder %s9, 2
      // Predicated region
      $region13: #{custom-call.11} parent=5 // pred_check
        %p81 = pneg %p80
      $region14: #{custom-call.11} parent=5 // pred_check_branch
        %83 = sbr.rel (%p81) target = $region16
      $region15: #{custom-call.11} parent=5 // pred_region
        %s84 = sand.u32 %s9, 1
        %s85 = sand.u32 %s9, 1
        %s86 = smul.addr %s85, 4
        %s87 = scalar_lea.vmem [#allocation1], %s86
        %s88 = smul.addr %s9, 4
        %s89 = scalar_lea.vmem %s0, %s88
        // Predicated region
        $region17: #{custom-call.11} parent=15 // pred_check
          _
        $region18: #{custom-call.11} parent=15 // pred_check_branch
          %91 = sbr.rel (0) target = $region20
        $region19: #{custom-call.11} parent=15 // pred_region
          // Predicated region
          $region21: #{custom-call.11} parent=19 // pred_check
            _
          $region22: #{custom-call.11} parent=19 // pred_check_branch
            %93 = sbr.rel target = $region24
          $region23: #{custom-call.11} parent=19 // pred_region
            // Predicated region
            $region36: #{custom-call.11} parent=23 // pred_check
              _
            $region37: #{custom-call.11} parent=23 // pred_check_branch
              %108 = sbr.rel (0) target = $region39
            $region38: #{custom-call.11} parent=23 // pred_region
              loop: start=0, step=1, limit=1
              $region40: #{custom-call.11} parent=38 // loop_pre_header
                _
              $region41: #{custom-call.11} parent=38 // loop_header
                %s111 = sphi 0, %s115
                %p112 = scmp.ge.s32.totalorder %s111, 1
                %s116 = sphi %s89, %s89
                %s117 = sphi %s87, %s87
              $region42: #{custom-call.11} parent=38 // loop_header_branch
                %114 = sbr.rel (%p112) target = $region46
              $region43: #{custom-call.11} parent=38 // loop_body
                %v118 = vld [vmem:[%s116] sm:$0xf]
                %119 = vst [vmem:[%s117] sm:$0xf] %v118
              $region44: #{custom-call.11} parent=38 // loop_footer
                %s115 = sadd.s32 1, %s111
              $region45: #{custom-call.11} parent=38 // loop_footer_branch
                %110 = sbr.rel target = $region41
              $region46: #{custom-call.11} parent=38 // loop_exit
                _
            $region39: #{custom-call.11} parent=23 // pred_fallthru
              _
          $region24: #{custom-call.11} parent=19 // pred_fallthru
            _
          // Predicated region
          $region25: #{custom-call.11} parent=19 // pred_check
            _
          $region26: #{custom-call.11} parent=19 // pred_check_branch
            %95 = sbr.rel (0) target = $region28
          $region27: #{custom-call.11} parent=19 // pred_region
            loop: start=0, step=1, limit=1
            $region29: #{custom-call.11} parent=27 // loop_pre_header
              _
            $region30: #{custom-call.11} parent=27 // loop_header
              %s98 = sphi 0, %s102
              %p99 = scmp.ge.s32.totalorder %s98, 1
              %s103 = sphi %s89, %s89
              %s104 = sphi %s87, %s87
            $region31: #{custom-call.11} parent=27 // loop_header_branch
              %101 = sbr.rel (%p99) target = $region35
            $region32: #{custom-call.11} parent=27 // loop_body
              %v105 = vld [vmem:[%s103] sm:$0xf]
              %106 = vst [vmem:[%s104] sm:$0xf] %v105
            $region33: #{custom-call.11} parent=27 // loop_footer
              %s102 = sadd.s32 1, %s98
            $region34: #{custom-call.11} parent=27 // loop_footer_branch
              %97 = sbr.rel target = $region30
            $region35: #{custom-call.11} parent=27 // loop_exit
              _
          $region28: #{custom-call.11} parent=19 // pred_fallthru
            _
        $region20: #{custom-call.11} parent=15 // pred_fallthru
          _
        %120 = vnop
      $region16: #{custom-call.11} parent=5 // pred_fallthru
        _
      %p121 = scmp.le.s32.totalorder 1, %s9
      %p122 = scmp.lt.s32.totalorder %s9, 3
      %p123 = pnand %p121, %p122
      %p124 = pneg %p123
      // Predicated region
      $region47: #{custom-call.11} parent=5 // pred_check
        _
      $region48: #{custom-call.11} parent=5 // pred_check_branch
        %126 = sbr.rel (%p123) target = $region50
      $region49: #{custom-call.11} parent=5 // pred_region
        #allocation9 [shape = 's32[3,128]{1,0}', space=vmem, size = 0x1000, scoped, tag = 'scratch for permutations']
        %s127 = ssub.s32 %s9, 1
        %s128 = sand.u32 %s14, 1
        %s129 = sand.u32 %s14, 1
        %s130 = smul.addr %s129, 4
        %s131 = scalar_lea.vmem [#allocation1], %s130
        %s132 = sand.u32 %s14, 1
        %s133 = sand.u32 %s14, 1
        %s134 = smul.addr %s133, 4
        %s135 = scalar_lea.vmem [#allocation1], %s134
        %s136 = sand.u32 %s14, 1
        %s137 = sand.u32 %s14, 1
        %s138 = smul.addr %s137, 4
        %s139 = scalar_lea.vmem [#allocation3], %s138
        %p140 = pneg %p37
        %p141 = pneg %p34
        %s142 = sand.u32 %s24, 1
        %s143 = scalar_lea.sflag [#allocation6], %s142
        %s144 = sand.u32 %s24, 1
        %s145 = smul.addr %s144, 2
        %s146 = scalar_lea.vmem [#allocation5], %s145
        %p147 = pneg %p65
        %p148 = pneg %p62
        %s149 = sand.u32 %s52, 1
        %s150 = sand.u32 %s52, 1
        %s151 = smul.addr %s150, 2
        %s152 = scalar_lea.vmem [#allocation8], %s151
        %s154 = sshllo.u32 0, 4
        %v155 = vld [vmem:[%s135] sm:%s154]
        %156 = vst [vmem:[#allocation0] sm:%s154] %v155
        %s157 = sshrl.u32 %s14, 3
        %s158 = sshrl.u32 %s14, 3
        %v159 = vld [vmem:[#allocation0] sm:$0xff]
        %160 = vst [vmem:[#allocation2] sm:$0xff] %v159
        %s161 = sand.u32 %s14, 7
        %s162 = scalar_lea.vmem [#allocation4], %s161
        %s163 = sand.u32 %s14, 7
        %s164 = scalar_lea.vmem [#allocation7], %s163
        %165 = vst [vmem:[%s162] sm:$0x1] 0
        %v166 = vlaneseq
        %v167 = vshrl.u32 %v166, 7
        %v168 = vmov %v167
        %170 = vst [vmem:[#allocation9] sm:$0xff] %v168
        loop: start=0, step=1, limit=3
        $region52: #{custom-call.11} parent=49 // loop_pre_header
          _
        $region53: #{custom-call.11} parent=49 // loop_header
          %s172 = sphi 0, %s176
          %p173 = scmp.ge.s32.totalorder %s172, 3
        $region54: #{custom-call.11} parent=49 // loop_header_branch
          %175 = sbr.rel (%p173) target = $region58
        $region55: #{custom-call.11} parent=49 // loop_body
          %v177 = vstv %s172
          %v178 = vlaneseq
          %v179 = vshrl.u32 %v178, 7
          %v180 = vmov %v179
          %v181 = vld [vmem:[#allocation2] sm:$0xff]
          %v182 = vand.u32 2147483647, %v181
          %v184 = vstv %s172
          %vm185 = vcmp.ge.s32.totalorder %v180, %v184
          %vm186 = vcmp.lt.s32.totalorder %v180, 3
          %vm187 = vmand %vm185, %vm186
          %vm188 = vcmp.lt.f32.partialorder -inf, %v182
          %vm189 = vmand %vm187, %vm188
          %v190 = vsel %vm189, %v180, %v177
          %v191 = vsel %vm189, %v182, -inf
          %v192 = vrot.slane %v191, 1
          %v193 = vrot.slane %v190, 1
          %vm194 = vcmp.ge.f32.partialorder %v192, %v191
          %v195 = vsel %vm194, %v192, %v191
          %v196 = vsel %vm194, %v193, %v190
          %v197 = vrot.slane %v192, 1
          %v198 = vrot.slane %v193, 1
          %vm199 = vcmp.ge.f32.partialorder %v197, %v195
          %v200 = vsel %vm199, %v197, %v195
          %v201 = vsel %vm199, %v198, %v196
          %v202 = vrot.slane %v197, 1
          %v203 = vrot.slane %v198, 1
          %vm204 = vcmp.ge.f32.partialorder %v202, %v200
          %v205 = vsel %vm204, %v202, %v200
          %v206 = vsel %vm204, %v203, %v201
          %v207 = vrot.slane %v202, 1
          %v208 = vrot.slane %v203, 1
          %vm209 = vcmp.ge.f32.partialorder %v207, %v205
          %v210 = vsel %vm209, %v207, %v205
          %v211 = vsel %vm209, %v208, %v206
          %v212 = vrot.slane %v207, 1
          %v213 = vrot.slane %v208, 1
          %vm214 = vcmp.ge.f32.partialorder %v212, %v210
          %v215 = vsel %vm214, %v212, %v210
          %v216 = vsel %vm214, %v213, %v211
          %v217 = vrot.slane %v212, 1
          %v218 = vrot.slane %v213, 1
          %vm219 = vcmp.ge.f32.partialorder %v217, %v215
          %v220 = vsel %vm219, %v217, %v215
          %v221 = vsel %vm219, %v218, %v216
          %v222 = vrot.slane %v217, 1
          %v223 = vrot.slane %v218, 1
          %vm224 = vcmp.ge.f32.partialorder %v222, %v220
          %v225 = vsel %vm224, %v222, %v220
          %v226 = vsel %vm224, %v223, %v221
          %s227 = ssub.s32 128, %s172
          %228 = vrot.lane.b32.xlu0 %v226, %s227
          %v229 = vpop.permute.xlu0 %228
          %s230 = vtos %v229
          %v231 = vstv %s172
          %v232 = vlaneseq
          %v233 = vand.u32 %v232, 127
          %vm234 = vcmp.eq.s32.totalorder %v233, %v231
          %v235 = vstv %s230
          %v236 = vld [vmem:[%s162] ss:$0 sm:$0xff]
          %v237 = vsel %vm234, %v235, %v236
          %238 = vst [vmem:[%s162] sm:$0x1] %v237
          %s239 = scalar_lea.vmem [#allocation2], %s172
          %s240 = scalar_lea.vmem [#allocation2], %s230
          %v241 = vld [vmem:[%s239] ss:$0 sm:$0xff]
          %v242 = vld [vmem:[%s240] ss:$0 sm:$0xff]
          %243 = vst [vmem:[%s240] sm:$0x1] %v241
          %244 = vst [vmem:[%s239] sm:$0x1] %v242
          %s245 = scalar_lea.vmem [#allocation9], %s172
          %s246 = scalar_lea.vmem [#allocation9], %s230
          %v247 = vld [vmem:[%s245] ss:$0 sm:$0xff]
          %v248 = vld [vmem:[%s246] ss:$0 sm:$0xff]
          %249 = vst [vmem:[%s246] sm:$0x1] %v247
          %250 = vst [vmem:[%s245] sm:$0x1] %v248
          %vm251 = vcmp.ne.f32.partialorder %v242, 0.0
          %vm252 = vmand %vm234, %vm251
          %v253 = vsel %vm252, %v242, 1.0
          %v254 = vlaneseq
          %v255 = vand.u32 %v254, 127
          %v256 = vstv %s172
          %vm257 = vcmp.gt.s32.totalorder %v255, %v256
          %v258 = vsel %vm257, %v242, 0.0
          %v259 = vlaneseq
          %v260 = vshrl.u32 %v259, 7
          %v261 = vmov %v260
          %v262 = vld [vmem:[#allocation2] sm:$0xff]
          %v264 = vstv %s172
          %vm265 = vcmp.gt.s32.totalorder %v261, %v264
          %v266 = vsel %vm265, %v253, 1.0
          %v267 = vrcp.pop %v266
          %v268 = vmul.f32 %v262, %v267
          %vm269 = vmand %vm265, %vm234
          %v270 = vsel %vm269, %v268, 0.0
          %271 = vadd.xlane.f32.xlu0 %v270
          %v272 = vpop.xlane.xlu0 %271
          %v273 = vmul.f32 %v272, %v258
          %v274 = vsub.f32 %v268, %v273
          %275 = vst [vmem:[#allocation2] sm:$0xff] %v274
        $region56: #{custom-call.11} parent=49 // loop_footer
          %s176 = sadd.s32 1, %s172
        $region57: #{custom-call.11} parent=49 // loop_footer_branch
          %171 = sbr.rel target = $region53
        $region58: #{custom-call.11} parent=49 // loop_exit
          _
        %v276 = vld [vmem:[#allocation9] sm:$0xff]
        %s277 = scalar_lea.vmem [#allocation9], 8
        %s278 = scalar_lea.vmem [#allocation9], 16
        %s279 = scalar_lea.vmem [#allocation9], 24
        %s280 = scalar_lea.vmem [#allocation9], 32
        %s281 = scalar_lea.vmem [#allocation9], 40
        %s282 = scalar_lea.vmem [#allocation9], 48
        %s283 = scalar_lea.vmem [#allocation9], 56
        %s284 = scalar_lea.vmem [#allocation9], 64
        %s285 = scalar_lea.vmem [#allocation9], 72
        %s286 = scalar_lea.vmem [#allocation9], 80
        %s287 = scalar_lea.vmem [#allocation9], 88
        %s288 = scalar_lea.vmem [#allocation9], 96
        %s289 = scalar_lea.vmem [#allocation9], 104
        %s290 = scalar_lea.vmem [#allocation9], 112
        %s291 = scalar_lea.vmem [#allocation9], 120
        %292 = vxpose.xlu0.b32.start [1/16] %v276, 128
        %293 = vxpose.xlu0.b32.cont [2/16] 0, 128
        %294 = vxpose.xlu0.b32.cont [3/16] 0, 128
        %295 = vxpose.xlu0.b32.cont [4/16] 0, 128
        %296 = vxpose.xlu0.b32.cont [5/16] 0, 128
        %297 = vxpose.xlu0.b32.cont [6/16] 0, 128
        %298 = vxpose.xlu0.b32.cont [7/16] 0, 128
        %299 = vxpose.xlu0.b32.cont [8/16] 0, 128
        %300 = vxpose.xlu0.b32.cont [9/16] 0, 128
        %301 = vxpose.xlu0.b32.cont [10/16] 0, 128
        %302 = vxpose.xlu0.b32.cont [11/16] 0, 128
        %303 = vxpose.xlu0.b32.cont [12/16] 0, 128
        %304 = vxpose.xlu0.b32.cont [13/16] 0, 128
        %305 = vxpose.xlu0.b32.cont [14/16] 0, 128
        %306 = vxpose.xlu0.b32.cont [15/16] 0, 128
        %307 = vxpose.xlu0.b32.end [16/16] 0, 128
        %v308 = vpop.trf.xlu0
        %v309 = vpop.trf.xlu0
        %v310 = vpop.trf.xlu0
        %v311 = vpop.trf.xlu0
        %v312 = vpop.trf.xlu0
        %v313 = vpop.trf.xlu0
        %v314 = vpop.trf.xlu0
        %v315 = vpop.trf.xlu0
        %v316 = vpop.trf.xlu0
        %v317 = vpop.trf.xlu0
        %v318 = vpop.trf.xlu0
        %v319 = vpop.trf.xlu0
        %v320 = vpop.trf.xlu0
        %v321 = vpop.trf.xlu0
        %v322 = vpop.trf.xlu0
        %v323 = vpop.trf.xlu0
        %324 = vst [vmem:[%s164] sm:$0x1] %v308
        %s326 = sshllo.u32 0, 4
        %v328 = vld [vmem:[#allocation2] sm:%s326]
        %s329 = sshllo.u32 0, 4
        %330 = vst [vmem:[%s139] sm:%s329] %v328
        %s332 = sshllo.u32 0, 2
        %v334 = vld [vmem:[#allocation4] sm:%s332]
        %s335 = sshllo.u32 0, 2
        %336 = vst [vmem:[%s146] sm:%s335] %v334
        %s338 = sshllo.u32 0, 2
        %v340 = vld [vmem:[#allocation7] sm:%s338]
        %s341 = sshllo.u32 0, 2
        %342 = vst [vmem:[%s152] sm:%s341] %v340
        %s343 = sand.u32 %s14, 1
        %s344 = sand.u32 %s14, 1
        %s345 = smul.addr %s344, 4
        %s346 = scalar_lea.vmem [#allocation3], %s345
        %s347 = sand.u32 %s24, 1
        %s348 = scalar_lea.sflag [#allocation6], %s347
        %s349 = sand.u32 %s24, 1
        %s350 = smul.addr %s349, 2
        %s351 = scalar_lea.vmem [#allocation5], %s350
        %s352 = sand.u32 %s52, 1
        %s353 = sand.u32 %s52, 1
        %s354 = smul.addr %s353, 2
        %s355 = scalar_lea.vmem [#allocation8], %s354
        %s356 = smul.addr %s14, 4
        %s357 = scalar_lea.vmem %s1, %s356
        // Predicated region
        $region59: #{custom-call.11} parent=49 // pred_check
          _
        $region60: #{custom-call.11} parent=49 // pred_check_branch
          %359 = sbr.rel (0) target = $region62
        $region61: #{custom-call.11} parent=49 // pred_region
          // Predicated region
          $region63: #{custom-call.11} parent=61 // pred_check
            _
          $region64: #{custom-call.11} parent=61 // pred_check_branch
            %361 = sbr.rel target = $region66
          $region65: #{custom-call.11} parent=61 // pred_region
            // Predicated region
            $region78: #{custom-call.11} parent=65 // pred_check
              _
            $region79: #{custom-call.11} parent=65 // pred_check_branch
              %376 = sbr.rel (0) target = $region81
            $region80: #{custom-call.11} parent=65 // pred_region
              loop: start=0, step=1, limit=1
              $region82: #{custom-call.11} parent=80 // loop_pre_header
                _
              $region83: #{custom-call.11} parent=80 // loop_header
                %s379 = sphi 0, %s383
                %p380 = scmp.ge.s32.totalorder %s379, 1
                %s384 = sphi %s346, %s346
                %s385 = sphi %s357, %s357
              $region84: #{custom-call.11} parent=80 // loop_header_branch
                %382 = sbr.rel (%p380) target = $region88
              $region85: #{custom-call.11} parent=80 // loop_body
                %v386 = vld [vmem:[%s384] sm:$0xf]
                %387 = vst [vmem:[%s385] sm:$0xf] %v386
              $region86: #{custom-call.11} parent=80 // loop_footer
                %s383 = sadd.s32 1, %s379
              $region87: #{custom-call.11} parent=80 // loop_footer_branch
                %378 = sbr.rel target = $region83
              $region88: #{custom-call.11} parent=80 // loop_exit
                _
            $region81: #{custom-call.11} parent=65 // pred_fallthru
              _
          $region66: #{custom-call.11} parent=61 // pred_fallthru
            _
          // Predicated region
          $region67: #{custom-call.11} parent=61 // pred_check
            _
          $region68: #{custom-call.11} parent=61 // pred_check_branch
            %363 = sbr.rel (0) target = $region70
          $region69: #{custom-call.11} parent=61 // pred_region
            loop: start=0, step=1, limit=1
            $region71: #{custom-call.11} parent=69 // loop_pre_header
              _
            $region72: #{custom-call.11} parent=69 // loop_header
              %s366 = sphi 0, %s370
              %p367 = scmp.ge.s32.totalorder %s366, 1
              %s371 = sphi %s346, %s346
              %s372 = sphi %s357, %s357
            $region73: #{custom-call.11} parent=69 // loop_header_branch
              %369 = sbr.rel (%p367) target = $region77
            $region74: #{custom-call.11} parent=69 // loop_body
              %v373 = vld [vmem:[%s371] sm:$0xf]
              %374 = vst [vmem:[%s372] sm:$0xf] %v373
            $region75: #{custom-call.11} parent=69 // loop_footer
              %s370 = sadd.s32 1, %s366
            $region76: #{custom-call.11} parent=69 // loop_footer_branch
              %365 = sbr.rel target = $region72
            $region77: #{custom-call.11} parent=69 // loop_exit
              _
          $region70: #{custom-call.11} parent=61 // pred_fallthru
            _
        $region62: #{custom-call.11} parent=49 // pred_fallthru
          _
        %388 = vnop
        // Predicated region
        $region89: #{custom-call.11} parent=49 // pred_check
          %p389 = pneg %p34
        $region90: #{custom-call.11} parent=49 // pred_check_branch
          %391 = sbr.rel (%p389) target = $region92
        $region91: #{custom-call.11} parent=49 // pred_region
          %s392 = sshrl.u32 %s14, 3
          %s394 = ssub.s32 32, 32
          %395 = vsyncadd %s348, %s394
          %s396 = smul.addr %s392, 32
          %s397 = scalar_lea.hbm %s2, %s396
          %s399 = sshll.u32 %s351, 4
          %s400 = int_to_ptr.vmem [resolvable:$true] %s399
          %402 = dma.vmem_to_hbm [thread:$0]  %s400, 32, %s397, %s348
        $region92: #{custom-call.11} parent=49 // pred_fallthru
          _
        // Predicated region
        $region93: #{custom-call.11} parent=49 // pred_check
          %p403 = pneg %p62
        $region94: #{custom-call.11} parent=49 // pred_check_branch
          %405 = sbr.rel (%p403) target = $region96
        $region95: #{custom-call.11} parent=49 // pred_region
          %s406 = sshrl.u32 %s14, 3
          %s407 = smul.addr %s406, 2
          %s408 = scalar_lea.vmem %s3, %s407
          // Predicated region
          $region97: #{custom-call.11} parent=95 // pred_check
            _
          $region98: #{custom-call.11} parent=95 // pred_check_branch
            %410 = sbr.rel (0) target = $region100
          $region99: #{custom-call.11} parent=95 // pred_region
            // Predicated region
            $region101: #{custom-call.11} parent=99 // pred_check
              _
            $region102: #{custom-call.11} parent=99 // pred_check_branch
              %412 = sbr.rel target = $region104
            $region103: #{custom-call.11} parent=99 // pred_region
              // Predicated region
              $region116: #{custom-call.11} parent=103 // pred_check
                _
              $region117: #{custom-call.11} parent=103 // pred_check_branch
                %427 = sbr.rel (0) target = $region119
              $region118: #{custom-call.11} parent=103 // pred_region
                loop: start=0, step=1, limit=1
                $region120: #{custom-call.11} parent=118 // loop_pre_header
                  _
                $region121: #{custom-call.11} parent=118 // loop_header
                  %s430 = sphi 0, %s434
                  %p431 = scmp.ge.s32.totalorder %s430, 1
                  %s435 = sphi %s355, %s355
                  %s436 = sphi %s408, %s408
                $region122: #{custom-call.11} parent=118 // loop_header_branch
                  %433 = sbr.rel (%p431) target = $region126
                $region123: #{custom-call.11} parent=118 // loop_body
                  %v437 = vld [vmem:[%s435] sm:$0x3]
                  %438 = vst [vmem:[%s436] sm:$0x3] %v437
                $region124: #{custom-call.11} parent=118 // loop_footer
                  %s434 = sadd.s32 1, %s430
                $region125: #{custom-call.11} parent=118 // loop_footer_branch
                  %429 = sbr.rel target = $region121
                $region126: #{custom-call.11} parent=118 // loop_exit
                  _
              $region119: #{custom-call.11} parent=103 // pred_fallthru
                _
            $region104: #{custom-call.11} parent=99 // pred_fallthru
              _
            // Predicated region
            $region105: #{custom-call.11} parent=99 // pred_check
              _
            $region106: #{custom-call.11} parent=99 // pred_check_branch
              %414 = sbr.rel (0) target = $region108
            $region107: #{custom-call.11} parent=99 // pred_region
              loop: start=0, step=1, limit=1
              $region109: #{custom-call.11} parent=107 // loop_pre_header
                _
              $region110: #{custom-call.11} parent=107 // loop_header
                %s417 = sphi 0, %s421
                %p418 = scmp.ge.s32.totalorder %s417, 1
                %s422 = sphi %s355, %s355
                %s423 = sphi %s408, %s408
              $region111: #{custom-call.11} parent=107 // loop_header_branch
                %420 = sbr.rel (%p418) target = $region115
              $region112: #{custom-call.11} parent=107 // loop_body
                %v424 = vld [vmem:[%s422] sm:$0x3]
                %425 = vst [vmem:[%s423] sm:$0x3] %v424
              $region113: #{custom-call.11} parent=107 // loop_footer
                %s421 = sadd.s32 1, %s417
              $region114: #{custom-call.11} parent=107 // loop_footer_branch
                %416 = sbr.rel target = $region110
              $region115: #{custom-call.11} parent=107 // loop_exit
                _
            $region108: #{custom-call.11} parent=99 // pred_fallthru
              _
          $region100: #{custom-call.11} parent=95 // pred_fallthru
            _
          %439 = vnop
        $region96: #{custom-call.11} parent=49 // pred_fallthru
          _
      $region50: #{custom-call.11} parent=5 // pred_fallthru
        _
      %p440 = scmp.le.s32.totalorder 2, %s9
      // Predicated region
      $region127: #{custom-call.11} parent=5 // pred_check
        %p441 = pneg %p440
      $region128: #{custom-call.11} parent=5 // pred_check_branch
        %443 = sbr.rel (%p441) target = $region130
      $region129: #{custom-call.11} parent=5 // pred_region
        %s444 = ssub.s32 %s9, 2
        %s445 = sand.u32 %s15, 1
        %s446 = sand.u32 %s15, 1
        %s447 = smul.addr %s446, 4
        %s448 = scalar_lea.vmem [#allocation3], %s447
        // Predicated region
        $region131: #{custom-call.11} parent=129 // pred_check
          %p449 = pneg %p40
        $region132: #{custom-call.11} parent=129 // pred_check_branch
          %451 = sbr.rel (%p449) target = $region134
        $region133: #{custom-call.11} parent=129 // pred_region
          %s452 = sand.u32 %s25, 1
          %s453 = scalar_lea.sflag [#allocation6], %s452
          %s454 = sand.u32 %s25, 1
          %s455 = smul.addr %s454, 2
          %s456 = scalar_lea.vmem [#allocation5], %s455
          %457 = dma.done %s453, 32
        $region134: #{custom-call.11} parent=129 // pred_fallthru
          _
        // Predicated region
        $region135: #{custom-call.11} parent=129 // pred_check
          %p458 = pneg %p68
        $region136: #{custom-call.11} parent=129 // pred_check_branch
          %460 = sbr.rel (%p458) target = $region138
        $region137: #{custom-call.11} parent=129 // pred_region
          %s461 = sand.u32 %s53, 1
          %s462 = sand.u32 %s53, 1
          %s463 = smul.addr %s462, 2
          %s464 = scalar_lea.vmem [#allocation8], %s463
        $region138: #{custom-call.11} parent=129 // pred_fallthru
          _
      $region130: #{custom-call.11} parent=5 // pred_fallthru
        _
    $region6: #{custom-call.11} parent=1 // loop_footer
      %s13 = sadd.s32 1, %s9
    $region7: #{custom-call.11} parent=1 // loop_footer_branch
      %8 = sbr.rel target = $region3
    $region8: #{custom-call.11} parent=1 // loop_exit
      _
    %465 = vsyncpa [#allocation6], 1
    %s466 = scalar_lea.sflag [#allocation6], 1
    %467 = vsyncpa %s466, 1

// kernel: custom-call.13
$region0: #{custom-call.13}
  %s0 = inlined_call_operand.vmem [shape: f32[2,1,3,3], index: 0, kind: input, shape index: {}]
  %s1 = inlined_call_operand.vmem [shape: f32[2,1,3,3], index: 1, kind: output, shape index: {}]
  $region1: #{custom-call.13} parent=0
    #allocation0 [shape = 'u8[4096]{0}', space=vmem, size = 0x1000, scoped, tag = 'operand span for operand 0']
    #allocation1 [shape = 'u8[4096]{0}', space=vmem, size = 0x1000, scoped, tag = 'packed  for operand 0']
    #allocation2 [shape = 'u8[4096]{0}', space=vmem, size = 0x1000, scoped, tag = 'operand span for operand 1']
    #allocation3 [shape = 'u8[4096]{0}', space=vmem, size = 0x1000, scoped, tag = 'packed  for operand 1']
    loop: start=0, step=1, limit=4
    $region2: #{custom-call.13} parent=1 // loop_pre_header
      _
    $region3: #{custom-call.13} parent=1 // loop_header
      %s3 = sphi 0, %s7
      %p4 = scmp.ge.s32.totalorder %s3, 4
      %s10 = sphi 0, %s36
      %s11 = sphi 0, %s32
      %s12 = sphi 0, %s28
      %s13 = sphi 0, %s24
      %s14 = sphi 0, %s10
      %s15 = sphi 0, %s11
      %s16 = sphi 0, %s12
      %s17 = sphi 0, %s13
      %s18 = sphi 0, %s14
      %s19 = sphi 0, %s15
      %s20 = sphi 0, %s16
      %s21 = sphi 0, %s17
    $region4: #{custom-call.13} parent=1 // loop_header_branch
      %6 = sbr.rel (%p4) target = $region8
    $region5: #{custom-call.13} parent=1 // loop_body
      %s8 = ssub.s32 %s3, 1
      %s9 = ssub.s32 %s3, 2
      %s22 = sadd.s32 1, %s13
      %p23 = scmp.ge.s32.totalorder %s22, 1
      %s24 = scalar_select %p23, 0, %s22
      %s25 = sadd.s32 1, %s12
      %s26 = scalar_select %p23, %s25, %s12
      %p27 = scmp.ge.s32.totalorder %s26, 1
      %s28 = scalar_select %p27, 0, %s26
      %s29 = sadd.s32 1, %s11
      %s30 = scalar_select %p27, %s29, %s11
      %p31 = scmp.ge.s32.totalorder %s30, 1
      %s32 = scalar_select %p31, 0, %s30
      %s33 = sadd.s32 1, %s10
      %s34 = scalar_select %p31, %s33, %s10
      %p35 = scmp.ge.s32.totalorder %s34, 2
      %s36 = scalar_select %p35, 0, %s34
      %p37 = scmp.le.s32.totalorder 1, %s3
      %p38 = scmp.lt.s32.totalorder %s3, 3
      %p39 = pnand %p37, %p38
      %p40 = pneg %p39
      // Predicated region
      $region9: #{custom-call.13} parent=5 // pred_check
        _
      $region10: #{custom-call.13} parent=5 // pred_check_branch
        %42 = sbr.rel (%p39) target = $region12
      $region11: #{custom-call.13} parent=5 // pred_region
        %s43 = ssub.s32 %s3, 1
      $region12: #{custom-call.13} parent=5 // pred_fallthru
        _
      %p44 = scmp.lt.s32.totalorder %s3, 2
      // Predicated region
      $region13: #{custom-call.13} parent=5 // pred_check
        %p45 = pneg %p44
      $region14: #{custom-call.13} parent=5 // pred_check_branch
        %47 = sbr.rel (%p45) target = $region16
      $region15: #{custom-call.13} parent=5 // pred_region
        %s48 = sand.u32 %s3, 1
        %s49 = sand.u32 %s3, 1
        %s50 = smul.addr %s49, 4
        %s51 = scalar_lea.vmem [#allocation1], %s50
        %s52 = sadd.s32 %s13, %s12
        %s53 = sadd.s32 %s52, %s11
        %s54 = sadd.s32 %s53, %s10
        %s55 = smul.addr %s54, 4
        %s56 = scalar_lea.vmem %s0, %s55
        // Predicated region
        $region17: #{custom-call.13} parent=15 // pred_check
          _
        $region18: #{custom-call.13} parent=15 // pred_check_branch
          %58 = sbr.rel (0) target = $region20
        $region19: #{custom-call.13} parent=15 // pred_region
          // Predicated region
          $region21: #{custom-call.13} parent=19 // pred_check
            _
          $region22: #{custom-call.13} parent=19 // pred_check_branch
            %60 = sbr.rel target = $region24
          $region23: #{custom-call.13} parent=19 // pred_region
            // Predicated region
            $region36: #{custom-call.13} parent=23 // pred_check
              _
            $region37: #{custom-call.13} parent=23 // pred_check_branch
              %75 = sbr.rel (0) target = $region39
            $region38: #{custom-call.13} parent=23 // pred_region
              loop: start=0, step=1, limit=1
              $region40: #{custom-call.13} parent=38 // loop_pre_header
                _
              $region41: #{custom-call.13} parent=38 // loop_header
                %s78 = sphi 0, %s82
                %p79 = scmp.ge.s32.totalorder %s78, 1
                %s83 = sphi %s56, %s56
                %s84 = sphi %s51, %s51
              $region42: #{custom-call.13} parent=38 // loop_header_branch
                %81 = sbr.rel (%p79) target = $region46
              $region43: #{custom-call.13} parent=38 // loop_body
                %v85 = vld [vmem:[%s83] sm:$0xf]
                %86 = vst [vmem:[%s84] sm:$0xf] %v85
              $region44: #{custom-call.13} parent=38 // loop_footer
                %s82 = sadd.s32 1, %s78
              $region45: #{custom-call.13} parent=38 // loop_footer_branch
                %77 = sbr.rel target = $region41
              $region46: #{custom-call.13} parent=38 // loop_exit
                _
            $region39: #{custom-call.13} parent=23 // pred_fallthru
              _
          $region24: #{custom-call.13} parent=19 // pred_fallthru
            _
          // Predicated region
          $region25: #{custom-call.13} parent=19 // pred_check
            _
          $region26: #{custom-call.13} parent=19 // pred_check_branch
            %62 = sbr.rel (0) target = $region28
          $region27: #{custom-call.13} parent=19 // pred_region
            loop: start=0, step=1, limit=1
            $region29: #{custom-call.13} parent=27 // loop_pre_header
              _
            $region30: #{custom-call.13} parent=27 // loop_header
              %s65 = sphi 0, %s69
              %p66 = scmp.ge.s32.totalorder %s65, 1
              %s70 = sphi %s56, %s56
              %s71 = sphi %s51, %s51
            $region31: #{custom-call.13} parent=27 // loop_header_branch
              %68 = sbr.rel (%p66) target = $region35
            $region32: #{custom-call.13} parent=27 // loop_body
              %v72 = vld [vmem:[%s70] sm:$0xf]
              %73 = vst [vmem:[%s71] sm:$0xf] %v72
            $region33: #{custom-call.13} parent=27 // loop_footer
              %s69 = sadd.s32 1, %s65
            $region34: #{custom-call.13} parent=27 // loop_footer_branch
              %64 = sbr.rel target = $region30
            $region35: #{custom-call.13} parent=27 // loop_exit
              _
          $region28: #{custom-call.13} parent=19 // pred_fallthru
            _
        $region20: #{custom-call.13} parent=15 // pred_fallthru
          _
        %87 = vnop
      $region16: #{custom-call.13} parent=5 // pred_fallthru
        _
      %p88 = scmp.le.s32.totalorder 1, %s3
      %p89 = scmp.lt.s32.totalorder %s3, 3
      %p90 = pnand %p88, %p89
      %p91 = pneg %p90
      // Predicated region
      $region47: #{custom-call.13} parent=5 // pred_check
        _
      $region48: #{custom-call.13} parent=5 // pred_check_branch
        %93 = sbr.rel (%p90) target = $region50
      $region49: #{custom-call.13} parent=5 // pred_region
        #allocation4 [shape = 'f32[3,3]{1,0}', space=vmem, size = 0x1000, scoped, tag = 'rescaled input a']
        %s94 = ssub.s32 %s3, 1
        %s95 = sand.u32 %s8, 1
        %s96 = sand.u32 %s8, 1
        %s97 = smul.addr %s96, 4
        %s98 = scalar_lea.vmem [#allocation1], %s97
        %s99 = sand.u32 %s8, 1
        %s100 = sand.u32 %s8, 1
        %s101 = smul.addr %s100, 4
        %s102 = scalar_lea.vmem [#allocation1], %s101
        %s103 = sand.u32 %s8, 1
        %s104 = sand.u32 %s8, 1
        %s105 = smul.addr %s104, 4
        %s106 = scalar_lea.vmem [#allocation3], %s105
        %s108 = sshllo.u32 0, 4
        %v109 = vld [vmem:[%s102] sm:%s108]
        %110 = vst [vmem:[#allocation0] sm:%s108] %v109
        %v111 = vlaneseq
        %v112 = vand.u32 %v111, 127
        %vm113 = vcmp.lt.s32.totalorder %v112, 3
        %v114 = vlaneseq
        %v115 = vshrl.u32 %v114, 7
        %vm117 = vcmp.eq.s32.totalorder %v115, %v112
        %v118 = vld [vmem:[#allocation0] sm:$0xff]
        %v119 = vsel %vm117, %v118, 0.0
        %120 = vadd.xlane.f32.xlu0 %v119
        %v121 = vpop.xlane.xlu0 %120
        %vm122 = vcmp.ge.s32.totalorder %v115, %v112
        %vm123 = vmand %vm122, %vm113
        %v124 = vsel %vm123, %v118, 0.0
        %v125 = vrcp.pop %v121
        %v126 = vmul.f32 %v124, %v125
        %127 = vst [vmem:[#allocation4] sm:$0xff] %v126
        %v128 = vlaneseq
        %v129 = vand.u32 %v128, 127
        %v130 = vlaneseq
        %v131 = vshrl.u32 %v130, 7
        %vm133 = vcmp.eq.s32.totalorder %v129, %v131
        %v134 = vlaneseq
        %v135 = vand.u32 %v134, 127
        %vm136 = vcmp.eq.s32.totalorder %v135, 0
        %v137 = vsel %vm136, 1.0, -1.0
        %v138 = vsel %vm133, %v137, 0.0
        %s139 = scalar_lea.vmem [#allocation4], 1
        %v140 = vld [vmem:[%s139] ss:$0 sm:$0xff]
        %v141 = vxor.u32 %v140, 2147483648
        %v142 = vlaneseq
        %v143 = vand.u32 %v142, 127
        %vm144 = vcmp.eq.s32.totalorder %v143, 1
        %v145 = vmul.f32 %v141, %v138
        %146 = vadd.xlane.f32.xlu0 %v145
        %v147 = vpop.xlane.xlu0 %146
        %v148 = vsel %vm144, %v147, %v138
        %s149 = scalar_lea.vmem [#allocation4], 2
        %v150 = vld [vmem:[%s149] ss:$0 sm:$0xff]
        %v151 = vxor.u32 %v150, 2147483648
        %v152 = vlaneseq
        %v153 = vand.u32 %v152, 127
        %vm154 = vcmp.eq.s32.totalorder %v153, 2
        %v155 = vmul.f32 %v151, %v148
        %156 = vadd.xlane.f32.xlu0 %v155
        %v157 = vpop.xlane.xlu0 %156
        %v158 = vsel %vm154, %v157, %v148
        %v159 = vrcp.pop %v121
        %v160 = vmul.f32 %v158, %v159
        %vm161 = vweird.f32 %v121
        %v162 = vsel %vm161, %v158, %v160
        %163 = vst [vmem:[#allocation2] sm:$0xff] %v162
        %s165 = sshllo.u32 0, 4
        %v167 = vld [vmem:[#allocation2] sm:%s165]
        %s168 = sshllo.u32 0, 4
        %169 = vst [vmem:[%s106] sm:%s168] %v167
        %s170 = sand.u32 %s8, 1
        %s171 = sand.u32 %s8, 1
        %s172 = smul.addr %s171, 4
        %s173 = scalar_lea.vmem [#allocation3], %s172
        %s174 = sadd.s32 %s17, %s16
        %s175 = sadd.s32 %s174, %s15
        %s176 = sadd.s32 %s175, %s14
        %s177 = smul.addr %s176, 4
        %s178 = scalar_lea.vmem %s1, %s177
        // Predicated region
        $region51: #{custom-call.13} parent=49 // pred_check
          _
        $region52: #{custom-call.13} parent=49 // pred_check_branch
          %180 = sbr.rel (0) target = $region54
        $region53: #{custom-call.13} parent=49 // pred_region
          // Predicated region
          $region55: #{custom-call.13} parent=53 // pred_check
            _
          $region56: #{custom-call.13} parent=53 // pred_check_branch
            %182 = sbr.rel target = $region58
          $region57: #{custom-call.13} parent=53 // pred_region
            // Predicated region
            $region70: #{custom-call.13} parent=57 // pred_check
              _
            $region71: #{custom-call.13} parent=57 // pred_check_branch
              %197 = sbr.rel (0) target = $region73
            $region72: #{custom-call.13} parent=57 // pred_region
              loop: start=0, step=1, limit=1
              $region74: #{custom-call.13} parent=72 // loop_pre_header
                _
              $region75: #{custom-call.13} parent=72 // loop_header
                %s200 = sphi 0, %s204
                %p201 = scmp.ge.s32.totalorder %s200, 1
                %s205 = sphi %s173, %s173
                %s206 = sphi %s178, %s178
              $region76: #{custom-call.13} parent=72 // loop_header_branch
                %203 = sbr.rel (%p201) target = $region80
              $region77: #{custom-call.13} parent=72 // loop_body
                %v207 = vld [vmem:[%s205] sm:$0xf]
                %208 = vst [vmem:[%s206] sm:$0xf] %v207
              $region78: #{custom-call.13} parent=72 // loop_footer
                %s204 = sadd.s32 1, %s200
              $region79: #{custom-call.13} parent=72 // loop_footer_branch
                %199 = sbr.rel target = $region75
              $region80: #{custom-call.13} parent=72 // loop_exit
                _
            $region73: #{custom-call.13} parent=57 // pred_fallthru
              _
          $region58: #{custom-call.13} parent=53 // pred_fallthru
            _
          // Predicated region
          $region59: #{custom-call.13} parent=53 // pred_check
            _
          $region60: #{custom-call.13} parent=53 // pred_check_branch
            %184 = sbr.rel (0) target = $region62
          $region61: #{custom-call.13} parent=53 // pred_region
            loop: start=0, step=1, limit=1
            $region63: #{custom-call.13} parent=61 // loop_pre_header
              _
            $region64: #{custom-call.13} parent=61 // loop_header
              %s187 = sphi 0, %s191
              %p188 = scmp.ge.s32.totalorder %s187, 1
              %s192 = sphi %s173, %s173
              %s193 = sphi %s178, %s178
            $region65: #{custom-call.13} parent=61 // loop_header_branch
              %190 = sbr.rel (%p188) target = $region69
            $region66: #{custom-call.13} parent=61 // loop_body
              %v194 = vld [vmem:[%s192] sm:$0xf]
              %195 = vst [vmem:[%s193] sm:$0xf] %v194
            $region67: #{custom-call.13} parent=61 // loop_footer
              %s191 = sadd.s32 1, %s187
            $region68: #{custom-call.13} parent=61 // loop_footer_branch
              %186 = sbr.rel target = $region64
            $region69: #{custom-call.13} parent=61 // loop_exit
              _
          $region62: #{custom-call.13} parent=53 // pred_fallthru
            _
        $region54: #{custom-call.13} parent=49 // pred_fallthru
          _
        %209 = vnop
      $region50: #{custom-call.13} parent=5 // pred_fallthru
        _
      %p210 = scmp.le.s32.totalorder 2, %s3
      // Predicated region
      $region81: #{custom-call.13} parent=5 // pred_check
        %p211 = pneg %p210
      $region82: #{custom-call.13} parent=5 // pred_check_branch
        %213 = sbr.rel (%p211) target = $region84
      $region83: #{custom-call.13} parent=5 // pred_region
        %s214 = ssub.s32 %s3, 2
        %s215 = sand.u32 %s9, 1
        %s216 = sand.u32 %s9, 1
        %s217 = smul.addr %s216, 4
        %s218 = scalar_lea.vmem [#allocation3], %s217
      $region84: #{custom-call.13} parent=5 // pred_fallthru
        _
    $region6: #{custom-call.13} parent=1 // loop_footer
      %s7 = sadd.s32 1, %s3
    $region7: #{custom-call.13} parent=1 // loop_footer_branch
      %2 = sbr.rel target = $region3
    $region8: #{custom-call.13} parent=1 // loop_exit
      _

// kernel: custom-call.12
$region0: #{custom-call.12}
  %s0 = inlined_call_operand.vmem [shape: f32[2,1,3,3], index: 0, kind: input, shape index: {}]
  %s1 = inlined_call_operand.vmem [shape: f32[2,1,3,3], index: 1, kind: output, shape index: {}]
  $region1: #{custom-call.12} parent=0
    #allocation0 [shape = 'u8[4096]{0}', space=vmem, size = 0x1000, scoped, tag = 'operand span for operand 0']
    #allocation1 [shape = 'u8[4096]{0}', space=vmem, size = 0x1000, scoped, tag = 'packed  for operand 0']
    #allocation2 [shape = 'u8[4096]{0}', space=vmem, size = 0x1000, scoped, tag = 'operand span for operand 1']
    #allocation3 [shape = 'u8[4096]{0}', space=vmem, size = 0x1000, scoped, tag = 'packed  for operand 1']
    loop: start=0, step=1, limit=4
    $region2: #{custom-call.12} parent=1 // loop_pre_header
      _
    $region3: #{custom-call.12} parent=1 // loop_header
      %s3 = sphi 0, %s7
      %p4 = scmp.ge.s32.totalorder %s3, 4
      %s10 = sphi 0, %s36
      %s11 = sphi 0, %s32
      %s12 = sphi 0, %s28
      %s13 = sphi 0, %s24
      %s14 = sphi 0, %s10
      %s15 = sphi 0, %s11
      %s16 = sphi 0, %s12
      %s17 = sphi 0, %s13
      %s18 = sphi 0, %s14
      %s19 = sphi 0, %s15
      %s20 = sphi 0, %s16
      %s21 = sphi 0, %s17
    $region4: #{custom-call.12} parent=1 // loop_header_branch
      %6 = sbr.rel (%p4) target = $region8
    $region5: #{custom-call.12} parent=1 // loop_body
      %s8 = ssub.s32 %s3, 1
      %s9 = ssub.s32 %s3, 2
      %s22 = sadd.s32 1, %s13
      %p23 = scmp.ge.s32.totalorder %s22, 1
      %s24 = scalar_select %p23, 0, %s22
      %s25 = sadd.s32 1, %s12
      %s26 = scalar_select %p23, %s25, %s12
      %p27 = scmp.ge.s32.totalorder %s26, 1
      %s28 = scalar_select %p27, 0, %s26
      %s29 = sadd.s32 1, %s11
      %s30 = scalar_select %p27, %s29, %s11
      %p31 = scmp.ge.s32.totalorder %s30, 1
      %s32 = scalar_select %p31, 0, %s30
      %s33 = sadd.s32 1, %s10
      %s34 = scalar_select %p31, %s33, %s10
      %p35 = scmp.ge.s32.totalorder %s34, 2
      %s36 = scalar_select %p35, 0, %s34
      %p37 = scmp.le.s32.totalorder 1, %s3
      %p38 = scmp.lt.s32.totalorder %s3, 3
      %p39 = pnand %p37, %p38
      %p40 = pneg %p39
      // Predicated region
      $region9: #{custom-call.12} parent=5 // pred_check
        _
      $region10: #{custom-call.12} parent=5 // pred_check_branch
        %42 = sbr.rel (%p39) target = $region12
      $region11: #{custom-call.12} parent=5 // pred_region
        %s43 = ssub.s32 %s3, 1
      $region12: #{custom-call.12} parent=5 // pred_fallthru
        _
      %p44 = scmp.lt.s32.totalorder %s3, 2
      // Predicated region
      $region13: #{custom-call.12} parent=5 // pred_check
        %p45 = pneg %p44
      $region14: #{custom-call.12} parent=5 // pred_check_branch
        %47 = sbr.rel (%p45) target = $region16
      $region15: #{custom-call.12} parent=5 // pred_region
        %s48 = sand.u32 %s3, 1
        %s49 = sand.u32 %s3, 1
        %s50 = smul.addr %s49, 4
        %s51 = scalar_lea.vmem [#allocation1], %s50
        %s52 = sadd.s32 %s13, %s12
        %s53 = sadd.s32 %s52, %s11
        %s54 = sadd.s32 %s53, %s10
        %s55 = smul.addr %s54, 4
        %s56 = scalar_lea.vmem %s0, %s55
        // Predicated region
        $region17: #{custom-call.12} parent=15 // pred_check
          _
        $region18: #{custom-call.12} parent=15 // pred_check_branch
          %58 = sbr.rel (0) target = $region20
        $region19: #{custom-call.12} parent=15 // pred_region
          // Predicated region
          $region21: #{custom-call.12} parent=19 // pred_check
            _
          $region22: #{custom-call.12} parent=19 // pred_check_branch
            %60 = sbr.rel target = $region24
          $region23: #{custom-call.12} parent=19 // pred_region
            // Predicated region
            $region36: #{custom-call.12} parent=23 // pred_check
              _
            $region37: #{custom-call.12} parent=23 // pred_check_branch
              %75 = sbr.rel (0) target = $region39
            $region38: #{custom-call.12} parent=23 // pred_region
              loop: start=0, step=1, limit=1
              $region40: #{custom-call.12} parent=38 // loop_pre_header
                _
              $region41: #{custom-call.12} parent=38 // loop_header
                %s78 = sphi 0, %s82
                %p79 = scmp.ge.s32.totalorder %s78, 1
                %s83 = sphi %s56, %s56
                %s84 = sphi %s51, %s51
              $region42: #{custom-call.12} parent=38 // loop_header_branch
                %81 = sbr.rel (%p79) target = $region46
              $region43: #{custom-call.12} parent=38 // loop_body
                %v85 = vld [vmem:[%s83] sm:$0xf]
                %86 = vst [vmem:[%s84] sm:$0xf] %v85
              $region44: #{custom-call.12} parent=38 // loop_footer
                %s82 = sadd.s32 1, %s78
              $region45: #{custom-call.12} parent=38 // loop_footer_branch
                %77 = sbr.rel target = $region41
              $region46: #{custom-call.12} parent=38 // loop_exit
                _
            $region39: #{custom-call.12} parent=23 // pred_fallthru
              _
          $region24: #{custom-call.12} parent=19 // pred_fallthru
            _
          // Predicated region
          $region25: #{custom-call.12} parent=19 // pred_check
            _
          $region26: #{custom-call.12} parent=19 // pred_check_branch
            %62 = sbr.rel (0) target = $region28
          $region27: #{custom-call.12} parent=19 // pred_region
            loop: start=0, step=1, limit=1
            $region29: #{custom-call.12} parent=27 // loop_pre_header
              _
            $region30: #{custom-call.12} parent=27 // loop_header
              %s65 = sphi 0, %s69
              %p66 = scmp.ge.s32.totalorder %s65, 1
              %s70 = sphi %s56, %s56
              %s71 = sphi %s51, %s51
            $region31: #{custom-call.12} parent=27 // loop_header_branch
              %68 = sbr.rel (%p66) target = $region35
            $region32: #{custom-call.12} parent=27 // loop_body
              %v72 = vld [vmem:[%s70] sm:$0xf]
              %73 = vst [vmem:[%s71] sm:$0xf] %v72
            $region33: #{custom-call.12} parent=27 // loop_footer
              %s69 = sadd.s32 1, %s65
            $region34: #{custom-call.12} parent=27 // loop_footer_branch
              %64 = sbr.rel target = $region30
            $region35: #{custom-call.12} parent=27 // loop_exit
              _
          $region28: #{custom-call.12} parent=19 // pred_fallthru
            _
        $region20: #{custom-call.12} parent=15 // pred_fallthru
          _
        %87 = vnop
      $region16: #{custom-call.12} parent=5 // pred_fallthru
        _
      %p88 = scmp.le.s32.totalorder 1, %s3
      %p89 = scmp.lt.s32.totalorder %s3, 3
      %p90 = pnand %p88, %p89
      %p91 = pneg %p90
      // Predicated region
      $region47: #{custom-call.12} parent=5 // pred_check
        _
      $region48: #{custom-call.12} parent=5 // pred_check_branch
        %93 = sbr.rel (%p90) target = $region50
      $region49: #{custom-call.12} parent=5 // pred_region
        #allocation4 [shape = 'f32[3,3]{1,0}', space=vmem, size = 0x1000, scoped, tag = 'rescaled input a']
        %s94 = ssub.s32 %s3, 1
        %s95 = sand.u32 %s8, 1
        %s96 = sand.u32 %s8, 1
        %s97 = smul.addr %s96, 4
        %s98 = scalar_lea.vmem [#allocation1], %s97
        %s99 = sand.u32 %s8, 1
        %s100 = sand.u32 %s8, 1
        %s101 = smul.addr %s100, 4
        %s102 = scalar_lea.vmem [#allocation1], %s101
        %s103 = sand.u32 %s8, 1
        %s104 = sand.u32 %s8, 1
        %s105 = smul.addr %s104, 4
        %s106 = scalar_lea.vmem [#allocation3], %s105
        %s108 = sshllo.u32 0, 4
        %v109 = vld [vmem:[%s102] sm:%s108]
        %110 = vst [vmem:[#allocation0] sm:%s108] %v109
        %v111 = vlaneseq
        %v112 = vand.u32 %v111, 127
        %vm113 = vcmp.lt.s32.totalorder %v112, 3
        %v114 = vlaneseq
        %v115 = vshrl.u32 %v114, 7
        %vm117 = vcmp.eq.s32.totalorder %v115, %v112
        %v118 = vld [vmem:[#allocation0] sm:$0xff]
        %v119 = vsel %vm117, %v118, 0.0
        %120 = vadd.xlane.f32.xlu0 %v119
        %v121 = vpop.xlane.xlu0 %120
        %vm122 = vcmp.le.s32.totalorder %v115, %v112
        %vm123 = vmand %vm122, %vm113
        %v124 = vsel %vm123, %v118, 0.0
        %v125 = vrcp.pop %v121
        %v126 = vmul.f32 %v124, %v125
        %127 = vst [vmem:[#allocation4] sm:$0xff] %v126
        %v128 = vlaneseq
        %v129 = vand.u32 %v128, 127
        %v130 = vlaneseq
        %v131 = vshrl.u32 %v130, 7
        %vm133 = vcmp.eq.s32.totalorder %v129, %v131
        %v134 = vlaneseq
        %v135 = vand.u32 %v134, 127
        %vm136 = vcmp.eq.s32.totalorder %v135, 2
        %v137 = vsel %vm136, 1.0, -1.0
        %v138 = vsel %vm133, %v137, 0.0
        %s139 = scalar_lea.vmem [#allocation4], 1
        %v140 = vld [vmem:[%s139] ss:$0 sm:$0xff]
        %v141 = vxor.u32 %v140, 2147483648
        %v142 = vlaneseq
        %v143 = vand.u32 %v142, 127
        %vm144 = vcmp.eq.s32.totalorder %v143, 1
        %v145 = vmul.f32 %v141, %v138
        %146 = vadd.xlane.f32.xlu0 %v145
        %v147 = vpop.xlane.xlu0 %146
        %v148 = vsel %vm144, %v147, %v138
        %v149 = vld [vmem:[#allocation4] ss:$0 sm:$0xff]
        %v150 = vxor.u32 %v149, 2147483648
        %v151 = vlaneseq
        %v152 = vand.u32 %v151, 127
        %vm153 = vcmp.eq.s32.totalorder %v152, 0
        %v154 = vmul.f32 %v150, %v148
        %155 = vadd.xlane.f32.xlu0 %v154
        %v156 = vpop.xlane.xlu0 %155
        %v157 = vsel %vm153, %v156, %v148
        %v158 = vrcp.pop %v121
        %v159 = vmul.f32 %v157, %v158
        %vm160 = vweird.f32 %v121
        %v161 = vsel %vm160, %v157, %v159
        %162 = vst [vmem:[#allocation2] sm:$0xff] %v161
        %s164 = sshllo.u32 0, 4
        %v166 = vld [vmem:[#allocation2] sm:%s164]
        %s167 = sshllo.u32 0, 4
        %168 = vst [vmem:[%s106] sm:%s167] %v166
        %s169 = sand.u32 %s8, 1
        %s170 = sand.u32 %s8, 1
        %s171 = smul.addr %s170, 4
        %s172 = scalar_lea.vmem [#allocation3], %s171
        %s173 = sadd.s32 %s17, %s16
        %s174 = sadd.s32 %s173, %s15
        %s175 = sadd.s32 %s174, %s14
        %s176 = smul.addr %s175, 4
        %s177 = scalar_lea.vmem %s1, %s176
        // Predicated region
        $region51: #{custom-call.12} parent=49 // pred_check
          _
        $region52: #{custom-call.12} parent=49 // pred_check_branch
          %179 = sbr.rel (0) target = $region54
        $region53: #{custom-call.12} parent=49 // pred_region
          // Predicated region
          $region55: #{custom-call.12} parent=53 // pred_check
            _
          $region56: #{custom-call.12} parent=53 // pred_check_branch
            %181 = sbr.rel target = $region58
          $region57: #{custom-call.12} parent=53 // pred_region
            // Predicated region
            $region70: #{custom-call.12} parent=57 // pred_check
              _
            $region71: #{custom-call.12} parent=57 // pred_check_branch
              %196 = sbr.rel (0) target = $region73
            $region72: #{custom-call.12} parent=57 // pred_region
              loop: start=0, step=1, limit=1
              $region74: #{custom-call.12} parent=72 // loop_pre_header
                _
              $region75: #{custom-call.12} parent=72 // loop_header
                %s199 = sphi 0, %s203
                %p200 = scmp.ge.s32.totalorder %s199, 1
                %s204 = sphi %s172, %s172
                %s205 = sphi %s177, %s177
              $region76: #{custom-call.12} parent=72 // loop_header_branch
                %202 = sbr.rel (%p200) target = $region80
              $region77: #{custom-call.12} parent=72 // loop_body
                %v206 = vld [vmem:[%s204] sm:$0xf]
                %207 = vst [vmem:[%s205] sm:$0xf] %v206
              $region78: #{custom-call.12} parent=72 // loop_footer
                %s203 = sadd.s32 1, %s199
              $region79: #{custom-call.12} parent=72 // loop_footer_branch
                %198 = sbr.rel target = $region75
              $region80: #{custom-call.12} parent=72 // loop_exit
                _
            $region73: #{custom-call.12} parent=57 // pred_fallthru
              _
          $region58: #{custom-call.12} parent=53 // pred_fallthru
            _
          // Predicated region
          $region59: #{custom-call.12} parent=53 // pred_check
            _
          $region60: #{custom-call.12} parent=53 // pred_check_branch
            %183 = sbr.rel (0) target = $region62
          $region61: #{custom-call.12} parent=53 // pred_region
            loop: start=0, step=1, limit=1
            $region63: #{custom-call.12} parent=61 // loop_pre_header
              _
            $region64: #{custom-call.12} parent=61 // loop_header
              %s186 = sphi 0, %s190
              %p187 = scmp.ge.s32.totalorder %s186, 1
              %s191 = sphi %s172, %s172
              %s192 = sphi %s177, %s177
            $region65: #{custom-call.12} parent=61 // loop_header_branch
              %189 = sbr.rel (%p187) target = $region69
            $region66: #{custom-call.12} parent=61 // loop_body
              %v193 = vld [vmem:[%s191] sm:$0xf]
              %194 = vst [vmem:[%s192] sm:$0xf] %v193
            $region67: #{custom-call.12} parent=61 // loop_footer
              %s190 = sadd.s32 1, %s186
            $region68: #{custom-call.12} parent=61 // loop_footer_branch
              %185 = sbr.rel target = $region64
            $region69: #{custom-call.12} parent=61 // loop_exit
              _
          $region62: #{custom-call.12} parent=53 // pred_fallthru
            _
        $region54: #{custom-call.12} parent=49 // pred_fallthru
          _
        %208 = vnop
      $region50: #{custom-call.12} parent=5 // pred_fallthru
        _
      %p209 = scmp.le.s32.totalorder 2, %s3
      // Predicated region
      $region81: #{custom-call.12} parent=5 // pred_check
        %p210 = pneg %p209
      $region82: #{custom-call.12} parent=5 // pred_check_branch
        %212 = sbr.rel (%p210) target = $region84
      $region83: #{custom-call.12} parent=5 // pred_region
        %s213 = ssub.s32 %s3, 2
        %s214 = sand.u32 %s9, 1
        %s215 = sand.u32 %s9, 1
        %s216 = smul.addr %s215, 4
        %s217 = scalar_lea.vmem [#allocation3], %s216
      $region84: #{custom-call.12} parent=5 // pred_fallthru
        _
    $region6: #{custom-call.12} parent=1 // loop_footer
      %s7 = sadd.s32 1, %s3
    $region7: #{custom-call.12} parent=1 // loop_footer_branch
      %2 = sbr.rel target = $region3
    $region8: #{custom-call.12} parent=1 // loop_exit
      _

// kernel: fiery_forward.4
$region0: #{fiery_forward.4}
  #allocation0 [shape = 'u32[]', space=smem, size = 0x4, offset = 0x4, fixed_abs, tag = 'smem constant byte address 0x4 - core index']
  #allocation1 [shape = 'u32[144,128]{1,0:T(1,128)}', space=vmem, size = 0x12000, scoped, tag = 'internal scratch']
  %s0 = inlined_call_operand.vmem [shape: f32[2,48,16], index: 0, kind: input, shape index: {}]
  %s1 = inlined_call_operand.vmem [shape: s32[2,4,16,1], index: 1, kind: input, shape index: {}]
  %s2 = inlined_call_operand.vmem [shape: f32[16,49], index: 2, kind: input, shape index: {}]
  %s3 = inlined_call_operand.vmem [shape: f32[12,17], index: 3, kind: input, shape index: {}]
  %s4 = inlined_call_operand.vmem [shape: f32[2,8,256], index: 4, kind: output, shape index: {}]
  %s5 = sld [smem:[#allocation0]]
  $region49: #{fiery_forward.4} parent=0
    _
  %s7 = ssub.s32 1, %s5
  %s8 = scalar_select 0, %s7, %s5
  loop: start=0, step=1, limit=4
  $region2: #{fiery_forward.4} parent=0 // loop_pre_header
    _
  $region3: #{fiery_forward.4} parent=0 // loop_header
    %s10 = sphi 0, %s14
    %p11 = scmp.ge.s32.totalorder %s10, 4
    %s20 = sphi 0, %s22
    %s23 = sphi 0, %s20
    %s24 = sphi 0, %s23
    %s40 = sphi 0, %s24
    %s46 = sphi 0, %s48
    %s49 = sphi 0, %s46
    %s50 = sphi 0, %s49
    %s66 = sphi 0, %s50
    %s70 = sphi 0, %s70
    %s72 = sphi 0, %s70
    %s73 = sphi 0, %s72
    %s87 = sphi 0, %s73
    %s91 = sphi 0, %s91
    %s93 = sphi 0, %s91
    %s94 = sphi 0, %s93
    %s108 = sphi 0, %s94
    %s114 = sphi 0, %s116
    %s117 = sphi 0, %s114
    %s118 = sphi 0, %s117
    %s134 = sphi 0, %s118
  $region4: #{fiery_forward.4} parent=0 // loop_header_branch
    %13 = sbr.rel (%p11) target = $region8
  $region5: #{fiery_forward.4} parent=0 // loop_body
    %s15 = ssub.s32 %s10, 1
    %s16 = ssub.s32 %s10, 2
    %s17 = sadd.s32 %s10, 1
    %s18 = ssub.s32 %s10, %s17
    %p19 = scmp.eq.s32.totalorder %s18, 0
    %s21 = sadd.s32 %s20, 1
    %s22 = scalar_select %p19, %s20, %s21
    %p25 = pneg %p19
    %p26 = scmp.eq.s32.totalorder %s10, 1
    %p27 = por %p25, %p26
    %p28 = scmp.ne.s32.totalorder %s20, %s23
    %p29 = scmp.eq.s32.totalorder %s10, 0
    %p30 = por %p28, %p29
    %p31 = scmp.ne.s32.totalorder %s20, %s23
    %p32 = scmp.eq.s32.totalorder %s15, 1
    %p33 = por %p31, %p32
    %p34 = scmp.ne.s32.totalorder %s23, %s24
    %p35 = scmp.eq.s32.totalorder %s15, 0
    %p36 = por %p34, %p35
    %p37 = scmp.ne.s32.totalorder %s23, %s24
    %p38 = scmp.eq.s32.totalorder %s16, 1
    %p39 = por %p37, %p38
    %p41 = scmp.ne.s32.totalorder %s24, %s40
    %p42 = scmp.eq.s32.totalorder %s16, 0
    %p43 = por %p41, %p42
    %s44 = ssub.s32 %s10, %s17
    %p45 = scmp.eq.s32.totalorder %s44, 0
    %s47 = sadd.s32 %s46, 1
    %s48 = scalar_select %p45, %s46, %s47
    %p51 = pneg %p45
    %p52 = scmp.eq.s32.totalorder %s10, 1
    %p53 = por %p51, %p52
    %p54 = scmp.ne.s32.totalorder %s46, %s49
    %p55 = scmp.eq.s32.totalorder %s10, 0
    %p56 = por %p54, %p55
    %p57 = scmp.ne.s32.totalorder %s46, %s49
    %p58 = scmp.eq.s32.totalorder %s15, 1
    %p59 = por %p57, %p58
    %p60 = scmp.ne.s32.totalorder %s49, %s50
    %p61 = scmp.eq.s32.totalorder %s15, 0
    %p62 = por %p60, %p61
    %p63 = scmp.ne.s32.totalorder %s49, %s50
    %p64 = scmp.eq.s32.totalorder %s16, 1
    %p65 = por %p63, %p64
    %p67 = scmp.ne.s32.totalorder %s50, %s66
    %p68 = scmp.eq.s32.totalorder %s16, 0
    %p69 = por %p67, %p68
    %s71 = sadd.s32 %s70, 1
    %p74 = scmp.eq.s32.totalorder %s10, 1
    %p75 = scmp.ne.s32.totalorder %s70, %s72
    %p76 = scmp.eq.s32.totalorder %s10, 0
    %p77 = por %p75, %p76
    %p78 = scmp.ne.s32.totalorder %s70, %s72
    %p79 = scmp.eq.s32.totalorder %s15, 1
    %p80 = por %p78, %p79
    %p81 = scmp.ne.s32.totalorder %s72, %s73
    %p82 = scmp.eq.s32.totalorder %s15, 0
    %p83 = por %p81, %p82
    %p84 = scmp.ne.s32.totalorder %s72, %s73
    %p85 = scmp.eq.s32.totalorder %s16, 1
    %p86 = por %p84, %p85
    %p88 = scmp.ne.s32.totalorder %s73, %s87
    %p89 = scmp.eq.s32.totalorder %s16, 0
    %p90 = por %p88, %p89
    %s92 = sadd.s32 %s91, 1
    %p95 = scmp.eq.s32.totalorder %s10, 1
    %p96 = scmp.ne.s32.totalorder %s91, %s93
    %p97 = scmp.eq.s32.totalorder %s10, 0
    %p98 = por %p96, %p97
    %p99 = scmp.ne.s32.totalorder %s91, %s93
    %p100 = scmp.eq.s32.totalorder %s15, 1
    %p101 = por %p99, %p100
    %p102 = scmp.ne.s32.totalorder %s93, %s94
    %p103 = scmp.eq.s32.totalorder %s15, 0
    %p104 = por %p102, %p103
    %p105 = scmp.ne.s32.totalorder %s93, %s94
    %p106 = scmp.eq.s32.totalorder %s16, 1
    %p107 = por %p105, %p106
    %p109 = scmp.ne.s32.totalorder %s94, %s108
    %p110 = scmp.eq.s32.totalorder %s16, 0
    %p111 = por %p109, %p110
    %s112 = ssub.s32 %s10, %s17
    %p113 = scmp.eq.s32.totalorder %s112, 0
    %s115 = sadd.s32 %s114, 1
    %s116 = scalar_select %p113, %s114, %s115
    %p119 = pneg %p113
    %p120 = scmp.eq.s32.totalorder %s10, 1
    %p121 = por %p119, %p120
    %p122 = scmp.ne.s32.totalorder %s114, %s117
    %p123 = scmp.eq.s32.totalorder %s10, 0
    %p124 = por %p122, %p123
    %p125 = scmp.ne.s32.totalorder %s114, %s117
    %p126 = scmp.eq.s32.totalorder %s15, 1
    %p127 = por %p125, %p126
    %p128 = scmp.ne.s32.totalorder %s117, %s118
    %p129 = scmp.eq.s32.totalorder %s15, 0
    %p130 = por %p128, %p129
    %p131 = scmp.ne.s32.totalorder %s117, %s118
    %p132 = scmp.eq.s32.totalorder %s16, 1
    %p133 = por %p131, %p132
    %p135 = scmp.ne.s32.totalorder %s118, %s134
    %p136 = scmp.eq.s32.totalorder %s16, 0
    %p137 = por %p135, %p136
    %p138 = scmp.le.s32.totalorder 1, %s10
    %p139 = scmp.lt.s32.totalorder %s10, 3
    %p140 = pnand %p138, %p139
    %p141 = pneg %p140
    // Predicated region
    $region9: #{fiery_forward.4} parent=5 // pred_check
      _
    $region10: #{fiery_forward.4} parent=5 // pred_check_branch
      %143 = sbr.rel (%p140) target = $region12
    $region11: #{fiery_forward.4} parent=5 // pred_region
      %s144 = ssub.s32 %s10, 1
      // Predicated region
      $region13: #{fiery_forward.4} parent=11 // pred_check
        %p145 = pneg %p83
      $region14: #{fiery_forward.4} parent=11 // pred_check_branch
        %147 = sbr.rel (%p145) target = $region16
      $region15: #{fiery_forward.4} parent=11 // pred_region
        _
      $region16: #{fiery_forward.4} parent=11 // pred_fallthru
        _
      // Predicated region
      $region17: #{fiery_forward.4} parent=11 // pred_check
        %p148 = pneg %p104
      $region18: #{fiery_forward.4} parent=11 // pred_check_branch
        %150 = sbr.rel (%p148) target = $region20
      $region19: #{fiery_forward.4} parent=11 // pred_region
        _
      $region20: #{fiery_forward.4} parent=11 // pred_fallthru
        _
    $region12: #{fiery_forward.4} parent=5 // pred_fallthru
      _
    %p151 = scmp.lt.s32.totalorder %s10, 2
    // Predicated region
    $region21: #{fiery_forward.4} parent=5 // pred_check
      %p152 = pneg %p151
    $region22: #{fiery_forward.4} parent=5 // pred_check_branch
      %154 = sbr.rel (%p152) target = $region24
    $region23: #{fiery_forward.4} parent=5 // pred_region
      // Predicated region
      $region25: #{fiery_forward.4} parent=23 // pred_check
        %p155 = pneg %p30
      $region26: #{fiery_forward.4} parent=23 // pred_check_branch
        %157 = sbr.rel (%p155) target = $region28
      $region27: #{fiery_forward.4} parent=23 // pred_region
        %p158 = scmp.lt.s32.totalorder %s10, 1
        %s159 = scalar_select %p158, %s10, 1
        %s160 = smul.addr %s159, 6
        %s161 = smul.addr %s160, 8
        %s162 = scalar_lea.vmem %s0, %s161
      $region28: #{fiery_forward.4} parent=23 // pred_fallthru
        _
      // Predicated region
      $region29: #{fiery_forward.4} parent=23 // pred_check
        %p163 = pneg %p56
      $region30: #{fiery_forward.4} parent=23 // pred_check_branch
        %165 = sbr.rel (%p163) target = $region32
      $region31: #{fiery_forward.4} parent=23 // pred_region
        %p166 = scmp.lt.s32.totalorder %s10, 1
        %s167 = scalar_select %p166, %s10, 1
        %s168 = smul.addr %s167, 8
        %s169 = smul.addr %s168, 8
        %s170 = scalar_lea.vmem %s1, %s169
      $region32: #{fiery_forward.4} parent=23 // pred_fallthru
        _
    $region24: #{fiery_forward.4} parent=5 // pred_fallthru
      _
    %p171 = scmp.le.s32.totalorder 1, %s10
    %p172 = scmp.lt.s32.totalorder %s10, 3
    %p173 = pnand %p171, %p172
    %p174 = pneg %p173
    // Predicated region
    $region33: #{fiery_forward.4} parent=5 // pred_check
      _
    $region34: #{fiery_forward.4} parent=5 // pred_check_branch
      %176 = sbr.rel (%p173) target = $region36
    $region35: #{fiery_forward.4} parent=5 // pred_region
      %s177 = ssub.s32 %s10, 1
      %p178 = scmp.lt.s32.totalorder %s15, 1
      %s179 = scalar_select %p178, %s15, 1
      %s180 = smul.addr %s179, 6
      %s181 = smul.addr %s180, 8
      %s182 = scalar_lea.vmem %s0, %s181
      %p183 = pneg %p36
      %p184 = pneg %p33
      %p185 = scmp.lt.s32.totalorder %s15, 1
      %s186 = scalar_select %p185, %s15, 1
      %s187 = smul.addr %s186, 8
      %s188 = smul.addr %s187, 8
      %s189 = scalar_lea.vmem %s1, %s188
      %p190 = pneg %p62
      %p191 = pneg %p59
      %p192 = pneg %p83
      %p193 = pneg %p80
      %p194 = pneg %p104
      %p195 = pneg %p101
      %p196 = pneg %p130
      %p197 = pneg %p127
      %p198 = scmp.lt.s32.totalorder %s15, 1
      %s199 = scalar_select %p198, %s15, 1
      %s200 = smul.addr %s199, 2
      %s201 = smul.addr %s200, 8
      %s202 = scalar_lea.vmem %s4, %s201
      %p203 = scmp.lt.s32.totalorder %s15, 1
      %s204 = scalar_select %p203, %s15, 1
      %s205 = smul.addr %s204, 6
      %s206 = smul.addr %s205, 8
      %s207 = scalar_lea.vmem %s0, %s206
      %p208 = scmp.lt.s32.totalorder %s15, 1
      %s209 = scalar_select %p208, %s15, 1
      %s210 = smul.addr %s209, 8
      %s211 = smul.addr %s210, 8
      %s212 = scalar_lea.vmem %s1, %s211
      %p213 = scmp.lt.s32.totalorder %s15, 1
      %s214 = scalar_select %p213, %s15, 1
      %s215 = smul.addr %s214, 2
      %s216 = smul.addr %s215, 8
      %s217 = scalar_lea.vmem %s4, %s216
      %v218 = vld [vmem:[%s207] sm:$0xff]
      %v219 = vld [vmem:[%s207 + $0x8] sm:$0xff]
      %v220 = vld [vmem:[%s207 + $0x10] sm:$0xff]
      %v221 = vld [vmem:[%s207 + $0x18] sm:$0xff]
      %v222 = vld [vmem:[%s207 + $0x20] sm:$0xff]
      %v223 = vld [vmem:[%s207 + $0x28] sm:$0xff]
      %v224 = vld [vmem:[%s2] sm:$0xff]
      %v225 = vld [vmem:[%s2 + $0x8] sm:$0xff]
      %vm226 = vcmask 400384
      %v228 = vsel %vm226, %v224, 0
      %v231 = vsel %vm226, %v225, 0
      %vm233 = vcmask 1040384
      %v235 = vsel %vm233, 1.0, 0
      %237 = vmatprep.subr.mxu0 0.0
      %238 = vmatpush1.msra.mxu0 %v218
      %239 = vmatprep.subr.mxu0 0.0
      %240 = vmatpush1.msra.mxu0 %v219
      %241 = vmatprep.subr.mxu0 0.0
      %242 = vmatpush1.msra.mxu0 %v220
      %243 = vmatprep.subr.mxu0 0.0
      %244 = vmatpush1.msra.mxu0 %v221
      %245 = vmatprep.subr.mxu0 0.0
      %246 = vmatpush1.msra.mxu0 %v222
      %247 = vmatprep.subr.mxu0 0.0
      %248 = vmatpush1.msra.mxu0 %v223
      %249 = vmatprep.subr.mxu0 0.0
      %250 = vmatpush1.msra.mxu0 %v235
      %251 = vmatprep.subr.mxu0 0.0
      %252 = vmatpush1.msra.mxu0 0.0
      %253 = vmatprep.subr.mxu0 0.0
      %254 = vmatpush1.msra.mxu0 0.0
      %255 = vmatprep.subr.mxu0 0.0
      %256 = vmatpush1.msra.mxu0 0.0
      %257 = vmatprep.subr.mxu0 0.0
      %258 = vmatpush1.msra.mxu0 0.0
      %259 = vmatprep.subr.mxu0 0.0
      %260 = vmatpush1.msra.mxu0 0.0
      %261 = vmatprep.subr.mxu0 0.0
      %262 = vmatpush1.msra.mxu0 0.0
      %263 = vmatprep.subr.mxu0 0.0
      %264 = vmatpush1.msra.mxu0 0.0
      %265 = vmatprep.subr.mxu0 0.0
      %266 = vmatpush1.msra.mxu0 0.0
      %267 = vmatprep.subr.mxu0 0.0
      %268 = vmatpush1.msra.mxu0 0.0
      %269 = vmatprep.subr.mxu0 0.0
      %270 = vmatpush1.msra.mxu0 0.0
      %271 = vmatprep.subr.mxu0 0.0
      %272 = vmatpush1.msra.mxu0 0.0
      %273 = vmatprep.subr.mxu0 0.0
      %274 = vmatpush1.msra.mxu0 0.0
      %275 = vmatprep.subr.mxu0 0.0
      %276 = vmatpush1.msra.mxu0 0.0
      %277 = vmatprep.subr.mxu0 0.0
      %278 = vmatpush1.msra.mxu0 0.0
      %279 = vmatprep.subr.mxu0 0.0
      %280 = vmatpush1.msra.mxu0 0.0
      %281 = vmatprep.subr.mxu0 0.0
      %282 = vmatpush1.msra.mxu0 0.0
      %283 = vmatprep.subr.mxu0 0.0
      %284 = vmatpush1.msra.mxu0 0.0
      %285 = vmatprep.subr.mxu0 0.0
      %286 = vmatpush1.msra.mxu0 0.0
      %287 = vmatprep.subr.mxu0 0.0
      %288 = vmatpush1.msra.mxu0 0.0
      %289 = vmatprep.subr.mxu0 0.0
      %290 = vmatpush1.msra.mxu0 0.0
      %291 = vmatprep.subr.mxu0 0.0
      %292 = vmatpush1.msra.mxu0 0.0
      %293 = vmatprep.subr.mxu0 0.0
      %294 = vmatpush1.msra.mxu0 0.0
      %295 = vmatprep.subr.mxu0 0.0
      %296 = vmatpush1.msra.mxu0 0.0
      %297 = vmatprep.subr.mxu0 0.0
      %298 = vmatpush1.msra.mxu0 0.0
      %299 = vmatprep.subr.mxu0 0.0
      %300 = vmatpush1.msra.mxu0 0.0
      %301 = vmatprep.mubr.f32.mxu0 0.0
      %302 = vmatmul.mubr.f32.gmra.mrb[0].mxu0 %v228
      %v303 = vpop.f32.mrb[0].mxu0
      %v304 = vadd.f32 0.0, %v303
      %v305 = vpop.f32.mrb[0].mxu0
      %306 = vmatprep.mubr.f32.mxu0 0.0
      %307 = vmatmul.mubr.f32.gmra.mrb[0].mxu0 %v231
      %v308 = vpop.f32.mrb[0].mxu0
      %v309 = vadd.f32 0.0, %v308
      %v310 = vpop.f32.mrb[0].mxu0
      %311 = vdwg.mxu0
      %v312 = vmax.f32 %v304, 0.0
      %v313 = vmax.f32 %v309, 0.0
      %v314 = vld [vmem:[%s3] sm:$0xff]
      %v315 = vld [vmem:[%s3 + $0x8] sm:$0xf]
      %vm316 = vcmask 138240
      %v318 = vsel %vm316, %v314, 0
      %v321 = vsel %vm316, %v315, 0
      %323 = vmatprep.subr.mxu0 0.0
      %324 = vmatpush1.msra.mxu0 %v312
      %325 = vmatprep.subr.mxu0 0.0
      %326 = vmatpush1.msra.mxu0 %v313
      %327 = vmatprep.subr.mxu0 0.0
      %328 = vmatpush1.msra.mxu0 %v235
      %329 = vmatprep.subr.mxu0 0.0
      %330 = vmatpush1.msra.mxu0 0.0
      %331 = vmatprep.subr.mxu0 0.0
      %332 = vmatpush1.msra.mxu0 0.0
      %333 = vmatprep.subr.mxu0 0.0
      %334 = vmatpush1.msra.mxu0 0.0
      %335 = vmatprep.subr.mxu0 0.0
      %336 = vmatpush1.msra.mxu0 0.0
      %337 = vmatprep.subr.mxu0 0.0
      %338 = vmatpush1.msra.mxu0 0.0
      %339 = vmatprep.subr.mxu0 0.0
      %340 = vmatpush1.msra.mxu0 0.0
      %341 = vmatprep.subr.mxu0 0.0
      %342 = vmatpush1.msra.mxu0 0.0
      %343 = vmatprep.subr.mxu0 0.0
      %344 = vmatpush1.msra.mxu0 0.0
      %345 = vmatprep.subr.mxu0 0.0
      %346 = vmatpush1.msra.mxu0 0.0
      %347 = vmatprep.subr.mxu0 0.0
      %348 = vmatpush1.msra.mxu0 0.0
      %349 = vmatprep.subr.mxu0 0.0
      %350 = vmatpush1.msra.mxu0 0.0
      %351 = vmatprep.subr.mxu0 0.0
      %352 = vmatpush1.msra.mxu0 0.0
      %353 = vmatprep.subr.mxu0 0.0
      %354 = vmatpush1.msra.mxu0 0.0
      %355 = vmatprep.subr.mxu0 0.0
      %356 = vmatpush1.msra.mxu0 0.0
      %357 = vmatprep.subr.mxu0 0.0
      %358 = vmatpush1.msra.mxu0 0.0
      %359 = vmatprep.subr.mxu0 0.0
      %360 = vmatpush1.msra.mxu0 0.0
      %361 = vmatprep.subr.mxu0 0.0
      %362 = vmatpush1.msra.mxu0 0.0
      %363 = vmatprep.subr.mxu0 0.0
      %364 = vmatpush1.msra.mxu0 0.0
      %365 = vmatprep.subr.mxu0 0.0
      %366 = vmatpush1.msra.mxu0 0.0
      %367 = vmatprep.subr.mxu0 0.0
      %368 = vmatpush1.msra.mxu0 0.0
      %369 = vmatprep.subr.mxu0 0.0
      %370 = vmatpush1.msra.mxu0 0.0
      %371 = vmatprep.subr.mxu0 0.0
      %372 = vmatpush1.msra.mxu0 0.0
      %373 = vmatprep.subr.mxu0 0.0
      %374 = vmatpush1.msra.mxu0 0.0
      %375 = vmatprep.subr.mxu0 0.0
      %376 = vmatpush1.msra.mxu0 0.0
      %377 = vmatprep.subr.mxu0 0.0
      %378 = vmatpush1.msra.mxu0 0.0
      %379 = vmatprep.subr.mxu0 0.0
      %380 = vmatpush1.msra.mxu0 0.0
      %381 = vmatprep.subr.mxu0 0.0
      %382 = vmatpush1.msra.mxu0 0.0
      %383 = vmatprep.subr.mxu0 0.0
      %384 = vmatpush1.msra.mxu0 0.0
      %385 = vmatprep.subr.mxu0 0.0
      %386 = vmatpush1.msra.mxu0 0.0
      %387 = vmatprep.mubr.f32.mxu0 0.0
      %388 = vmatmul.mubr.f32.gmra.mrb[0].mxu0 %v318
      %v389 = vpop.f32.mrb[0].mxu0
      %v390 = vadd.f32 0.0, %v389
      %v391 = vpop.f32.mrb[0].mxu0
      %392 = vmatprep.mubr.f32.mxu0 0.0
      %393 = vmatmul.mubr.f32.gmra.mrb[0].mxu0 %v321
      %v394 = vpop.f32.mrb[0].mxu0
      %v395 = vadd.f32 0.0, %v394
      %v396 = vpop.f32.mrb[0].mxu0
      %397 = vdwg.mxu0
      %vm398 = vcmask 125952
      %v399 = vsel %vm398, %v390, -inf
      %v400 = vrot.slane %v399, 4
      %v401 = vmax.f32 %v399, %v400
      %v402 = vrot.slane %v401, 2
      %v403 = vmax.f32 %v401, %v402
      %v404 = vrot.slane %v403, 1
      %v405 = vmax.f32 %v403, %v404
      %v406 = vsub.f32 %v390, %v405
      %v407 = vmul.f32 %v406, 1.442695
      %v408 = vpow.pop %v407
      %v409 = vsel %vm398, %v408, 0.0
      %v410 = vrot.slane %v409, 4
      %v411 = vadd.f32 %v409, %v410
      %v412 = vrot.slane %v411, 2
      %v413 = vadd.f32 %v411, %v412
      %v414 = vrot.slane %v413, 1
      %v415 = vadd.f32 %v413, %v414
      %v416 = vrcp.pop %v415
      %v417 = vmul.f32 %v408, %v416
      %v418 = vlaneseq
      %v419 = vand.u32 %v418, 127
      %v420 = vadd.s32 %v419, 128
      %v421 = vlaneseq
      %v422 = vshrl.u32 %v421, 7
      %v423 = vsub.s32 0, %v422
      %v424 = vrot.slane %v417, %v423
      %v425 = vmul.f32 %v424, %v390
      %v426 = vmul.f32 %v424, %v395
      %v427 = vld [vmem:[%s212] sm:$0xff]
      %v428 = vld [vmem:[%s212 + $0x8] sm:$0xff]
      %429 = vset.pattern.permute.xlu0 0
      %430 = vperm.xlu0 %429, %v427
      %v431 = vpop.permute.xlu0 %430
      %432 = vset.pattern.permute.xlu0 0
      %433 = vperm.xlu0 %432, %v428
      %v434 = vpop.permute.xlu0 %433
      %vm435 = vcmp.eq.s32.totalorder %v419, %v431
      %vm436 = vcmp.eq.s32.totalorder %v420, %v431
      %vm437 = vcmp.eq.s32.totalorder %v419, %v434
      %vm438 = vcmp.eq.s32.totalorder %v420, %v434
      %v439 = vsel %vm435, 1, 0
      %v440 = vsel %vm436, 1, 0
      %v441 = vsel %vm437, 1, 0
      %v442 = vsel %vm438, 1, 0
      %v443 = vcvt.s32.f32 %v439
      %v444 = vcvt.s32.f32 %v440
      %v445 = vcvt.s32.f32 %v441
      %v446 = vcvt.s32.f32 %v442
      %v447 = vlaneseq
      %v448 = vshrl.u32 %v447, 7
      %v449 = vsub.s32 1, %v448
      %v450 = vrot.slane %v417, %v449
      %v451 = vmul.f32 %v450, %v390
      %v452 = vmul.f32 %v450, %v395
      %s453 = scalar_lea.vmem %s212, 16
      %v454 = vld [vmem:[%s453] sm:$0xff]
      %v455 = vld [vmem:[%s453 + $0x8] sm:$0xff]
      %456 = vset.pattern.permute.xlu0 0
      %457 = vperm.xlu0 %456, %v454
      %v458 = vpop.permute.xlu0 %457
      %459 = vset.pattern.permute.xlu0 0
      %460 = vperm.xlu0 %459, %v455
      %v461 = vpop.permute.xlu0 %460
      %vm462 = vcmp.eq.s32.totalorder %v419, %v458
      %vm463 = vcmp.eq.s32.totalorder %v420, %v458
      %vm464 = vcmp.eq.s32.totalorder %v419, %v461
      %vm465 = vcmp.eq.s32.totalorder %v420, %v461
      %v466 = vsel %vm462, 1, 0
      %v467 = vsel %vm463, 1, 0
      %v468 = vsel %vm464, 1, 0
      %v469 = vsel %vm465, 1, 0
      %v470 = vcvt.s32.f32 %v466
      %v471 = vcvt.s32.f32 %v467
      %v472 = vcvt.s32.f32 %v468
      %v473 = vcvt.s32.f32 %v469
      %vm476 = vcmask 1043456
      %v477 = vrot.slane %v451, 4
      %v478 = vrot.slane %v452, 4
      %v479 = vsel %vm476, %v477, %v478
      %vm480 = vcmask 130048
      %v481 = vsel %vm480, %v479, 0
      %483 = vmatprep.subr.mxu0 %v471
      %484 = vmatpush1.msra.mxu0 %v470
      %485 = vmatprep.subr.mxu0 %v473
      %486 = vmatpush1.msra.mxu0 %v472
      %487 = vmatprep.subr.mxu0 0.0
      %488 = vmatpush1.msra.mxu0 0.0
      %489 = vmatprep.subr.mxu0 0.0
      %490 = vmatpush1.msra.mxu0 0.0
      %491 = vmatprep.subr.mxu0 0.0
      %492 = vmatpush1.msra.mxu0 0.0
      %493 = vmatprep.subr.mxu0 0.0
      %494 = vmatpush1.msra.mxu0 0.0
      %495 = vmatprep.subr.mxu0 0.0
      %496 = vmatpush1.msra.mxu0 0.0
      %497 = vmatprep.subr.mxu0 0.0
      %498 = vmatpush1.msra.mxu0 0.0
      %499 = vmatprep.subr.mxu0 0.0
      %500 = vmatpush1.msra.mxu0 0.0
      %501 = vmatprep.subr.mxu0 0.0
      %502 = vmatpush1.msra.mxu0 0.0
      %503 = vmatprep.subr.mxu0 0.0
      %504 = vmatpush1.msra.mxu0 0.0
      %505 = vmatprep.subr.mxu0 0.0
      %506 = vmatpush1.msra.mxu0 0.0
      %507 = vmatprep.subr.mxu0 0.0
      %508 = vmatpush1.msra.mxu0 0.0
      %509 = vmatprep.subr.mxu0 0.0
      %510 = vmatpush1.msra.mxu0 0.0
      %511 = vmatprep.subr.mxu0 0.0
      %512 = vmatpush1.msra.mxu0 0.0
      %513 = vmatprep.subr.mxu0 0.0
      %514 = vmatpush1.msra.mxu0 0.0
      %515 = vmatprep.subr.mxu0 0.0
      %516 = vmatpush1.msra.mxu0 0.0
      %517 = vmatprep.subr.mxu0 0.0
      %518 = vmatpush1.msra.mxu0 0.0
      %519 = vmatprep.subr.mxu0 0.0
      %520 = vmatpush1.msra.mxu0 0.0
      %521 = vmatprep.subr.mxu0 0.0
      %522 = vmatpush1.msra.mxu0 0.0
      %523 = vmatprep.subr.mxu0 0.0
      %524 = vmatpush1.msra.mxu0 0.0
      %525 = vmatprep.subr.mxu0 0.0
      %526 = vmatpush1.msra.mxu0 0.0
      %527 = vmatprep.subr.mxu0 0.0
      %528 = vmatpush1.msra.mxu0 0.0
      %529 = vmatprep.subr.mxu0 0.0
      %530 = vmatpush1.msra.mxu0 0.0
      %531 = vmatprep.subr.mxu0 0.0
      %532 = vmatpush1.msra.mxu0 0.0
      %533 = vmatprep.subr.mxu0 0.0
      %534 = vmatpush1.msra.mxu0 0.0
      %535 = vmatprep.subr.mxu0 0.0
      %536 = vmatpush1.msra.mxu0 0.0
      %537 = vmatprep.subr.mxu0 0.0
      %538 = vmatpush1.msra.mxu0 0.0
      %539 = vmatprep.subr.mxu0 0.0
      %540 = vmatpush1.msra.mxu0 0.0
      %541 = vmatprep.subr.mxu0 0.0
      %542 = vmatpush1.msra.mxu0 0.0
      %543 = vmatprep.subr.mxu0 0.0
      %544 = vmatpush1.msra.mxu0 0.0
      %545 = vmatprep.subr.mxu0 0.0
      %546 = vmatpush1.msra.mxu0 0.0
      %547 = vmatprep.mubr.f32.mxu0 0.0
      %548 = vmatmul.mubr.f32.gmra.mrb[0].mxu0 %v481
      %v549 = vpop.f32.mrb[0].mxu0
      %v550 = vadd.f32 0.0, %v549
      %v551 = vpop.f32.mrb[0].mxu0
      %v552 = vadd.f32 0.0, %v551
      %553 = vdwg.mxu0
      %v556 = vrot.slane %v425, 4
      %v557 = vrot.slane %v426, 4
      %v558 = vsel %vm476, %v556, %v557
      %v559 = vsel %vm480, %v558, 0
      %561 = vmatprep.subr.mxu0 %v444
      %562 = vmatpush1.msra.mxu0 %v443
      %563 = vmatprep.subr.mxu0 %v446
      %564 = vmatpush1.msra.mxu0 %v445
      %565 = vmatprep.subr.mxu0 0.0
      %566 = vmatpush1.msra.mxu0 0.0
      %567 = vmatprep.subr.mxu0 0.0
      %568 = vmatpush1.msra.mxu0 0.0
      %569 = vmatprep.subr.mxu0 0.0
      %570 = vmatpush1.msra.mxu0 0.0
      %571 = vmatprep.subr.mxu0 0.0
      %572 = vmatpush1.msra.mxu0 0.0
      %573 = vmatprep.subr.mxu0 0.0
      %574 = vmatpush1.msra.mxu0 0.0
      %575 = vmatprep.subr.mxu0 0.0
      %576 = vmatpush1.msra.mxu0 0.0
      %577 = vmatprep.subr.mxu0 0.0
      %578 = vmatpush1.msra.mxu0 0.0
      %579 = vmatprep.subr.mxu0 0.0
      %580 = vmatpush1.msra.mxu0 0.0
      %581 = vmatprep.subr.mxu0 0.0
      %582 = vmatpush1.msra.mxu0 0.0
      %583 = vmatprep.subr.mxu0 0.0
      %584 = vmatpush1.msra.mxu0 0.0
      %585 = vmatprep.subr.mxu0 0.0
      %586 = vmatpush1.msra.mxu0 0.0
      %587 = vmatprep.subr.mxu0 0.0
      %588 = vmatpush1.msra.mxu0 0.0
      %589 = vmatprep.subr.mxu0 0.0
      %590 = vmatpush1.msra.mxu0 0.0
      %591 = vmatprep.subr.mxu0 0.0
      %592 = vmatpush1.msra.mxu0 0.0
      %593 = vmatprep.subr.mxu0 0.0
      %594 = vmatpush1.msra.mxu0 0.0
      %595 = vmatprep.subr.mxu0 0.0
      %596 = vmatpush1.msra.mxu0 0.0
      %597 = vmatprep.subr.mxu0 0.0
      %598 = vmatpush1.msra.mxu0 0.0
      %599 = vmatprep.subr.mxu0 0.0
      %600 = vmatpush1.msra.mxu0 0.0
      %601 = vmatprep.subr.mxu0 0.0
      %602 = vmatpush1.msra.mxu0 0.0
      %603 = vmatprep.subr.mxu0 0.0
      %604 = vmatpush1.msra.mxu0 0.0
      %605 = vmatprep.subr.mxu0 0.0
      %606 = vmatpush1.msra.mxu0 0.0
      %607 = vmatprep.subr.mxu0 0.0
      %608 = vmatpush1.msra.mxu0 0.0
      %609 = vmatprep.subr.mxu0 0.0
      %610 = vmatpush1.msra.mxu0 0.0
      %611 = vmatprep.subr.mxu0 0.0
      %612 = vmatpush1.msra.mxu0 0.0
      %613 = vmatprep.subr.mxu0 0.0
      %614 = vmatpush1.msra.mxu0 0.0
      %615 = vmatprep.subr.mxu0 0.0
      %616 = vmatpush1.msra.mxu0 0.0
      %617 = vmatprep.subr.mxu0 0.0
      %618 = vmatpush1.msra.mxu0 0.0
      %619 = vmatprep.subr.mxu0 0.0
      %620 = vmatpush1.msra.mxu0 0.0
      %621 = vmatprep.subr.mxu0 0.0
      %622 = vmatpush1.msra.mxu0 0.0
      %623 = vmatprep.subr.mxu0 0.0
      %624 = vmatpush1.msra.mxu0 0.0
      %625 = vmatprep.mubr.f32.mxu0 0.0
      %626 = vmatmul.mubr.f32.gmra.mrb[0].mxu0 %v559
      %v627 = vpop.f32.mrb[0].mxu0
      %v628 = vadd.f32 %v550, %v627
      %v629 = vpop.f32.mrb[0].mxu0
      %v630 = vadd.f32 %v552, %v629
      %631 = vdwg.mxu0
      %v632 = vlaneseq
      %v633 = vshrl.u32 %v632, 7
      %v634 = vsub.s32 2, %v633
      %v635 = vrot.slane %v417, %v634
      %v636 = vmul.f32 %v635, %v390
      %v637 = vmul.f32 %v635, %v395
      %s638 = scalar_lea.vmem %s212, 32
      %v639 = vld [vmem:[%s638] sm:$0xff]
      %v640 = vld [vmem:[%s638 + $0x8] sm:$0xff]
      %641 = vset.pattern.permute.xlu0 0
      %642 = vperm.xlu0 %641, %v639
      %v643 = vpop.permute.xlu0 %642
      %644 = vset.pattern.permute.xlu0 0
      %645 = vperm.xlu0 %644, %v640
      %v646 = vpop.permute.xlu0 %645
      %vm647 = vcmp.eq.s32.totalorder %v419, %v643
      %vm648 = vcmp.eq.s32.totalorder %v420, %v643
      %vm649 = vcmp.eq.s32.totalorder %v419, %v646
      %vm650 = vcmp.eq.s32.totalorder %v420, %v646
      %v651 = vsel %vm647, 1, 0
      %v652 = vsel %vm648, 1, 0
      %v653 = vsel %vm649, 1, 0
      %v654 = vsel %vm650, 1, 0
      %v655 = vcvt.s32.f32 %v651
      %v656 = vcvt.s32.f32 %v652
      %v657 = vcvt.s32.f32 %v653
      %v658 = vcvt.s32.f32 %v654
      %v661 = vrot.slane %v636, 4
      %v662 = vrot.slane %v637, 4
      %v663 = vsel %vm476, %v661, %v662
      %v664 = vsel %vm480, %v663, 0
      %666 = vmatprep.subr.mxu0 %v656
      %667 = vmatpush1.msra.mxu0 %v655
      %668 = vmatprep.subr.mxu0 %v658
      %669 = vmatpush1.msra.mxu0 %v657
      %670 = vmatprep.subr.mxu0 0.0
      %671 = vmatpush1.msra.mxu0 0.0
      %672 = vmatprep.subr.mxu0 0.0
      %673 = vmatpush1.msra.mxu0 0.0
      %674 = vmatprep.subr.mxu0 0.0
      %675 = vmatpush1.msra.mxu0 0.0
      %676 = vmatprep.subr.mxu0 0.0
      %677 = vmatpush1.msra.mxu0 0.0
      %678 = vmatprep.subr.mxu0 0.0
      %679 = vmatpush1.msra.mxu0 0.0
      %680 = vmatprep.subr.mxu0 0.0
      %681 = vmatpush1.msra.mxu0 0.0
      %682 = vmatprep.subr.mxu0 0.0
      %683 = vmatpush1.msra.mxu0 0.0
      %684 = vmatprep.subr.mxu0 0.0
      %685 = vmatpush1.msra.mxu0 0.0
      %686 = vmatprep.subr.mxu0 0.0
      %687 = vmatpush1.msra.mxu0 0.0
      %688 = vmatprep.subr.mxu0 0.0
      %689 = vmatpush1.msra.mxu0 0.0
      %690 = vmatprep.subr.mxu0 0.0
      %691 = vmatpush1.msra.mxu0 0.0
      %692 = vmatprep.subr.mxu0 0.0
      %693 = vmatpush1.msra.mxu0 0.0
      %694 = vmatprep.subr.mxu0 0.0
      %695 = vmatpush1.msra.mxu0 0.0
      %696 = vmatprep.subr.mxu0 0.0
      %697 = vmatpush1.msra.mxu0 0.0
      %698 = vmatprep.subr.mxu0 0.0
      %699 = vmatpush1.msra.mxu0 0.0
      %700 = vmatprep.subr.mxu0 0.0
      %701 = vmatpush1.msra.mxu0 0.0
      %702 = vmatprep.subr.mxu0 0.0
      %703 = vmatpush1.msra.mxu0 0.0
      %704 = vmatprep.subr.mxu0 0.0
      %705 = vmatpush1.msra.mxu0 0.0
      %706 = vmatprep.subr.mxu0 0.0
      %707 = vmatpush1.msra.mxu0 0.0
      %708 = vmatprep.subr.mxu0 0.0
      %709 = vmatpush1.msra.mxu0 0.0
      %710 = vmatprep.subr.mxu0 0.0
      %711 = vmatpush1.msra.mxu0 0.0
      %712 = vmatprep.subr.mxu0 0.0
      %713 = vmatpush1.msra.mxu0 0.0
      %714 = vmatprep.subr.mxu0 0.0
      %715 = vmatpush1.msra.mxu0 0.0
      %716 = vmatprep.subr.mxu0 0.0
      %717 = vmatpush1.msra.mxu0 0.0
      %718 = vmatprep.subr.mxu0 0.0
      %719 = vmatpush1.msra.mxu0 0.0
      %720 = vmatprep.subr.mxu0 0.0
      %721 = vmatpush1.msra.mxu0 0.0
      %722 = vmatprep.subr.mxu0 0.0
      %723 = vmatpush1.msra.mxu0 0.0
      %724 = vmatprep.subr.mxu0 0.0
      %725 = vmatpush1.msra.mxu0 0.0
      %726 = vmatprep.subr.mxu0 0.0
      %727 = vmatpush1.msra.mxu0 0.0
      %728 = vmatprep.subr.mxu0 0.0
      %729 = vmatpush1.msra.mxu0 0.0
      %730 = vmatprep.mubr.f32.mxu0 0.0
      %731 = vmatmul.mubr.f32.gmra.mrb[0].mxu0 %v664
      %v732 = vpop.f32.mrb[0].mxu0
      %v733 = vadd.f32 0.0, %v732
      %v734 = vpop.f32.mrb[0].mxu0
      %v735 = vadd.f32 0.0, %v734
      %736 = vdwg.mxu0
      %v737 = vadd.f32 %v628, %v733
      %v738 = vadd.f32 %v630, %v735
      %v739 = vlaneseq
      %v740 = vshrl.u32 %v739, 7
      %v741 = vsub.s32 3, %v740
      %v742 = vrot.slane %v417, %v741
      %v743 = vmul.f32 %v742, %v390
      %v744 = vmul.f32 %v742, %v395
      %s745 = scalar_lea.vmem %s212, 48
      %v746 = vld [vmem:[%s745] sm:$0xff]
      %v747 = vld [vmem:[%s745 + $0x8] sm:$0xff]
      %748 = vset.pattern.permute.xlu0 0
      %749 = vperm.xlu0 %748, %v746
      %v750 = vpop.permute.xlu0 %749
      %751 = vset.pattern.permute.xlu0 0
      %752 = vperm.xlu0 %751, %v747
      %v753 = vpop.permute.xlu0 %752
      %vm754 = vcmp.eq.s32.totalorder %v419, %v750
      %vm755 = vcmp.eq.s32.totalorder %v420, %v750
      %vm756 = vcmp.eq.s32.totalorder %v419, %v753
      %vm757 = vcmp.eq.s32.totalorder %v420, %v753
      %v758 = vsel %vm754, 1, 0
      %v759 = vsel %vm755, 1, 0
      %v760 = vsel %vm756, 1, 0
      %v761 = vsel %vm757, 1, 0
      %v762 = vcvt.s32.f32 %v758
      %v763 = vcvt.s32.f32 %v759
      %v764 = vcvt.s32.f32 %v760
      %v765 = vcvt.s32.f32 %v761
      %v768 = vrot.slane %v743, 4
      %v769 = vrot.slane %v744, 4
      %v770 = vsel %vm476, %v768, %v769
      %v771 = vsel %vm480, %v770, 0
      %773 = vmatprep.subr.mxu0 %v763
      %774 = vmatpush1.msra.mxu0 %v762
      %775 = vmatprep.subr.mxu0 %v765
      %776 = vmatpush1.msra.mxu0 %v764
      %777 = vmatprep.subr.mxu0 0.0
      %778 = vmatpush1.msra.mxu0 0.0
      %779 = vmatprep.subr.mxu0 0.0
      %780 = vmatpush1.msra.mxu0 0.0
      %781 = vmatprep.subr.mxu0 0.0
      %782 = vmatpush1.msra.mxu0 0.0
      %783 = vmatprep.subr.mxu0 0.0
      %784 = vmatpush1.msra.mxu0 0.0
      %785 = vmatprep.subr.mxu0 0.0
      %786 = vmatpush1.msra.mxu0 0.0
      %787 = vmatprep.subr.mxu0 0.0
      %788 = vmatpush1.msra.mxu0 0.0
      %789 = vmatprep.subr.mxu0 0.0
      %790 = vmatpush1.msra.mxu0 0.0
      %791 = vmatprep.subr.mxu0 0.0
      %792 = vmatpush1.msra.mxu0 0.0
      %793 = vmatprep.subr.mxu0 0.0
      %794 = vmatpush1.msra.mxu0 0.0
      %795 = vmatprep.subr.mxu0 0.0
      %796 = vmatpush1.msra.mxu0 0.0
      %797 = vmatprep.subr.mxu0 0.0
      %798 = vmatpush1.msra.mxu0 0.0
      %799 = vmatprep.subr.mxu0 0.0
      %800 = vmatpush1.msra.mxu0 0.0
      %801 = vmatprep.subr.mxu0 0.0
      %802 = vmatpush1.msra.mxu0 0.0
      %803 = vmatprep.subr.mxu0 0.0
      %804 = vmatpush1.msra.mxu0 0.0
      %805 = vmatprep.subr.mxu0 0.0
      %806 = vmatpush1.msra.mxu0 0.0
      %807 = vmatprep.subr.mxu0 0.0
      %808 = vmatpush1.msra.mxu0 0.0
      %809 = vmatprep.subr.mxu0 0.0
      %810 = vmatpush1.msra.mxu0 0.0
      %811 = vmatprep.subr.mxu0 0.0
      %812 = vmatpush1.msra.mxu0 0.0
      %813 = vmatprep.subr.mxu0 0.0
      %814 = vmatpush1.msra.mxu0 0.0
      %815 = vmatprep.subr.mxu0 0.0
      %816 = vmatpush1.msra.mxu0 0.0
      %817 = vmatprep.subr.mxu0 0.0
      %818 = vmatpush1.msra.mxu0 0.0
      %819 = vmatprep.subr.mxu0 0.0
      %820 = vmatpush1.msra.mxu0 0.0
      %821 = vmatprep.subr.mxu0 0.0
      %822 = vmatpush1.msra.mxu0 0.0
      %823 = vmatprep.subr.mxu0 0.0
      %824 = vmatpush1.msra.mxu0 0.0
      %825 = vmatprep.subr.mxu0 0.0
      %826 = vmatpush1.msra.mxu0 0.0
      %827 = vmatprep.subr.mxu0 0.0
      %828 = vmatpush1.msra.mxu0 0.0
      %829 = vmatprep.subr.mxu0 0.0
      %830 = vmatpush1.msra.mxu0 0.0
      %831 = vmatprep.subr.mxu0 0.0
      %832 = vmatpush1.msra.mxu0 0.0
      %833 = vmatprep.subr.mxu0 0.0
      %834 = vmatpush1.msra.mxu0 0.0
      %835 = vmatprep.subr.mxu0 0.0
      %836 = vmatpush1.msra.mxu0 0.0
      %837 = vmatprep.mubr.f32.mxu0 0.0
      %838 = vmatmul.mubr.f32.gmra.mrb[0].mxu0 %v771
      %v839 = vpop.f32.mrb[0].mxu0
      %v840 = vadd.f32 0.0, %v839
      %v841 = vpop.f32.mrb[0].mxu0
      %v842 = vadd.f32 0.0, %v841
      %843 = vdwg.mxu0
      %v844 = vadd.f32 %v737, %v840
      %v845 = vadd.f32 %v738, %v842
      %846 = vst [vmem:[%s217] sm:$0xff] %v844
      %847 = vst [vmem:[%s217 + $0x8] sm:$0xff] %v845
      %p848 = scmp.lt.s32.totalorder %s15, 1
      %s849 = scalar_select %p848, %s15, 1
      %s850 = smul.addr %s849, 2
      %s851 = smul.addr %s850, 8
      %s852 = scalar_lea.vmem %s4, %s851
      // Predicated region
      $region37: #{fiery_forward.4} parent=35 // pred_check
        %p853 = pneg %p127
      $region38: #{fiery_forward.4} parent=35 // pred_check_branch
        %855 = sbr.rel (%p853) target = $region40
      $region39: #{fiery_forward.4} parent=35 // pred_region
        _
      $region40: #{fiery_forward.4} parent=35 // pred_fallthru
        _
    $region36: #{fiery_forward.4} parent=5 // pred_fallthru
      _
    %p856 = scmp.le.s32.totalorder 2, %s10
    // Predicated region
    $region41: #{fiery_forward.4} parent=5 // pred_check
      %p857 = pneg %p856
    $region42: #{fiery_forward.4} parent=5 // pred_check_branch
      %859 = sbr.rel (%p857) target = $region44
    $region43: #{fiery_forward.4} parent=5 // pred_region
      %s860 = ssub.s32 %s10, 2
      // Predicated region
      $region45: #{fiery_forward.4} parent=43 // pred_check
        %p861 = pneg %p133
      $region46: #{fiery_forward.4} parent=43 // pred_check_branch
        %863 = sbr.rel (%p861) target = $region48
      $region47: #{fiery_forward.4} parent=43 // pred_region
        %p864 = scmp.lt.s32.totalorder %s16, 1
        %s865 = scalar_select %p864, %s16, 1
        %s866 = smul.addr %s865, 2
        %s867 = smul.addr %s866, 8
        %s868 = scalar_lea.vmem %s4, %s867
      $region48: #{fiery_forward.4} parent=43 // pred_fallthru
        _
    $region44: #{fiery_forward.4} parent=5 // pred_fallthru
      _
  $region6: #{fiery_forward.4} parent=0 // loop_footer
    %s14 = sadd.s32 1, %s10
  $region7: #{fiery_forward.4} parent=0 // loop_footer_branch
    %9 = sbr.rel target = $region3
  $region8: #{fiery_forward.4} parent=0 // loop_exit
    _

// kernel: fiery_forward.5
$region0: #{fiery_forward.5}
  #allocation0 [shape = 'u32[]', space=smem, size = 0x4, offset = 0x4, fixed_abs, tag = 'smem constant byte address 0x4 - core index']
  #allocation1 [shape = 'u32[144,128]{1,0:T(1,128)}', space=vmem, size = 0x12000, scoped, tag = 'internal scratch']
  %s0 = inlined_call_operand.smem [shape: u32[30], index: -1, kind: input, shape index: {}]
  %s1 = sld [smem:[%s0]]
  %s2 = scalar_lea.smem %s0, 1
  %s3 = sld [smem:[%s2]]
  %s4 = scalar_lea.smem %s0, 2
  %s5 = sld [smem:[%s4]]
  %s6 = scalar_lea.smem %s0, 3
  %s7 = sld [smem:[%s6]]
  %s8 = scalar_lea.smem %s0, 4
  %s9 = sld [smem:[%s8]]
  %s10 = scalar_lea.smem %s0, 5
  %s11 = sld [smem:[%s10]]
  %s12 = scalar_lea.smem %s0, 6
  %s13 = sld [smem:[%s12]]
  %s14 = scalar_lea.smem %s0, 7
  %s15 = sld [smem:[%s14]]
  %s16 = scalar_lea.smem %s0, 8
  %s17 = sld [smem:[%s16]]
  %s18 = scalar_lea.smem %s0, 9
  %s19 = sld [smem:[%s18]]
  %s20 = scalar_lea.smem %s0, 10
  %s21 = sld [smem:[%s20]]
  %s22 = scalar_lea.smem %s0, 11
  %s23 = sld [smem:[%s22]]
  %s24 = scalar_lea.smem %s0, 12
  %s25 = sld [smem:[%s24]]
  %s26 = scalar_lea.smem %s0, 13
  %s27 = sld [smem:[%s26]]
  %s28 = scalar_lea.smem %s0, 14
  %s29 = sld [smem:[%s28]]
  %s30 = scalar_lea.smem %s0, 15
  %s31 = sld [smem:[%s30]]
  %s32 = scalar_lea.smem %s0, 16
  %s33 = sld [smem:[%s32]]
  %s34 = scalar_lea.smem %s0, 17
  %s35 = sld [smem:[%s34]]
  %s36 = scalar_lea.smem %s0, 18
  %s37 = sld [smem:[%s36]]
  %s38 = scalar_lea.smem %s0, 19
  %s39 = sld [smem:[%s38]]
  %s40 = scalar_lea.smem %s0, 20
  %s41 = sld [smem:[%s40]]
  %s42 = scalar_lea.smem %s0, 21
  %s43 = sld [smem:[%s42]]
  %s44 = scalar_lea.smem %s0, 22
  %s45 = sld [smem:[%s44]]
  %s46 = scalar_lea.smem %s0, 23
  %s47 = sld [smem:[%s46]]
  %s48 = scalar_lea.smem %s0, 24
  %s49 = sld [smem:[%s48]]
  %s50 = scalar_lea.smem %s0, 25
  %s51 = sld [smem:[%s50]]
  %s52 = scalar_lea.smem %s0, 26
  %s53 = sld [smem:[%s52]]
  %s54 = scalar_lea.smem %s0, 27
  %s55 = sld [smem:[%s54]]
  %s56 = scalar_lea.smem %s0, 28
  %s57 = sld [smem:[%s56]]
  %s58 = scalar_lea.smem %s0, 29
  %s59 = sld [smem:[%s58]]
  %60 = xla_tuple %s51, %s53, %s55, %s57, %s59
  %s61 = sld [smem:[#allocation0]]
  $region142: #{fiery_forward.5} parent=0
    _
  %s63 = ssub.s32 1, %s61
  %s64 = scalar_select 0, %s63, %s61
  // Predicated region
  $region2: #{fiery_forward.5} parent=0 // pred_check
    _
  $region3: #{fiery_forward.5} parent=0 // pred_check_branch
    %66 = sbr.rel (0) target = $region5
  $region4: #{fiery_forward.5} parent=0 // pred_region
    _
  $region5: #{fiery_forward.5} parent=0 // pred_fallthru
    _
  // Predicated region
  $region6: #{fiery_forward.5} parent=0 // pred_check
    _
  $region7: #{fiery_forward.5} parent=0 // pred_check_branch
    %68 = sbr.rel (0) target = $region9
  $region8: #{fiery_forward.5} parent=0 // pred_region
    _
  $region9: #{fiery_forward.5} parent=0 // pred_fallthru
    _
  // Predicated region
  $region10: #{fiery_forward.5} parent=0 // pred_check
    _
  $region11: #{fiery_forward.5} parent=0 // pred_check_branch
    %70 = sbr.rel (0) target = $region13
  $region12: #{fiery_forward.5} parent=0 // pred_region
    _
  $region13: #{fiery_forward.5} parent=0 // pred_fallthru
    _
  // Predicated region
  $region14: #{fiery_forward.5} parent=0 // pred_check
    _
  $region15: #{fiery_forward.5} parent=0 // pred_check_branch
    %72 = sbr.rel (0) target = $region17
  $region16: #{fiery_forward.5} parent=0 // pred_region
    _
  $region17: #{fiery_forward.5} parent=0 // pred_fallthru
    _
  // Predicated region
  $region18: #{fiery_forward.5} parent=0 // pred_check
    _
  $region19: #{fiery_forward.5} parent=0 // pred_check_branch
    %74 = sbr.rel (0) target = $region21
  $region20: #{fiery_forward.5} parent=0 // pred_region
    _
  $region21: #{fiery_forward.5} parent=0 // pred_fallthru
    _
  // Predicated region
  $region22: #{fiery_forward.5} parent=0 // pred_check
    _
  $region23: #{fiery_forward.5} parent=0 // pred_check_branch
    %76 = sbr.rel (0) target = $region25
  $region24: #{fiery_forward.5} parent=0 // pred_region
    _
  $region25: #{fiery_forward.5} parent=0 // pred_fallthru
    _
  // Predicated region
  $region26: #{fiery_forward.5} parent=0 // pred_check
    _
  $region27: #{fiery_forward.5} parent=0 // pred_check_branch
    %78 = sbr.rel (0) target = $region29
  $region28: #{fiery_forward.5} parent=0 // pred_region
    _
  $region29: #{fiery_forward.5} parent=0 // pred_fallthru
    _
  // Predicated region
  $region30: #{fiery_forward.5} parent=0 // pred_check
    _
  $region31: #{fiery_forward.5} parent=0 // pred_check_branch
    %80 = sbr.rel (0) target = $region33
  $region32: #{fiery_forward.5} parent=0 // pred_region
    _
  $region33: #{fiery_forward.5} parent=0 // pred_fallthru
    _
  // Predicated region
  $region34: #{fiery_forward.5} parent=0 // pred_check
    _
  $region35: #{fiery_forward.5} parent=0 // pred_check_branch
    %82 = sbr.rel (0) target = $region37
  $region36: #{fiery_forward.5} parent=0 // pred_region
    _
  $region37: #{fiery_forward.5} parent=0 // pred_fallthru
    _
  // Predicated region
  $region38: #{fiery_forward.5} parent=0 // pred_check
    _
  $region39: #{fiery_forward.5} parent=0 // pred_check_branch
    %84 = sbr.rel (0) target = $region41
  $region40: #{fiery_forward.5} parent=0 // pred_region
    _
  $region41: #{fiery_forward.5} parent=0 // pred_fallthru
    _
  // Predicated region
  $region42: #{fiery_forward.5} parent=0 // pred_check
    _
  $region43: #{fiery_forward.5} parent=0 // pred_check_branch
    %86 = sbr.rel (0) target = $region45
  $region44: #{fiery_forward.5} parent=0 // pred_region
    _
  $region45: #{fiery_forward.5} parent=0 // pred_fallthru
    _
  // Predicated region
  $region46: #{fiery_forward.5} parent=0 // pred_check
    _
  $region47: #{fiery_forward.5} parent=0 // pred_check_branch
    %88 = sbr.rel (0) target = $region49
  $region48: #{fiery_forward.5} parent=0 // pred_region
    _
  $region49: #{fiery_forward.5} parent=0 // pred_fallthru
    _
  // Predicated region
  $region50: #{fiery_forward.5} parent=0 // pred_check
    _
  $region51: #{fiery_forward.5} parent=0 // pred_check_branch
    %90 = sbr.rel (0) target = $region53
  $region52: #{fiery_forward.5} parent=0 // pred_region
    _
  $region53: #{fiery_forward.5} parent=0 // pred_fallthru
    _
  // Predicated region
  $region54: #{fiery_forward.5} parent=0 // pred_check
    _
  $region55: #{fiery_forward.5} parent=0 // pred_check_branch
    %92 = sbr.rel (0) target = $region57
  $region56: #{fiery_forward.5} parent=0 // pred_region
    _
  $region57: #{fiery_forward.5} parent=0 // pred_fallthru
    _
  // Predicated region
  $region58: #{fiery_forward.5} parent=0 // pred_check
    _
  $region59: #{fiery_forward.5} parent=0 // pred_check_branch
    %94 = sbr.rel (0) target = $region61
  $region60: #{fiery_forward.5} parent=0 // pred_region
    _
  $region61: #{fiery_forward.5} parent=0 // pred_fallthru
    _
  // Predicated region
  $region62: #{fiery_forward.5} parent=0 // pred_check
    _
  $region63: #{fiery_forward.5} parent=0 // pred_check_branch
    %96 = sbr.rel (0) target = $region65
  $region64: #{fiery_forward.5} parent=0 // pred_region
    _
  $region65: #{fiery_forward.5} parent=0 // pred_fallthru
    _
  // Predicated region
  $region66: #{fiery_forward.5} parent=0 // pred_check
    _
  $region67: #{fiery_forward.5} parent=0 // pred_check_branch
    %98 = sbr.rel (0) target = $region69
  $region68: #{fiery_forward.5} parent=0 // pred_region
    _
  $region69: #{fiery_forward.5} parent=0 // pred_fallthru
    _
  // Predicated region
  $region70: #{fiery_forward.5} parent=0 // pred_check
    _
  $region71: #{fiery_forward.5} parent=0 // pred_check_branch
    %100 = sbr.rel (0) target = $region73
  $region72: #{fiery_forward.5} parent=0 // pred_region
    _
  $region73: #{fiery_forward.5} parent=0 // pred_fallthru
    _
  // Predicated region
  $region74: #{fiery_forward.5} parent=0 // pred_check
    _
  $region75: #{fiery_forward.5} parent=0 // pred_check_branch
    %102 = sbr.rel (0) target = $region77
  $region76: #{fiery_forward.5} parent=0 // pred_region
    _
  $region77: #{fiery_forward.5} parent=0 // pred_fallthru
    _
  // Predicated region
  $region78: #{fiery_forward.5} parent=0 // pred_check
    _
  $region79: #{fiery_forward.5} parent=0 // pred_check_branch
    %104 = sbr.rel (0) target = $region81
  $region80: #{fiery_forward.5} parent=0 // pred_region
    _
  $region81: #{fiery_forward.5} parent=0 // pred_fallthru
    _
  // Predicated region
  $region82: #{fiery_forward.5} parent=0 // pred_check
    _
  $region83: #{fiery_forward.5} parent=0 // pred_check_branch
    %106 = sbr.rel (0) target = $region85
  $region84: #{fiery_forward.5} parent=0 // pred_region
    _
  $region85: #{fiery_forward.5} parent=0 // pred_fallthru
    _
  // Predicated region
  $region86: #{fiery_forward.5} parent=0 // pred_check
    _
  $region87: #{fiery_forward.5} parent=0 // pred_check_branch
    %108 = sbr.rel (0) target = $region89
  $region88: #{fiery_forward.5} parent=0 // pred_region
    _
  $region89: #{fiery_forward.5} parent=0 // pred_fallthru
    _
  // Predicated region
  $region90: #{fiery_forward.5} parent=0 // pred_check
    _
  $region91: #{fiery_forward.5} parent=0 // pred_check_branch
    %110 = sbr.rel (0) target = $region93
  $region92: #{fiery_forward.5} parent=0 // pred_region
    _
  $region93: #{fiery_forward.5} parent=0 // pred_fallthru
    _
  // Predicated region
  $region94: #{fiery_forward.5} parent=0 // pred_check
    _
  $region95: #{fiery_forward.5} parent=0 // pred_check_branch
    %112 = sbr.rel (0) target = $region97
  $region96: #{fiery_forward.5} parent=0 // pred_region
    _
  $region97: #{fiery_forward.5} parent=0 // pred_fallthru
    _
  // Predicated region
  $region98: #{fiery_forward.5} parent=0 // pred_check
    _
  $region99: #{fiery_forward.5} parent=0 // pred_check_branch
    %114 = sbr.rel (0) target = $region101
  $region100: #{fiery_forward.5} parent=0 // pred_region
    _
  $region101: #{fiery_forward.5} parent=0 // pred_fallthru
    _
  %v115 = vld [vmem:[%s9] ss:$8 sm:$0x3]
  %s116 = scalar_lea.vmem %s9, 1
  %v117 = vld [vmem:[%s116] ss:$8 sm:$0x3]
  %s118 = scalar_lea.vmem %s9, 2
  %v119 = vld [vmem:[%s118] ss:$8 sm:$0x3]
  %s120 = scalar_lea.vmem %s9, 3
  %v121 = vld [vmem:[%s120] ss:$8 sm:$0x3]
  %s122 = scalar_lea.vmem %s9, 5
  %v123 = vld [vmem:[%s122] ss:$8 sm:$0x3]
  %s124 = scalar_lea.vmem %s9, 6
  %v125 = vld [vmem:[%s124] ss:$8 sm:$0x3]
  %s126 = scalar_lea.vmem %s9, 7
  %v127 = vld [vmem:[%s126] ss:$8 sm:$0x3]
  %s128 = scalar_lea.vmem %s9, 16
  %v129 = vld [vmem:[%s128] ss:$8 sm:$0x3]
  %v130 = vld [vmem:[%s1] sm:$0xff]
  %v131 = vld [vmem:[%s1 + $0x8] sm:$0xff]
  %132 = vrot.lane.b32.xlu0 %v130, 17
  %v133 = vpop.permute.xlu0 %132
  %134 = vrot.lane.b32.xlu0 %v131, 17
  %v135 = vpop.permute.xlu0 %134
  %v136 = vlaneseq
  %v137 = vand.u32 %v136, 127
  %vm138 = vcmp.lt.s32.totalorder %v137, 17
  %v139 = vsel %vm138, %v133, %v135
  %v140 = vsel %vm138, %v135, %v133
  %v142 = vlaneseq
  %v143 = vshrl.u32 %v142, 7
  %v144 = vsub.s32 0, %v143
  %v145 = vrot.slane %v115, %v144
  %v146 = vlaneseq
  %v147 = vshrl.u32 %v146, 7
  %v148 = vsub.s32 1, %v147
  %v149 = vrot.slane %v115, %v148
  %v152 = vmul.f32 %v140, %v145
  %v153 = vmul.f32 %v139, %v149
  %154 = vrot.lane.b32.xlu0 %v130, 16
  %v155 = vpop.permute.xlu0 %154
  %156 = vrot.lane.b32.xlu0 %v131, 16
  %v157 = vpop.permute.xlu0 %156
  %vm158 = vcmp.lt.s32.totalorder %v137, 16
  %v159 = vsel %vm158, %v155, %v157
  %v160 = vsel %vm158, %v157, %v155
  %v162 = vlaneseq
  %v163 = vshrl.u32 %v162, 7
  %v164 = vsub.s32 0, %v163
  %v165 = vrot.slane %v117, %v164
  %v166 = vlaneseq
  %v167 = vshrl.u32 %v166, 7
  %v168 = vsub.s32 1, %v167
  %v169 = vrot.slane %v117, %v168
  %v172 = vmul.f32 %v160, %v165
  %v173 = vmul.f32 %v159, %v169
  %174 = vrot.lane.b32.xlu0 %v130, 15
  %v175 = vpop.permute.xlu0 %174
  %176 = vrot.lane.b32.xlu0 %v131, 15
  %v177 = vpop.permute.xlu0 %176
  %vm178 = vcmp.lt.s32.totalorder %v137, 15
  %v179 = vsel %vm178, %v175, %v177
  %v180 = vsel %vm178, %v177, %v175
  %v182 = vlaneseq
  %v183 = vshrl.u32 %v182, 7
  %v184 = vsub.s32 0, %v183
  %v185 = vrot.slane %v119, %v184
  %v186 = vlaneseq
  %v187 = vshrl.u32 %v186, 7
  %v188 = vsub.s32 1, %v187
  %v189 = vrot.slane %v119, %v188
  %v192 = vmul.f32 %v180, %v185
  %v193 = vmul.f32 %v179, %v189
  %194 = vrot.lane.b32.xlu0 %v130, 1
  %v195 = vpop.permute.xlu0 %194
  %196 = vrot.lane.b32.xlu0 %v131, 1
  %v197 = vpop.permute.xlu0 %196
  %vm198 = vcmp.lt.s32.totalorder %v137, 1
  %v199 = vsel %vm198, %v195, %v197
  %v200 = vsel %vm198, %v197, %v195
  %v202 = vlaneseq
  %v203 = vshrl.u32 %v202, 7
  %v204 = vsub.s32 0, %v203
  %v205 = vrot.slane %v121, %v204
  %v206 = vlaneseq
  %v207 = vshrl.u32 %v206, 7
  %v208 = vsub.s32 1, %v207
  %v209 = vrot.slane %v121, %v208
  %v212 = vmul.f32 %v200, %v205
  %v213 = vmul.f32 %v199, %v209
  %214 = vrot.lane.b32.xlu0 %v130, 127
  %v215 = vpop.permute.xlu0 %214
  %216 = vrot.lane.b32.xlu0 %v131, 127
  %v217 = vpop.permute.xlu0 %216
  %vm218 = vcmp.lt.s32.totalorder %v137, 127
  %v219 = vsel %vm218, %v215, %v217
  %v220 = vsel %vm218, %v217, %v215
  %v222 = vlaneseq
  %v223 = vshrl.u32 %v222, 7
  %v224 = vsub.s32 0, %v223
  %v225 = vrot.slane %v123, %v224
  %v226 = vlaneseq
  %v227 = vshrl.u32 %v226, 7
  %v228 = vsub.s32 1, %v227
  %v229 = vrot.slane %v123, %v228
  %v232 = vmul.f32 %v219, %v225
  %v233 = vmul.f32 %v220, %v229
  %234 = vrot.lane.b32.xlu0 %v130, 113
  %v235 = vpop.permute.xlu0 %234
  %236 = vrot.lane.b32.xlu0 %v131, 113
  %v237 = vpop.permute.xlu0 %236
  %vm238 = vcmp.lt.s32.totalorder %v137, 113
  %v239 = vsel %vm238, %v235, %v237
  %v240 = vsel %vm238, %v237, %v235
  %v242 = vlaneseq
  %v243 = vshrl.u32 %v242, 7
  %v244 = vsub.s32 0, %v243
  %v245 = vrot.slane %v125, %v244
  %v246 = vlaneseq
  %v247 = vshrl.u32 %v246, 7
  %v248 = vsub.s32 1, %v247
  %v249 = vrot.slane %v125, %v248
  %v252 = vmul.f32 %v239, %v245
  %v253 = vmul.f32 %v240, %v249
  %254 = vrot.lane.b32.xlu0 %v130, 112
  %v255 = vpop.permute.xlu0 %254
  %256 = vrot.lane.b32.xlu0 %v131, 112
  %v257 = vpop.permute.xlu0 %256
  %vm258 = vcmp.lt.s32.totalorder %v137, 112
  %v259 = vsel %vm258, %v255, %v257
  %v260 = vsel %vm258, %v257, %v255
  %v262 = vlaneseq
  %v263 = vshrl.u32 %v262, 7
  %v264 = vsub.s32 0, %v263
  %v265 = vrot.slane %v127, %v264
  %v266 = vlaneseq
  %v267 = vshrl.u32 %v266, 7
  %v268 = vsub.s32 1, %v267
  %v269 = vrot.slane %v127, %v268
  %v272 = vmul.f32 %v259, %v265
  %v273 = vmul.f32 %v260, %v269
  %274 = vrot.lane.b32.xlu0 %v130, 111
  %v275 = vpop.permute.xlu0 %274
  %276 = vrot.lane.b32.xlu0 %v131, 111
  %v277 = vpop.permute.xlu0 %276
  %vm278 = vcmp.lt.s32.totalorder %v137, 111
  %v279 = vsel %vm278, %v275, %v277
  %v280 = vsel %vm278, %v277, %v275
  %v282 = vlaneseq
  %v283 = vshrl.u32 %v282, 7
  %v284 = vsub.s32 0, %v283
  %v285 = vrot.slane %v129, %v284
  %v286 = vlaneseq
  %v287 = vshrl.u32 %v286, 7
  %v288 = vsub.s32 1, %v287
  %v289 = vrot.slane %v129, %v288
  %v292 = vmul.f32 %v279, %v285
  %v293 = vmul.f32 %v280, %v289
  %v294 = vld [vmem:[%s11] sm:$0xff]
  %vm295 = vcmask 596992
  %v297 = vsel %vm295, %v294, 0
  %vm299 = vcmask 1040384
  %v301 = vsel %vm299, 1.0, 0
  %303 = vmatprep.subr.mxu0 %v153
  %304 = vmatpush1.msra.mxu0 %v152
  %305 = vmatprep.subr.mxu0 %v173
  %306 = vmatpush1.msra.mxu0 %v172
  %307 = vmatprep.subr.mxu0 %v193
  %308 = vmatpush1.msra.mxu0 %v192
  %309 = vmatprep.subr.mxu0 %v213
  %310 = vmatpush1.msra.mxu0 %v212
  %311 = vmatprep.subr.mxu0 %v131
  %312 = vmatpush1.msra.mxu0 %v130
  %313 = vmatprep.subr.mxu0 %v233
  %314 = vmatpush1.msra.mxu0 %v232
  %315 = vmatprep.subr.mxu0 %v253
  %316 = vmatpush1.msra.mxu0 %v252
  %317 = vmatprep.subr.mxu0 %v273
  %318 = vmatpush1.msra.mxu0 %v272
  %319 = vmatprep.subr.mxu0 %v293
  %320 = vmatpush1.msra.mxu0 %v292
  %321 = vmatprep.subr.mxu0 %v301
  %322 = vmatpush1.msra.mxu0 %v301
  %323 = vmatprep.subr.mxu0 0.0
  %324 = vmatpush1.msra.mxu0 0.0
  %325 = vmatprep.subr.mxu0 0.0
  %326 = vmatpush1.msra.mxu0 0.0
  %327 = vmatprep.subr.mxu0 0.0
  %328 = vmatpush1.msra.mxu0 0.0
  %329 = vmatprep.subr.mxu0 0.0
  %330 = vmatpush1.msra.mxu0 0.0
  %331 = vmatprep.subr.mxu0 0.0
  %332 = vmatpush1.msra.mxu0 0.0
  %333 = vmatprep.subr.mxu0 0.0
  %334 = vmatpush1.msra.mxu0 0.0
  %335 = vmatprep.subr.mxu0 0.0
  %336 = vmatpush1.msra.mxu0 0.0
  %337 = vmatprep.subr.mxu0 0.0
  %338 = vmatpush1.msra.mxu0 0.0
  %339 = vmatprep.subr.mxu0 0.0
  %340 = vmatpush1.msra.mxu0 0.0
  %341 = vmatprep.subr.mxu0 0.0
  %342 = vmatpush1.msra.mxu0 0.0
  %343 = vmatprep.subr.mxu0 0.0
  %344 = vmatpush1.msra.mxu0 0.0
  %345 = vmatprep.subr.mxu0 0.0
  %346 = vmatpush1.msra.mxu0 0.0
  %347 = vmatprep.subr.mxu0 0.0
  %348 = vmatpush1.msra.mxu0 0.0
  %349 = vmatprep.subr.mxu0 0.0
  %350 = vmatpush1.msra.mxu0 0.0
  %351 = vmatprep.subr.mxu0 0.0
  %352 = vmatpush1.msra.mxu0 0.0
  %353 = vmatprep.subr.mxu0 0.0
  %354 = vmatpush1.msra.mxu0 0.0
  %355 = vmatprep.subr.mxu0 0.0
  %356 = vmatpush1.msra.mxu0 0.0
  %357 = vmatprep.subr.mxu0 0.0
  %358 = vmatpush1.msra.mxu0 0.0
  %359 = vmatprep.subr.mxu0 0.0
  %360 = vmatpush1.msra.mxu0 0.0
  %361 = vmatprep.subr.mxu0 0.0
  %362 = vmatpush1.msra.mxu0 0.0
  %363 = vmatprep.subr.mxu0 0.0
  %364 = vmatpush1.msra.mxu0 0.0
  %365 = vmatprep.subr.mxu0 0.0
  %366 = vmatpush1.msra.mxu0 0.0
  %367 = vmatprep.mubr.f32.mxu0 0.0
  %368 = vmatmul.mubr.f32.gmra.mrb[0].mxu0 %v297
  %v369 = vpop.f32.mrb[0].mxu0
  %v370 = vadd.f32 0.0, %v369
  %v371 = vpop.f32.mrb[0].mxu0
  %v372 = vadd.f32 0.0, %v371
  %373 = vdwg.mxu0
  %vm374 = vcmp.gt.f32.partialorder %v370, 0.0
  %vm375 = vcmp.gt.f32.partialorder %v372, 0.0
  %v376 = vmul.f32 %v370, 0.2
  %v377 = vmul.f32 %v372, 0.2
  %v378 = vsel %vm374, %v370, %v376
  %v379 = vsel %vm375, %v372, %v377
  %380 = vrot.lane.b32.xlu0 %v378, 17
  %v381 = vpop.permute.xlu0 %380
  %382 = vrot.lane.b32.xlu0 %v379, 17
  %v383 = vpop.permute.xlu0 %382
  %v384 = vsel %vm138, %v381, %v383
  %v385 = vsel %vm138, %v383, %v381
  %v386 = vmul.f32 %v385, %v145
  %v387 = vmul.f32 %v384, %v149
  %388 = vrot.lane.b32.xlu0 %v378, 16
  %v389 = vpop.permute.xlu0 %388
  %390 = vrot.lane.b32.xlu0 %v379, 16
  %v391 = vpop.permute.xlu0 %390
  %v392 = vsel %vm158, %v389, %v391
  %v393 = vsel %vm158, %v391, %v389
  %v394 = vmul.f32 %v393, %v165
  %v395 = vmul.f32 %v392, %v169
  %396 = vrot.lane.b32.xlu0 %v378, 15
  %v397 = vpop.permute.xlu0 %396
  %398 = vrot.lane.b32.xlu0 %v379, 15
  %v399 = vpop.permute.xlu0 %398
  %v400 = vsel %vm178, %v397, %v399
  %v401 = vsel %vm178, %v399, %v397
  %v402 = vmul.f32 %v401, %v185
  %v403 = vmul.f32 %v400, %v189
  %404 = vrot.lane.b32.xlu0 %v378, 1
  %v405 = vpop.permute.xlu0 %404
  %406 = vrot.lane.b32.xlu0 %v379, 1
  %v407 = vpop.permute.xlu0 %406
  %v408 = vsel %vm198, %v405, %v407
  %v409 = vsel %vm198, %v407, %v405
  %v410 = vmul.f32 %v409, %v205
  %v411 = vmul.f32 %v408, %v209
  %412 = vrot.lane.b32.xlu0 %v378, 127
  %v413 = vpop.permute.xlu0 %412
  %414 = vrot.lane.b32.xlu0 %v379, 127
  %v415 = vpop.permute.xlu0 %414
  %v416 = vsel %vm218, %v413, %v415
  %v417 = vsel %vm218, %v415, %v413
  %v418 = vmul.f32 %v416, %v225
  %v419 = vmul.f32 %v417, %v229
  %420 = vrot.lane.b32.xlu0 %v378, 113
  %v421 = vpop.permute.xlu0 %420
  %422 = vrot.lane.b32.xlu0 %v379, 113
  %v423 = vpop.permute.xlu0 %422
  %v424 = vsel %vm238, %v421, %v423
  %v425 = vsel %vm238, %v423, %v421
  %v426 = vmul.f32 %v424, %v245
  %v427 = vmul.f32 %v425, %v249
  %428 = vrot.lane.b32.xlu0 %v378, 112
  %v429 = vpop.permute.xlu0 %428
  %430 = vrot.lane.b32.xlu0 %v379, 112
  %v431 = vpop.permute.xlu0 %430
  %v432 = vsel %vm258, %v429, %v431
  %v433 = vsel %vm258, %v431, %v429
  %v434 = vmul.f32 %v432, %v265
  %v435 = vmul.f32 %v433, %v269
  %436 = vrot.lane.b32.xlu0 %v378, 111
  %v437 = vpop.permute.xlu0 %436
  %438 = vrot.lane.b32.xlu0 %v379, 111
  %v439 = vpop.permute.xlu0 %438
  %v440 = vsel %vm278, %v437, %v439
  %v441 = vsel %vm278, %v439, %v437
  %v442 = vmul.f32 %v440, %v285
  %v443 = vmul.f32 %v441, %v289
  %v444 = vld [vmem:[%s13] sm:$0xff]
  %v446 = vsel %vm295, %v444, 0
  %448 = vmatprep.subr.mxu0 %v387
  %449 = vmatpush1.msra.mxu0 %v386
  %450 = vmatprep.subr.mxu0 %v395
  %451 = vmatpush1.msra.mxu0 %v394
  %452 = vmatprep.subr.mxu0 %v403
  %453 = vmatpush1.msra.mxu0 %v402
  %454 = vmatprep.subr.mxu0 %v411
  %455 = vmatpush1.msra.mxu0 %v410
  %456 = vmatprep.subr.mxu0 %v379
  %457 = vmatpush1.msra.mxu0 %v378
  %458 = vmatprep.subr.mxu0 %v419
  %459 = vmatpush1.msra.mxu0 %v418
  %460 = vmatprep.subr.mxu0 %v427
  %461 = vmatpush1.msra.mxu0 %v426
  %462 = vmatprep.subr.mxu0 %v435
  %463 = vmatpush1.msra.mxu0 %v434
  %464 = vmatprep.subr.mxu0 %v443
  %465 = vmatpush1.msra.mxu0 %v442
  %466 = vmatprep.subr.mxu0 %v301
  %467 = vmatpush1.msra.mxu0 %v301
  %468 = vmatprep.subr.mxu0 0.0
  %469 = vmatpush1.msra.mxu0 0.0
  %470 = vmatprep.subr.mxu0 0.0
  %471 = vmatpush1.msra.mxu0 0.0
  %472 = vmatprep.subr.mxu0 0.0
  %473 = vmatpush1.msra.mxu0 0.0
  %474 = vmatprep.subr.mxu0 0.0
  %475 = vmatpush1.msra.mxu0 0.0
  %476 = vmatprep.subr.mxu0 0.0
  %477 = vmatpush1.msra.mxu0 0.0
  %478 = vmatprep.subr.mxu0 0.0
  %479 = vmatpush1.msra.mxu0 0.0
  %480 = vmatprep.subr.mxu0 0.0
  %481 = vmatpush1.msra.mxu0 0.0
  %482 = vmatprep.subr.mxu0 0.0
  %483 = vmatpush1.msra.mxu0 0.0
  %484 = vmatprep.subr.mxu0 0.0
  %485 = vmatpush1.msra.mxu0 0.0
  %486 = vmatprep.subr.mxu0 0.0
  %487 = vmatpush1.msra.mxu0 0.0
  %488 = vmatprep.subr.mxu0 0.0
  %489 = vmatpush1.msra.mxu0 0.0
  %490 = vmatprep.subr.mxu0 0.0
  %491 = vmatpush1.msra.mxu0 0.0
  %492 = vmatprep.subr.mxu0 0.0
  %493 = vmatpush1.msra.mxu0 0.0
  %494 = vmatprep.subr.mxu0 0.0
  %495 = vmatpush1.msra.mxu0 0.0
  %496 = vmatprep.subr.mxu0 0.0
  %497 = vmatpush1.msra.mxu0 0.0
  %498 = vmatprep.subr.mxu0 0.0
  %499 = vmatpush1.msra.mxu0 0.0
  %500 = vmatprep.subr.mxu0 0.0
  %501 = vmatpush1.msra.mxu0 0.0
  %502 = vmatprep.subr.mxu0 0.0
  %503 = vmatpush1.msra.mxu0 0.0
  %504 = vmatprep.subr.mxu0 0.0
  %505 = vmatpush1.msra.mxu0 0.0
  %506 = vmatprep.subr.mxu0 0.0
  %507 = vmatpush1.msra.mxu0 0.0
  %508 = vmatprep.subr.mxu0 0.0
  %509 = vmatpush1.msra.mxu0 0.0
  %510 = vmatprep.subr.mxu0 0.0
  %511 = vmatpush1.msra.mxu0 0.0
  %512 = vmatprep.mubr.f32.mxu0 0.0
  %513 = vmatmul.mubr.f32.gmra.mrb[0].mxu0 %v446
  %v514 = vpop.f32.mrb[0].mxu0
  %v515 = vadd.f32 0.0, %v514
  %v516 = vpop.f32.mrb[0].mxu0
  %v517 = vadd.f32 0.0, %v516
  %518 = vdwg.mxu0
  %vm519 = vcmp.gt.f32.partialorder %v515, 0.0
  %vm520 = vcmp.gt.f32.partialorder %v517, 0.0
  %v521 = vmul.f32 %v515, 0.2
  %v522 = vmul.f32 %v517, 0.2
  %v523 = vsel %vm519, %v515, %v521
  %v524 = vsel %vm520, %v517, %v522
  %s525 = scalar_lea.vmem %s1, 16
  %v526 = vld [vmem:[%s525] sm:$0xff]
  %v527 = vld [vmem:[%s525 + $0x8] sm:$0xff]
  %528 = vrot.lane.b32.xlu0 %v526, 17
  %v529 = vpop.permute.xlu0 %528
  %530 = vrot.lane.b32.xlu0 %v527, 17
  %v531 = vpop.permute.xlu0 %530
  %v532 = vsel %vm138, %v529, %v531
  %v533 = vsel %vm138, %v531, %v529
  %v534 = vmul.f32 %v533, %v145
  %v535 = vmul.f32 %v532, %v149
  %536 = vrot.lane.b32.xlu0 %v526, 16
  %v537 = vpop.permute.xlu0 %536
  %538 = vrot.lane.b32.xlu0 %v527, 16
  %v539 = vpop.permute.xlu0 %538
  %v540 = vsel %vm158, %v537, %v539
  %v541 = vsel %vm158, %v539, %v537
  %v542 = vmul.f32 %v541, %v165
  %v543 = vmul.f32 %v540, %v169
  %544 = vrot.lane.b32.xlu0 %v526, 15
  %v545 = vpop.permute.xlu0 %544
  %546 = vrot.lane.b32.xlu0 %v527, 15
  %v547 = vpop.permute.xlu0 %546
  %v548 = vsel %vm178, %v545, %v547
  %v549 = vsel %vm178, %v547, %v545
  %v550 = vmul.f32 %v549, %v185
  %v551 = vmul.f32 %v548, %v189
  %552 = vrot.lane.b32.xlu0 %v526, 1
  %v553 = vpop.permute.xlu0 %552
  %554 = vrot.lane.b32.xlu0 %v527, 1
  %v555 = vpop.permute.xlu0 %554
  %v556 = vsel %vm198, %v553, %v555
  %v557 = vsel %vm198, %v555, %v553
  %v558 = vmul.f32 %v557, %v205
  %v559 = vmul.f32 %v556, %v209
  %560 = vrot.lane.b32.xlu0 %v526, 127
  %v561 = vpop.permute.xlu0 %560
  %562 = vrot.lane.b32.xlu0 %v527, 127
  %v563 = vpop.permute.xlu0 %562
  %v564 = vsel %vm218, %v561, %v563
  %v565 = vsel %vm218, %v563, %v561
  %v566 = vmul.f32 %v564, %v225
  %v567 = vmul.f32 %v565, %v229
  %568 = vrot.lane.b32.xlu0 %v526, 113
  %v569 = vpop.permute.xlu0 %568
  %570 = vrot.lane.b32.xlu0 %v527, 113
  %v571 = vpop.permute.xlu0 %570
  %v572 = vsel %vm238, %v569, %v571
  %v573 = vsel %vm238, %v571, %v569
  %v574 = vmul.f32 %v572, %v245
  %v575 = vmul.f32 %v573, %v249
  %576 = vrot.lane.b32.xlu0 %v526, 112
  %v577 = vpop.permute.xlu0 %576
  %578 = vrot.lane.b32.xlu0 %v527, 112
  %v579 = vpop.permute.xlu0 %578
  %v580 = vsel %vm258, %v577, %v579
  %v581 = vsel %vm258, %v579, %v577
  %v582 = vmul.f32 %v580, %v265
  %v583 = vmul.f32 %v581, %v269
  %584 = vrot.lane.b32.xlu0 %v526, 111
  %v585 = vpop.permute.xlu0 %584
  %586 = vrot.lane.b32.xlu0 %v527, 111
  %v587 = vpop.permute.xlu0 %586
  %v588 = vsel %vm278, %v585, %v587
  %v589 = vsel %vm278, %v587, %v585
  %v590 = vmul.f32 %v588, %v285
  %v591 = vmul.f32 %v589, %v289
  %592 = vmatprep.subr.mxu0 %v535
  %593 = vmatpush1.msra.mxu0 %v534
  %594 = vmatprep.subr.mxu0 %v543
  %595 = vmatpush1.msra.mxu0 %v542
  %596 = vmatprep.subr.mxu0 %v551
  %597 = vmatpush1.msra.mxu0 %v550
  %598 = vmatprep.subr.mxu0 %v559
  %599 = vmatpush1.msra.mxu0 %v558
  %600 = vmatprep.subr.mxu0 %v527
  %601 = vmatpush1.msra.mxu0 %v526
  %602 = vmatprep.subr.mxu0 %v567
  %603 = vmatpush1.msra.mxu0 %v566
  %604 = vmatprep.subr.mxu0 %v575
  %605 = vmatpush1.msra.mxu0 %v574
  %606 = vmatprep.subr.mxu0 %v583
  %607 = vmatpush1.msra.mxu0 %v582
  %608 = vmatprep.subr.mxu0 %v591
  %609 = vmatpush1.msra.mxu0 %v590
  %610 = vmatprep.subr.mxu0 %v301
  %611 = vmatpush1.msra.mxu0 %v301
  %612 = vmatprep.subr.mxu0 0.0
  %613 = vmatpush1.msra.mxu0 0.0
  %614 = vmatprep.subr.mxu0 0.0
  %615 = vmatpush1.msra.mxu0 0.0
  %616 = vmatprep.subr.mxu0 0.0
  %617 = vmatpush1.msra.mxu0 0.0
  %618 = vmatprep.subr.mxu0 0.0
  %619 = vmatpush1.msra.mxu0 0.0
  %620 = vmatprep.subr.mxu0 0.0
  %621 = vmatpush1.msra.mxu0 0.0
  %622 = vmatprep.subr.mxu0 0.0
  %623 = vmatpush1.msra.mxu0 0.0
  %624 = vmatprep.subr.mxu0 0.0
  %625 = vmatpush1.msra.mxu0 0.0
  %626 = vmatprep.subr.mxu0 0.0
  %627 = vmatpush1.msra.mxu0 0.0
  %628 = vmatprep.subr.mxu0 0.0
  %629 = vmatpush1.msra.mxu0 0.0
  %630 = vmatprep.subr.mxu0 0.0
  %631 = vmatpush1.msra.mxu0 0.0
  %632 = vmatprep.subr.mxu0 0.0
  %633 = vmatpush1.msra.mxu0 0.0
  %634 = vmatprep.subr.mxu0 0.0
  %635 = vmatpush1.msra.mxu0 0.0
  %636 = vmatprep.subr.mxu0 0.0
  %637 = vmatpush1.msra.mxu0 0.0
  %638 = vmatprep.subr.mxu0 0.0
  %639 = vmatpush1.msra.mxu0 0.0
  %640 = vmatprep.subr.mxu0 0.0
  %641 = vmatpush1.msra.mxu0 0.0
  %642 = vmatprep.subr.mxu0 0.0
  %643 = vmatpush1.msra.mxu0 0.0
  %644 = vmatprep.subr.mxu0 0.0
  %645 = vmatpush1.msra.mxu0 0.0
  %646 = vmatprep.subr.mxu0 0.0
  %647 = vmatpush1.msra.mxu0 0.0
  %648 = vmatprep.subr.mxu0 0.0
  %649 = vmatpush1.msra.mxu0 0.0
  %650 = vmatprep.subr.mxu0 0.0
  %651 = vmatpush1.msra.mxu0 0.0
  %652 = vmatprep.subr.mxu0 0.0
  %653 = vmatpush1.msra.mxu0 0.0
  %654 = vmatprep.subr.mxu0 0.0
  %655 = vmatpush1.msra.mxu0 0.0
  %656 = vmatprep.mubr.f32.mxu0 0.0
  %657 = vmatmul.mubr.f32.gmra.mrb[0].mxu0 %v297
  %v658 = vpop.f32.mrb[0].mxu0
  %v659 = vadd.f32 0.0, %v658
  %v660 = vpop.f32.mrb[0].mxu0
  %v661 = vadd.f32 0.0, %v660
  %662 = vdwg.mxu0
  %vm663 = vcmp.gt.f32.partialorder %v659, 0.0
  %vm664 = vcmp.gt.f32.partialorder %v661, 0.0
  %v665 = vmul.f32 %v659, 0.2
  %v666 = vmul.f32 %v661, 0.2
  %v667 = vsel %vm663, %v659, %v665
  %v668 = vsel %vm664, %v661, %v666
  %669 = vrot.lane.b32.xlu0 %v667, 17
  %v670 = vpop.permute.xlu0 %669
  %671 = vrot.lane.b32.xlu0 %v668, 17
  %v672 = vpop.permute.xlu0 %671
  %v673 = vsel %vm138, %v670, %v672
  %v674 = vsel %vm138, %v672, %v670
  %v675 = vmul.f32 %v674, %v145
  %v676 = vmul.f32 %v673, %v149
  %677 = vrot.lane.b32.xlu0 %v667, 16
  %v678 = vpop.permute.xlu0 %677
  %679 = vrot.lane.b32.xlu0 %v668, 16
  %v680 = vpop.permute.xlu0 %679
  %v681 = vsel %vm158, %v678, %v680
  %v682 = vsel %vm158, %v680, %v678
  %v683 = vmul.f32 %v682, %v165
  %v684 = vmul.f32 %v681, %v169
  %685 = vrot.lane.b32.xlu0 %v667, 15
  %v686 = vpop.permute.xlu0 %685
  %687 = vrot.lane.b32.xlu0 %v668, 15
  %v688 = vpop.permute.xlu0 %687
  %v689 = vsel %vm178, %v686, %v688
  %v690 = vsel %vm178, %v688, %v686
  %v691 = vmul.f32 %v690, %v185
  %v692 = vmul.f32 %v689, %v189
  %693 = vrot.lane.b32.xlu0 %v667, 1
  %v694 = vpop.permute.xlu0 %693
  %695 = vrot.lane.b32.xlu0 %v668, 1
  %v696 = vpop.permute.xlu0 %695
  %v697 = vsel %vm198, %v694, %v696
  %v698 = vsel %vm198, %v696, %v694
  %v699 = vmul.f32 %v698, %v205
  %v700 = vmul.f32 %v697, %v209
  %701 = vrot.lane.b32.xlu0 %v667, 127
  %v702 = vpop.permute.xlu0 %701
  %703 = vrot.lane.b32.xlu0 %v668, 127
  %v704 = vpop.permute.xlu0 %703
  %v705 = vsel %vm218, %v702, %v704
  %v706 = vsel %vm218, %v704, %v702
  %v707 = vmul.f32 %v705, %v225
  %v708 = vmul.f32 %v706, %v229
  %709 = vrot.lane.b32.xlu0 %v667, 113
  %v710 = vpop.permute.xlu0 %709
  %711 = vrot.lane.b32.xlu0 %v668, 113
  %v712 = vpop.permute.xlu0 %711
  %v713 = vsel %vm238, %v710, %v712
  %v714 = vsel %vm238, %v712, %v710
  %v715 = vmul.f32 %v713, %v245
  %v716 = vmul.f32 %v714, %v249
  %717 = vrot.lane.b32.xlu0 %v667, 112
  %v718 = vpop.permute.xlu0 %717
  %719 = vrot.lane.b32.xlu0 %v668, 112
  %v720 = vpop.permute.xlu0 %719
  %v721 = vsel %vm258, %v718, %v720
  %v722 = vsel %vm258, %v720, %v718
  %v723 = vmul.f32 %v721, %v265
  %v724 = vmul.f32 %v722, %v269
  %725 = vrot.lane.b32.xlu0 %v667, 111
  %v726 = vpop.permute.xlu0 %725
  %727 = vrot.lane.b32.xlu0 %v668, 111
  %v728 = vpop.permute.xlu0 %727
  %v729 = vsel %vm278, %v726, %v728
  %v730 = vsel %vm278, %v728, %v726
  %v731 = vmul.f32 %v729, %v285
  %v732 = vmul.f32 %v730, %v289
  %733 = vmatprep.subr.mxu0 %v676
  %734 = vmatpush1.msra.mxu0 %v675
  %735 = vmatprep.subr.mxu0 %v684
  %736 = vmatpush1.msra.mxu0 %v683
  %737 = vmatprep.subr.mxu0 %v692
  %738 = vmatpush1.msra.mxu0 %v691
  %739 = vmatprep.subr.mxu0 %v700
  %740 = vmatpush1.msra.mxu0 %v699
  %741 = vmatprep.subr.mxu0 %v668
  %742 = vmatpush1.msra.mxu0 %v667
  %743 = vmatprep.subr.mxu0 %v708
  %744 = vmatpush1.msra.mxu0 %v707
  %745 = vmatprep.subr.mxu0 %v716
  %746 = vmatpush1.msra.mxu0 %v715
  %747 = vmatprep.subr.mxu0 %v724
  %748 = vmatpush1.msra.mxu0 %v723
  %749 = vmatprep.subr.mxu0 %v732
  %750 = vmatpush1.msra.mxu0 %v731
  %751 = vmatprep.subr.mxu0 %v301
  %752 = vmatpush1.msra.mxu0 %v301
  %753 = vmatprep.subr.mxu0 0.0
  %754 = vmatpush1.msra.mxu0 0.0
  %755 = vmatprep.subr.mxu0 0.0
  %756 = vmatpush1.msra.mxu0 0.0
  %757 = vmatprep.subr.mxu0 0.0
  %758 = vmatpush1.msra.mxu0 0.0
  %759 = vmatprep.subr.mxu0 0.0
  %760 = vmatpush1.msra.mxu0 0.0
  %761 = vmatprep.subr.mxu0 0.0
  %762 = vmatpush1.msra.mxu0 0.0
  %763 = vmatprep.subr.mxu0 0.0
  %764 = vmatpush1.msra.mxu0 0.0
  %765 = vmatprep.subr.mxu0 0.0
  %766 = vmatpush1.msra.mxu0 0.0
  %767 = vmatprep.subr.mxu0 0.0
  %768 = vmatpush1.msra.mxu0 0.0
  %769 = vmatprep.subr.mxu0 0.0
  %770 = vmatpush1.msra.mxu0 0.0
  %771 = vmatprep.subr.mxu0 0.0
  %772 = vmatpush1.msra.mxu0 0.0
  %773 = vmatprep.subr.mxu0 0.0
  %774 = vmatpush1.msra.mxu0 0.0
  %775 = vmatprep.subr.mxu0 0.0
  %776 = vmatpush1.msra.mxu0 0.0
  %777 = vmatprep.subr.mxu0 0.0
  %778 = vmatpush1.msra.mxu0 0.0
  %779 = vmatprep.subr.mxu0 0.0
  %780 = vmatpush1.msra.mxu0 0.0
  %781 = vmatprep.subr.mxu0 0.0
  %782 = vmatpush1.msra.mxu0 0.0
  %783 = vmatprep.subr.mxu0 0.0
  %784 = vmatpush1.msra.mxu0 0.0
  %785 = vmatprep.subr.mxu0 0.0
  %786 = vmatpush1.msra.mxu0 0.0
  %787 = vmatprep.subr.mxu0 0.0
  %788 = vmatpush1.msra.mxu0 0.0
  %789 = vmatprep.subr.mxu0 0.0
  %790 = vmatpush1.msra.mxu0 0.0
  %791 = vmatprep.subr.mxu0 0.0
  %792 = vmatpush1.msra.mxu0 0.0
  %793 = vmatprep.subr.mxu0 0.0
  %794 = vmatpush1.msra.mxu0 0.0
  %795 = vmatprep.subr.mxu0 0.0
  %796 = vmatpush1.msra.mxu0 0.0
  %797 = vmatprep.mubr.f32.mxu0 0.0
  %798 = vmatmul.mubr.f32.gmra.mrb[0].mxu0 %v446
  %v799 = vpop.f32.mrb[0].mxu0
  %v800 = vadd.f32 0.0, %v799
  %v801 = vpop.f32.mrb[0].mxu0
  %v802 = vadd.f32 0.0, %v801
  %803 = vdwg.mxu0
  %vm804 = vcmp.gt.f32.partialorder %v800, 0.0
  %vm805 = vcmp.gt.f32.partialorder %v802, 0.0
  %v806 = vmul.f32 %v800, 0.2
  %v807 = vmul.f32 %v802, 0.2
  %v808 = vsel %vm804, %v800, %v806
  %v809 = vsel %vm805, %v802, %v807
  %810 = vrot.lane.b32.xlu0 %v523, 17
  %v811 = vpop.permute.xlu0 %810
  %812 = vrot.lane.b32.xlu0 %v808, 17
  %v813 = vpop.permute.xlu0 %812
  %814 = vrot.lane.b32.xlu0 %v524, 17
  %v815 = vpop.permute.xlu0 %814
  %816 = vrot.lane.b32.xlu0 %v809, 17
  %v817 = vpop.permute.xlu0 %816
  %v818 = vsel %vm138, %v811, %v815
  %v819 = vsel %vm138, %v813, %v817
  %v820 = vsel %vm138, %v815, %v811
  %v821 = vsel %vm138, %v817, %v813
  %v822 = vmul.f32 %v820, %v145
  %v823 = vmul.f32 %v818, %v149
  %v824 = vmul.f32 %v821, %v145
  %v825 = vmul.f32 %v819, %v149
  %826 = vrot.lane.b32.xlu0 %v523, 16
  %v827 = vpop.permute.xlu0 %826
  %828 = vrot.lane.b32.xlu0 %v808, 16
  %v829 = vpop.permute.xlu0 %828
  %830 = vrot.lane.b32.xlu0 %v524, 16
  %v831 = vpop.permute.xlu0 %830
  %832 = vrot.lane.b32.xlu0 %v809, 16
  %v833 = vpop.permute.xlu0 %832
  %v834 = vsel %vm158, %v827, %v831
  %v835 = vsel %vm158, %v829, %v833
  %v836 = vsel %vm158, %v831, %v827
  %v837 = vsel %vm158, %v833, %v829
  %v838 = vmul.f32 %v836, %v165
  %v839 = vmul.f32 %v834, %v169
  %v840 = vmul.f32 %v837, %v165
  %v841 = vmul.f32 %v835, %v169
  %842 = vrot.lane.b32.xlu0 %v523, 15
  %v843 = vpop.permute.xlu0 %842
  %844 = vrot.lane.b32.xlu0 %v808, 15
  %v845 = vpop.permute.xlu0 %844
  %846 = vrot.lane.b32.xlu0 %v524, 15
  %v847 = vpop.permute.xlu0 %846
  %848 = vrot.lane.b32.xlu0 %v809, 15
  %v849 = vpop.permute.xlu0 %848
  %v850 = vsel %vm178, %v843, %v847
  %v851 = vsel %vm178, %v845, %v849
  %v852 = vsel %vm178, %v847, %v843
  %v853 = vsel %vm178, %v849, %v845
  %v854 = vmul.f32 %v852, %v185
  %v855 = vmul.f32 %v850, %v189
  %v856 = vmul.f32 %v853, %v185
  %v857 = vmul.f32 %v851, %v189
  %858 = vrot.lane.b32.xlu0 %v523, 1
  %v859 = vpop.permute.xlu0 %858
  %860 = vrot.lane.b32.xlu0 %v808, 1
  %v861 = vpop.permute.xlu0 %860
  %862 = vrot.lane.b32.xlu0 %v524, 1
  %v863 = vpop.permute.xlu0 %862
  %864 = vrot.lane.b32.xlu0 %v809, 1
  %v865 = vpop.permute.xlu0 %864
  %v866 = vsel %vm198, %v859, %v863
  %v867 = vsel %vm198, %v861, %v865
  %v868 = vsel %vm198, %v863, %v859
  %v869 = vsel %vm198, %v865, %v861
  %v870 = vmul.f32 %v868, %v205
  %v871 = vmul.f32 %v866, %v209
  %v872 = vmul.f32 %v869, %v205
  %v873 = vmul.f32 %v867, %v209
  %874 = vrot.lane.b32.xlu0 %v523, 127
  %v875 = vpop.permute.xlu0 %874
  %876 = vrot.lane.b32.xlu0 %v808, 127
  %v877 = vpop.permute.xlu0 %876
  %878 = vrot.lane.b32.xlu0 %v524, 127
  %v879 = vpop.permute.xlu0 %878
  %880 = vrot.lane.b32.xlu0 %v809, 127
  %v881 = vpop.permute.xlu0 %880
  %v882 = vsel %vm218, %v875, %v879
  %v883 = vsel %vm218, %v877, %v881
  %v884 = vsel %vm218, %v879, %v875
  %v885 = vsel %vm218, %v881, %v877
  %v886 = vmul.f32 %v882, %v225
  %v887 = vmul.f32 %v884, %v229
  %v888 = vmul.f32 %v883, %v225
  %v889 = vmul.f32 %v885, %v229
  %890 = vrot.lane.b32.xlu0 %v523, 113
  %v891 = vpop.permute.xlu0 %890
  %892 = vrot.lane.b32.xlu0 %v808, 113
  %v893 = vpop.permute.xlu0 %892
  %894 = vrot.lane.b32.xlu0 %v524, 113
  %v895 = vpop.permute.xlu0 %894
  %896 = vrot.lane.b32.xlu0 %v809, 113
  %v897 = vpop.permute.xlu0 %896
  %v898 = vsel %vm238, %v891, %v895
  %v899 = vsel %vm238, %v893, %v897
  %v900 = vsel %vm238, %v895, %v891
  %v901 = vsel %vm238, %v897, %v893
  %v902 = vmul.f32 %v898, %v245
  %v903 = vmul.f32 %v900, %v249
  %v904 = vmul.f32 %v899, %v245
  %v905 = vmul.f32 %v901, %v249
  %906 = vrot.lane.b32.xlu0 %v523, 112
  %v907 = vpop.permute.xlu0 %906
  %908 = vrot.lane.b32.xlu0 %v808, 112
  %v909 = vpop.permute.xlu0 %908
  %910 = vrot.lane.b32.xlu0 %v524, 112
  %v911 = vpop.permute.xlu0 %910
  %912 = vrot.lane.b32.xlu0 %v809, 112
  %v913 = vpop.permute.xlu0 %912
  %v914 = vsel %vm258, %v907, %v911
  %v915 = vsel %vm258, %v909, %v913
  %v916 = vsel %vm258, %v911, %v907
  %v917 = vsel %vm258, %v913, %v909
  %v918 = vmul.f32 %v914, %v265
  %v919 = vmul.f32 %v916, %v269
  %v920 = vmul.f32 %v915, %v265
  %v921 = vmul.f32 %v917, %v269
  %922 = vrot.lane.b32.xlu0 %v523, 111
  %v923 = vpop.permute.xlu0 %922
  %924 = vrot.lane.b32.xlu0 %v808, 111
  %v925 = vpop.permute.xlu0 %924
  %926 = vrot.lane.b32.xlu0 %v524, 111
  %v927 = vpop.permute.xlu0 %926
  %928 = vrot.lane.b32.xlu0 %v809, 111
  %v929 = vpop.permute.xlu0 %928
  %v930 = vsel %vm278, %v923, %v927
  %v931 = vsel %vm278, %v925, %v929
  %v932 = vsel %vm278, %v927, %v923
  %v933 = vsel %vm278, %v929, %v925
  %v934 = vmul.f32 %v930, %v285
  %v935 = vmul.f32 %v932, %v289
  %v936 = vmul.f32 %v931, %v285
  %v937 = vmul.f32 %v933, %v289
  %v938 = vld [vmem:[%s15] sm:$0xff]
  %v939 = vld [vmem:[%s15 + $0x8] sm:$0xff]
  %v940 = vld [vmem:[%s15 + $0x10] sm:$0xff]
  %v941 = vld [vmem:[%s15 + $0x18] sm:$0xff]
  %vm942 = vcmask 138240
  %v944 = vsel %vm942, %v939, 0
  %v947 = vsel %vm942, %v941, 0
  %949 = vmatprep.subr.mxu0 %v823
  %950 = vmatpush1.msra.mxu0 %v822
  %951 = vmatprep.subr.mxu0 %v825
  %952 = vmatpush1.msra.mxu0 %v824
  %953 = vmatprep.subr.mxu0 %v839
  %954 = vmatpush1.msra.mxu0 %v838
  %955 = vmatprep.subr.mxu0 %v841
  %956 = vmatpush1.msra.mxu0 %v840
  %957 = vmatprep.subr.mxu0 %v855
  %958 = vmatpush1.msra.mxu0 %v854
  %959 = vmatprep.subr.mxu0 %v857
  %960 = vmatpush1.msra.mxu0 %v856
  %961 = vmatprep.subr.mxu0 %v871
  %962 = vmatpush1.msra.mxu0 %v870
  %963 = vmatprep.subr.mxu0 %v873
  %964 = vmatpush1.msra.mxu0 %v872
  %965 = vmatprep.subr.mxu0 %v524
  %966 = vmatpush1.msra.mxu0 %v523
  %967 = vmatprep.subr.mxu0 %v809
  %968 = vmatpush1.msra.mxu0 %v808
  %969 = vmatprep.subr.mxu0 %v887
  %970 = vmatpush1.msra.mxu0 %v886
  %971 = vmatprep.subr.mxu0 %v889
  %972 = vmatpush1.msra.mxu0 %v888
  %973 = vmatprep.subr.mxu0 %v903
  %974 = vmatpush1.msra.mxu0 %v902
  %975 = vmatprep.subr.mxu0 %v905
  %976 = vmatpush1.msra.mxu0 %v904
  %977 = vmatprep.subr.mxu0 %v919
  %978 = vmatpush1.msra.mxu0 %v918
  %979 = vmatprep.subr.mxu0 %v921
  %980 = vmatpush1.msra.mxu0 %v920
  %981 = vmatprep.subr.mxu0 %v935
  %982 = vmatpush1.msra.mxu0 %v934
  %983 = vmatprep.subr.mxu0 %v937
  %984 = vmatpush1.msra.mxu0 %v936
  %985 = vmatprep.subr.mxu0 %v301
  %986 = vmatpush1.msra.mxu0 %v301
  %987 = vmatprep.subr.mxu0 0.0
  %988 = vmatpush1.msra.mxu0 0.0
  %989 = vmatprep.subr.mxu0 0.0
  %990 = vmatpush1.msra.mxu0 0.0
  %991 = vmatprep.subr.mxu0 0.0
  %992 = vmatpush1.msra.mxu0 0.0
  %993 = vmatprep.subr.mxu0 0.0
  %994 = vmatpush1.msra.mxu0 0.0
  %995 = vmatprep.subr.mxu0 0.0
  %996 = vmatpush1.msra.mxu0 0.0
  %997 = vmatprep.subr.mxu0 0.0
  %998 = vmatpush1.msra.mxu0 0.0
  %999 = vmatprep.subr.mxu0 0.0
  %1000 = vmatpush1.msra.mxu0 0.0
  %1001 = vmatprep.subr.mxu0 0.0
  %1002 = vmatpush1.msra.mxu0 0.0
  %1003 = vmatprep.subr.mxu0 0.0
  %1004 = vmatpush1.msra.mxu0 0.0
  %1005 = vmatprep.subr.mxu0 0.0
  %1006 = vmatpush1.msra.mxu0 0.0
  %1007 = vmatprep.subr.mxu0 0.0
  %1008 = vmatpush1.msra.mxu0 0.0
  %1009 = vmatprep.subr.mxu0 0.0
  %1010 = vmatpush1.msra.mxu0 0.0
  %1011 = vmatprep.subr.mxu0 0.0
  %1012 = vmatpush1.msra.mxu0 0.0
  %1013 = vmatprep.mubr.f32.mxu0 %v944
  %1014 = vmatmul.mubr.f32.gmra.mrb[0].mxu0 %v938
  %v1015 = vpop.f32.mrb[0].mxu0
  %v1016 = vadd.f32 0.0, %v1015
  %v1017 = vpop.f32.mrb[0].mxu0
  %v1018 = vadd.f32 0.0, %v1017
  %1019 = vmatprep.mubr.f32.mxu0 %v947
  %1020 = vmatmul.mubr.f32.gmra.mrb[0].mxu0 %v940
  %v1021 = vpop.f32.mrb[0].mxu0
  %v1022 = vadd.f32 0.0, %v1021
  %v1023 = vpop.f32.mrb[0].mxu0
  %v1024 = vadd.f32 0.0, %v1023
  %1025 = vdwg.mxu0
  %vm1026 = vcmp.gt.f32.partialorder %v1016, 0.0
  %vm1027 = vcmp.gt.f32.partialorder %v1018, 0.0
  %vm1028 = vcmp.gt.f32.partialorder %v1022, 0.0
  %vm1029 = vcmp.gt.f32.partialorder %v1024, 0.0
  %v1030 = vmul.f32 %v1016, 0.2
  %v1031 = vmul.f32 %v1018, 0.2
  %v1032 = vmul.f32 %v1022, 0.2
  %v1033 = vmul.f32 %v1024, 0.2
  %v1034 = vsel %vm1026, %v1016, %v1030
  %v1035 = vsel %vm1027, %v1018, %v1031
  %v1036 = vsel %vm1028, %v1022, %v1032
  %v1037 = vsel %vm1029, %v1024, %v1033
  %1038 = vrot.lane.b32.xlu0 %v1034, 17
  %v1039 = vpop.permute.xlu0 %1038
  %1040 = vrot.lane.b32.xlu0 %v1036, 17
  %v1041 = vpop.permute.xlu0 %1040
  %1042 = vrot.lane.b32.xlu0 %v1035, 17
  %v1043 = vpop.permute.xlu0 %1042
  %1044 = vrot.lane.b32.xlu0 %v1037, 17
  %v1045 = vpop.permute.xlu0 %1044
  %v1046 = vsel %vm138, %v1039, %v1043
  %v1047 = vsel %vm138, %v1041, %v1045
  %v1048 = vsel %vm138, %v1043, %v1039
  %v1049 = vsel %vm138, %v1045, %v1041
  %v1050 = vmul.f32 %v1048, %v145
  %v1051 = vmul.f32 %v1046, %v149
  %v1052 = vmul.f32 %v1049, %v145
  %v1053 = vmul.f32 %v1047, %v149
  %1054 = vrot.lane.b32.xlu0 %v1034, 16
  %v1055 = vpop.permute.xlu0 %1054
  %1056 = vrot.lane.b32.xlu0 %v1036, 16
  %v1057 = vpop.permute.xlu0 %1056
  %1058 = vrot.lane.b32.xlu0 %v1035, 16
  %v1059 = vpop.permute.xlu0 %1058
  %1060 = vrot.lane.b32.xlu0 %v1037, 16
  %v1061 = vpop.permute.xlu0 %1060
  %v1062 = vsel %vm158, %v1055, %v1059
  %v1063 = vsel %vm158, %v1057, %v1061
  %v1064 = vsel %vm158, %v1059, %v1055
  %v1065 = vsel %vm158, %v1061, %v1057
  %v1066 = vmul.f32 %v1064, %v165
  %v1067 = vmul.f32 %v1062, %v169
  %v1068 = vmul.f32 %v1065, %v165
  %v1069 = vmul.f32 %v1063, %v169
  %1070 = vrot.lane.b32.xlu0 %v1034, 15
  %v1071 = vpop.permute.xlu0 %1070
  %1072 = vrot.lane.b32.xlu0 %v1036, 15
  %v1073 = vpop.permute.xlu0 %1072
  %1074 = vrot.lane.b32.xlu0 %v1035, 15
  %v1075 = vpop.permute.xlu0 %1074
  %1076 = vrot.lane.b32.xlu0 %v1037, 15
  %v1077 = vpop.permute.xlu0 %1076
  %v1078 = vsel %vm178, %v1071, %v1075
  %v1079 = vsel %vm178, %v1073, %v1077
  %v1080 = vsel %vm178, %v1075, %v1071
  %v1081 = vsel %vm178, %v1077, %v1073
  %v1082 = vmul.f32 %v1080, %v185
  %v1083 = vmul.f32 %v1078, %v189
  %v1084 = vmul.f32 %v1081, %v185
  %v1085 = vmul.f32 %v1079, %v189
  %1086 = vrot.lane.b32.xlu0 %v1034, 1
  %v1087 = vpop.permute.xlu0 %1086
  %1088 = vrot.lane.b32.xlu0 %v1036, 1
  %v1089 = vpop.permute.xlu0 %1088
  %1090 = vrot.lane.b32.xlu0 %v1035, 1
  %v1091 = vpop.permute.xlu0 %1090
  %1092 = vrot.lane.b32.xlu0 %v1037, 1
  %v1093 = vpop.permute.xlu0 %1092
  %v1094 = vsel %vm198, %v1087, %v1091
  %v1095 = vsel %vm198, %v1089, %v1093
  %v1096 = vsel %vm198, %v1091, %v1087
  %v1097 = vsel %vm198, %v1093, %v1089
  %v1098 = vmul.f32 %v1096, %v205
  %v1099 = vmul.f32 %v1094, %v209
  %v1100 = vmul.f32 %v1097, %v205
  %v1101 = vmul.f32 %v1095, %v209
  %1102 = vrot.lane.b32.xlu0 %v1034, 127
  %v1103 = vpop.permute.xlu0 %1102
  %1104 = vrot.lane.b32.xlu0 %v1036, 127
  %v1105 = vpop.permute.xlu0 %1104
  %1106 = vrot.lane.b32.xlu0 %v1035, 127
  %v1107 = vpop.permute.xlu0 %1106
  %1108 = vrot.lane.b32.xlu0 %v1037, 127
  %v1109 = vpop.permute.xlu0 %1108
  %v1110 = vsel %vm218, %v1103, %v1107
  %v1111 = vsel %vm218, %v1105, %v1109
  %v1112 = vsel %vm218, %v1107, %v1103
  %v1113 = vsel %vm218, %v1109, %v1105
  %v1114 = vmul.f32 %v1110, %v225
  %v1115 = vmul.f32 %v1112, %v229
  %v1116 = vmul.f32 %v1111, %v225
  %v1117 = vmul.f32 %v1113, %v229
  %1118 = vrot.lane.b32.xlu0 %v1034, 113
  %v1119 = vpop.permute.xlu0 %1118
  %1120 = vrot.lane.b32.xlu0 %v1036, 113
  %v1121 = vpop.permute.xlu0 %1120
  %1122 = vrot.lane.b32.xlu0 %v1035, 113
  %v1123 = vpop.permute.xlu0 %1122
  %1124 = vrot.lane.b32.xlu0 %v1037, 113
  %v1125 = vpop.permute.xlu0 %1124
  %v1126 = vsel %vm238, %v1119, %v1123
  %v1127 = vsel %vm238, %v1121, %v1125
  %v1128 = vsel %vm238, %v1123, %v1119
  %v1129 = vsel %vm238, %v1125, %v1121
  %v1130 = vmul.f32 %v1126, %v245
  %v1131 = vmul.f32 %v1128, %v249
  %v1132 = vmul.f32 %v1127, %v245
  %v1133 = vmul.f32 %v1129, %v249
  %1134 = vrot.lane.b32.xlu0 %v1034, 112
  %v1135 = vpop.permute.xlu0 %1134
  %1136 = vrot.lane.b32.xlu0 %v1036, 112
  %v1137 = vpop.permute.xlu0 %1136
  %1138 = vrot.lane.b32.xlu0 %v1035, 112
  %v1139 = vpop.permute.xlu0 %1138
  %1140 = vrot.lane.b32.xlu0 %v1037, 112
  %v1141 = vpop.permute.xlu0 %1140
  %v1142 = vsel %vm258, %v1135, %v1139
  %v1143 = vsel %vm258, %v1137, %v1141
  %v1144 = vsel %vm258, %v1139, %v1135
  %v1145 = vsel %vm258, %v1141, %v1137
  %v1146 = vmul.f32 %v1142, %v265
  %v1147 = vmul.f32 %v1144, %v269
  %v1148 = vmul.f32 %v1143, %v265
  %v1149 = vmul.f32 %v1145, %v269
  %1150 = vrot.lane.b32.xlu0 %v1034, 111
  %v1151 = vpop.permute.xlu0 %1150
  %1152 = vrot.lane.b32.xlu0 %v1036, 111
  %v1153 = vpop.permute.xlu0 %1152
  %1154 = vrot.lane.b32.xlu0 %v1035, 111
  %v1155 = vpop.permute.xlu0 %1154
  %1156 = vrot.lane.b32.xlu0 %v1037, 111
  %v1157 = vpop.permute.xlu0 %1156
  %v1158 = vsel %vm278, %v1151, %v1155
  %v1159 = vsel %vm278, %v1153, %v1157
  %v1160 = vsel %vm278, %v1155, %v1151
  %v1161 = vsel %vm278, %v1157, %v1153
  %v1162 = vmul.f32 %v1158, %v285
  %v1163 = vmul.f32 %v1160, %v289
  %v1164 = vmul.f32 %v1159, %v285
  %v1165 = vmul.f32 %v1161, %v289
  %v1166 = vld [vmem:[%s17] sm:$0xff]
  %v1167 = vld [vmem:[%s17 + $0x8] sm:$0xff]
  %v1168 = vld [vmem:[%s17 + $0x10] sm:$0xff]
  %v1169 = vld [vmem:[%s17 + $0x18] sm:$0xff]
  %v1171 = vsel %vm942, %v1167, 0
  %v1174 = vsel %vm942, %v1169, 0
  %1176 = vmatprep.subr.mxu0 %v1051
  %1177 = vmatpush1.msra.mxu0 %v1050
  %1178 = vmatprep.subr.mxu0 %v1053
  %1179 = vmatpush1.msra.mxu0 %v1052
  %1180 = vmatprep.subr.mxu0 %v1067
  %1181 = vmatpush1.msra.mxu0 %v1066
  %1182 = vmatprep.subr.mxu0 %v1069
  %1183 = vmatpush1.msra.mxu0 %v1068
  %1184 = vmatprep.subr.mxu0 %v1083
  %1185 = vmatpush1.msra.mxu0 %v1082
  %1186 = vmatprep.subr.mxu0 %v1085
  %1187 = vmatpush1.msra.mxu0 %v1084
  %1188 = vmatprep.subr.mxu0 %v1099
  %1189 = vmatpush1.msra.mxu0 %v1098
  %1190 = vmatprep.subr.mxu0 %v1101
  %1191 = vmatpush1.msra.mxu0 %v1100
  %1192 = vmatprep.subr.mxu0 %v1035
  %1193 = vmatpush1.msra.mxu0 %v1034
  %1194 = vmatprep.subr.mxu0 %v1037
  %1195 = vmatpush1.msra.mxu0 %v1036
  %1196 = vmatprep.subr.mxu0 %v1115
  %1197 = vmatpush1.msra.mxu0 %v1114
  %1198 = vmatprep.subr.mxu0 %v1117
  %1199 = vmatpush1.msra.mxu0 %v1116
  %1200 = vmatprep.subr.mxu0 %v1131
  %1201 = vmatpush1.msra.mxu0 %v1130
  %1202 = vmatprep.subr.mxu0 %v1133
  %1203 = vmatpush1.msra.mxu0 %v1132
  %1204 = vmatprep.subr.mxu0 %v1147
  %1205 = vmatpush1.msra.mxu0 %v1146
  %1206 = vmatprep.subr.mxu0 %v1149
  %1207 = vmatpush1.msra.mxu0 %v1148
  %1208 = vmatprep.subr.mxu0 %v1163
  %1209 = vmatpush1.msra.mxu0 %v1162
  %1210 = vmatprep.subr.mxu0 %v1165
  %1211 = vmatpush1.msra.mxu0 %v1164
  %1212 = vmatprep.subr.mxu0 %v301
  %1213 = vmatpush1.msra.mxu0 %v301
  %1214 = vmatprep.subr.mxu0 0.0
  %1215 = vmatpush1.msra.mxu0 0.0
  %1216 = vmatprep.subr.mxu0 0.0
  %1217 = vmatpush1.msra.mxu0 0.0
  %1218 = vmatprep.subr.mxu0 0.0
  %1219 = vmatpush1.msra.mxu0 0.0
  %1220 = vmatprep.subr.mxu0 0.0
  %1221 = vmatpush1.msra.mxu0 0.0
  %1222 = vmatprep.subr.mxu0 0.0
  %1223 = vmatpush1.msra.mxu0 0.0
  %1224 = vmatprep.subr.mxu0 0.0
  %1225 = vmatpush1.msra.mxu0 0.0
  %1226 = vmatprep.subr.mxu0 0.0
  %1227 = vmatpush1.msra.mxu0 0.0
  %1228 = vmatprep.subr.mxu0 0.0
  %1229 = vmatpush1.msra.mxu0 0.0
  %1230 = vmatprep.subr.mxu0 0.0
  %1231 = vmatpush1.msra.mxu0 0.0
  %1232 = vmatprep.subr.mxu0 0.0
  %1233 = vmatpush1.msra.mxu0 0.0
  %1234 = vmatprep.subr.mxu0 0.0
  %1235 = vmatpush1.msra.mxu0 0.0
  %1236 = vmatprep.subr.mxu0 0.0
  %1237 = vmatpush1.msra.mxu0 0.0
  %1238 = vmatprep.subr.mxu0 0.0
  %1239 = vmatpush1.msra.mxu0 0.0
  %1240 = vmatprep.mubr.f32.mxu0 %v1171
  %1241 = vmatmul.mubr.f32.gmra.mrb[0].mxu0 %v1166
  %v1242 = vpop.f32.mrb[0].mxu0
  %v1243 = vadd.f32 0.0, %v1242
  %v1244 = vpop.f32.mrb[0].mxu0
  %v1245 = vadd.f32 0.0, %v1244
  %1246 = vmatprep.mubr.f32.mxu0 %v1174
  %1247 = vmatmul.mubr.f32.gmra.mrb[0].mxu0 %v1168
  %v1248 = vpop.f32.mrb[0].mxu0
  %v1249 = vadd.f32 0.0, %v1248
  %v1250 = vpop.f32.mrb[0].mxu0
  %v1251 = vadd.f32 0.0, %v1250
  %1252 = vdwg.mxu0
  %1253 = vst [vmem:[%s51] sm:$0xff] %v1243
  %1254 = vst [vmem:[%s51 + $0x8] sm:$0xff] %v1245
  %1255 = vst [vmem:[%s51 + $0x10] sm:$0xff] %v1249
  %1256 = vst [vmem:[%s51 + $0x18] sm:$0xff] %v1251
  %v1257 = vld [vmem:[%s5] sm:$0xff]
  %v1258 = vld [vmem:[%s5 + $0x8] sm:$0xff]
  %v1259 = vmax.f32 %v1249, -5.0
  %v1260 = vmax.f32 %v1251, -5.0
  %v1261 = vmin.f32 %v1259, 5.0
  %v1262 = vmin.f32 %v1260, 5.0
  %v1263 = vmul.f32 %v1261, 1.442695
  %v1264 = vpow.pop %v1263
  %v1265 = vmul.f32 %v1262, 1.442695
  %v1266 = vpow.pop %v1265
  %v1267 = vmul.f32 %v1264, %v1257
  %v1268 = vmul.f32 %v1266, %v1258
  %v1269 = vadd.f32 %v1243, %v1267
  %v1270 = vadd.f32 %v1245, %v1268
  %v1271 = vld [vmem:[%s3] sm:$0x3f]
  %v1272 = vld [vmem:[%s3 + $0x8] sm:$0x3f]
  %s1273 = scalar_lea.vmem %s3, 16
  %v1274 = vld [vmem:[%s1273] sm:$0x3f]
  %v1275 = vld [vmem:[%s1273 + $0x8] sm:$0x3f]
  %v1276 = vld [vmem:[%s35] sm:$0xff]
  %v1277 = vld [vmem:[%s35 + $0x8] sm:$0xff]
  %v1278 = vld [vmem:[%s35 + $0x10] sm:$0xff]
  %v1279 = vld [vmem:[%s37] sm:$0xff]
  %v1280 = vld [vmem:[%s37 + $0x8] sm:$0xff]
  %v1281 = vld [vmem:[%s39] sm:$0xff]
  %vm1282 = vcmask 1045504
  %v1283 = vsel %vm1282, %v1271, 1.0
  %v1284 = vsel %vm1282, %v1272, 1.0
  %vm1285 = vcmask 121856
  %v1287 = vsel %vm1285, %v1276, 0
  %v1290 = vsel %vm1285, %v1277, 0
  %v1293 = vsel %vm1285, %v1278, 0
  %vm1295 = vcmask 1046528
  %v1297 = vsel %vm1295, %v1283, 0
  %v1300 = vsel %vm1295, %v1284, 0
  %1302 = vmatprep.subr.mxu0 %v524
  %1303 = vmatpush1.msra.mxu0 %v523
  %1304 = vmatprep.subr.mxu0 %v1300
  %1305 = vmatpush1.msra.mxu0 %v1297
  %1306 = vmatprep.subr.mxu0 0.0
  %1307 = vmatpush1.msra.mxu0 0.0
  %1308 = vmatprep.subr.mxu0 0.0
  %1309 = vmatpush1.msra.mxu0 0.0
  %1310 = vmatprep.subr.mxu0 0.0
  %1311 = vmatpush1.msra.mxu0 0.0
  %1312 = vmatprep.subr.mxu0 0.0
  %1313 = vmatpush1.msra.mxu0 0.0
  %1314 = vmatprep.subr.mxu0 0.0
  %1315 = vmatpush1.msra.mxu0 0.0
  %1316 = vmatprep.subr.mxu0 0.0
  %1317 = vmatpush1.msra.mxu0 0.0
  %1318 = vmatprep.subr.mxu0 0.0
  %1319 = vmatpush1.msra.mxu0 0.0
  %1320 = vmatprep.subr.mxu0 0.0
  %1321 = vmatpush1.msra.mxu0 0.0
  %1322 = vmatprep.subr.mxu0 0.0
  %1323 = vmatpush1.msra.mxu0 0.0
  %1324 = vmatprep.subr.mxu0 0.0
  %1325 = vmatpush1.msra.mxu0 0.0
  %1326 = vmatprep.subr.mxu0 0.0
  %1327 = vmatpush1.msra.mxu0 0.0
  %1328 = vmatprep.subr.mxu0 0.0
  %1329 = vmatpush1.msra.mxu0 0.0
  %1330 = vmatprep.subr.mxu0 0.0
  %1331 = vmatpush1.msra.mxu0 0.0
  %1332 = vmatprep.subr.mxu0 0.0
  %1333 = vmatpush1.msra.mxu0 0.0
  %1334 = vmatprep.subr.mxu0 0.0
  %1335 = vmatpush1.msra.mxu0 0.0
  %1336 = vmatprep.subr.mxu0 0.0
  %1337 = vmatpush1.msra.mxu0 0.0
  %1338 = vmatprep.subr.mxu0 0.0
  %1339 = vmatpush1.msra.mxu0 0.0
  %1340 = vmatprep.subr.mxu0 0.0
  %1341 = vmatpush1.msra.mxu0 0.0
  %1342 = vmatprep.subr.mxu0 0.0
  %1343 = vmatpush1.msra.mxu0 0.0
  %1344 = vmatprep.subr.mxu0 0.0
  %1345 = vmatpush1.msra.mxu0 0.0
  %1346 = vmatprep.subr.mxu0 0.0
  %1347 = vmatpush1.msra.mxu0 0.0
  %1348 = vmatprep.subr.mxu0 0.0
  %1349 = vmatpush1.msra.mxu0 0.0
  %1350 = vmatprep.subr.mxu0 0.0
  %1351 = vmatpush1.msra.mxu0 0.0
  %1352 = vmatprep.subr.mxu0 0.0
  %1353 = vmatpush1.msra.mxu0 0.0
  %1354 = vmatprep.subr.mxu0 0.0
  %1355 = vmatpush1.msra.mxu0 0.0
  %1356 = vmatprep.subr.mxu0 0.0
  %1357 = vmatpush1.msra.mxu0 0.0
  %1358 = vmatprep.subr.mxu0 0.0
  %1359 = vmatpush1.msra.mxu0 0.0
  %1360 = vmatprep.subr.mxu0 0.0
  %1361 = vmatpush1.msra.mxu0 0.0
  %1362 = vmatprep.subr.mxu0 0.0
  %1363 = vmatpush1.msra.mxu0 0.0
  %1364 = vmatprep.subr.mxu0 0.0
  %1365 = vmatpush1.msra.mxu0 0.0
  %1366 = vmatprep.mubr.f32.mxu0 0.0
  %1367 = vmatmul.mubr.f32.gmra.mrb[0].mxu0 %v1287
  %v1368 = vpop.f32.mrb[0].mxu0
  %v1369 = vadd.f32 0.0, %v1368
  %v1370 = vpop.f32.mrb[0].mxu0
  %v1371 = vadd.f32 0.0, %v1370
  %1372 = vmatprep.mubr.f32.mxu0 0.0
  %1373 = vmatmul.mubr.f32.gmra.mrb[0].mxu0 %v1290
  %v1374 = vpop.f32.mrb[0].mxu0
  %v1375 = vadd.f32 0.0, %v1374
  %v1376 = vpop.f32.mrb[0].mxu0
  %v1377 = vadd.f32 0.0, %v1376
  %1378 = vmatprep.mubr.f32.mxu0 0.0
  %1379 = vmatmul.mubr.f32.gmra.mrb[0].mxu0 %v1293
  %v1380 = vpop.f32.mrb[0].mxu0
  %v1381 = vadd.f32 0.0, %v1380
  %v1382 = vpop.f32.mrb[0].mxu0
  %v1383 = vadd.f32 0.0, %v1382
  %1384 = vdwg.mxu0
  %vm1385 = vcmask 64512
  %v1387 = vsel %vm1385, %v1279, 0
  %v1390 = vsel %vm1385, %v1280, 0
  %1392 = vmatprep.subr.mxu0 0.0
  %1393 = vmatpush1.msra.mxu0 0.0
  %1394 = vmatprep.subr.mxu0 0.0
  %1395 = vmatpush1.msra.mxu0 0.0
  %1396 = vmatprep.subr.mxu0 0.0
  %1397 = vmatpush1.msra.mxu0 0.0
  %1398 = vmatprep.subr.mxu0 0.0
  %1399 = vmatpush1.msra.mxu0 0.0
  %1400 = vmatprep.subr.mxu0 0.0
  %1401 = vmatpush1.msra.mxu0 0.0
  %1402 = vmatprep.subr.mxu0 0.0
  %1403 = vmatpush1.msra.mxu0 0.0
  %1404 = vmatprep.subr.mxu0 0.0
  %1405 = vmatpush1.msra.mxu0 0.0
  %1406 = vmatprep.subr.mxu0 0.0
  %1407 = vmatpush1.msra.mxu0 0.0
  %1408 = vmatprep.subr.mxu0 0.0
  %1409 = vmatpush1.msra.mxu0 0.0
  %1410 = vmatprep.subr.mxu0 0.0
  %1411 = vmatpush1.msra.mxu0 0.0
  %1412 = vmatprep.subr.mxu0 0.0
  %1413 = vmatpush1.msra.mxu0 0.0
  %1414 = vmatprep.subr.mxu0 0.0
  %1415 = vmatpush1.msra.mxu0 0.0
  %1416 = vmatprep.subr.mxu0 0.0
  %1417 = vmatpush1.msra.mxu0 0.0
  %1418 = vmatprep.subr.mxu0 0.0
  %1419 = vmatpush1.msra.mxu0 0.0
  %1420 = vmatprep.subr.mxu0 0.0
  %1421 = vmatpush1.msra.mxu0 0.0
  %1422 = vmatprep.subr.mxu0 0.0
  %1423 = vmatpush1.msra.mxu0 0.0
  %1424 = vmatprep.subr.mxu0 0.0
  %1425 = vmatpush1.msra.mxu0 0.0
  %1426 = vmatprep.subr.mxu0 0.0
  %1427 = vmatpush1.msra.mxu0 0.0
  %1428 = vmatprep.subr.mxu0 0.0
  %1429 = vmatpush1.msra.mxu0 0.0
  %1430 = vmatprep.subr.mxu0 0.0
  %1431 = vmatpush1.msra.mxu0 0.0
  %1432 = vmatprep.subr.mxu0 0.0
  %1433 = vmatpush1.msra.mxu0 0.0
  %1434 = vmatprep.subr.mxu0 0.0
  %1435 = vmatpush1.msra.mxu0 0.0
  %1436 = vmatprep.subr.mxu0 0.0
  %1437 = vmatpush1.msra.mxu0 0.0
  %1438 = vmatprep.subr.mxu0 0.0
  %1439 = vmatpush1.msra.mxu0 0.0
  %1440 = vmatprep.subr.mxu0 0.0
  %1441 = vmatpush1.msra.mxu0 0.0
  %1442 = vmatprep.subr.mxu0 0.0
  %1443 = vmatpush1.msra.mxu0 0.0
  %1444 = vmatprep.subr.mxu0 0.0
  %1445 = vmatpush1.msra.mxu0 0.0
  %1446 = vmatprep.subr.mxu0 0.0
  %1447 = vmatpush1.msra.mxu0 0.0
  %1448 = vmatprep.subr.mxu0 0.0
  %1449 = vmatpush1.msra.mxu0 0.0
  %1450 = vmatprep.subr.mxu0 0.0
  %1451 = vmatpush1.msra.mxu0 0.0
  %1452 = vmatprep.subr.mxu0 0.0
  %1453 = vmatpush1.msra.mxu0 0.0
  %1454 = vmatprep.subr.mxu0 0.0
  %1455 = vmatpush1.msra.mxu0 0.0
  %1456 = vmatprep.mubr.f32.mxu0 0.0
  %1457 = vmatmul.mubr.f32.gmra.mrb[0].mxu0 %v1387
  %v1458 = vpop.f32.mrb[0].mxu0
  %v1459 = vadd.f32 0.0, %v1458
  %v1460 = vpop.f32.mrb[0].mxu0
  %v1461 = vadd.f32 0.0, %v1460
  %1462 = vmatprep.mubr.f32.mxu0 0.0
  %1463 = vmatmul.mubr.f32.gmra.mrb[0].mxu0 %v1390
  %v1464 = vpop.f32.mrb[0].mxu0
  %v1465 = vadd.f32 0.0, %v1464
  %v1466 = vpop.f32.mrb[0].mxu0
  %v1467 = vadd.f32 0.0, %v1466
  %1468 = vdwg.mxu0
  %v1469 = vadd.f32 %v1369, %v1459
  %v1470 = vadd.f32 %v1371, %v1461
  %v1471 = vxor.u32 %v1469, 2147483648
  %v1472 = vxor.u32 %v1470, 2147483648
  %v1473 = vmul.f32 %v1471, 1.442695
  %v1474 = vpow.pop %v1473
  %v1475 = vmul.f32 %v1472, 1.442695
  %v1476 = vpow.pop %v1475
  %v1477 = vadd.f32 %v1474, 1.0
  %v1478 = vadd.f32 %v1476, 1.0
  %v1479 = vrcp.pop %v1477
  %v1480 = vmul.f32 1.0, %v1479
  %v1481 = vrcp.pop %v1478
  %v1482 = vmul.f32 1.0, %v1481
  %v1483 = vadd.f32 %v1375, %v1465
  %v1484 = vadd.f32 %v1377, %v1467
  %v1485 = vxor.u32 %v1483, 2147483648
  %v1486 = vxor.u32 %v1484, 2147483648
  %v1487 = vmul.f32 %v1485, 1.442695
  %v1488 = vpow.pop %v1487
  %v1489 = vmul.f32 %v1486, 1.442695
  %v1490 = vpow.pop %v1489
  %v1491 = vadd.f32 %v1488, 1.0
  %v1492 = vadd.f32 %v1490, 1.0
  %v1493 = vrcp.pop %v1491
  %v1494 = vmul.f32 1.0, %v1493
  %v1495 = vrcp.pop %v1492
  %v1496 = vmul.f32 1.0, %v1495
  %v1497 = vmul.f32 %v1494, 0.0
  %v1498 = vmul.f32 %v1496, 0.0
  %v1500 = vsel %vm1385, %v1281, 0
  %1502 = vmatprep.subr.mxu0 %v1498
  %1503 = vmatpush1.msra.mxu0 %v1497
  %1504 = vmatprep.subr.mxu0 0.0
  %1505 = vmatpush1.msra.mxu0 0.0
  %1506 = vmatprep.subr.mxu0 0.0
  %1507 = vmatpush1.msra.mxu0 0.0
  %1508 = vmatprep.subr.mxu0 0.0
  %1509 = vmatpush1.msra.mxu0 0.0
  %1510 = vmatprep.subr.mxu0 0.0
  %1511 = vmatpush1.msra.mxu0 0.0
  %1512 = vmatprep.subr.mxu0 0.0
  %1513 = vmatpush1.msra.mxu0 0.0
  %1514 = vmatprep.subr.mxu0 0.0
  %1515 = vmatpush1.msra.mxu0 0.0
  %1516 = vmatprep.subr.mxu0 0.0
  %1517 = vmatpush1.msra.mxu0 0.0
  %1518 = vmatprep.subr.mxu0 0.0
  %1519 = vmatpush1.msra.mxu0 0.0
  %1520 = vmatprep.subr.mxu0 0.0
  %1521 = vmatpush1.msra.mxu0 0.0
  %1522 = vmatprep.subr.mxu0 0.0
  %1523 = vmatpush1.msra.mxu0 0.0
  %1524 = vmatprep.subr.mxu0 0.0
  %1525 = vmatpush1.msra.mxu0 0.0
  %1526 = vmatprep.subr.mxu0 0.0
  %1527 = vmatpush1.msra.mxu0 0.0
  %1528 = vmatprep.subr.mxu0 0.0
  %1529 = vmatpush1.msra.mxu0 0.0
  %1530 = vmatprep.subr.mxu0 0.0
  %1531 = vmatpush1.msra.mxu0 0.0
  %1532 = vmatprep.subr.mxu0 0.0
  %1533 = vmatpush1.msra.mxu0 0.0
  %1534 = vmatprep.subr.mxu0 0.0
  %1535 = vmatpush1.msra.mxu0 0.0
  %1536 = vmatprep.subr.mxu0 0.0
  %1537 = vmatpush1.msra.mxu0 0.0
  %1538 = vmatprep.subr.mxu0 0.0
  %1539 = vmatpush1.msra.mxu0 0.0
  %1540 = vmatprep.subr.mxu0 0.0
  %1541 = vmatpush1.msra.mxu0 0.0
  %1542 = vmatprep.subr.mxu0 0.0
  %1543 = vmatpush1.msra.mxu0 0.0
  %1544 = vmatprep.subr.mxu0 0.0
  %1545 = vmatpush1.msra.mxu0 0.0
  %1546 = vmatprep.subr.mxu0 0.0
  %1547 = vmatpush1.msra.mxu0 0.0
  %1548 = vmatprep.subr.mxu0 0.0
  %1549 = vmatpush1.msra.mxu0 0.0
  %1550 = vmatprep.subr.mxu0 0.0
  %1551 = vmatpush1.msra.mxu0 0.0
  %1552 = vmatprep.subr.mxu0 0.0
  %1553 = vmatpush1.msra.mxu0 0.0
  %1554 = vmatprep.subr.mxu0 0.0
  %1555 = vmatpush1.msra.mxu0 0.0
  %1556 = vmatprep.subr.mxu0 0.0
  %1557 = vmatpush1.msra.mxu0 0.0
  %1558 = vmatprep.subr.mxu0 0.0
  %1559 = vmatpush1.msra.mxu0 0.0
  %1560 = vmatprep.subr.mxu0 0.0
  %1561 = vmatpush1.msra.mxu0 0.0
  %1562 = vmatprep.subr.mxu0 0.0
  %1563 = vmatpush1.msra.mxu0 0.0
  %1564 = vmatprep.subr.mxu0 0.0
  %1565 = vmatpush1.msra.mxu0 0.0
  %1566 = vmatprep.mubr.f32.mxu0 0.0
  %1567 = vmatmul.mubr.f32.gmra.mrb[0].mxu0 %v1500
  %v1568 = vpop.f32.mrb[0].mxu0
  %v1569 = vadd.f32 0.0, %v1568
  %v1570 = vpop.f32.mrb[0].mxu0
  %v1571 = vadd.f32 0.0, %v1570
  %1572 = vdwg.mxu0
  %v1573 = vadd.f32 %v1381, %v1569
  %v1574 = vadd.f32 %v1383, %v1571
  %v1575 = vtanh.pop %v1573
  %v1576 = vtanh.pop %v1574
  %v1577 = vsub.f32 1.0, %v1480
  %v1578 = vsub.f32 1.0, %v1482
  %v1579 = vmul.f32 %v1577, 0.0
  %v1580 = vmul.f32 %v1578, 0.0
  %v1581 = vmul.f32 %v1480, %v1575
  %v1582 = vmul.f32 %v1482, %v1576
  %v1583 = vadd.f32 %v1579, %v1581
  %v1584 = vadd.f32 %v1580, %v1582
  %1585 = vrot.lane.b32.xlu0 %v1583, 17
  %v1586 = vpop.permute.xlu0 %1585
  %1587 = vrot.lane.b32.xlu0 %v1584, 17
  %v1588 = vpop.permute.xlu0 %1587
  %v1589 = vsel %vm138, %v1586, %v1588
  %v1590 = vsel %vm138, %v1588, %v1586
  %v1591 = vmul.f32 %v1590, %v145
  %v1592 = vmul.f32 %v1589, %v149
  %1593 = vrot.lane.b32.xlu0 %v1583, 16
  %v1594 = vpop.permute.xlu0 %1593
  %1595 = vrot.lane.b32.xlu0 %v1584, 16
  %v1596 = vpop.permute.xlu0 %1595
  %v1597 = vsel %vm158, %v1594, %v1596
  %v1598 = vsel %vm158, %v1596, %v1594
  %v1599 = vmul.f32 %v1598, %v165
  %v1600 = vmul.f32 %v1597, %v169
  %1601 = vrot.lane.b32.xlu0 %v1583, 15
  %v1602 = vpop.permute.xlu0 %1601
  %1603 = vrot.lane.b32.xlu0 %v1584, 15
  %v1604 = vpop.permute.xlu0 %1603
  %v1605 = vsel %vm178, %v1602, %v1604
  %v1606 = vsel %vm178, %v1604, %v1602
  %v1607 = vmul.f32 %v1606, %v185
  %v1608 = vmul.f32 %v1605, %v189
  %1609 = vrot.lane.b32.xlu0 %v1583, 1
  %v1610 = vpop.permute.xlu0 %1609
  %1611 = vrot.lane.b32.xlu0 %v1584, 1
  %v1612 = vpop.permute.xlu0 %1611
  %v1613 = vsel %vm198, %v1610, %v1612
  %v1614 = vsel %vm198, %v1612, %v1610
  %v1615 = vmul.f32 %v1614, %v205
  %v1616 = vmul.f32 %v1613, %v209
  %1617 = vrot.lane.b32.xlu0 %v1583, 127
  %v1618 = vpop.permute.xlu0 %1617
  %1619 = vrot.lane.b32.xlu0 %v1584, 127
  %v1620 = vpop.permute.xlu0 %1619
  %v1621 = vsel %vm218, %v1618, %v1620
  %v1622 = vsel %vm218, %v1620, %v1618
  %v1623 = vmul.f32 %v1621, %v225
  %v1624 = vmul.f32 %v1622, %v229
  %1625 = vrot.lane.b32.xlu0 %v1583, 113
  %v1626 = vpop.permute.xlu0 %1625
  %1627 = vrot.lane.b32.xlu0 %v1584, 113
  %v1628 = vpop.permute.xlu0 %1627
  %v1629 = vsel %vm238, %v1626, %v1628
  %v1630 = vsel %vm238, %v1628, %v1626
  %v1631 = vmul.f32 %v1629, %v245
  %v1632 = vmul.f32 %v1630, %v249
  %1633 = vrot.lane.b32.xlu0 %v1583, 112
  %v1634 = vpop.permute.xlu0 %1633
  %1635 = vrot.lane.b32.xlu0 %v1584, 112
  %v1636 = vpop.permute.xlu0 %1635
  %v1637 = vsel %vm258, %v1634, %v1636
  %v1638 = vsel %vm258, %v1636, %v1634
  %v1639 = vmul.f32 %v1637, %v265
  %v1640 = vmul.f32 %v1638, %v269
  %1641 = vrot.lane.b32.xlu0 %v1583, 111
  %v1642 = vpop.permute.xlu0 %1641
  %1643 = vrot.lane.b32.xlu0 %v1584, 111
  %v1644 = vpop.permute.xlu0 %1643
  %v1645 = vsel %vm278, %v1642, %v1644
  %v1646 = vsel %vm278, %v1644, %v1642
  %v1647 = vmul.f32 %v1645, %v285
  %v1648 = vmul.f32 %v1646, %v289
  %v1649 = vld [vmem:[%s41] sm:$0xff]
  %v1651 = vsel %vm295, %v1649, 0
  %1653 = vmatprep.subr.mxu0 %v1592
  %1654 = vmatpush1.msra.mxu0 %v1591
  %1655 = vmatprep.subr.mxu0 %v1600
  %1656 = vmatpush1.msra.mxu0 %v1599
  %1657 = vmatprep.subr.mxu0 %v1608
  %1658 = vmatpush1.msra.mxu0 %v1607
  %1659 = vmatprep.subr.mxu0 %v1616
  %1660 = vmatpush1.msra.mxu0 %v1615
  %1661 = vmatprep.subr.mxu0 %v1584
  %1662 = vmatpush1.msra.mxu0 %v1583
  %1663 = vmatprep.subr.mxu0 %v1624
  %1664 = vmatpush1.msra.mxu0 %v1623
  %1665 = vmatprep.subr.mxu0 %v1632
  %1666 = vmatpush1.msra.mxu0 %v1631
  %1667 = vmatprep.subr.mxu0 %v1640
  %1668 = vmatpush1.msra.mxu0 %v1639
  %1669 = vmatprep.subr.mxu0 %v1648
  %1670 = vmatpush1.msra.mxu0 %v1647
  %1671 = vmatprep.subr.mxu0 %v301
  %1672 = vmatpush1.msra.mxu0 %v301
  %1673 = vmatprep.subr.mxu0 0.0
  %1674 = vmatpush1.msra.mxu0 0.0
  %1675 = vmatprep.subr.mxu0 0.0
  %1676 = vmatpush1.msra.mxu0 0.0
  %1677 = vmatprep.subr.mxu0 0.0
  %1678 = vmatpush1.msra.mxu0 0.0
  %1679 = vmatprep.subr.mxu0 0.0
  %1680 = vmatpush1.msra.mxu0 0.0
  %1681 = vmatprep.subr.mxu0 0.0
  %1682 = vmatpush1.msra.mxu0 0.0
  %1683 = vmatprep.subr.mxu0 0.0
  %1684 = vmatpush1.msra.mxu0 0.0
  %1685 = vmatprep.subr.mxu0 0.0
  %1686 = vmatpush1.msra.mxu0 0.0
  %1687 = vmatprep.subr.mxu0 0.0
  %1688 = vmatpush1.msra.mxu0 0.0
  %1689 = vmatprep.subr.mxu0 0.0
  %1690 = vmatpush1.msra.mxu0 0.0
  %1691 = vmatprep.subr.mxu0 0.0
  %1692 = vmatpush1.msra.mxu0 0.0
  %1693 = vmatprep.subr.mxu0 0.0
  %1694 = vmatpush1.msra.mxu0 0.0
  %1695 = vmatprep.subr.mxu0 0.0
  %1696 = vmatpush1.msra.mxu0 0.0
  %1697 = vmatprep.subr.mxu0 0.0
  %1698 = vmatpush1.msra.mxu0 0.0
  %1699 = vmatprep.subr.mxu0 0.0
  %1700 = vmatpush1.msra.mxu0 0.0
  %1701 = vmatprep.subr.mxu0 0.0
  %1702 = vmatpush1.msra.mxu0 0.0
  %1703 = vmatprep.subr.mxu0 0.0
  %1704 = vmatpush1.msra.mxu0 0.0
  %1705 = vmatprep.subr.mxu0 0.0
  %1706 = vmatpush1.msra.mxu0 0.0
  %1707 = vmatprep.subr.mxu0 0.0
  %1708 = vmatpush1.msra.mxu0 0.0
  %1709 = vmatprep.subr.mxu0 0.0
  %1710 = vmatpush1.msra.mxu0 0.0
  %1711 = vmatprep.subr.mxu0 0.0
  %1712 = vmatpush1.msra.mxu0 0.0
  %1713 = vmatprep.subr.mxu0 0.0
  %1714 = vmatpush1.msra.mxu0 0.0
  %1715 = vmatprep.subr.mxu0 0.0
  %1716 = vmatpush1.msra.mxu0 0.0
  %1717 = vmatprep.mubr.f32.mxu0 0.0
  %1718 = vmatmul.mubr.f32.gmra.mrb[0].mxu0 %v1651
  %v1719 = vpop.f32.mrb[0].mxu0
  %v1720 = vadd.f32 0.0, %v1719
  %v1721 = vpop.f32.mrb[0].mxu0
  %v1722 = vadd.f32 0.0, %v1721
  %1723 = vdwg.mxu0
  %v1724 = vmax.f32 %v1720, 0.0
  %v1725 = vmax.f32 %v1722, 0.0
  %v1726 = vadd.f32 %v1583, %v1724
  %v1727 = vadd.f32 %v1584, %v1725
  %v1728 = vsel %vm1282, %v1274, 1.0
  %v1729 = vsel %vm1282, %v1275, 1.0
  %v1731 = vsel %vm1295, %v1728, 0
  %v1734 = vsel %vm1295, %v1729, 0
  %1736 = vmatprep.subr.mxu0 %v809
  %1737 = vmatpush1.msra.mxu0 %v808
  %1738 = vmatprep.subr.mxu0 %v1734
  %1739 = vmatpush1.msra.mxu0 %v1731
  %1740 = vmatprep.subr.mxu0 0.0
  %1741 = vmatpush1.msra.mxu0 0.0
  %1742 = vmatprep.subr.mxu0 0.0
  %1743 = vmatpush1.msra.mxu0 0.0
  %1744 = vmatprep.subr.mxu0 0.0
  %1745 = vmatpush1.msra.mxu0 0.0
  %1746 = vmatprep.subr.mxu0 0.0
  %1747 = vmatpush1.msra.mxu0 0.0
  %1748 = vmatprep.subr.mxu0 0.0
  %1749 = vmatpush1.msra.mxu0 0.0
  %1750 = vmatprep.subr.mxu0 0.0
  %1751 = vmatpush1.msra.mxu0 0.0
  %1752 = vmatprep.subr.mxu0 0.0
  %1753 = vmatpush1.msra.mxu0 0.0
  %1754 = vmatprep.subr.mxu0 0.0
  %1755 = vmatpush1.msra.mxu0 0.0
  %1756 = vmatprep.subr.mxu0 0.0
  %1757 = vmatpush1.msra.mxu0 0.0
  %1758 = vmatprep.subr.mxu0 0.0
  %1759 = vmatpush1.msra.mxu0 0.0
  %1760 = vmatprep.subr.mxu0 0.0
  %1761 = vmatpush1.msra.mxu0 0.0
  %1762 = vmatprep.subr.mxu0 0.0
  %1763 = vmatpush1.msra.mxu0 0.0
  %1764 = vmatprep.subr.mxu0 0.0
  %1765 = vmatpush1.msra.mxu0 0.0
  %1766 = vmatprep.subr.mxu0 0.0
  %1767 = vmatpush1.msra.mxu0 0.0
  %1768 = vmatprep.subr.mxu0 0.0
  %1769 = vmatpush1.msra.mxu0 0.0
  %1770 = vmatprep.subr.mxu0 0.0
  %1771 = vmatpush1.msra.mxu0 0.0
  %1772 = vmatprep.subr.mxu0 0.0
  %1773 = vmatpush1.msra.mxu0 0.0
  %1774 = vmatprep.subr.mxu0 0.0
  %1775 = vmatpush1.msra.mxu0 0.0
  %1776 = vmatprep.subr.mxu0 0.0
  %1777 = vmatpush1.msra.mxu0 0.0
  %1778 = vmatprep.subr.mxu0 0.0
  %1779 = vmatpush1.msra.mxu0 0.0
  %1780 = vmatprep.subr.mxu0 0.0
  %1781 = vmatpush1.msra.mxu0 0.0
  %1782 = vmatprep.subr.mxu0 0.0
  %1783 = vmatpush1.msra.mxu0 0.0
  %1784 = vmatprep.subr.mxu0 0.0
  %1785 = vmatpush1.msra.mxu0 0.0
  %1786 = vmatprep.subr.mxu0 0.0
  %1787 = vmatpush1.msra.mxu0 0.0
  %1788 = vmatprep.subr.mxu0 0.0
  %1789 = vmatpush1.msra.mxu0 0.0
  %1790 = vmatprep.subr.mxu0 0.0
  %1791 = vmatpush1.msra.mxu0 0.0
  %1792 = vmatprep.subr.mxu0 0.0
  %1793 = vmatpush1.msra.mxu0 0.0
  %1794 = vmatprep.subr.mxu0 0.0
  %1795 = vmatpush1.msra.mxu0 0.0
  %1796 = vmatprep.subr.mxu0 0.0
  %1797 = vmatpush1.msra.mxu0 0.0
  %1798 = vmatprep.subr.mxu0 0.0
  %1799 = vmatpush1.msra.mxu0 0.0
  %1800 = vmatprep.mubr.f32.mxu0 0.0
  %1801 = vmatmul.mubr.f32.gmra.mrb[0].mxu0 %v1287
  %v1802 = vpop.f32.mrb[0].mxu0
  %v1803 = vadd.f32 0.0, %v1802
  %v1804 = vpop.f32.mrb[0].mxu0
  %v1805 = vadd.f32 0.0, %v1804
  %1806 = vmatprep.mubr.f32.mxu0 0.0
  %1807 = vmatmul.mubr.f32.gmra.mrb[0].mxu0 %v1290
  %v1808 = vpop.f32.mrb[0].mxu0
  %v1809 = vadd.f32 0.0, %v1808
  %v1810 = vpop.f32.mrb[0].mxu0
  %v1811 = vadd.f32 0.0, %v1810
  %1812 = vmatprep.mubr.f32.mxu0 0.0
  %1813 = vmatmul.mubr.f32.gmra.mrb[0].mxu0 %v1293
  %v1814 = vpop.f32.mrb[0].mxu0
  %v1815 = vadd.f32 0.0, %v1814
  %v1816 = vpop.f32.mrb[0].mxu0
  %v1817 = vadd.f32 0.0, %v1816
  %1818 = vdwg.mxu0
  %1819 = vmatprep.subr.mxu0 %v1584
  %1820 = vmatpush1.msra.mxu0 %v1583
  %1821 = vmatprep.subr.mxu0 0.0
  %1822 = vmatpush1.msra.mxu0 0.0
  %1823 = vmatprep.subr.mxu0 0.0
  %1824 = vmatpush1.msra.mxu0 0.0
  %1825 = vmatprep.subr.mxu0 0.0
  %1826 = vmatpush1.msra.mxu0 0.0
  %1827 = vmatprep.subr.mxu0 0.0
  %1828 = vmatpush1.msra.mxu0 0.0
  %1829 = vmatprep.subr.mxu0 0.0
  %1830 = vmatpush1.msra.mxu0 0.0
  %1831 = vmatprep.subr.mxu0 0.0
  %1832 = vmatpush1.msra.mxu0 0.0
  %1833 = vmatprep.subr.mxu0 0.0
  %1834 = vmatpush1.msra.mxu0 0.0
  %1835 = vmatprep.subr.mxu0 0.0
  %1836 = vmatpush1.msra.mxu0 0.0
  %1837 = vmatprep.subr.mxu0 0.0
  %1838 = vmatpush1.msra.mxu0 0.0
  %1839 = vmatprep.subr.mxu0 0.0
  %1840 = vmatpush1.msra.mxu0 0.0
  %1841 = vmatprep.subr.mxu0 0.0
  %1842 = vmatpush1.msra.mxu0 0.0
  %1843 = vmatprep.subr.mxu0 0.0
  %1844 = vmatpush1.msra.mxu0 0.0
  %1845 = vmatprep.subr.mxu0 0.0
  %1846 = vmatpush1.msra.mxu0 0.0
  %1847 = vmatprep.subr.mxu0 0.0
  %1848 = vmatpush1.msra.mxu0 0.0
  %1849 = vmatprep.subr.mxu0 0.0
  %1850 = vmatpush1.msra.mxu0 0.0
  %1851 = vmatprep.subr.mxu0 0.0
  %1852 = vmatpush1.msra.mxu0 0.0
  %1853 = vmatprep.subr.mxu0 0.0
  %1854 = vmatpush1.msra.mxu0 0.0
  %1855 = vmatprep.subr.mxu0 0.0
  %1856 = vmatpush1.msra.mxu0 0.0
  %1857 = vmatprep.subr.mxu0 0.0
  %1858 = vmatpush1.msra.mxu0 0.0
  %1859 = vmatprep.subr.mxu0 0.0
  %1860 = vmatpush1.msra.mxu0 0.0
  %1861 = vmatprep.subr.mxu0 0.0
  %1862 = vmatpush1.msra.mxu0 0.0
  %1863 = vmatprep.subr.mxu0 0.0
  %1864 = vmatpush1.msra.mxu0 0.0
  %1865 = vmatprep.subr.mxu0 0.0
  %1866 = vmatpush1.msra.mxu0 0.0
  %1867 = vmatprep.subr.mxu0 0.0
  %1868 = vmatpush1.msra.mxu0 0.0
  %1869 = vmatprep.subr.mxu0 0.0
  %1870 = vmatpush1.msra.mxu0 0.0
  %1871 = vmatprep.subr.mxu0 0.0
  %1872 = vmatpush1.msra.mxu0 0.0
  %1873 = vmatprep.subr.mxu0 0.0
  %1874 = vmatpush1.msra.mxu0 0.0
  %1875 = vmatprep.subr.mxu0 0.0
  %1876 = vmatpush1.msra.mxu0 0.0
  %1877 = vmatprep.subr.mxu0 0.0
  %1878 = vmatpush1.msra.mxu0 0.0
  %1879 = vmatprep.subr.mxu0 0.0
  %1880 = vmatpush1.msra.mxu0 0.0
  %1881 = vmatprep.subr.mxu0 0.0
  %1882 = vmatpush1.msra.mxu0 0.0
  %1883 = vmatprep.mubr.f32.mxu0 0.0
  %1884 = vmatmul.mubr.f32.gmra.mrb[0].mxu0 %v1387
  %v1885 = vpop.f32.mrb[0].mxu0
  %v1886 = vadd.f32 0.0, %v1885
  %v1887 = vpop.f32.mrb[0].mxu0
  %v1888 = vadd.f32 0.0, %v1887
  %1889 = vmatprep.mubr.f32.mxu0 0.0
  %1890 = vmatmul.mubr.f32.gmra.mrb[0].mxu0 %v1390
  %v1891 = vpop.f32.mrb[0].mxu0
  %v1892 = vadd.f32 0.0, %v1891
  %v1893 = vpop.f32.mrb[0].mxu0
  %v1894 = vadd.f32 0.0, %v1893
  %1895 = vdwg.mxu0
  %v1896 = vadd.f32 %v1803, %v1886
  %v1897 = vadd.f32 %v1805, %v1888
  %v1898 = vxor.u32 %v1896, 2147483648
  %v1899 = vxor.u32 %v1897, 2147483648
  %v1900 = vmul.f32 %v1898, 1.442695
  %v1901 = vpow.pop %v1900
  %v1902 = vmul.f32 %v1899, 1.442695
  %v1903 = vpow.pop %v1902
  %v1904 = vadd.f32 %v1901, 1.0
  %v1905 = vadd.f32 %v1903, 1.0
  %v1906 = vrcp.pop %v1904
  %v1907 = vmul.f32 1.0, %v1906
  %v1908 = vrcp.pop %v1905
  %v1909 = vmul.f32 1.0, %v1908
  %v1910 = vadd.f32 %v1809, %v1892
  %v1911 = vadd.f32 %v1811, %v1894
  %v1912 = vxor.u32 %v1910, 2147483648
  %v1913 = vxor.u32 %v1911, 2147483648
  %v1914 = vmul.f32 %v1912, 1.442695
  %v1915 = vpow.pop %v1914
  %v1916 = vmul.f32 %v1913, 1.442695
  %v1917 = vpow.pop %v1916
  %v1918 = vadd.f32 %v1915, 1.0
  %v1919 = vadd.f32 %v1917, 1.0
  %v1920 = vrcp.pop %v1918
  %v1921 = vmul.f32 1.0, %v1920
  %v1922 = vrcp.pop %v1919
  %v1923 = vmul.f32 1.0, %v1922
  %v1924 = vmul.f32 %v1921, %v1583
  %v1925 = vmul.f32 %v1923, %v1584
  %1926 = vmatprep.subr.mxu0 %v1925
  %1927 = vmatpush1.msra.mxu0 %v1924
  %1928 = vmatprep.subr.mxu0 0.0
  %1929 = vmatpush1.msra.mxu0 0.0
  %1930 = vmatprep.subr.mxu0 0.0
  %1931 = vmatpush1.msra.mxu0 0.0
  %1932 = vmatprep.subr.mxu0 0.0
  %1933 = vmatpush1.msra.mxu0 0.0
  %1934 = vmatprep.subr.mxu0 0.0
  %1935 = vmatpush1.msra.mxu0 0.0
  %1936 = vmatprep.subr.mxu0 0.0
  %1937 = vmatpush1.msra.mxu0 0.0
  %1938 = vmatprep.subr.mxu0 0.0
  %1939 = vmatpush1.msra.mxu0 0.0
  %1940 = vmatprep.subr.mxu0 0.0
  %1941 = vmatpush1.msra.mxu0 0.0
  %1942 = vmatprep.subr.mxu0 0.0
  %1943 = vmatpush1.msra.mxu0 0.0
  %1944 = vmatprep.subr.mxu0 0.0
  %1945 = vmatpush1.msra.mxu0 0.0
  %1946 = vmatprep.subr.mxu0 0.0
  %1947 = vmatpush1.msra.mxu0 0.0
  %1948 = vmatprep.subr.mxu0 0.0
  %1949 = vmatpush1.msra.mxu0 0.0
  %1950 = vmatprep.subr.mxu0 0.0
  %1951 = vmatpush1.msra.mxu0 0.0
  %1952 = vmatprep.subr.mxu0 0.0
  %1953 = vmatpush1.msra.mxu0 0.0
  %1954 = vmatprep.subr.mxu0 0.0
  %1955 = vmatpush1.msra.mxu0 0.0
  %1956 = vmatprep.subr.mxu0 0.0
  %1957 = vmatpush1.msra.mxu0 0.0
  %1958 = vmatprep.subr.mxu0 0.0
  %1959 = vmatpush1.msra.mxu0 0.0
  %1960 = vmatprep.subr.mxu0 0.0
  %1961 = vmatpush1.msra.mxu0 0.0
  %1962 = vmatprep.subr.mxu0 0.0
  %1963 = vmatpush1.msra.mxu0 0.0
  %1964 = vmatprep.subr.mxu0 0.0
  %1965 = vmatpush1.msra.mxu0 0.0
  %1966 = vmatprep.subr.mxu0 0.0
  %1967 = vmatpush1.msra.mxu0 0.0
  %1968 = vmatprep.subr.mxu0 0.0
  %1969 = vmatpush1.msra.mxu0 0.0
  %1970 = vmatprep.subr.mxu0 0.0
  %1971 = vmatpush1.msra.mxu0 0.0
  %1972 = vmatprep.subr.mxu0 0.0
  %1973 = vmatpush1.msra.mxu0 0.0
  %1974 = vmatprep.subr.mxu0 0.0
  %1975 = vmatpush1.msra.mxu0 0.0
  %1976 = vmatprep.subr.mxu0 0.0
  %1977 = vmatpush1.msra.mxu0 0.0
  %1978 = vmatprep.subr.mxu0 0.0
  %1979 = vmatpush1.msra.mxu0 0.0
  %1980 = vmatprep.subr.mxu0 0.0
  %1981 = vmatpush1.msra.mxu0 0.0
  %1982 = vmatprep.subr.mxu0 0.0
  %1983 = vmatpush1.msra.mxu0 0.0
  %1984 = vmatprep.subr.mxu0 0.0
  %1985 = vmatpush1.msra.mxu0 0.0
  %1986 = vmatprep.subr.mxu0 0.0
  %1987 = vmatpush1.msra.mxu0 0.0
  %1988 = vmatprep.subr.mxu0 0.0
  %1989 = vmatpush1.msra.mxu0 0.0
  %1990 = vmatprep.mubr.f32.mxu0 0.0
  %1991 = vmatmul.mubr.f32.gmra.mrb[0].mxu0 %v1500
  %v1992 = vpop.f32.mrb[0].mxu0
  %v1993 = vadd.f32 0.0, %v1992
  %v1994 = vpop.f32.mrb[0].mxu0
  %v1995 = vadd.f32 0.0, %v1994
  %1996 = vdwg.mxu0
  %v1997 = vadd.f32 %v1815, %v1993
  %v1998 = vadd.f32 %v1817, %v1995
  %v1999 = vtanh.pop %v1997
  %v2000 = vtanh.pop %v1998
  %v2001 = vsub.f32 1.0, %v1907
  %v2002 = vsub.f32 1.0, %v1909
  %v2003 = vmul.f32 %v2001, %v1583
  %v2004 = vmul.f32 %v2002, %v1584
  %v2005 = vmul.f32 %v1907, %v1999
  %v2006 = vmul.f32 %v1909, %v2000
  %v2007 = vadd.f32 %v2003, %v2005
  %v2008 = vadd.f32 %v2004, %v2006
  %2009 = vrot.lane.b32.xlu0 %v2007, 17
  %v2010 = vpop.permute.xlu0 %2009
  %2011 = vrot.lane.b32.xlu0 %v2008, 17
  %v2012 = vpop.permute.xlu0 %2011
  %v2013 = vsel %vm138, %v2010, %v2012
  %v2014 = vsel %vm138, %v2012, %v2010
  %v2015 = vmul.f32 %v2014, %v145
  %v2016 = vmul.f32 %v2013, %v149
  %2017 = vrot.lane.b32.xlu0 %v2007, 16
  %v2018 = vpop.permute.xlu0 %2017
  %2019 = vrot.lane.b32.xlu0 %v2008, 16
  %v2020 = vpop.permute.xlu0 %2019
  %v2021 = vsel %vm158, %v2018, %v2020
  %v2022 = vsel %vm158, %v2020, %v2018
  %v2023 = vmul.f32 %v2022, %v165
  %v2024 = vmul.f32 %v2021, %v169
  %2025 = vrot.lane.b32.xlu0 %v2007, 15
  %v2026 = vpop.permute.xlu0 %2025
  %2027 = vrot.lane.b32.xlu0 %v2008, 15
  %v2028 = vpop.permute.xlu0 %2027
  %v2029 = vsel %vm178, %v2026, %v2028
  %v2030 = vsel %vm178, %v2028, %v2026
  %v2031 = vmul.f32 %v2030, %v185
  %v2032 = vmul.f32 %v2029, %v189
  %2033 = vrot.lane.b32.xlu0 %v2007, 1
  %v2034 = vpop.permute.xlu0 %2033
  %2035 = vrot.lane.b32.xlu0 %v2008, 1
  %v2036 = vpop.permute.xlu0 %2035
  %v2037 = vsel %vm198, %v2034, %v2036
  %v2038 = vsel %vm198, %v2036, %v2034
  %v2039 = vmul.f32 %v2038, %v205
  %v2040 = vmul.f32 %v2037, %v209
  %2041 = vrot.lane.b32.xlu0 %v2007, 127
  %v2042 = vpop.permute.xlu0 %2041
  %2043 = vrot.lane.b32.xlu0 %v2008, 127
  %v2044 = vpop.permute.xlu0 %2043
  %v2045 = vsel %vm218, %v2042, %v2044
  %v2046 = vsel %vm218, %v2044, %v2042
  %v2047 = vmul.f32 %v2045, %v225
  %v2048 = vmul.f32 %v2046, %v229
  %2049 = vrot.lane.b32.xlu0 %v2007, 113
  %v2050 = vpop.permute.xlu0 %2049
  %2051 = vrot.lane.b32.xlu0 %v2008, 113
  %v2052 = vpop.permute.xlu0 %2051
  %v2053 = vsel %vm238, %v2050, %v2052
  %v2054 = vsel %vm238, %v2052, %v2050
  %v2055 = vmul.f32 %v2053, %v245
  %v2056 = vmul.f32 %v2054, %v249
  %2057 = vrot.lane.b32.xlu0 %v2007, 112
  %v2058 = vpop.permute.xlu0 %2057
  %2059 = vrot.lane.b32.xlu0 %v2008, 112
  %v2060 = vpop.permute.xlu0 %2059
  %v2061 = vsel %vm258, %v2058, %v2060
  %v2062 = vsel %vm258, %v2060, %v2058
  %v2063 = vmul.f32 %v2061, %v265
  %v2064 = vmul.f32 %v2062, %v269
  %2065 = vrot.lane.b32.xlu0 %v2007, 111
  %v2066 = vpop.permute.xlu0 %2065
  %2067 = vrot.lane.b32.xlu0 %v2008, 111
  %v2068 = vpop.permute.xlu0 %2067
  %v2069 = vsel %vm278, %v2066, %v2068
  %v2070 = vsel %vm278, %v2068, %v2066
  %v2071 = vmul.f32 %v2069, %v285
  %v2072 = vmul.f32 %v2070, %v289
  %2073 = vmatprep.subr.mxu0 %v2016
  %2074 = vmatpush1.msra.mxu0 %v2015
  %2075 = vmatprep.subr.mxu0 %v2024
  %2076 = vmatpush1.msra.mxu0 %v2023
  %2077 = vmatprep.subr.mxu0 %v2032
  %2078 = vmatpush1.msra.mxu0 %v2031
  %2079 = vmatprep.subr.mxu0 %v2040
  %2080 = vmatpush1.msra.mxu0 %v2039
  %2081 = vmatprep.subr.mxu0 %v2008
  %2082 = vmatpush1.msra.mxu0 %v2007
  %2083 = vmatprep.subr.mxu0 %v2048
  %2084 = vmatpush1.msra.mxu0 %v2047
  %2085 = vmatprep.subr.mxu0 %v2056
  %2086 = vmatpush1.msra.mxu0 %v2055
  %2087 = vmatprep.subr.mxu0 %v2064
  %2088 = vmatpush1.msra.mxu0 %v2063
  %2089 = vmatprep.subr.mxu0 %v2072
  %2090 = vmatpush1.msra.mxu0 %v2071
  %2091 = vmatprep.subr.mxu0 %v301
  %2092 = vmatpush1.msra.mxu0 %v301
  %2093 = vmatprep.subr.mxu0 0.0
  %2094 = vmatpush1.msra.mxu0 0.0
  %2095 = vmatprep.subr.mxu0 0.0
  %2096 = vmatpush1.msra.mxu0 0.0
  %2097 = vmatprep.subr.mxu0 0.0
  %2098 = vmatpush1.msra.mxu0 0.0
  %2099 = vmatprep.subr.mxu0 0.0
  %2100 = vmatpush1.msra.mxu0 0.0
  %2101 = vmatprep.subr.mxu0 0.0
  %2102 = vmatpush1.msra.mxu0 0.0
  %2103 = vmatprep.subr.mxu0 0.0
  %2104 = vmatpush1.msra.mxu0 0.0
  %2105 = vmatprep.subr.mxu0 0.0
  %2106 = vmatpush1.msra.mxu0 0.0
  %2107 = vmatprep.subr.mxu0 0.0
  %2108 = vmatpush1.msra.mxu0 0.0
  %2109 = vmatprep.subr.mxu0 0.0
  %2110 = vmatpush1.msra.mxu0 0.0
  %2111 = vmatprep.subr.mxu0 0.0
  %2112 = vmatpush1.msra.mxu0 0.0
  %2113 = vmatprep.subr.mxu0 0.0
  %2114 = vmatpush1.msra.mxu0 0.0
  %2115 = vmatprep.subr.mxu0 0.0
  %2116 = vmatpush1.msra.mxu0 0.0
  %2117 = vmatprep.subr.mxu0 0.0
  %2118 = vmatpush1.msra.mxu0 0.0
  %2119 = vmatprep.subr.mxu0 0.0
  %2120 = vmatpush1.msra.mxu0 0.0
  %2121 = vmatprep.subr.mxu0 0.0
  %2122 = vmatpush1.msra.mxu0 0.0
  %2123 = vmatprep.subr.mxu0 0.0
  %2124 = vmatpush1.msra.mxu0 0.0
  %2125 = vmatprep.subr.mxu0 0.0
  %2126 = vmatpush1.msra.mxu0 0.0
  %2127 = vmatprep.subr.mxu0 0.0
  %2128 = vmatpush1.msra.mxu0 0.0
  %2129 = vmatprep.subr.mxu0 0.0
  %2130 = vmatpush1.msra.mxu0 0.0
  %2131 = vmatprep.subr.mxu0 0.0
  %2132 = vmatpush1.msra.mxu0 0.0
  %2133 = vmatprep.subr.mxu0 0.0
  %2134 = vmatpush1.msra.mxu0 0.0
  %2135 = vmatprep.subr.mxu0 0.0
  %2136 = vmatpush1.msra.mxu0 0.0
  %2137 = vmatprep.mubr.f32.mxu0 0.0
  %2138 = vmatmul.mubr.f32.gmra.mrb[0].mxu0 %v1651
  %v2139 = vpop.f32.mrb[0].mxu0
  %v2140 = vadd.f32 0.0, %v2139
  %v2141 = vpop.f32.mrb[0].mxu0
  %v2142 = vadd.f32 0.0, %v2141
  %2143 = vdwg.mxu0
  %v2144 = vmax.f32 %v2140, 0.0
  %v2145 = vmax.f32 %v2142, 0.0
  %v2146 = vadd.f32 %v2007, %v2144
  %v2147 = vadd.f32 %v2008, %v2145
  %v2148 = vld [vmem:[%s43] sm:$0xff]
  %v2149 = vld [vmem:[%s43 + $0x8] sm:$0xff]
  %v2150 = vld [vmem:[%s43 + $0x10] sm:$0xff]
  %v2151 = vld [vmem:[%s45] sm:$0xff]
  %v2152 = vld [vmem:[%s45 + $0x8] sm:$0xff]
  %v2153 = vld [vmem:[%s47] sm:$0xff]
  %vm2154 = vcmask 72704
  %v2156 = vsel %vm2154, %v2148, 0
  %v2159 = vsel %vm2154, %v2149, 0
  %v2162 = vsel %vm2154, %v2150, 0
  %2164 = vmatprep.subr.mxu0 %v1727
  %2165 = vmatpush1.msra.mxu0 %v1726
  %2166 = vmatprep.subr.mxu0 %v301
  %2167 = vmatpush1.msra.mxu0 %v301
  %2168 = vmatprep.subr.mxu0 0.0
  %2169 = vmatpush1.msra.mxu0 0.0
  %2170 = vmatprep.subr.mxu0 0.0
  %2171 = vmatpush1.msra.mxu0 0.0
  %2172 = vmatprep.subr.mxu0 0.0
  %2173 = vmatpush1.msra.mxu0 0.0
  %2174 = vmatprep.subr.mxu0 0.0
  %2175 = vmatpush1.msra.mxu0 0.0
  %2176 = vmatprep.subr.mxu0 0.0
  %2177 = vmatpush1.msra.mxu0 0.0
  %2178 = vmatprep.subr.mxu0 0.0
  %2179 = vmatpush1.msra.mxu0 0.0
  %2180 = vmatprep.subr.mxu0 0.0
  %2181 = vmatpush1.msra.mxu0 0.0
  %2182 = vmatprep.subr.mxu0 0.0
  %2183 = vmatpush1.msra.mxu0 0.0
  %2184 = vmatprep.subr.mxu0 0.0
  %2185 = vmatpush1.msra.mxu0 0.0
  %2186 = vmatprep.subr.mxu0 0.0
  %2187 = vmatpush1.msra.mxu0 0.0
  %2188 = vmatprep.subr.mxu0 0.0
  %2189 = vmatpush1.msra.mxu0 0.0
  %2190 = vmatprep.subr.mxu0 0.0
  %2191 = vmatpush1.msra.mxu0 0.0
  %2192 = vmatprep.subr.mxu0 0.0
  %2193 = vmatpush1.msra.mxu0 0.0
  %2194 = vmatprep.subr.mxu0 0.0
  %2195 = vmatpush1.msra.mxu0 0.0
  %2196 = vmatprep.subr.mxu0 0.0
  %2197 = vmatpush1.msra.mxu0 0.0
  %2198 = vmatprep.subr.mxu0 0.0
  %2199 = vmatpush1.msra.mxu0 0.0
  %2200 = vmatprep.subr.mxu0 0.0
  %2201 = vmatpush1.msra.mxu0 0.0
  %2202 = vmatprep.subr.mxu0 0.0
  %2203 = vmatpush1.msra.mxu0 0.0
  %2204 = vmatprep.subr.mxu0 0.0
  %2205 = vmatpush1.msra.mxu0 0.0
  %2206 = vmatprep.subr.mxu0 0.0
  %2207 = vmatpush1.msra.mxu0 0.0
  %2208 = vmatprep.subr.mxu0 0.0
  %2209 = vmatpush1.msra.mxu0 0.0
  %2210 = vmatprep.subr.mxu0 0.0
  %2211 = vmatpush1.msra.mxu0 0.0
  %2212 = vmatprep.subr.mxu0 0.0
  %2213 = vmatpush1.msra.mxu0 0.0
  %2214 = vmatprep.subr.mxu0 0.0
  %2215 = vmatpush1.msra.mxu0 0.0
  %2216 = vmatprep.subr.mxu0 0.0
  %2217 = vmatpush1.msra.mxu0 0.0
  %2218 = vmatprep.subr.mxu0 0.0
  %2219 = vmatpush1.msra.mxu0 0.0
  %2220 = vmatprep.subr.mxu0 0.0
  %2221 = vmatpush1.msra.mxu0 0.0
  %2222 = vmatprep.subr.mxu0 0.0
  %2223 = vmatpush1.msra.mxu0 0.0
  %2224 = vmatprep.subr.mxu0 0.0
  %2225 = vmatpush1.msra.mxu0 0.0
  %2226 = vmatprep.subr.mxu0 0.0
  %2227 = vmatpush1.msra.mxu0 0.0
  %2228 = vmatprep.mubr.f32.mxu0 0.0
  %2229 = vmatmul.mubr.f32.gmra.mrb[0].mxu0 %v2156
  %v2230 = vpop.f32.mrb[0].mxu0
  %v2231 = vadd.f32 0.0, %v2230
  %v2232 = vpop.f32.mrb[0].mxu0
  %v2233 = vadd.f32 0.0, %v2232
  %2234 = vmatprep.mubr.f32.mxu0 0.0
  %2235 = vmatmul.mubr.f32.gmra.mrb[0].mxu0 %v2159
  %v2236 = vpop.f32.mrb[0].mxu0
  %v2237 = vadd.f32 0.0, %v2236
  %v2238 = vpop.f32.mrb[0].mxu0
  %v2239 = vadd.f32 0.0, %v2238
  %2240 = vmatprep.mubr.f32.mxu0 0.0
  %2241 = vmatmul.mubr.f32.gmra.mrb[0].mxu0 %v2162
  %v2242 = vpop.f32.mrb[0].mxu0
  %v2243 = vadd.f32 0.0, %v2242
  %v2244 = vpop.f32.mrb[0].mxu0
  %v2245 = vadd.f32 0.0, %v2244
  %2246 = vdwg.mxu0
  %v2248 = vsel %vm1385, %v2151, 0
  %v2251 = vsel %vm1385, %v2152, 0
  %2253 = vmatprep.subr.mxu0 0.0
  %2254 = vmatpush1.msra.mxu0 0.0
  %2255 = vmatprep.subr.mxu0 0.0
  %2256 = vmatpush1.msra.mxu0 0.0
  %2257 = vmatprep.subr.mxu0 0.0
  %2258 = vmatpush1.msra.mxu0 0.0
  %2259 = vmatprep.subr.mxu0 0.0
  %2260 = vmatpush1.msra.mxu0 0.0
  %2261 = vmatprep.subr.mxu0 0.0
  %2262 = vmatpush1.msra.mxu0 0.0
  %2263 = vmatprep.subr.mxu0 0.0
  %2264 = vmatpush1.msra.mxu0 0.0
  %2265 = vmatprep.subr.mxu0 0.0
  %2266 = vmatpush1.msra.mxu0 0.0
  %2267 = vmatprep.subr.mxu0 0.0
  %2268 = vmatpush1.msra.mxu0 0.0
  %2269 = vmatprep.subr.mxu0 0.0
  %2270 = vmatpush1.msra.mxu0 0.0
  %2271 = vmatprep.subr.mxu0 0.0
  %2272 = vmatpush1.msra.mxu0 0.0
  %2273 = vmatprep.subr.mxu0 0.0
  %2274 = vmatpush1.msra.mxu0 0.0
  %2275 = vmatprep.subr.mxu0 0.0
  %2276 = vmatpush1.msra.mxu0 0.0
  %2277 = vmatprep.subr.mxu0 0.0
  %2278 = vmatpush1.msra.mxu0 0.0
  %2279 = vmatprep.subr.mxu0 0.0
  %2280 = vmatpush1.msra.mxu0 0.0
  %2281 = vmatprep.subr.mxu0 0.0
  %2282 = vmatpush1.msra.mxu0 0.0
  %2283 = vmatprep.subr.mxu0 0.0
  %2284 = vmatpush1.msra.mxu0 0.0
  %2285 = vmatprep.subr.mxu0 0.0
  %2286 = vmatpush1.msra.mxu0 0.0
  %2287 = vmatprep.subr.mxu0 0.0
  %2288 = vmatpush1.msra.mxu0 0.0
  %2289 = vmatprep.subr.mxu0 0.0
  %2290 = vmatpush1.msra.mxu0 0.0
  %2291 = vmatprep.subr.mxu0 0.0
  %2292 = vmatpush1.msra.mxu0 0.0
  %2293 = vmatprep.subr.mxu0 0.0
  %2294 = vmatpush1.msra.mxu0 0.0
  %2295 = vmatprep.subr.mxu0 0.0
  %2296 = vmatpush1.msra.mxu0 0.0
  %2297 = vmatprep.subr.mxu0 0.0
  %2298 = vmatpush1.msra.mxu0 0.0
  %2299 = vmatprep.subr.mxu0 0.0
  %2300 = vmatpush1.msra.mxu0 0.0
  %2301 = vmatprep.subr.mxu0 0.0
  %2302 = vmatpush1.msra.mxu0 0.0
  %2303 = vmatprep.subr.mxu0 0.0
  %2304 = vmatpush1.msra.mxu0 0.0
  %2305 = vmatprep.subr.mxu0 0.0
  %2306 = vmatpush1.msra.mxu0 0.0
  %2307 = vmatprep.subr.mxu0 0.0
  %2308 = vmatpush1.msra.mxu0 0.0
  %2309 = vmatprep.subr.mxu0 0.0
  %2310 = vmatpush1.msra.mxu0 0.0
  %2311 = vmatprep.subr.mxu0 0.0
  %2312 = vmatpush1.msra.mxu0 0.0
  %2313 = vmatprep.subr.mxu0 0.0
  %2314 = vmatpush1.msra.mxu0 0.0
  %2315 = vmatprep.subr.mxu0 0.0
  %2316 = vmatpush1.msra.mxu0 0.0
  %2317 = vmatprep.mubr.f32.mxu0 0.0
  %2318 = vmatmul.mubr.f32.gmra.mrb[0].mxu0 %v2248
  %v2319 = vpop.f32.mrb[0].mxu0
  %v2320 = vadd.f32 0.0, %v2319
  %v2321 = vpop.f32.mrb[0].mxu0
  %v2322 = vadd.f32 0.0, %v2321
  %2323 = vmatprep.mubr.f32.mxu0 0.0
  %2324 = vmatmul.mubr.f32.gmra.mrb[0].mxu0 %v2251
  %v2325 = vpop.f32.mrb[0].mxu0
  %v2326 = vadd.f32 0.0, %v2325
  %v2327 = vpop.f32.mrb[0].mxu0
  %v2328 = vadd.f32 0.0, %v2327
  %2329 = vdwg.mxu0
  %v2330 = vadd.f32 %v2231, %v2320
  %v2331 = vadd.f32 %v2233, %v2322
  %v2332 = vxor.u32 %v2330, 2147483648
  %v2333 = vxor.u32 %v2331, 2147483648
  %v2334 = vmul.f32 %v2332, 1.442695
  %v2335 = vpow.pop %v2334
  %v2336 = vmul.f32 %v2333, 1.442695
  %v2337 = vpow.pop %v2336
  %v2338 = vadd.f32 %v2335, 1.0
  %v2339 = vadd.f32 %v2337, 1.0
  %v2340 = vrcp.pop %v2338
  %v2341 = vmul.f32 1.0, %v2340
  %v2342 = vrcp.pop %v2339
  %v2343 = vmul.f32 1.0, %v2342
  %v2344 = vadd.f32 %v2237, %v2326
  %v2345 = vadd.f32 %v2239, %v2328
  %v2346 = vxor.u32 %v2344, 2147483648
  %v2347 = vxor.u32 %v2345, 2147483648
  %v2348 = vmul.f32 %v2346, 1.442695
  %v2349 = vpow.pop %v2348
  %v2350 = vmul.f32 %v2347, 1.442695
  %v2351 = vpow.pop %v2350
  %v2352 = vadd.f32 %v2349, 1.0
  %v2353 = vadd.f32 %v2351, 1.0
  %v2354 = vrcp.pop %v2352
  %v2355 = vmul.f32 1.0, %v2354
  %v2356 = vrcp.pop %v2353
  %v2357 = vmul.f32 1.0, %v2356
  %v2358 = vmul.f32 %v2355, 0.0
  %v2359 = vmul.f32 %v2357, 0.0
  %v2361 = vsel %vm1385, %v2153, 0
  %2363 = vmatprep.subr.mxu0 %v2359
  %2364 = vmatpush1.msra.mxu0 %v2358
  %2365 = vmatprep.subr.mxu0 0.0
  %2366 = vmatpush1.msra.mxu0 0.0
  %2367 = vmatprep.subr.mxu0 0.0
  %2368 = vmatpush1.msra.mxu0 0.0
  %2369 = vmatprep.subr.mxu0 0.0
  %2370 = vmatpush1.msra.mxu0 0.0
  %2371 = vmatprep.subr.mxu0 0.0
  %2372 = vmatpush1.msra.mxu0 0.0
  %2373 = vmatprep.subr.mxu0 0.0
  %2374 = vmatpush1.msra.mxu0 0.0
  %2375 = vmatprep.subr.mxu0 0.0
  %2376 = vmatpush1.msra.mxu0 0.0
  %2377 = vmatprep.subr.mxu0 0.0
  %2378 = vmatpush1.msra.mxu0 0.0
  %2379 = vmatprep.subr.mxu0 0.0
  %2380 = vmatpush1.msra.mxu0 0.0
  %2381 = vmatprep.subr.mxu0 0.0
  %2382 = vmatpush1.msra.mxu0 0.0
  %2383 = vmatprep.subr.mxu0 0.0
  %2384 = vmatpush1.msra.mxu0 0.0
  %2385 = vmatprep.subr.mxu0 0.0
  %2386 = vmatpush1.msra.mxu0 0.0
  %2387 = vmatprep.subr.mxu0 0.0
  %2388 = vmatpush1.msra.mxu0 0.0
  %2389 = vmatprep.subr.mxu0 0.0
  %2390 = vmatpush1.msra.mxu0 0.0
  %2391 = vmatprep.subr.mxu0 0.0
  %2392 = vmatpush1.msra.mxu0 0.0
  %2393 = vmatprep.subr.mxu0 0.0
  %2394 = vmatpush1.msra.mxu0 0.0
  %2395 = vmatprep.subr.mxu0 0.0
  %2396 = vmatpush1.msra.mxu0 0.0
  %2397 = vmatprep.subr.mxu0 0.0
  %2398 = vmatpush1.msra.mxu0 0.0
  %2399 = vmatprep.subr.mxu0 0.0
  %2400 = vmatpush1.msra.mxu0 0.0
  %2401 = vmatprep.subr.mxu0 0.0
  %2402 = vmatpush1.msra.mxu0 0.0
  %2403 = vmatprep.subr.mxu0 0.0
  %2404 = vmatpush1.msra.mxu0 0.0
  %2405 = vmatprep.subr.mxu0 0.0
  %2406 = vmatpush1.msra.mxu0 0.0
  %2407 = vmatprep.subr.mxu0 0.0
  %2408 = vmatpush1.msra.mxu0 0.0
  %2409 = vmatprep.subr.mxu0 0.0
  %2410 = vmatpush1.msra.mxu0 0.0
  %2411 = vmatprep.subr.mxu0 0.0
  %2412 = vmatpush1.msra.mxu0 0.0
  %2413 = vmatprep.subr.mxu0 0.0
  %2414 = vmatpush1.msra.mxu0 0.0
  %2415 = vmatprep.subr.mxu0 0.0
  %2416 = vmatpush1.msra.mxu0 0.0
  %2417 = vmatprep.subr.mxu0 0.0
  %2418 = vmatpush1.msra.mxu0 0.0
  %2419 = vmatprep.subr.mxu0 0.0
  %2420 = vmatpush1.msra.mxu0 0.0
  %2421 = vmatprep.subr.mxu0 0.0
  %2422 = vmatpush1.msra.mxu0 0.0
  %2423 = vmatprep.subr.mxu0 0.0
  %2424 = vmatpush1.msra.mxu0 0.0
  %2425 = vmatprep.subr.mxu0 0.0
  %2426 = vmatpush1.msra.mxu0 0.0
  %2427 = vmatprep.mubr.f32.mxu0 0.0
  %2428 = vmatmul.mubr.f32.gmra.mrb[0].mxu0 %v2361
  %v2429 = vpop.f32.mrb[0].mxu0
  %v2430 = vadd.f32 0.0, %v2429
  %v2431 = vpop.f32.mrb[0].mxu0
  %v2432 = vadd.f32 0.0, %v2431
  %2433 = vdwg.mxu0
  %v2434 = vadd.f32 %v2243, %v2430
  %v2435 = vadd.f32 %v2245, %v2432
  %v2436 = vtanh.pop %v2434
  %v2437 = vtanh.pop %v2435
  %v2438 = vsub.f32 1.0, %v2341
  %v2439 = vsub.f32 1.0, %v2343
  %v2440 = vmul.f32 %v2438, 0.0
  %v2441 = vmul.f32 %v2439, 0.0
  %v2442 = vmul.f32 %v2341, %v2436
  %v2443 = vmul.f32 %v2343, %v2437
  %v2444 = vadd.f32 %v2440, %v2442
  %v2445 = vadd.f32 %v2441, %v2443
  %2446 = vmatprep.subr.mxu0 %v2147
  %2447 = vmatpush1.msra.mxu0 %v2146
  %2448 = vmatprep.subr.mxu0 %v301
  %2449 = vmatpush1.msra.mxu0 %v301
  %2450 = vmatprep.subr.mxu0 0.0
  %2451 = vmatpush1.msra.mxu0 0.0
  %2452 = vmatprep.subr.mxu0 0.0
  %2453 = vmatpush1.msra.mxu0 0.0
  %2454 = vmatprep.subr.mxu0 0.0
  %2455 = vmatpush1.msra.mxu0 0.0
  %2456 = vmatprep.subr.mxu0 0.0
  %2457 = vmatpush1.msra.mxu0 0.0
  %2458 = vmatprep.subr.mxu0 0.0
  %2459 = vmatpush1.msra.mxu0 0.0
  %2460 = vmatprep.subr.mxu0 0.0
  %2461 = vmatpush1.msra.mxu0 0.0
  %2462 = vmatprep.subr.mxu0 0.0
  %2463 = vmatpush1.msra.mxu0 0.0
  %2464 = vmatprep.subr.mxu0 0.0
  %2465 = vmatpush1.msra.mxu0 0.0
  %2466 = vmatprep.subr.mxu0 0.0
  %2467 = vmatpush1.msra.mxu0 0.0
  %2468 = vmatprep.subr.mxu0 0.0
  %2469 = vmatpush1.msra.mxu0 0.0
  %2470 = vmatprep.subr.mxu0 0.0
  %2471 = vmatpush1.msra.mxu0 0.0
  %2472 = vmatprep.subr.mxu0 0.0
  %2473 = vmatpush1.msra.mxu0 0.0
  %2474 = vmatprep.subr.mxu0 0.0
  %2475 = vmatpush1.msra.mxu0 0.0
  %2476 = vmatprep.subr.mxu0 0.0
  %2477 = vmatpush1.msra.mxu0 0.0
  %2478 = vmatprep.subr.mxu0 0.0
  %2479 = vmatpush1.msra.mxu0 0.0
  %2480 = vmatprep.subr.mxu0 0.0
  %2481 = vmatpush1.msra.mxu0 0.0
  %2482 = vmatprep.subr.mxu0 0.0
  %2483 = vmatpush1.msra.mxu0 0.0
  %2484 = vmatprep.subr.mxu0 0.0
  %2485 = vmatpush1.msra.mxu0 0.0
  %2486 = vmatprep.subr.mxu0 0.0
  %2487 = vmatpush1.msra.mxu0 0.0
  %2488 = vmatprep.subr.mxu0 0.0
  %2489 = vmatpush1.msra.mxu0 0.0
  %2490 = vmatprep.subr.mxu0 0.0
  %2491 = vmatpush1.msra.mxu0 0.0
  %2492 = vmatprep.subr.mxu0 0.0
  %2493 = vmatpush1.msra.mxu0 0.0
  %2494 = vmatprep.subr.mxu0 0.0
  %2495 = vmatpush1.msra.mxu0 0.0
  %2496 = vmatprep.subr.mxu0 0.0
  %2497 = vmatpush1.msra.mxu0 0.0
  %2498 = vmatprep.subr.mxu0 0.0
  %2499 = vmatpush1.msra.mxu0 0.0
  %2500 = vmatprep.subr.mxu0 0.0
  %2501 = vmatpush1.msra.mxu0 0.0
  %2502 = vmatprep.subr.mxu0 0.0
  %2503 = vmatpush1.msra.mxu0 0.0
  %2504 = vmatprep.subr.mxu0 0.0
  %2505 = vmatpush1.msra.mxu0 0.0
  %2506 = vmatprep.subr.mxu0 0.0
  %2507 = vmatpush1.msra.mxu0 0.0
  %2508 = vmatprep.subr.mxu0 0.0
  %2509 = vmatpush1.msra.mxu0 0.0
  %2510 = vmatprep.mubr.f32.mxu0 0.0
  %2511 = vmatmul.mubr.f32.gmra.mrb[0].mxu0 %v2156
  %v2512 = vpop.f32.mrb[0].mxu0
  %v2513 = vadd.f32 0.0, %v2512
  %v2514 = vpop.f32.mrb[0].mxu0
  %v2515 = vadd.f32 0.0, %v2514
  %2516 = vmatprep.mubr.f32.mxu0 0.0
  %2517 = vmatmul.mubr.f32.gmra.mrb[0].mxu0 %v2159
  %v2518 = vpop.f32.mrb[0].mxu0
  %v2519 = vadd.f32 0.0, %v2518
  %v2520 = vpop.f32.mrb[0].mxu0
  %v2521 = vadd.f32 0.0, %v2520
  %2522 = vmatprep.mubr.f32.mxu0 0.0
  %2523 = vmatmul.mubr.f32.gmra.mrb[0].mxu0 %v2162
  %v2524 = vpop.f32.mrb[0].mxu0
  %v2525 = vadd.f32 0.0, %v2524
  %v2526 = vpop.f32.mrb[0].mxu0
  %v2527 = vadd.f32 0.0, %v2526
  %2528 = vdwg.mxu0
  %2529 = vmatprep.subr.mxu0 %v2445
  %2530 = vmatpush1.msra.mxu0 %v2444
  %2531 = vmatprep.subr.mxu0 0.0
  %2532 = vmatpush1.msra.mxu0 0.0
  %2533 = vmatprep.subr.mxu0 0.0
  %2534 = vmatpush1.msra.mxu0 0.0
  %2535 = vmatprep.subr.mxu0 0.0
  %2536 = vmatpush1.msra.mxu0 0.0
  %2537 = vmatprep.subr.mxu0 0.0
  %2538 = vmatpush1.msra.mxu0 0.0
  %2539 = vmatprep.subr.mxu0 0.0
  %2540 = vmatpush1.msra.mxu0 0.0
  %2541 = vmatprep.subr.mxu0 0.0
  %2542 = vmatpush1.msra.mxu0 0.0
  %2543 = vmatprep.subr.mxu0 0.0
  %2544 = vmatpush1.msra.mxu0 0.0
  %2545 = vmatprep.subr.mxu0 0.0
  %2546 = vmatpush1.msra.mxu0 0.0
  %2547 = vmatprep.subr.mxu0 0.0
  %2548 = vmatpush1.msra.mxu0 0.0
  %2549 = vmatprep.subr.mxu0 0.0
  %2550 = vmatpush1.msra.mxu0 0.0
  %2551 = vmatprep.subr.mxu0 0.0
  %2552 = vmatpush1.msra.mxu0 0.0
  %2553 = vmatprep.subr.mxu0 0.0
  %2554 = vmatpush1.msra.mxu0 0.0
  %2555 = vmatprep.subr.mxu0 0.0
  %2556 = vmatpush1.msra.mxu0 0.0
  %2557 = vmatprep.subr.mxu0 0.0
  %2558 = vmatpush1.msra.mxu0 0.0
  %2559 = vmatprep.subr.mxu0 0.0
  %2560 = vmatpush1.msra.mxu0 0.0
  %2561 = vmatprep.subr.mxu0 0.0
  %2562 = vmatpush1.msra.mxu0 0.0
  %2563 = vmatprep.subr.mxu0 0.0
  %2564 = vmatpush1.msra.mxu0 0.0
  %2565 = vmatprep.subr.mxu0 0.0
  %2566 = vmatpush1.msra.mxu0 0.0
  %2567 = vmatprep.subr.mxu0 0.0
  %2568 = vmatpush1.msra.mxu0 0.0
  %2569 = vmatprep.subr.mxu0 0.0
  %2570 = vmatpush1.msra.mxu0 0.0
  %2571 = vmatprep.subr.mxu0 0.0
  %2572 = vmatpush1.msra.mxu0 0.0
  %2573 = vmatprep.subr.mxu0 0.0
  %2574 = vmatpush1.msra.mxu0 0.0
  %2575 = vmatprep.subr.mxu0 0.0
  %2576 = vmatpush1.msra.mxu0 0.0
  %2577 = vmatprep.subr.mxu0 0.0
  %2578 = vmatpush1.msra.mxu0 0.0
  %2579 = vmatprep.subr.mxu0 0.0
  %2580 = vmatpush1.msra.mxu0 0.0
  %2581 = vmatprep.subr.mxu0 0.0
  %2582 = vmatpush1.msra.mxu0 0.0
  %2583 = vmatprep.subr.mxu0 0.0
  %2584 = vmatpush1.msra.mxu0 0.0
  %2585 = vmatprep.subr.mxu0 0.0
  %2586 = vmatpush1.msra.mxu0 0.0
  %2587 = vmatprep.subr.mxu0 0.0
  %2588 = vmatpush1.msra.mxu0 0.0
  %2589 = vmatprep.subr.mxu0 0.0
  %2590 = vmatpush1.msra.mxu0 0.0
  %2591 = vmatprep.subr.mxu0 0.0
  %2592 = vmatpush1.msra.mxu0 0.0
  %2593 = vmatprep.mubr.f32.mxu0 0.0
  %2594 = vmatmul.mubr.f32.gmra.mrb[0].mxu0 %v2248
  %v2595 = vpop.f32.mrb[0].mxu0
  %v2596 = vadd.f32 0.0, %v2595
  %v2597 = vpop.f32.mrb[0].mxu0
  %v2598 = vadd.f32 0.0, %v2597
  %2599 = vmatprep.mubr.f32.mxu0 0.0
  %2600 = vmatmul.mubr.f32.gmra.mrb[0].mxu0 %v2251
  %v2601 = vpop.f32.mrb[0].mxu0
  %v2602 = vadd.f32 0.0, %v2601
  %v2603 = vpop.f32.mrb[0].mxu0
  %v2604 = vadd.f32 0.0, %v2603
  %2605 = vdwg.mxu0
  %v2606 = vadd.f32 %v2513, %v2596
  %v2607 = vadd.f32 %v2515, %v2598
  %v2608 = vxor.u32 %v2606, 2147483648
  %v2609 = vxor.u32 %v2607, 2147483648
  %v2610 = vmul.f32 %v2608, 1.442695
  %v2611 = vpow.pop %v2610
  %v2612 = vmul.f32 %v2609, 1.442695
  %v2613 = vpow.pop %v2612
  %v2614 = vadd.f32 %v2611, 1.0
  %v2615 = vadd.f32 %v2613, 1.0
  %v2616 = vrcp.pop %v2614
  %v2617 = vmul.f32 1.0, %v2616
  %v2618 = vrcp.pop %v2615
  %v2619 = vmul.f32 1.0, %v2618
  %v2620 = vadd.f32 %v2519, %v2602
  %v2621 = vadd.f32 %v2521, %v2604
  %v2622 = vxor.u32 %v2620, 2147483648
  %v2623 = vxor.u32 %v2621, 2147483648
  %v2624 = vmul.f32 %v2622, 1.442695
  %v2625 = vpow.pop %v2624
  %v2626 = vmul.f32 %v2623, 1.442695
  %v2627 = vpow.pop %v2626
  %v2628 = vadd.f32 %v2625, 1.0
  %v2629 = vadd.f32 %v2627, 1.0
  %v2630 = vrcp.pop %v2628
  %v2631 = vmul.f32 1.0, %v2630
  %v2632 = vrcp.pop %v2629
  %v2633 = vmul.f32 1.0, %v2632
  %v2634 = vmul.f32 %v2631, %v2444
  %v2635 = vmul.f32 %v2633, %v2445
  %2636 = vmatprep.subr.mxu0 %v2635
  %2637 = vmatpush1.msra.mxu0 %v2634
  %2638 = vmatprep.subr.mxu0 0.0
  %2639 = vmatpush1.msra.mxu0 0.0
  %2640 = vmatprep.subr.mxu0 0.0
  %2641 = vmatpush1.msra.mxu0 0.0
  %2642 = vmatprep.subr.mxu0 0.0
  %2643 = vmatpush1.msra.mxu0 0.0
  %2644 = vmatprep.subr.mxu0 0.0
  %2645 = vmatpush1.msra.mxu0 0.0
  %2646 = vmatprep.subr.mxu0 0.0
  %2647 = vmatpush1.msra.mxu0 0.0
  %2648 = vmatprep.subr.mxu0 0.0
  %2649 = vmatpush1.msra.mxu0 0.0
  %2650 = vmatprep.subr.mxu0 0.0
  %2651 = vmatpush1.msra.mxu0 0.0
  %2652 = vmatprep.subr.mxu0 0.0
  %2653 = vmatpush1.msra.mxu0 0.0
  %2654 = vmatprep.subr.mxu0 0.0
  %2655 = vmatpush1.msra.mxu0 0.0
  %2656 = vmatprep.subr.mxu0 0.0
  %2657 = vmatpush1.msra.mxu0 0.0
  %2658 = vmatprep.subr.mxu0 0.0
  %2659 = vmatpush1.msra.mxu0 0.0
  %2660 = vmatprep.subr.mxu0 0.0
  %2661 = vmatpush1.msra.mxu0 0.0
  %2662 = vmatprep.subr.mxu0 0.0
  %2663 = vmatpush1.msra.mxu0 0.0
  %2664 = vmatprep.subr.mxu0 0.0
  %2665 = vmatpush1.msra.mxu0 0.0
  %2666 = vmatprep.subr.mxu0 0.0
  %2667 = vmatpush1.msra.mxu0 0.0
  %2668 = vmatprep.subr.mxu0 0.0
  %2669 = vmatpush1.msra.mxu0 0.0
  %2670 = vmatprep.subr.mxu0 0.0
  %2671 = vmatpush1.msra.mxu0 0.0
  %2672 = vmatprep.subr.mxu0 0.0
  %2673 = vmatpush1.msra.mxu0 0.0
  %2674 = vmatprep.subr.mxu0 0.0
  %2675 = vmatpush1.msra.mxu0 0.0
  %2676 = vmatprep.subr.mxu0 0.0
  %2677 = vmatpush1.msra.mxu0 0.0
  %2678 = vmatprep.subr.mxu0 0.0
  %2679 = vmatpush1.msra.mxu0 0.0
  %2680 = vmatprep.subr.mxu0 0.0
  %2681 = vmatpush1.msra.mxu0 0.0
  %2682 = vmatprep.subr.mxu0 0.0
  %2683 = vmatpush1.msra.mxu0 0.0
  %2684 = vmatprep.subr.mxu0 0.0
  %2685 = vmatpush1.msra.mxu0 0.0
  %2686 = vmatprep.subr.mxu0 0.0
  %2687 = vmatpush1.msra.mxu0 0.0
  %2688 = vmatprep.subr.mxu0 0.0
  %2689 = vmatpush1.msra.mxu0 0.0
  %2690 = vmatprep.subr.mxu0 0.0
  %2691 = vmatpush1.msra.mxu0 0.0
  %2692 = vmatprep.subr.mxu0 0.0
  %2693 = vmatpush1.msra.mxu0 0.0
  %2694 = vmatprep.subr.mxu0 0.0
  %2695 = vmatpush1.msra.mxu0 0.0
  %2696 = vmatprep.subr.mxu0 0.0
  %2697 = vmatpush1.msra.mxu0 0.0
  %2698 = vmatprep.subr.mxu0 0.0
  %2699 = vmatpush1.msra.mxu0 0.0
  %2700 = vmatprep.mubr.f32.mxu0 0.0
  %2701 = vmatmul.mubr.f32.gmra.mrb[0].mxu0 %v2361
  %v2702 = vpop.f32.mrb[0].mxu0
  %v2703 = vadd.f32 0.0, %v2702
  %v2704 = vpop.f32.mrb[0].mxu0
  %v2705 = vadd.f32 0.0, %v2704
  %2706 = vdwg.mxu0
  %v2707 = vadd.f32 %v2525, %v2703
  %v2708 = vadd.f32 %v2527, %v2705
  %v2709 = vtanh.pop %v2707
  %v2710 = vtanh.pop %v2708
  %v2711 = vsub.f32 1.0, %v2617
  %v2712 = vsub.f32 1.0, %v2619
  %v2713 = vmul.f32 %v2711, %v2444
  %v2714 = vmul.f32 %v2712, %v2445
  %v2715 = vmul.f32 %v2617, %v2709
  %v2716 = vmul.f32 %v2619, %v2710
  %v2717 = vadd.f32 %v2713, %v2715
  %v2718 = vadd.f32 %v2714, %v2716
  %2719 = vrot.lane.b32.xlu0 %v2717, 17
  %v2720 = vpop.permute.xlu0 %2719
  %2721 = vrot.lane.b32.xlu0 %v2718, 17
  %v2722 = vpop.permute.xlu0 %2721
  %v2723 = vsel %vm138, %v2720, %v2722
  %v2724 = vsel %vm138, %v2722, %v2720
  %v2725 = vmul.f32 %v2724, %v145
  %v2726 = vmul.f32 %v2723, %v149
  %2727 = vrot.lane.b32.xlu0 %v2717, 16
  %v2728 = vpop.permute.xlu0 %2727
  %2729 = vrot.lane.b32.xlu0 %v2718, 16
  %v2730 = vpop.permute.xlu0 %2729
  %v2731 = vsel %vm158, %v2728, %v2730
  %v2732 = vsel %vm158, %v2730, %v2728
  %v2733 = vmul.f32 %v2732, %v165
  %v2734 = vmul.f32 %v2731, %v169
  %2735 = vrot.lane.b32.xlu0 %v2717, 15
  %v2736 = vpop.permute.xlu0 %2735
  %2737 = vrot.lane.b32.xlu0 %v2718, 15
  %v2738 = vpop.permute.xlu0 %2737
  %v2739 = vsel %vm178, %v2736, %v2738
  %v2740 = vsel %vm178, %v2738, %v2736
  %v2741 = vmul.f32 %v2740, %v185
  %v2742 = vmul.f32 %v2739, %v189
  %2743 = vrot.lane.b32.xlu0 %v2717, 1
  %v2744 = vpop.permute.xlu0 %2743
  %2745 = vrot.lane.b32.xlu0 %v2718, 1
  %v2746 = vpop.permute.xlu0 %2745
  %v2747 = vsel %vm198, %v2744, %v2746
  %v2748 = vsel %vm198, %v2746, %v2744
  %v2749 = vmul.f32 %v2748, %v205
  %v2750 = vmul.f32 %v2747, %v209
  %2751 = vrot.lane.b32.xlu0 %v2717, 127
  %v2752 = vpop.permute.xlu0 %2751
  %2753 = vrot.lane.b32.xlu0 %v2718, 127
  %v2754 = vpop.permute.xlu0 %2753
  %v2755 = vsel %vm218, %v2752, %v2754
  %v2756 = vsel %vm218, %v2754, %v2752
  %v2757 = vmul.f32 %v2755, %v225
  %v2758 = vmul.f32 %v2756, %v229
  %2759 = vrot.lane.b32.xlu0 %v2717, 113
  %v2760 = vpop.permute.xlu0 %2759
  %2761 = vrot.lane.b32.xlu0 %v2718, 113
  %v2762 = vpop.permute.xlu0 %2761
  %v2763 = vsel %vm238, %v2760, %v2762
  %v2764 = vsel %vm238, %v2762, %v2760
  %v2765 = vmul.f32 %v2763, %v245
  %v2766 = vmul.f32 %v2764, %v249
  %2767 = vrot.lane.b32.xlu0 %v2717, 112
  %v2768 = vpop.permute.xlu0 %2767
  %2769 = vrot.lane.b32.xlu0 %v2718, 112
  %v2770 = vpop.permute.xlu0 %2769
  %v2771 = vsel %vm258, %v2768, %v2770
  %v2772 = vsel %vm258, %v2770, %v2768
  %v2773 = vmul.f32 %v2771, %v265
  %v2774 = vmul.f32 %v2772, %v269
  %2775 = vrot.lane.b32.xlu0 %v2717, 111
  %v2776 = vpop.permute.xlu0 %2775
  %2777 = vrot.lane.b32.xlu0 %v2718, 111
  %v2778 = vpop.permute.xlu0 %2777
  %v2779 = vsel %vm278, %v2776, %v2778
  %v2780 = vsel %vm278, %v2778, %v2776
  %v2781 = vmul.f32 %v2779, %v285
  %v2782 = vmul.f32 %v2780, %v289
  %v2783 = vld [vmem:[%s49] sm:$0xff]
  %v2785 = vsel %vm295, %v2783, 0
  %2787 = vmatprep.subr.mxu0 %v2726
  %2788 = vmatpush1.msra.mxu0 %v2725
  %2789 = vmatprep.subr.mxu0 %v2734
  %2790 = vmatpush1.msra.mxu0 %v2733
  %2791 = vmatprep.subr.mxu0 %v2742
  %2792 = vmatpush1.msra.mxu0 %v2741
  %2793 = vmatprep.subr.mxu0 %v2750
  %2794 = vmatpush1.msra.mxu0 %v2749
  %2795 = vmatprep.subr.mxu0 %v2718
  %2796 = vmatpush1.msra.mxu0 %v2717
  %2797 = vmatprep.subr.mxu0 %v2758
  %2798 = vmatpush1.msra.mxu0 %v2757
  %2799 = vmatprep.subr.mxu0 %v2766
  %2800 = vmatpush1.msra.mxu0 %v2765
  %2801 = vmatprep.subr.mxu0 %v2774
  %2802 = vmatpush1.msra.mxu0 %v2773
  %2803 = vmatprep.subr.mxu0 %v2782
  %2804 = vmatpush1.msra.mxu0 %v2781
  %2805 = vmatprep.subr.mxu0 %v301
  %2806 = vmatpush1.msra.mxu0 %v301
  %2807 = vmatprep.subr.mxu0 0.0
  %2808 = vmatpush1.msra.mxu0 0.0
  %2809 = vmatprep.subr.mxu0 0.0
  %2810 = vmatpush1.msra.mxu0 0.0
  %2811 = vmatprep.subr.mxu0 0.0
  %2812 = vmatpush1.msra.mxu0 0.0
  %2813 = vmatprep.subr.mxu0 0.0
  %2814 = vmatpush1.msra.mxu0 0.0
  %2815 = vmatprep.subr.mxu0 0.0
  %2816 = vmatpush1.msra.mxu0 0.0
  %2817 = vmatprep.subr.mxu0 0.0
  %2818 = vmatpush1.msra.mxu0 0.0
  %2819 = vmatprep.subr.mxu0 0.0
  %2820 = vmatpush1.msra.mxu0 0.0
  %2821 = vmatprep.subr.mxu0 0.0
  %2822 = vmatpush1.msra.mxu0 0.0
  %2823 = vmatprep.subr.mxu0 0.0
  %2824 = vmatpush1.msra.mxu0 0.0
  %2825 = vmatprep.subr.mxu0 0.0
  %2826 = vmatpush1.msra.mxu0 0.0
  %2827 = vmatprep.subr.mxu0 0.0
  %2828 = vmatpush1.msra.mxu0 0.0
  %2829 = vmatprep.subr.mxu0 0.0
  %2830 = vmatpush1.msra.mxu0 0.0
  %2831 = vmatprep.subr.mxu0 0.0
  %2832 = vmatpush1.msra.mxu0 0.0
  %2833 = vmatprep.subr.mxu0 0.0
  %2834 = vmatpush1.msra.mxu0 0.0
  %2835 = vmatprep.subr.mxu0 0.0
  %2836 = vmatpush1.msra.mxu0 0.0
  %2837 = vmatprep.subr.mxu0 0.0
  %2838 = vmatpush1.msra.mxu0 0.0
  %2839 = vmatprep.subr.mxu0 0.0
  %2840 = vmatpush1.msra.mxu0 0.0
  %2841 = vmatprep.subr.mxu0 0.0
  %2842 = vmatpush1.msra.mxu0 0.0
  %2843 = vmatprep.subr.mxu0 0.0
  %2844 = vmatpush1.msra.mxu0 0.0
  %2845 = vmatprep.subr.mxu0 0.0
  %2846 = vmatpush1.msra.mxu0 0.0
  %2847 = vmatprep.subr.mxu0 0.0
  %2848 = vmatpush1.msra.mxu0 0.0
  %2849 = vmatprep.subr.mxu0 0.0
  %2850 = vmatpush1.msra.mxu0 0.0
  %2851 = vmatprep.mubr.f32.mxu0 0.0
  %2852 = vmatmul.mubr.f32.gmra.mrb[0].mxu0 %v2785
  %v2853 = vpop.f32.mrb[0].mxu0
  %v2854 = vadd.f32 0.0, %v2853
  %v2855 = vpop.f32.mrb[0].mxu0
  %v2856 = vadd.f32 0.0, %v2855
  %2857 = vdwg.mxu0
  %v2858 = vmax.f32 %v2854, 0.0
  %v2859 = vmax.f32 %v2856, 0.0
  %v2860 = vadd.f32 %v2717, %v2858
  %v2861 = vadd.f32 %v2718, %v2859
  %v2862 = vld [vmem:[%s7] sm:$0xff]
  %v2863 = vld [vmem:[%s7 + $0x8] sm:$0xff]
  %2864 = vrot.lane.b32.xlu0 %v1269, 17
  %v2865 = vpop.permute.xlu0 %2864
  %2866 = vrot.lane.b32.xlu0 %v1270, 17
  %v2867 = vpop.permute.xlu0 %2866
  %v2868 = vsel %vm138, %v2865, %v2867
  %v2869 = vsel %vm138, %v2867, %v2865
  %v2870 = vmul.f32 %v2869, %v145
  %v2871 = vmul.f32 %v2868, %v149
  %2872 = vrot.lane.b32.xlu0 %v1269, 16
  %v2873 = vpop.permute.xlu0 %2872
  %2874 = vrot.lane.b32.xlu0 %v1270, 16
  %v2875 = vpop.permute.xlu0 %2874
  %v2876 = vsel %vm158, %v2873, %v2875
  %v2877 = vsel %vm158, %v2875, %v2873
  %v2878 = vmul.f32 %v2877, %v165
  %v2879 = vmul.f32 %v2876, %v169
  %2880 = vrot.lane.b32.xlu0 %v1269, 15
  %v2881 = vpop.permute.xlu0 %2880
  %2882 = vrot.lane.b32.xlu0 %v1270, 15
  %v2883 = vpop.permute.xlu0 %2882
  %v2884 = vsel %vm178, %v2881, %v2883
  %v2885 = vsel %vm178, %v2883, %v2881
  %v2886 = vmul.f32 %v2885, %v185
  %v2887 = vmul.f32 %v2884, %v189
  %2888 = vrot.lane.b32.xlu0 %v1269, 1
  %v2889 = vpop.permute.xlu0 %2888
  %2890 = vrot.lane.b32.xlu0 %v1270, 1
  %v2891 = vpop.permute.xlu0 %2890
  %v2892 = vsel %vm198, %v2889, %v2891
  %v2893 = vsel %vm198, %v2891, %v2889
  %v2894 = vmul.f32 %v2893, %v205
  %v2895 = vmul.f32 %v2892, %v209
  %2896 = vrot.lane.b32.xlu0 %v1269, 127
  %v2897 = vpop.permute.xlu0 %2896
  %2898 = vrot.lane.b32.xlu0 %v1270, 127
  %v2899 = vpop.permute.xlu0 %2898
  %v2900 = vsel %vm218, %v2897, %v2899
  %v2901 = vsel %vm218, %v2899, %v2897
  %v2902 = vmul.f32 %v2900, %v225
  %v2903 = vmul.f32 %v2901, %v229
  %2904 = vrot.lane.b32.xlu0 %v1269, 113
  %v2905 = vpop.permute.xlu0 %2904
  %2906 = vrot.lane.b32.xlu0 %v1270, 113
  %v2907 = vpop.permute.xlu0 %2906
  %v2908 = vsel %vm238, %v2905, %v2907
  %v2909 = vsel %vm238, %v2907, %v2905
  %v2910 = vmul.f32 %v2908, %v245
  %v2911 = vmul.f32 %v2909, %v249
  %2912 = vrot.lane.b32.xlu0 %v1269, 112
  %v2913 = vpop.permute.xlu0 %2912
  %2914 = vrot.lane.b32.xlu0 %v1270, 112
  %v2915 = vpop.permute.xlu0 %2914
  %v2916 = vsel %vm258, %v2913, %v2915
  %v2917 = vsel %vm258, %v2915, %v2913
  %v2918 = vmul.f32 %v2916, %v265
  %v2919 = vmul.f32 %v2917, %v269
  %2920 = vrot.lane.b32.xlu0 %v1269, 111
  %v2921 = vpop.permute.xlu0 %2920
  %2922 = vrot.lane.b32.xlu0 %v1270, 111
  %v2923 = vpop.permute.xlu0 %2922
  %v2924 = vsel %vm278, %v2921, %v2923
  %v2925 = vsel %vm278, %v2923, %v2921
  %v2926 = vmul.f32 %v2924, %v285
  %v2927 = vmul.f32 %v2925, %v289
  %v2928 = vld [vmem:[%s25] sm:$0xff]
  %v2929 = vld [vmem:[%s25 + $0x8] sm:$0xff]
  %v2931 = vsel %vm295, %v2928, 0
  %v2934 = vsel %vm295, %v2929, 0
  %2936 = vmatprep.subr.mxu0 %v2871
  %2937 = vmatpush1.msra.mxu0 %v2870
  %2938 = vmatprep.subr.mxu0 %v2879
  %2939 = vmatpush1.msra.mxu0 %v2878
  %2940 = vmatprep.subr.mxu0 %v2887
  %2941 = vmatpush1.msra.mxu0 %v2886
  %2942 = vmatprep.subr.mxu0 %v2895
  %2943 = vmatpush1.msra.mxu0 %v2894
  %2944 = vmatprep.subr.mxu0 %v1270
  %2945 = vmatpush1.msra.mxu0 %v1269
  %2946 = vmatprep.subr.mxu0 %v2903
  %2947 = vmatpush1.msra.mxu0 %v2902
  %2948 = vmatprep.subr.mxu0 %v2911
  %2949 = vmatpush1.msra.mxu0 %v2910
  %2950 = vmatprep.subr.mxu0 %v2919
  %2951 = vmatpush1.msra.mxu0 %v2918
  %2952 = vmatprep.subr.mxu0 %v2927
  %2953 = vmatpush1.msra.mxu0 %v2926
  %2954 = vmatprep.subr.mxu0 %v301
  %2955 = vmatpush1.msra.mxu0 %v301
  %2956 = vmatprep.subr.mxu0 0.0
  %2957 = vmatpush1.msra.mxu0 0.0
  %2958 = vmatprep.subr.mxu0 0.0
  %2959 = vmatpush1.msra.mxu0 0.0
  %2960 = vmatprep.subr.mxu0 0.0
  %2961 = vmatpush1.msra.mxu0 0.0
  %2962 = vmatprep.subr.mxu0 0.0
  %2963 = vmatpush1.msra.mxu0 0.0
  %2964 = vmatprep.subr.mxu0 0.0
  %2965 = vmatpush1.msra.mxu0 0.0
  %2966 = vmatprep.subr.mxu0 0.0
  %2967 = vmatpush1.msra.mxu0 0.0
  %2968 = vmatprep.subr.mxu0 0.0
  %2969 = vmatpush1.msra.mxu0 0.0
  %2970 = vmatprep.subr.mxu0 0.0
  %2971 = vmatpush1.msra.mxu0 0.0
  %2972 = vmatprep.subr.mxu0 0.0
  %2973 = vmatpush1.msra.mxu0 0.0
  %2974 = vmatprep.subr.mxu0 0.0
  %2975 = vmatpush1.msra.mxu0 0.0
  %2976 = vmatprep.subr.mxu0 0.0
  %2977 = vmatpush1.msra.mxu0 0.0
  %2978 = vmatprep.subr.mxu0 0.0
  %2979 = vmatpush1.msra.mxu0 0.0
  %2980 = vmatprep.subr.mxu0 0.0
  %2981 = vmatpush1.msra.mxu0 0.0
  %2982 = vmatprep.subr.mxu0 0.0
  %2983 = vmatpush1.msra.mxu0 0.0
  %2984 = vmatprep.subr.mxu0 0.0
  %2985 = vmatpush1.msra.mxu0 0.0
  %2986 = vmatprep.subr.mxu0 0.0
  %2987 = vmatpush1.msra.mxu0 0.0
  %2988 = vmatprep.subr.mxu0 0.0
  %2989 = vmatpush1.msra.mxu0 0.0
  %2990 = vmatprep.subr.mxu0 0.0
  %2991 = vmatpush1.msra.mxu0 0.0
  %2992 = vmatprep.subr.mxu0 0.0
  %2993 = vmatpush1.msra.mxu0 0.0
  %2994 = vmatprep.subr.mxu0 0.0
  %2995 = vmatpush1.msra.mxu0 0.0
  %2996 = vmatprep.subr.mxu0 0.0
  %2997 = vmatpush1.msra.mxu0 0.0
  %2998 = vmatprep.subr.mxu0 0.0
  %2999 = vmatpush1.msra.mxu0 0.0
  %3000 = vmatprep.mubr.f32.mxu0 0.0
  %3001 = vmatmul.mubr.f32.gmra.mrb[0].mxu0 %v2931
  %v3002 = vpop.f32.mrb[0].mxu0
  %v3003 = vadd.f32 0.0, %v3002
  %v3004 = vpop.f32.mrb[0].mxu0
  %v3005 = vadd.f32 0.0, %v3004
  %3006 = vmatprep.mubr.f32.mxu0 0.0
  %3007 = vmatmul.mubr.f32.gmra.mrb[0].mxu0 %v2934
  %v3008 = vpop.f32.mrb[0].mxu0
  %v3009 = vadd.f32 0.0, %v3008
  %v3010 = vpop.f32.mrb[0].mxu0
  %v3011 = vadd.f32 0.0, %v3010
  %3012 = vdwg.mxu0
  %3013 = vst [vmem:[%s55] sm:$0xff] %v3003
  %3014 = vst [vmem:[%s55 + $0x8] sm:$0xff] %v3005
  %3015 = vst [vmem:[%s55 + $0x10] sm:$0xff] %v3009
  %3016 = vst [vmem:[%s55 + $0x18] sm:$0xff] %v3011
  %3017 = vrot.lane.b32.xlu0 %v2860, 17
  %v3018 = vpop.permute.xlu0 %3017
  %3019 = vrot.lane.b32.xlu0 %v2861, 17
  %v3020 = vpop.permute.xlu0 %3019
  %v3021 = vsel %vm138, %v3018, %v3020
  %v3022 = vsel %vm138, %v3020, %v3018
  %v3023 = vmul.f32 %v3022, %v145
  %v3024 = vmul.f32 %v3021, %v149
  %3025 = vrot.lane.b32.xlu0 %v2860, 16
  %v3026 = vpop.permute.xlu0 %3025
  %3027 = vrot.lane.b32.xlu0 %v2861, 16
  %v3028 = vpop.permute.xlu0 %3027
  %v3029 = vsel %vm158, %v3026, %v3028
  %v3030 = vsel %vm158, %v3028, %v3026
  %v3031 = vmul.f32 %v3030, %v165
  %v3032 = vmul.f32 %v3029, %v169
  %3033 = vrot.lane.b32.xlu0 %v2860, 15
  %v3034 = vpop.permute.xlu0 %3033
  %3035 = vrot.lane.b32.xlu0 %v2861, 15
  %v3036 = vpop.permute.xlu0 %3035
  %v3037 = vsel %vm178, %v3034, %v3036
  %v3038 = vsel %vm178, %v3036, %v3034
  %v3039 = vmul.f32 %v3038, %v185
  %v3040 = vmul.f32 %v3037, %v189
  %3041 = vrot.lane.b32.xlu0 %v2860, 1
  %v3042 = vpop.permute.xlu0 %3041
  %3043 = vrot.lane.b32.xlu0 %v2861, 1
  %v3044 = vpop.permute.xlu0 %3043
  %v3045 = vsel %vm198, %v3042, %v3044
  %v3046 = vsel %vm198, %v3044, %v3042
  %v3047 = vmul.f32 %v3046, %v205
  %v3048 = vmul.f32 %v3045, %v209
  %3049 = vrot.lane.b32.xlu0 %v2860, 127
  %v3050 = vpop.permute.xlu0 %3049
  %3051 = vrot.lane.b32.xlu0 %v2861, 127
  %v3052 = vpop.permute.xlu0 %3051
  %v3053 = vsel %vm218, %v3050, %v3052
  %v3054 = vsel %vm218, %v3052, %v3050
  %v3055 = vmul.f32 %v3053, %v225
  %v3056 = vmul.f32 %v3054, %v229
  %3057 = vrot.lane.b32.xlu0 %v2860, 113
  %v3058 = vpop.permute.xlu0 %3057
  %3059 = vrot.lane.b32.xlu0 %v2861, 113
  %v3060 = vpop.permute.xlu0 %3059
  %v3061 = vsel %vm238, %v3058, %v3060
  %v3062 = vsel %vm238, %v3060, %v3058
  %v3063 = vmul.f32 %v3061, %v245
  %v3064 = vmul.f32 %v3062, %v249
  %3065 = vrot.lane.b32.xlu0 %v2860, 112
  %v3066 = vpop.permute.xlu0 %3065
  %3067 = vrot.lane.b32.xlu0 %v2861, 112
  %v3068 = vpop.permute.xlu0 %3067
  %v3069 = vsel %vm258, %v3066, %v3068
  %v3070 = vsel %vm258, %v3068, %v3066
  %v3071 = vmul.f32 %v3069, %v265
  %v3072 = vmul.f32 %v3070, %v269
  %3073 = vrot.lane.b32.xlu0 %v2860, 111
  %v3074 = vpop.permute.xlu0 %3073
  %3075 = vrot.lane.b32.xlu0 %v2861, 111
  %v3076 = vpop.permute.xlu0 %3075
  %v3077 = vsel %vm278, %v3074, %v3076
  %v3078 = vsel %vm278, %v3076, %v3074
  %v3079 = vmul.f32 %v3077, %v285
  %v3080 = vmul.f32 %v3078, %v289
  %v3081 = vld [vmem:[%s23] sm:$0xff]
  %v3082 = vld [vmem:[%s23 + $0x8] sm:$0xff]
  %v3084 = vsel %vm295, %v3081, 0
  %v3087 = vsel %vm295, %v3082, 0
  %3089 = vmatprep.subr.mxu0 %v3024
  %3090 = vmatpush1.msra.mxu0 %v3023
  %3091 = vmatprep.subr.mxu0 %v3032
  %3092 = vmatpush1.msra.mxu0 %v3031
  %3093 = vmatprep.subr.mxu0 %v3040
  %3094 = vmatpush1.msra.mxu0 %v3039
  %3095 = vmatprep.subr.mxu0 %v3048
  %3096 = vmatpush1.msra.mxu0 %v3047
  %3097 = vmatprep.subr.mxu0 %v2861
  %3098 = vmatpush1.msra.mxu0 %v2860
  %3099 = vmatprep.subr.mxu0 %v3056
  %3100 = vmatpush1.msra.mxu0 %v3055
  %3101 = vmatprep.subr.mxu0 %v3064
  %3102 = vmatpush1.msra.mxu0 %v3063
  %3103 = vmatprep.subr.mxu0 %v3072
  %3104 = vmatpush1.msra.mxu0 %v3071
  %3105 = vmatprep.subr.mxu0 %v3080
  %3106 = vmatpush1.msra.mxu0 %v3079
  %3107 = vmatprep.subr.mxu0 %v301
  %3108 = vmatpush1.msra.mxu0 %v301
  %3109 = vmatprep.subr.mxu0 0.0
  %3110 = vmatpush1.msra.mxu0 0.0
  %3111 = vmatprep.subr.mxu0 0.0
  %3112 = vmatpush1.msra.mxu0 0.0
  %3113 = vmatprep.subr.mxu0 0.0
  %3114 = vmatpush1.msra.mxu0 0.0
  %3115 = vmatprep.subr.mxu0 0.0
  %3116 = vmatpush1.msra.mxu0 0.0
  %3117 = vmatprep.subr.mxu0 0.0
  %3118 = vmatpush1.msra.mxu0 0.0
  %3119 = vmatprep.subr.mxu0 0.0
  %3120 = vmatpush1.msra.mxu0 0.0
  %3121 = vmatprep.subr.mxu0 0.0
  %3122 = vmatpush1.msra.mxu0 0.0
  %3123 = vmatprep.subr.mxu0 0.0
  %3124 = vmatpush1.msra.mxu0 0.0
  %3125 = vmatprep.subr.mxu0 0.0
  %3126 = vmatpush1.msra.mxu0 0.0
  %3127 = vmatprep.subr.mxu0 0.0
  %3128 = vmatpush1.msra.mxu0 0.0
  %3129 = vmatprep.subr.mxu0 0.0
  %3130 = vmatpush1.msra.mxu0 0.0
  %3131 = vmatprep.subr.mxu0 0.0
  %3132 = vmatpush1.msra.mxu0 0.0
  %3133 = vmatprep.subr.mxu0 0.0
  %3134 = vmatpush1.msra.mxu0 0.0
  %3135 = vmatprep.subr.mxu0 0.0
  %3136 = vmatpush1.msra.mxu0 0.0
  %3137 = vmatprep.subr.mxu0 0.0
  %3138 = vmatpush1.msra.mxu0 0.0
  %3139 = vmatprep.subr.mxu0 0.0
  %3140 = vmatpush1.msra.mxu0 0.0
  %3141 = vmatprep.subr.mxu0 0.0
  %3142 = vmatpush1.msra.mxu0 0.0
  %3143 = vmatprep.subr.mxu0 0.0
  %3144 = vmatpush1.msra.mxu0 0.0
  %3145 = vmatprep.subr.mxu0 0.0
  %3146 = vmatpush1.msra.mxu0 0.0
  %3147 = vmatprep.subr.mxu0 0.0
  %3148 = vmatpush1.msra.mxu0 0.0
  %3149 = vmatprep.subr.mxu0 0.0
  %3150 = vmatpush1.msra.mxu0 0.0
  %3151 = vmatprep.subr.mxu0 0.0
  %3152 = vmatpush1.msra.mxu0 0.0
  %3153 = vmatprep.mubr.f32.mxu0 0.0
  %3154 = vmatmul.mubr.f32.gmra.mrb[0].mxu0 %v3084
  %v3155 = vpop.f32.mrb[0].mxu0
  %v3156 = vadd.f32 0.0, %v3155
  %v3157 = vpop.f32.mrb[0].mxu0
  %v3158 = vadd.f32 0.0, %v3157
  %3159 = vmatprep.mubr.f32.mxu0 0.0
  %3160 = vmatmul.mubr.f32.gmra.mrb[0].mxu0 %v3087
  %v3161 = vpop.f32.mrb[0].mxu0
  %v3162 = vadd.f32 0.0, %v3161
  %v3163 = vpop.f32.mrb[0].mxu0
  %v3164 = vadd.f32 0.0, %v3163
  %3165 = vdwg.mxu0
  %3166 = vst [vmem:[%s53] sm:$0xff] %v3156
  %3167 = vst [vmem:[%s53 + $0x8] sm:$0xff] %v3158
  %3168 = vst [vmem:[%s53 + $0x10] sm:$0xff] %v3162
  %3169 = vst [vmem:[%s53 + $0x18] sm:$0xff] %v3164
  %v3170 = vmax.f32 %v3162, -5.0
  %v3171 = vmax.f32 %v3164, -5.0
  %v3172 = vmin.f32 %v3170, 5.0
  %v3173 = vmin.f32 %v3171, 5.0
  %v3174 = vmul.f32 %v3172, 1.442695
  %v3175 = vpow.pop %v3174
  %v3176 = vmul.f32 %v3173, 1.442695
  %v3177 = vpow.pop %v3176
  %v3178 = vmul.f32 %v3175, %v2862
  %v3179 = vmul.f32 %v3177, %v2863
  %v3180 = vadd.f32 %v3156, %v3178
  %v3181 = vadd.f32 %v3158, %v3179
  %3182 = vrot.lane.b32.xlu0 %v3180, 17
  %v3183 = vpop.permute.xlu0 %3182
  %3184 = vrot.lane.b32.xlu0 %v3181, 17
  %v3185 = vpop.permute.xlu0 %3184
  %v3186 = vsel %vm138, %v3183, %v3185
  %v3187 = vsel %vm138, %v3185, %v3183
  %v3188 = vmul.f32 %v3187, %v145
  %v3189 = vmul.f32 %v3186, %v149
  %3190 = vrot.lane.b32.xlu0 %v3180, 16
  %v3191 = vpop.permute.xlu0 %3190
  %3192 = vrot.lane.b32.xlu0 %v3181, 16
  %v3193 = vpop.permute.xlu0 %3192
  %v3194 = vsel %vm158, %v3191, %v3193
  %v3195 = vsel %vm158, %v3193, %v3191
  %v3196 = vmul.f32 %v3195, %v165
  %v3197 = vmul.f32 %v3194, %v169
  %3198 = vrot.lane.b32.xlu0 %v3180, 15
  %v3199 = vpop.permute.xlu0 %3198
  %3200 = vrot.lane.b32.xlu0 %v3181, 15
  %v3201 = vpop.permute.xlu0 %3200
  %v3202 = vsel %vm178, %v3199, %v3201
  %v3203 = vsel %vm178, %v3201, %v3199
  %v3204 = vmul.f32 %v3203, %v185
  %v3205 = vmul.f32 %v3202, %v189
  %3206 = vrot.lane.b32.xlu0 %v3180, 1
  %v3207 = vpop.permute.xlu0 %3206
  %3208 = vrot.lane.b32.xlu0 %v3181, 1
  %v3209 = vpop.permute.xlu0 %3208
  %v3210 = vsel %vm198, %v3207, %v3209
  %v3211 = vsel %vm198, %v3209, %v3207
  %v3212 = vmul.f32 %v3211, %v205
  %v3213 = vmul.f32 %v3210, %v209
  %3214 = vrot.lane.b32.xlu0 %v3180, 127
  %v3215 = vpop.permute.xlu0 %3214
  %3216 = vrot.lane.b32.xlu0 %v3181, 127
  %v3217 = vpop.permute.xlu0 %3216
  %v3218 = vsel %vm218, %v3215, %v3217
  %v3219 = vsel %vm218, %v3217, %v3215
  %v3220 = vmul.f32 %v3218, %v225
  %v3221 = vmul.f32 %v3219, %v229
  %3222 = vrot.lane.b32.xlu0 %v3180, 113
  %v3223 = vpop.permute.xlu0 %3222
  %3224 = vrot.lane.b32.xlu0 %v3181, 113
  %v3225 = vpop.permute.xlu0 %3224
  %v3226 = vsel %vm238, %v3223, %v3225
  %v3227 = vsel %vm238, %v3225, %v3223
  %v3228 = vmul.f32 %v3226, %v245
  %v3229 = vmul.f32 %v3227, %v249
  %3230 = vrot.lane.b32.xlu0 %v3180, 112
  %v3231 = vpop.permute.xlu0 %3230
  %3232 = vrot.lane.b32.xlu0 %v3181, 112
  %v3233 = vpop.permute.xlu0 %3232
  %v3234 = vsel %vm258, %v3231, %v3233
  %v3235 = vsel %vm258, %v3233, %v3231
  %v3236 = vmul.f32 %v3234, %v265
  %v3237 = vmul.f32 %v3235, %v269
  %3238 = vrot.lane.b32.xlu0 %v3180, 111
  %v3239 = vpop.permute.xlu0 %3238
  %3240 = vrot.lane.b32.xlu0 %v3181, 111
  %v3241 = vpop.permute.xlu0 %3240
  %v3242 = vsel %vm278, %v3239, %v3241
  %v3243 = vsel %vm278, %v3241, %v3239
  %v3244 = vmul.f32 %v3242, %v285
  %v3245 = vmul.f32 %v3243, %v289
  %v3246 = vld [vmem:[%s19] sm:$0xff]
  %v3247 = vld [vmem:[%s19 + $0x8] sm:$0xff]
  %v3249 = vsel %vm942, %v3247, 0
  %3251 = vmatprep.subr.mxu0 %v2871
  %3252 = vmatpush1.msra.mxu0 %v2870
  %3253 = vmatprep.subr.mxu0 %v3189
  %3254 = vmatpush1.msra.mxu0 %v3188
  %3255 = vmatprep.subr.mxu0 %v2879
  %3256 = vmatpush1.msra.mxu0 %v2878
  %3257 = vmatprep.subr.mxu0 %v3197
  %3258 = vmatpush1.msra.mxu0 %v3196
  %3259 = vmatprep.subr.mxu0 %v2887
  %3260 = vmatpush1.msra.mxu0 %v2886
  %3261 = vmatprep.subr.mxu0 %v3205
  %3262 = vmatpush1.msra.mxu0 %v3204
  %3263 = vmatprep.subr.mxu0 %v2895
  %3264 = vmatpush1.msra.mxu0 %v2894
  %3265 = vmatprep.subr.mxu0 %v3213
  %3266 = vmatpush1.msra.mxu0 %v3212
  %3267 = vmatprep.subr.mxu0 %v1270
  %3268 = vmatpush1.msra.mxu0 %v1269
  %3269 = vmatprep.subr.mxu0 %v3181
  %3270 = vmatpush1.msra.mxu0 %v3180
  %3271 = vmatprep.subr.mxu0 %v2903
  %3272 = vmatpush1.msra.mxu0 %v2902
  %3273 = vmatprep.subr.mxu0 %v3221
  %3274 = vmatpush1.msra.mxu0 %v3220
  %3275 = vmatprep.subr.mxu0 %v2911
  %3276 = vmatpush1.msra.mxu0 %v2910
  %3277 = vmatprep.subr.mxu0 %v3229
  %3278 = vmatpush1.msra.mxu0 %v3228
  %3279 = vmatprep.subr.mxu0 %v2919
  %3280 = vmatpush1.msra.mxu0 %v2918
  %3281 = vmatprep.subr.mxu0 %v3237
  %3282 = vmatpush1.msra.mxu0 %v3236
  %3283 = vmatprep.subr.mxu0 %v2927
  %3284 = vmatpush1.msra.mxu0 %v2926
  %3285 = vmatprep.subr.mxu0 %v3245
  %3286 = vmatpush1.msra.mxu0 %v3244
  %3287 = vmatprep.subr.mxu0 %v301
  %3288 = vmatpush1.msra.mxu0 %v301
  %3289 = vmatprep.subr.mxu0 0.0
  %3290 = vmatpush1.msra.mxu0 0.0
  %3291 = vmatprep.subr.mxu0 0.0
  %3292 = vmatpush1.msra.mxu0 0.0
  %3293 = vmatprep.subr.mxu0 0.0
  %3294 = vmatpush1.msra.mxu0 0.0
  %3295 = vmatprep.subr.mxu0 0.0
  %3296 = vmatpush1.msra.mxu0 0.0
  %3297 = vmatprep.subr.mxu0 0.0
  %3298 = vmatpush1.msra.mxu0 0.0
  %3299 = vmatprep.subr.mxu0 0.0
  %3300 = vmatpush1.msra.mxu0 0.0
  %3301 = vmatprep.subr.mxu0 0.0
  %3302 = vmatpush1.msra.mxu0 0.0
  %3303 = vmatprep.subr.mxu0 0.0
  %3304 = vmatpush1.msra.mxu0 0.0
  %3305 = vmatprep.subr.mxu0 0.0
  %3306 = vmatpush1.msra.mxu0 0.0
  %3307 = vmatprep.subr.mxu0 0.0
  %3308 = vmatpush1.msra.mxu0 0.0
  %3309 = vmatprep.subr.mxu0 0.0
  %3310 = vmatpush1.msra.mxu0 0.0
  %3311 = vmatprep.subr.mxu0 0.0
  %3312 = vmatpush1.msra.mxu0 0.0
  %3313 = vmatprep.subr.mxu0 0.0
  %3314 = vmatpush1.msra.mxu0 0.0
  %3315 = vmatprep.mubr.f32.mxu0 %v3249
  %3316 = vmatmul.mubr.f32.gmra.mrb[0].mxu0 %v3246
  %v3317 = vpop.f32.mrb[0].mxu0
  %v3318 = vadd.f32 0.0, %v3317
  %v3319 = vpop.f32.mrb[0].mxu0
  %v3320 = vadd.f32 0.0, %v3319
  %3321 = vdwg.mxu0
  %vm3322 = vcmp.gt.f32.partialorder %v3318, 0.0
  %vm3323 = vcmp.gt.f32.partialorder %v3320, 0.0
  %v3324 = vmul.f32 %v3318, 0.2
  %v3325 = vmul.f32 %v3320, 0.2
  %v3326 = vsel %vm3322, %v3318, %v3324
  %v3327 = vsel %vm3323, %v3320, %v3325
  %3328 = vrot.lane.b32.xlu0 %v3326, 17
  %v3329 = vpop.permute.xlu0 %3328
  %3330 = vrot.lane.b32.xlu0 %v3327, 17
  %v3331 = vpop.permute.xlu0 %3330
  %v3332 = vsel %vm138, %v3329, %v3331
  %v3333 = vsel %vm138, %v3331, %v3329
  %v3334 = vmul.f32 %v3333, %v145
  %v3335 = vmul.f32 %v3332, %v149
  %3336 = vrot.lane.b32.xlu0 %v3326, 16
  %v3337 = vpop.permute.xlu0 %3336
  %3338 = vrot.lane.b32.xlu0 %v3327, 16
  %v3339 = vpop.permute.xlu0 %3338
  %v3340 = vsel %vm158, %v3337, %v3339
  %v3341 = vsel %vm158, %v3339, %v3337
  %v3342 = vmul.f32 %v3341, %v165
  %v3343 = vmul.f32 %v3340, %v169
  %3344 = vrot.lane.b32.xlu0 %v3326, 15
  %v3345 = vpop.permute.xlu0 %3344
  %3346 = vrot.lane.b32.xlu0 %v3327, 15
  %v3347 = vpop.permute.xlu0 %3346
  %v3348 = vsel %vm178, %v3345, %v3347
  %v3349 = vsel %vm178, %v3347, %v3345
  %v3350 = vmul.f32 %v3349, %v185
  %v3351 = vmul.f32 %v3348, %v189
  %3352 = vrot.lane.b32.xlu0 %v3326, 1
  %v3353 = vpop.permute.xlu0 %3352
  %3354 = vrot.lane.b32.xlu0 %v3327, 1
  %v3355 = vpop.permute.xlu0 %3354
  %v3356 = vsel %vm198, %v3353, %v3355
  %v3357 = vsel %vm198, %v3355, %v3353
  %v3358 = vmul.f32 %v3357, %v205
  %v3359 = vmul.f32 %v3356, %v209
  %3360 = vrot.lane.b32.xlu0 %v3326, 127
  %v3361 = vpop.permute.xlu0 %3360
  %3362 = vrot.lane.b32.xlu0 %v3327, 127
  %v3363 = vpop.permute.xlu0 %3362
  %v3364 = vsel %vm218, %v3361, %v3363
  %v3365 = vsel %vm218, %v3363, %v3361
  %v3366 = vmul.f32 %v3364, %v225
  %v3367 = vmul.f32 %v3365, %v229
  %3368 = vrot.lane.b32.xlu0 %v3326, 113
  %v3369 = vpop.permute.xlu0 %3368
  %3370 = vrot.lane.b32.xlu0 %v3327, 113
  %v3371 = vpop.permute.xlu0 %3370
  %v3372 = vsel %vm238, %v3369, %v3371
  %v3373 = vsel %vm238, %v3371, %v3369
  %v3374 = vmul.f32 %v3372, %v245
  %v3375 = vmul.f32 %v3373, %v249
  %3376 = vrot.lane.b32.xlu0 %v3326, 112
  %v3377 = vpop.permute.xlu0 %3376
  %3378 = vrot.lane.b32.xlu0 %v3327, 112
  %v3379 = vpop.permute.xlu0 %3378
  %v3380 = vsel %vm258, %v3377, %v3379
  %v3381 = vsel %vm258, %v3379, %v3377
  %v3382 = vmul.f32 %v3380, %v265
  %v3383 = vmul.f32 %v3381, %v269
  %3384 = vrot.lane.b32.xlu0 %v3326, 111
  %v3385 = vpop.permute.xlu0 %3384
  %3386 = vrot.lane.b32.xlu0 %v3327, 111
  %v3387 = vpop.permute.xlu0 %3386
  %v3388 = vsel %vm278, %v3385, %v3387
  %v3389 = vsel %vm278, %v3387, %v3385
  %v3390 = vmul.f32 %v3388, %v285
  %v3391 = vmul.f32 %v3389, %v289
  %v3392 = vld [vmem:[%s21] sm:$0xff]
  %v3394 = vsel %vm295, %v3392, 0
  %3396 = vmatprep.subr.mxu0 %v3335
  %3397 = vmatpush1.msra.mxu0 %v3334
  %3398 = vmatprep.subr.mxu0 %v3343
  %3399 = vmatpush1.msra.mxu0 %v3342
  %3400 = vmatprep.subr.mxu0 %v3351
  %3401 = vmatpush1.msra.mxu0 %v3350
  %3402 = vmatprep.subr.mxu0 %v3359
  %3403 = vmatpush1.msra.mxu0 %v3358
  %3404 = vmatprep.subr.mxu0 %v3327
  %3405 = vmatpush1.msra.mxu0 %v3326
  %3406 = vmatprep.subr.mxu0 %v3367
  %3407 = vmatpush1.msra.mxu0 %v3366
  %3408 = vmatprep.subr.mxu0 %v3375
  %3409 = vmatpush1.msra.mxu0 %v3374
  %3410 = vmatprep.subr.mxu0 %v3383
  %3411 = vmatpush1.msra.mxu0 %v3382
  %3412 = vmatprep.subr.mxu0 %v3391
  %3413 = vmatpush1.msra.mxu0 %v3390
  %3414 = vmatprep.subr.mxu0 %v301
  %3415 = vmatpush1.msra.mxu0 %v301
  %3416 = vmatprep.subr.mxu0 0.0
  %3417 = vmatpush1.msra.mxu0 0.0
  %3418 = vmatprep.subr.mxu0 0.0
  %3419 = vmatpush1.msra.mxu0 0.0
  %3420 = vmatprep.subr.mxu0 0.0
  %3421 = vmatpush1.msra.mxu0 0.0
  %3422 = vmatprep.subr.mxu0 0.0
  %3423 = vmatpush1.msra.mxu0 0.0
  %3424 = vmatprep.subr.mxu0 0.0
  %3425 = vmatpush1.msra.mxu0 0.0
  %3426 = vmatprep.subr.mxu0 0.0
  %3427 = vmatpush1.msra.mxu0 0.0
  %3428 = vmatprep.subr.mxu0 0.0
  %3429 = vmatpush1.msra.mxu0 0.0
  %3430 = vmatprep.subr.mxu0 0.0
  %3431 = vmatpush1.msra.mxu0 0.0
  %3432 = vmatprep.subr.mxu0 0.0
  %3433 = vmatpush1.msra.mxu0 0.0
  %3434 = vmatprep.subr.mxu0 0.0
  %3435 = vmatpush1.msra.mxu0 0.0
  %3436 = vmatprep.subr.mxu0 0.0
  %3437 = vmatpush1.msra.mxu0 0.0
  %3438 = vmatprep.subr.mxu0 0.0
  %3439 = vmatpush1.msra.mxu0 0.0
  %3440 = vmatprep.subr.mxu0 0.0
  %3441 = vmatpush1.msra.mxu0 0.0
  %3442 = vmatprep.subr.mxu0 0.0
  %3443 = vmatpush1.msra.mxu0 0.0
  %3444 = vmatprep.subr.mxu0 0.0
  %3445 = vmatpush1.msra.mxu0 0.0
  %3446 = vmatprep.subr.mxu0 0.0
  %3447 = vmatpush1.msra.mxu0 0.0
  %3448 = vmatprep.subr.mxu0 0.0
  %3449 = vmatpush1.msra.mxu0 0.0
  %3450 = vmatprep.subr.mxu0 0.0
  %3451 = vmatpush1.msra.mxu0 0.0
  %3452 = vmatprep.subr.mxu0 0.0
  %3453 = vmatpush1.msra.mxu0 0.0
  %3454 = vmatprep.subr.mxu0 0.0
  %3455 = vmatpush1.msra.mxu0 0.0
  %3456 = vmatprep.subr.mxu0 0.0
  %3457 = vmatpush1.msra.mxu0 0.0
  %3458 = vmatprep.subr.mxu0 0.0
  %3459 = vmatpush1.msra.mxu0 0.0
  %3460 = vmatprep.mubr.f32.mxu0 0.0
  %3461 = vmatmul.mubr.f32.gmra.mrb[0].mxu0 %v3394
  %v3462 = vpop.f32.mrb[0].mxu0
  %v3463 = vadd.f32 0.0, %v3462
  %v3464 = vpop.f32.mrb[0].mxu0
  %v3465 = vadd.f32 0.0, %v3464
  %3466 = vdwg.mxu0
  %v3467 = vadd.f32 %v1269, %v3463
  %v3468 = vadd.f32 %v1270, %v3465
  %s3469 = scalar_lea.vmem %s7, 16
  %v3470 = vld [vmem:[%s3469] sm:$0xff]
  %v3471 = vld [vmem:[%s3469 + $0x8] sm:$0xff]
  %3472 = vrot.lane.b32.xlu0 %v3467, 17
  %v3473 = vpop.permute.xlu0 %3472
  %3474 = vrot.lane.b32.xlu0 %v3468, 17
  %v3475 = vpop.permute.xlu0 %3474
  %v3476 = vsel %vm138, %v3473, %v3475
  %v3477 = vsel %vm138, %v3475, %v3473
  %v3478 = vmul.f32 %v3477, %v145
  %v3479 = vmul.f32 %v3476, %v149
  %3480 = vrot.lane.b32.xlu0 %v3467, 16
  %v3481 = vpop.permute.xlu0 %3480
  %3482 = vrot.lane.b32.xlu0 %v3468, 16
  %v3483 = vpop.permute.xlu0 %3482
  %v3484 = vsel %vm158, %v3481, %v3483
  %v3485 = vsel %vm158, %v3483, %v3481
  %v3486 = vmul.f32 %v3485, %v165
  %v3487 = vmul.f32 %v3484, %v169
  %3488 = vrot.lane.b32.xlu0 %v3467, 15
  %v3489 = vpop.permute.xlu0 %3488
  %3490 = vrot.lane.b32.xlu0 %v3468, 15
  %v3491 = vpop.permute.xlu0 %3490
  %v3492 = vsel %vm178, %v3489, %v3491
  %v3493 = vsel %vm178, %v3491, %v3489
  %v3494 = vmul.f32 %v3493, %v185
  %v3495 = vmul.f32 %v3492, %v189
  %3496 = vrot.lane.b32.xlu0 %v3467, 1
  %v3497 = vpop.permute.xlu0 %3496
  %3498 = vrot.lane.b32.xlu0 %v3468, 1
  %v3499 = vpop.permute.xlu0 %3498
  %v3500 = vsel %vm198, %v3497, %v3499
  %v3501 = vsel %vm198, %v3499, %v3497
  %v3502 = vmul.f32 %v3501, %v205
  %v3503 = vmul.f32 %v3500, %v209
  %3504 = vrot.lane.b32.xlu0 %v3467, 127
  %v3505 = vpop.permute.xlu0 %3504
  %3506 = vrot.lane.b32.xlu0 %v3468, 127
  %v3507 = vpop.permute.xlu0 %3506
  %v3508 = vsel %vm218, %v3505, %v3507
  %v3509 = vsel %vm218, %v3507, %v3505
  %v3510 = vmul.f32 %v3508, %v225
  %v3511 = vmul.f32 %v3509, %v229
  %3512 = vrot.lane.b32.xlu0 %v3467, 113
  %v3513 = vpop.permute.xlu0 %3512
  %3514 = vrot.lane.b32.xlu0 %v3468, 113
  %v3515 = vpop.permute.xlu0 %3514
  %v3516 = vsel %vm238, %v3513, %v3515
  %v3517 = vsel %vm238, %v3515, %v3513
  %v3518 = vmul.f32 %v3516, %v245
  %v3519 = vmul.f32 %v3517, %v249
  %3520 = vrot.lane.b32.xlu0 %v3467, 112
  %v3521 = vpop.permute.xlu0 %3520
  %3522 = vrot.lane.b32.xlu0 %v3468, 112
  %v3523 = vpop.permute.xlu0 %3522
  %v3524 = vsel %vm258, %v3521, %v3523
  %v3525 = vsel %vm258, %v3523, %v3521
  %v3526 = vmul.f32 %v3524, %v265
  %v3527 = vmul.f32 %v3525, %v269
  %3528 = vrot.lane.b32.xlu0 %v3467, 111
  %v3529 = vpop.permute.xlu0 %3528
  %3530 = vrot.lane.b32.xlu0 %v3468, 111
  %v3531 = vpop.permute.xlu0 %3530
  %v3532 = vsel %vm278, %v3529, %v3531
  %v3533 = vsel %vm278, %v3531, %v3529
  %v3534 = vmul.f32 %v3532, %v285
  %v3535 = vmul.f32 %v3533, %v289
  %v3536 = vld [vmem:[%s25] sm:$0xff]
  %v3537 = vld [vmem:[%s25 + $0x8] sm:$0xff]
  %v3539 = vsel %vm295, %v3536, 0
  %v3542 = vsel %vm295, %v3537, 0
  %3544 = vmatprep.subr.mxu0 %v3479
  %3545 = vmatpush1.msra.mxu0 %v3478
  %3546 = vmatprep.subr.mxu0 %v3487
  %3547 = vmatpush1.msra.mxu0 %v3486
  %3548 = vmatprep.subr.mxu0 %v3495
  %3549 = vmatpush1.msra.mxu0 %v3494
  %3550 = vmatprep.subr.mxu0 %v3503
  %3551 = vmatpush1.msra.mxu0 %v3502
  %3552 = vmatprep.subr.mxu0 %v3468
  %3553 = vmatpush1.msra.mxu0 %v3467
  %3554 = vmatprep.subr.mxu0 %v3511
  %3555 = vmatpush1.msra.mxu0 %v3510
  %3556 = vmatprep.subr.mxu0 %v3519
  %3557 = vmatpush1.msra.mxu0 %v3518
  %3558 = vmatprep.subr.mxu0 %v3527
  %3559 = vmatpush1.msra.mxu0 %v3526
  %3560 = vmatprep.subr.mxu0 %v3535
  %3561 = vmatpush1.msra.mxu0 %v3534
  %3562 = vmatprep.subr.mxu0 %v301
  %3563 = vmatpush1.msra.mxu0 %v301
  %3564 = vmatprep.subr.mxu0 0.0
  %3565 = vmatpush1.msra.mxu0 0.0
  %3566 = vmatprep.subr.mxu0 0.0
  %3567 = vmatpush1.msra.mxu0 0.0
  %3568 = vmatprep.subr.mxu0 0.0
  %3569 = vmatpush1.msra.mxu0 0.0
  %3570 = vmatprep.subr.mxu0 0.0
  %3571 = vmatpush1.msra.mxu0 0.0
  %3572 = vmatprep.subr.mxu0 0.0
  %3573 = vmatpush1.msra.mxu0 0.0
  %3574 = vmatprep.subr.mxu0 0.0
  %3575 = vmatpush1.msra.mxu0 0.0
  %3576 = vmatprep.subr.mxu0 0.0
  %3577 = vmatpush1.msra.mxu0 0.0
  %3578 = vmatprep.subr.mxu0 0.0
  %3579 = vmatpush1.msra.mxu0 0.0
  %3580 = vmatprep.subr.mxu0 0.0
  %3581 = vmatpush1.msra.mxu0 0.0
  %3582 = vmatprep.subr.mxu0 0.0
  %3583 = vmatpush1.msra.mxu0 0.0
  %3584 = vmatprep.subr.mxu0 0.0
  %3585 = vmatpush1.msra.mxu0 0.0
  %3586 = vmatprep.subr.mxu0 0.0
  %3587 = vmatpush1.msra.mxu0 0.0
  %3588 = vmatprep.subr.mxu0 0.0
  %3589 = vmatpush1.msra.mxu0 0.0
  %3590 = vmatprep.subr.mxu0 0.0
  %3591 = vmatpush1.msra.mxu0 0.0
  %3592 = vmatprep.subr.mxu0 0.0
  %3593 = vmatpush1.msra.mxu0 0.0
  %3594 = vmatprep.subr.mxu0 0.0
  %3595 = vmatpush1.msra.mxu0 0.0
  %3596 = vmatprep.subr.mxu0 0.0
  %3597 = vmatpush1.msra.mxu0 0.0
  %3598 = vmatprep.subr.mxu0 0.0
  %3599 = vmatpush1.msra.mxu0 0.0
  %3600 = vmatprep.subr.mxu0 0.0
  %3601 = vmatpush1.msra.mxu0 0.0
  %3602 = vmatprep.subr.mxu0 0.0
  %3603 = vmatpush1.msra.mxu0 0.0
  %3604 = vmatprep.subr.mxu0 0.0
  %3605 = vmatpush1.msra.mxu0 0.0
  %3606 = vmatprep.subr.mxu0 0.0
  %3607 = vmatpush1.msra.mxu0 0.0
  %3608 = vmatprep.mubr.f32.mxu0 0.0
  %3609 = vmatmul.mubr.f32.gmra.mrb[0].mxu0 %v3539
  %v3610 = vpop.f32.mrb[0].mxu0
  %v3611 = vadd.f32 0.0, %v3610
  %v3612 = vpop.f32.mrb[0].mxu0
  %v3613 = vadd.f32 0.0, %v3612
  %3614 = vmatprep.mubr.f32.mxu0 0.0
  %3615 = vmatmul.mubr.f32.gmra.mrb[0].mxu0 %v3542
  %v3616 = vpop.f32.mrb[0].mxu0
  %v3617 = vadd.f32 0.0, %v3616
  %v3618 = vpop.f32.mrb[0].mxu0
  %v3619 = vadd.f32 0.0, %v3618
  %3620 = vdwg.mxu0
  %s3621 = scalar_lea.vmem %s55, 32
  %3622 = vst [vmem:[%s3621] sm:$0xff] %v3611
  %3623 = vst [vmem:[%s3621 + $0x8] sm:$0xff] %v3613
  %3624 = vst [vmem:[%s3621 + $0x10] sm:$0xff] %v3617
  %3625 = vst [vmem:[%s3621 + $0x18] sm:$0xff] %v3619
  %v3626 = vmax.f32 %v3617, -5.0
  %v3627 = vmax.f32 %v3619, -5.0
  %v3628 = vmin.f32 %v3626, 5.0
  %v3629 = vmin.f32 %v3627, 5.0
  %v3630 = vmul.f32 %v3628, 1.442695
  %v3631 = vpow.pop %v3630
  %v3632 = vmul.f32 %v3629, 1.442695
  %v3633 = vpow.pop %v3632
  %v3634 = vmul.f32 %v3631, %v3470
  %v3635 = vmul.f32 %v3633, %v3471
  %v3636 = vadd.f32 %v3611, %v3634
  %v3637 = vadd.f32 %v3613, %v3635
  %3638 = vrot.lane.b32.xlu0 %v3636, 17
  %v3639 = vpop.permute.xlu0 %3638
  %3640 = vrot.lane.b32.xlu0 %v3637, 17
  %v3641 = vpop.permute.xlu0 %3640
  %v3642 = vsel %vm138, %v3639, %v3641
  %v3643 = vsel %vm138, %v3641, %v3639
  %v3644 = vmul.f32 %v3643, %v145
  %v3645 = vmul.f32 %v3642, %v149
  %3646 = vrot.lane.b32.xlu0 %v3636, 16
  %v3647 = vpop.permute.xlu0 %3646
  %3648 = vrot.lane.b32.xlu0 %v3637, 16
  %v3649 = vpop.permute.xlu0 %3648
  %v3650 = vsel %vm158, %v3647, %v3649
  %v3651 = vsel %vm158, %v3649, %v3647
  %v3652 = vmul.f32 %v3651, %v165
  %v3653 = vmul.f32 %v3650, %v169
  %3654 = vrot.lane.b32.xlu0 %v3636, 15
  %v3655 = vpop.permute.xlu0 %3654
  %3656 = vrot.lane.b32.xlu0 %v3637, 15
  %v3657 = vpop.permute.xlu0 %3656
  %v3658 = vsel %vm178, %v3655, %v3657
  %v3659 = vsel %vm178, %v3657, %v3655
  %v3660 = vmul.f32 %v3659, %v185
  %v3661 = vmul.f32 %v3658, %v189
  %3662 = vrot.lane.b32.xlu0 %v3636, 1
  %v3663 = vpop.permute.xlu0 %3662
  %3664 = vrot.lane.b32.xlu0 %v3637, 1
  %v3665 = vpop.permute.xlu0 %3664
  %v3666 = vsel %vm198, %v3663, %v3665
  %v3667 = vsel %vm198, %v3665, %v3663
  %v3668 = vmul.f32 %v3667, %v205
  %v3669 = vmul.f32 %v3666, %v209
  %3670 = vrot.lane.b32.xlu0 %v3636, 127
  %v3671 = vpop.permute.xlu0 %3670
  %3672 = vrot.lane.b32.xlu0 %v3637, 127
  %v3673 = vpop.permute.xlu0 %3672
  %v3674 = vsel %vm218, %v3671, %v3673
  %v3675 = vsel %vm218, %v3673, %v3671
  %v3676 = vmul.f32 %v3674, %v225
  %v3677 = vmul.f32 %v3675, %v229
  %3678 = vrot.lane.b32.xlu0 %v3636, 113
  %v3679 = vpop.permute.xlu0 %3678
  %3680 = vrot.lane.b32.xlu0 %v3637, 113
  %v3681 = vpop.permute.xlu0 %3680
  %v3682 = vsel %vm238, %v3679, %v3681
  %v3683 = vsel %vm238, %v3681, %v3679
  %v3684 = vmul.f32 %v3682, %v245
  %v3685 = vmul.f32 %v3683, %v249
  %3686 = vrot.lane.b32.xlu0 %v3636, 112
  %v3687 = vpop.permute.xlu0 %3686
  %3688 = vrot.lane.b32.xlu0 %v3637, 112
  %v3689 = vpop.permute.xlu0 %3688
  %v3690 = vsel %vm258, %v3687, %v3689
  %v3691 = vsel %vm258, %v3689, %v3687
  %v3692 = vmul.f32 %v3690, %v265
  %v3693 = vmul.f32 %v3691, %v269
  %3694 = vrot.lane.b32.xlu0 %v3636, 111
  %v3695 = vpop.permute.xlu0 %3694
  %3696 = vrot.lane.b32.xlu0 %v3637, 111
  %v3697 = vpop.permute.xlu0 %3696
  %v3698 = vsel %vm278, %v3695, %v3697
  %v3699 = vsel %vm278, %v3697, %v3695
  %v3700 = vmul.f32 %v3698, %v285
  %v3701 = vmul.f32 %v3699, %v289
  %v3702 = vld [vmem:[%s19] sm:$0xff]
  %v3703 = vld [vmem:[%s19 + $0x8] sm:$0xff]
  %v3705 = vsel %vm942, %v3703, 0
  %3707 = vmatprep.subr.mxu0 %v3479
  %3708 = vmatpush1.msra.mxu0 %v3478
  %3709 = vmatprep.subr.mxu0 %v3645
  %3710 = vmatpush1.msra.mxu0 %v3644
  %3711 = vmatprep.subr.mxu0 %v3487
  %3712 = vmatpush1.msra.mxu0 %v3486
  %3713 = vmatprep.subr.mxu0 %v3653
  %3714 = vmatpush1.msra.mxu0 %v3652
  %3715 = vmatprep.subr.mxu0 %v3495
  %3716 = vmatpush1.msra.mxu0 %v3494
  %3717 = vmatprep.subr.mxu0 %v3661
  %3718 = vmatpush1.msra.mxu0 %v3660
  %3719 = vmatprep.subr.mxu0 %v3503
  %3720 = vmatpush1.msra.mxu0 %v3502
  %3721 = vmatprep.subr.mxu0 %v3669
  %3722 = vmatpush1.msra.mxu0 %v3668
  %3723 = vmatprep.subr.mxu0 %v3468
  %3724 = vmatpush1.msra.mxu0 %v3467
  %3725 = vmatprep.subr.mxu0 %v3637
  %3726 = vmatpush1.msra.mxu0 %v3636
  %3727 = vmatprep.subr.mxu0 %v3511
  %3728 = vmatpush1.msra.mxu0 %v3510
  %3729 = vmatprep.subr.mxu0 %v3677
  %3730 = vmatpush1.msra.mxu0 %v3676
  %3731 = vmatprep.subr.mxu0 %v3519
  %3732 = vmatpush1.msra.mxu0 %v3518
  %3733 = vmatprep.subr.mxu0 %v3685
  %3734 = vmatpush1.msra.mxu0 %v3684
  %3735 = vmatprep.subr.mxu0 %v3527
  %3736 = vmatpush1.msra.mxu0 %v3526
  %3737 = vmatprep.subr.mxu0 %v3693
  %3738 = vmatpush1.msra.mxu0 %v3692
  %3739 = vmatprep.subr.mxu0 %v3535
  %3740 = vmatpush1.msra.mxu0 %v3534
  %3741 = vmatprep.subr.mxu0 %v3701
  %3742 = vmatpush1.msra.mxu0 %v3700
  %3743 = vmatprep.subr.mxu0 %v301
  %3744 = vmatpush1.msra.mxu0 %v301
  %3745 = vmatprep.subr.mxu0 0.0
  %3746 = vmatpush1.msra.mxu0 0.0
  %3747 = vmatprep.subr.mxu0 0.0
  %3748 = vmatpush1.msra.mxu0 0.0
  %3749 = vmatprep.subr.mxu0 0.0
  %3750 = vmatpush1.msra.mxu0 0.0
  %3751 = vmatprep.subr.mxu0 0.0
  %3752 = vmatpush1.msra.mxu0 0.0
  %3753 = vmatprep.subr.mxu0 0.0
  %3754 = vmatpush1.msra.mxu0 0.0
  %3755 = vmatprep.subr.mxu0 0.0
  %3756 = vmatpush1.msra.mxu0 0.0
  %3757 = vmatprep.subr.mxu0 0.0
  %3758 = vmatpush1.msra.mxu0 0.0
  %3759 = vmatprep.subr.mxu0 0.0
  %3760 = vmatpush1.msra.mxu0 0.0
  %3761 = vmatprep.subr.mxu0 0.0
  %3762 = vmatpush1.msra.mxu0 0.0
  %3763 = vmatprep.subr.mxu0 0.0
  %3764 = vmatpush1.msra.mxu0 0.0
  %3765 = vmatprep.subr.mxu0 0.0
  %3766 = vmatpush1.msra.mxu0 0.0
  %3767 = vmatprep.subr.mxu0 0.0
  %3768 = vmatpush1.msra.mxu0 0.0
  %3769 = vmatprep.subr.mxu0 0.0
  %3770 = vmatpush1.msra.mxu0 0.0
  %3771 = vmatprep.mubr.f32.mxu0 %v3705
  %3772 = vmatmul.mubr.f32.gmra.mrb[0].mxu0 %v3702
  %v3773 = vpop.f32.mrb[0].mxu0
  %v3774 = vadd.f32 0.0, %v3773
  %v3775 = vpop.f32.mrb[0].mxu0
  %v3776 = vadd.f32 0.0, %v3775
  %3777 = vdwg.mxu0
  %vm3778 = vcmp.gt.f32.partialorder %v3774, 0.0
  %vm3779 = vcmp.gt.f32.partialorder %v3776, 0.0
  %v3780 = vmul.f32 %v3774, 0.2
  %v3781 = vmul.f32 %v3776, 0.2
  %v3782 = vsel %vm3778, %v3774, %v3780
  %v3783 = vsel %vm3779, %v3776, %v3781
  %3784 = vrot.lane.b32.xlu0 %v3782, 17
  %v3785 = vpop.permute.xlu0 %3784
  %3786 = vrot.lane.b32.xlu0 %v3783, 17
  %v3787 = vpop.permute.xlu0 %3786
  %v3788 = vsel %vm138, %v3785, %v3787
  %v3789 = vsel %vm138, %v3787, %v3785
  %v3790 = vmul.f32 %v3789, %v145
  %v3791 = vmul.f32 %v3788, %v149
  %3792 = vrot.lane.b32.xlu0 %v3782, 16
  %v3793 = vpop.permute.xlu0 %3792
  %3794 = vrot.lane.b32.xlu0 %v3783, 16
  %v3795 = vpop.permute.xlu0 %3794
  %v3796 = vsel %vm158, %v3793, %v3795
  %v3797 = vsel %vm158, %v3795, %v3793
  %v3798 = vmul.f32 %v3797, %v165
  %v3799 = vmul.f32 %v3796, %v169
  %3800 = vrot.lane.b32.xlu0 %v3782, 15
  %v3801 = vpop.permute.xlu0 %3800
  %3802 = vrot.lane.b32.xlu0 %v3783, 15
  %v3803 = vpop.permute.xlu0 %3802
  %v3804 = vsel %vm178, %v3801, %v3803
  %v3805 = vsel %vm178, %v3803, %v3801
  %v3806 = vmul.f32 %v3805, %v185
  %v3807 = vmul.f32 %v3804, %v189
  %3808 = vrot.lane.b32.xlu0 %v3782, 1
  %v3809 = vpop.permute.xlu0 %3808
  %3810 = vrot.lane.b32.xlu0 %v3783, 1
  %v3811 = vpop.permute.xlu0 %3810
  %v3812 = vsel %vm198, %v3809, %v3811
  %v3813 = vsel %vm198, %v3811, %v3809
  %v3814 = vmul.f32 %v3813, %v205
  %v3815 = vmul.f32 %v3812, %v209
  %3816 = vrot.lane.b32.xlu0 %v3782, 127
  %v3817 = vpop.permute.xlu0 %3816
  %3818 = vrot.lane.b32.xlu0 %v3783, 127
  %v3819 = vpop.permute.xlu0 %3818
  %v3820 = vsel %vm218, %v3817, %v3819
  %v3821 = vsel %vm218, %v3819, %v3817
  %v3822 = vmul.f32 %v3820, %v225
  %v3823 = vmul.f32 %v3821, %v229
  %3824 = vrot.lane.b32.xlu0 %v3782, 113
  %v3825 = vpop.permute.xlu0 %3824
  %3826 = vrot.lane.b32.xlu0 %v3783, 113
  %v3827 = vpop.permute.xlu0 %3826
  %v3828 = vsel %vm238, %v3825, %v3827
  %v3829 = vsel %vm238, %v3827, %v3825
  %v3830 = vmul.f32 %v3828, %v245
  %v3831 = vmul.f32 %v3829, %v249
  %3832 = vrot.lane.b32.xlu0 %v3782, 112
  %v3833 = vpop.permute.xlu0 %3832
  %3834 = vrot.lane.b32.xlu0 %v3783, 112
  %v3835 = vpop.permute.xlu0 %3834
  %v3836 = vsel %vm258, %v3833, %v3835
  %v3837 = vsel %vm258, %v3835, %v3833
  %v3838 = vmul.f32 %v3836, %v265
  %v3839 = vmul.f32 %v3837, %v269
  %3840 = vrot.lane.b32.xlu0 %v3782, 111
  %v3841 = vpop.permute.xlu0 %3840
  %3842 = vrot.lane.b32.xlu0 %v3783, 111
  %v3843 = vpop.permute.xlu0 %3842
  %v3844 = vsel %vm278, %v3841, %v3843
  %v3845 = vsel %vm278, %v3843, %v3841
  %v3846 = vmul.f32 %v3844, %v285
  %v3847 = vmul.f32 %v3845, %v289
  %v3848 = vld [vmem:[%s21] sm:$0xff]
  %v3850 = vsel %vm295, %v3848, 0
  %3852 = vmatprep.subr.mxu0 %v3791
  %3853 = vmatpush1.msra.mxu0 %v3790
  %3854 = vmatprep.subr.mxu0 %v3799
  %3855 = vmatpush1.msra.mxu0 %v3798
  %3856 = vmatprep.subr.mxu0 %v3807
  %3857 = vmatpush1.msra.mxu0 %v3806
  %3858 = vmatprep.subr.mxu0 %v3815
  %3859 = vmatpush1.msra.mxu0 %v3814
  %3860 = vmatprep.subr.mxu0 %v3783
  %3861 = vmatpush1.msra.mxu0 %v3782
  %3862 = vmatprep.subr.mxu0 %v3823
  %3863 = vmatpush1.msra.mxu0 %v3822
  %3864 = vmatprep.subr.mxu0 %v3831
  %3865 = vmatpush1.msra.mxu0 %v3830
  %3866 = vmatprep.subr.mxu0 %v3839
  %3867 = vmatpush1.msra.mxu0 %v3838
  %3868 = vmatprep.subr.mxu0 %v3847
  %3869 = vmatpush1.msra.mxu0 %v3846
  %3870 = vmatprep.subr.mxu0 %v301
  %3871 = vmatpush1.msra.mxu0 %v301
  %3872 = vmatprep.subr.mxu0 0.0
  %3873 = vmatpush1.msra.mxu0 0.0
  %3874 = vmatprep.subr.mxu0 0.0
  %3875 = vmatpush1.msra.mxu0 0.0
  %3876 = vmatprep.subr.mxu0 0.0
  %3877 = vmatpush1.msra.mxu0 0.0
  %3878 = vmatprep.subr.mxu0 0.0
  %3879 = vmatpush1.msra.mxu0 0.0
  %3880 = vmatprep.subr.mxu0 0.0
  %3881 = vmatpush1.msra.mxu0 0.0
  %3882 = vmatprep.subr.mxu0 0.0
  %3883 = vmatpush1.msra.mxu0 0.0
  %3884 = vmatprep.subr.mxu0 0.0
  %3885 = vmatpush1.msra.mxu0 0.0
  %3886 = vmatprep.subr.mxu0 0.0
  %3887 = vmatpush1.msra.mxu0 0.0
  %3888 = vmatprep.subr.mxu0 0.0
  %3889 = vmatpush1.msra.mxu0 0.0
  %3890 = vmatprep.subr.mxu0 0.0
  %3891 = vmatpush1.msra.mxu0 0.0
  %3892 = vmatprep.subr.mxu0 0.0
  %3893 = vmatpush1.msra.mxu0 0.0
  %3894 = vmatprep.subr.mxu0 0.0
  %3895 = vmatpush1.msra.mxu0 0.0
  %3896 = vmatprep.subr.mxu0 0.0
  %3897 = vmatpush1.msra.mxu0 0.0
  %3898 = vmatprep.subr.mxu0 0.0
  %3899 = vmatpush1.msra.mxu0 0.0
  %3900 = vmatprep.subr.mxu0 0.0
  %3901 = vmatpush1.msra.mxu0 0.0
  %3902 = vmatprep.subr.mxu0 0.0
  %3903 = vmatpush1.msra.mxu0 0.0
  %3904 = vmatprep.subr.mxu0 0.0
  %3905 = vmatpush1.msra.mxu0 0.0
  %3906 = vmatprep.subr.mxu0 0.0
  %3907 = vmatpush1.msra.mxu0 0.0
  %3908 = vmatprep.subr.mxu0 0.0
  %3909 = vmatpush1.msra.mxu0 0.0
  %3910 = vmatprep.subr.mxu0 0.0
  %3911 = vmatpush1.msra.mxu0 0.0
  %3912 = vmatprep.subr.mxu0 0.0
  %3913 = vmatpush1.msra.mxu0 0.0
  %3914 = vmatprep.subr.mxu0 0.0
  %3915 = vmatpush1.msra.mxu0 0.0
  %3916 = vmatprep.mubr.f32.mxu0 0.0
  %3917 = vmatmul.mubr.f32.gmra.mrb[0].mxu0 %v3850
  %v3918 = vpop.f32.mrb[0].mxu0
  %v3919 = vadd.f32 0.0, %v3918
  %v3920 = vpop.f32.mrb[0].mxu0
  %v3921 = vadd.f32 0.0, %v3920
  %3922 = vdwg.mxu0
  %v3923 = vadd.f32 %v3467, %v3919
  %v3924 = vadd.f32 %v3468, %v3921
  %v3925 = vld [vmem:[%s27] sm:$0xff]
  %v3927 = vsel %vm295, %v3925, 0
  %3929 = vmatprep.subr.mxu0 %v2871
  %3930 = vmatpush1.msra.mxu0 %v2870
  %3931 = vmatprep.subr.mxu0 %v2879
  %3932 = vmatpush1.msra.mxu0 %v2878
  %3933 = vmatprep.subr.mxu0 %v2887
  %3934 = vmatpush1.msra.mxu0 %v2886
  %3935 = vmatprep.subr.mxu0 %v2895
  %3936 = vmatpush1.msra.mxu0 %v2894
  %3937 = vmatprep.subr.mxu0 %v1270
  %3938 = vmatpush1.msra.mxu0 %v1269
  %3939 = vmatprep.subr.mxu0 %v2903
  %3940 = vmatpush1.msra.mxu0 %v2902
  %3941 = vmatprep.subr.mxu0 %v2911
  %3942 = vmatpush1.msra.mxu0 %v2910
  %3943 = vmatprep.subr.mxu0 %v2919
  %3944 = vmatpush1.msra.mxu0 %v2918
  %3945 = vmatprep.subr.mxu0 %v2927
  %3946 = vmatpush1.msra.mxu0 %v2926
  %3947 = vmatprep.subr.mxu0 %v301
  %3948 = vmatpush1.msra.mxu0 %v301
  %3949 = vmatprep.subr.mxu0 0.0
  %3950 = vmatpush1.msra.mxu0 0.0
  %3951 = vmatprep.subr.mxu0 0.0
  %3952 = vmatpush1.msra.mxu0 0.0
  %3953 = vmatprep.subr.mxu0 0.0
  %3954 = vmatpush1.msra.mxu0 0.0
  %3955 = vmatprep.subr.mxu0 0.0
  %3956 = vmatpush1.msra.mxu0 0.0
  %3957 = vmatprep.subr.mxu0 0.0
  %3958 = vmatpush1.msra.mxu0 0.0
  %3959 = vmatprep.subr.mxu0 0.0
  %3960 = vmatpush1.msra.mxu0 0.0
  %3961 = vmatprep.subr.mxu0 0.0
  %3962 = vmatpush1.msra.mxu0 0.0
  %3963 = vmatprep.subr.mxu0 0.0
  %3964 = vmatpush1.msra.mxu0 0.0
  %3965 = vmatprep.subr.mxu0 0.0
  %3966 = vmatpush1.msra.mxu0 0.0
  %3967 = vmatprep.subr.mxu0 0.0
  %3968 = vmatpush1.msra.mxu0 0.0
  %3969 = vmatprep.subr.mxu0 0.0
  %3970 = vmatpush1.msra.mxu0 0.0
  %3971 = vmatprep.subr.mxu0 0.0
  %3972 = vmatpush1.msra.mxu0 0.0
  %3973 = vmatprep.subr.mxu0 0.0
  %3974 = vmatpush1.msra.mxu0 0.0
  %3975 = vmatprep.subr.mxu0 0.0
  %3976 = vmatpush1.msra.mxu0 0.0
  %3977 = vmatprep.subr.mxu0 0.0
  %3978 = vmatpush1.msra.mxu0 0.0
  %3979 = vmatprep.subr.mxu0 0.0
  %3980 = vmatpush1.msra.mxu0 0.0
  %3981 = vmatprep.subr.mxu0 0.0
  %3982 = vmatpush1.msra.mxu0 0.0
  %3983 = vmatprep.subr.mxu0 0.0
  %3984 = vmatpush1.msra.mxu0 0.0
  %3985 = vmatprep.subr.mxu0 0.0
  %3986 = vmatpush1.msra.mxu0 0.0
  %3987 = vmatprep.subr.mxu0 0.0
  %3988 = vmatpush1.msra.mxu0 0.0
  %3989 = vmatprep.subr.mxu0 0.0
  %3990 = vmatpush1.msra.mxu0 0.0
  %3991 = vmatprep.subr.mxu0 0.0
  %3992 = vmatpush1.msra.mxu0 0.0
  %3993 = vmatprep.mubr.f32.mxu0 0.0
  %3994 = vmatmul.mubr.f32.gmra.mrb[0].mxu0 %v3927
  %v3995 = vpop.f32.mrb[0].mxu0
  %v3996 = vadd.f32 0.0, %v3995
  %v3997 = vpop.f32.mrb[0].mxu0
  %v3998 = vadd.f32 0.0, %v3997
  %3999 = vdwg.mxu0
  %vm4000 = vcmp.gt.f32.partialorder %v3996, 0.0
  %vm4001 = vcmp.gt.f32.partialorder %v3998, 0.0
  %v4002 = vmul.f32 %v3996, 0.2
  %v4003 = vmul.f32 %v3998, 0.2
  %v4004 = vsel %vm4000, %v3996, %v4002
  %v4005 = vsel %vm4001, %v3998, %v4003
  %4006 = vrot.lane.b32.xlu0 %v4004, 17
  %v4007 = vpop.permute.xlu0 %4006
  %4008 = vrot.lane.b32.xlu0 %v4005, 17
  %v4009 = vpop.permute.xlu0 %4008
  %v4010 = vsel %vm138, %v4007, %v4009
  %v4011 = vsel %vm138, %v4009, %v4007
  %v4012 = vmul.f32 %v4011, %v145
  %v4013 = vmul.f32 %v4010, %v149
  %4014 = vrot.lane.b32.xlu0 %v4004, 16
  %v4015 = vpop.permute.xlu0 %4014
  %4016 = vrot.lane.b32.xlu0 %v4005, 16
  %v4017 = vpop.permute.xlu0 %4016
  %v4018 = vsel %vm158, %v4015, %v4017
  %v4019 = vsel %vm158, %v4017, %v4015
  %v4020 = vmul.f32 %v4019, %v165
  %v4021 = vmul.f32 %v4018, %v169
  %4022 = vrot.lane.b32.xlu0 %v4004, 15
  %v4023 = vpop.permute.xlu0 %4022
  %4024 = vrot.lane.b32.xlu0 %v4005, 15
  %v4025 = vpop.permute.xlu0 %4024
  %v4026 = vsel %vm178, %v4023, %v4025
  %v4027 = vsel %vm178, %v4025, %v4023
  %v4028 = vmul.f32 %v4027, %v185
  %v4029 = vmul.f32 %v4026, %v189
  %4030 = vrot.lane.b32.xlu0 %v4004, 1
  %v4031 = vpop.permute.xlu0 %4030
  %4032 = vrot.lane.b32.xlu0 %v4005, 1
  %v4033 = vpop.permute.xlu0 %4032
  %v4034 = vsel %vm198, %v4031, %v4033
  %v4035 = vsel %vm198, %v4033, %v4031
  %v4036 = vmul.f32 %v4035, %v205
  %v4037 = vmul.f32 %v4034, %v209
  %4038 = vrot.lane.b32.xlu0 %v4004, 127
  %v4039 = vpop.permute.xlu0 %4038
  %4040 = vrot.lane.b32.xlu0 %v4005, 127
  %v4041 = vpop.permute.xlu0 %4040
  %v4042 = vsel %vm218, %v4039, %v4041
  %v4043 = vsel %vm218, %v4041, %v4039
  %v4044 = vmul.f32 %v4042, %v225
  %v4045 = vmul.f32 %v4043, %v229
  %4046 = vrot.lane.b32.xlu0 %v4004, 113
  %v4047 = vpop.permute.xlu0 %4046
  %4048 = vrot.lane.b32.xlu0 %v4005, 113
  %v4049 = vpop.permute.xlu0 %4048
  %v4050 = vsel %vm238, %v4047, %v4049
  %v4051 = vsel %vm238, %v4049, %v4047
  %v4052 = vmul.f32 %v4050, %v245
  %v4053 = vmul.f32 %v4051, %v249
  %4054 = vrot.lane.b32.xlu0 %v4004, 112
  %v4055 = vpop.permute.xlu0 %4054
  %4056 = vrot.lane.b32.xlu0 %v4005, 112
  %v4057 = vpop.permute.xlu0 %4056
  %v4058 = vsel %vm258, %v4055, %v4057
  %v4059 = vsel %vm258, %v4057, %v4055
  %v4060 = vmul.f32 %v4058, %v265
  %v4061 = vmul.f32 %v4059, %v269
  %4062 = vrot.lane.b32.xlu0 %v4004, 111
  %v4063 = vpop.permute.xlu0 %4062
  %4064 = vrot.lane.b32.xlu0 %v4005, 111
  %v4065 = vpop.permute.xlu0 %4064
  %v4066 = vsel %vm278, %v4063, %v4065
  %v4067 = vsel %vm278, %v4065, %v4063
  %v4068 = vmul.f32 %v4066, %v285
  %v4069 = vmul.f32 %v4067, %v289
  %v4070 = vld [vmem:[%s29] sm:$0xff]
  %v4072 = vsel %vm295, %v4070, 0
  %4074 = vmatprep.subr.mxu0 %v4013
  %4075 = vmatpush1.msra.mxu0 %v4012
  %4076 = vmatprep.subr.mxu0 %v4021
  %4077 = vmatpush1.msra.mxu0 %v4020
  %4078 = vmatprep.subr.mxu0 %v4029
  %4079 = vmatpush1.msra.mxu0 %v4028
  %4080 = vmatprep.subr.mxu0 %v4037
  %4081 = vmatpush1.msra.mxu0 %v4036
  %4082 = vmatprep.subr.mxu0 %v4005
  %4083 = vmatpush1.msra.mxu0 %v4004
  %4084 = vmatprep.subr.mxu0 %v4045
  %4085 = vmatpush1.msra.mxu0 %v4044
  %4086 = vmatprep.subr.mxu0 %v4053
  %4087 = vmatpush1.msra.mxu0 %v4052
  %4088 = vmatprep.subr.mxu0 %v4061
  %4089 = vmatpush1.msra.mxu0 %v4060
  %4090 = vmatprep.subr.mxu0 %v4069
  %4091 = vmatpush1.msra.mxu0 %v4068
  %4092 = vmatprep.subr.mxu0 %v301
  %4093 = vmatpush1.msra.mxu0 %v301
  %4094 = vmatprep.subr.mxu0 0.0
  %4095 = vmatpush1.msra.mxu0 0.0
  %4096 = vmatprep.subr.mxu0 0.0
  %4097 = vmatpush1.msra.mxu0 0.0
  %4098 = vmatprep.subr.mxu0 0.0
  %4099 = vmatpush1.msra.mxu0 0.0
  %4100 = vmatprep.subr.mxu0 0.0
  %4101 = vmatpush1.msra.mxu0 0.0
  %4102 = vmatprep.subr.mxu0 0.0
  %4103 = vmatpush1.msra.mxu0 0.0
  %4104 = vmatprep.subr.mxu0 0.0
  %4105 = vmatpush1.msra.mxu0 0.0
  %4106 = vmatprep.subr.mxu0 0.0
  %4107 = vmatpush1.msra.mxu0 0.0
  %4108 = vmatprep.subr.mxu0 0.0
  %4109 = vmatpush1.msra.mxu0 0.0
  %4110 = vmatprep.subr.mxu0 0.0
  %4111 = vmatpush1.msra.mxu0 0.0
  %4112 = vmatprep.subr.mxu0 0.0
  %4113 = vmatpush1.msra.mxu0 0.0
  %4114 = vmatprep.subr.mxu0 0.0
  %4115 = vmatpush1.msra.mxu0 0.0
  %4116 = vmatprep.subr.mxu0 0.0
  %4117 = vmatpush1.msra.mxu0 0.0
  %4118 = vmatprep.subr.mxu0 0.0
  %4119 = vmatpush1.msra.mxu0 0.0
  %4120 = vmatprep.subr.mxu0 0.0
  %4121 = vmatpush1.msra.mxu0 0.0
  %4122 = vmatprep.subr.mxu0 0.0
  %4123 = vmatpush1.msra.mxu0 0.0
  %4124 = vmatprep.subr.mxu0 0.0
  %4125 = vmatpush1.msra.mxu0 0.0
  %4126 = vmatprep.subr.mxu0 0.0
  %4127 = vmatpush1.msra.mxu0 0.0
  %4128 = vmatprep.subr.mxu0 0.0
  %4129 = vmatpush1.msra.mxu0 0.0
  %4130 = vmatprep.subr.mxu0 0.0
  %4131 = vmatpush1.msra.mxu0 0.0
  %4132 = vmatprep.subr.mxu0 0.0
  %4133 = vmatpush1.msra.mxu0 0.0
  %4134 = vmatprep.subr.mxu0 0.0
  %4135 = vmatpush1.msra.mxu0 0.0
  %4136 = vmatprep.subr.mxu0 0.0
  %4137 = vmatpush1.msra.mxu0 0.0
  %4138 = vmatprep.mubr.f32.mxu0 0.0
  %4139 = vmatmul.mubr.f32.gmra.mrb[0].mxu0 %v4072
  %v4140 = vpop.f32.mrb[0].mxu0
  %v4141 = vadd.f32 0.0, %v4140
  %v4142 = vpop.f32.mrb[0].mxu0
  %v4143 = vadd.f32 0.0, %v4142
  %4144 = vdwg.mxu0
  %4145 = vst [vmem:[%s57] sm:$0xff] %v4141
  %4146 = vst [vmem:[%s57 + $0x8] sm:$0xff] %v4143
  %4147 = vrot.lane.b32.xlu0 %v4141, 17
  %v4148 = vpop.permute.xlu0 %4147
  %4149 = vrot.lane.b32.xlu0 %v4143, 17
  %v4150 = vpop.permute.xlu0 %4149
  %v4151 = vsel %vm138, %v4148, %v4150
  %v4152 = vsel %vm138, %v4150, %v4148
  %v4153 = vmul.f32 %v4152, %v145
  %v4154 = vmul.f32 %v4151, %v149
  %4155 = vrot.lane.b32.xlu0 %v4141, 16
  %v4156 = vpop.permute.xlu0 %4155
  %4157 = vrot.lane.b32.xlu0 %v4143, 16
  %v4158 = vpop.permute.xlu0 %4157
  %v4159 = vsel %vm158, %v4156, %v4158
  %v4160 = vsel %vm158, %v4158, %v4156
  %v4161 = vmul.f32 %v4160, %v165
  %v4162 = vmul.f32 %v4159, %v169
  %4163 = vrot.lane.b32.xlu0 %v4141, 15
  %v4164 = vpop.permute.xlu0 %4163
  %4165 = vrot.lane.b32.xlu0 %v4143, 15
  %v4166 = vpop.permute.xlu0 %4165
  %v4167 = vsel %vm178, %v4164, %v4166
  %v4168 = vsel %vm178, %v4166, %v4164
  %v4169 = vmul.f32 %v4168, %v185
  %v4170 = vmul.f32 %v4167, %v189
  %4171 = vrot.lane.b32.xlu0 %v4141, 1
  %v4172 = vpop.permute.xlu0 %4171
  %4173 = vrot.lane.b32.xlu0 %v4143, 1
  %v4174 = vpop.permute.xlu0 %4173
  %v4175 = vsel %vm198, %v4172, %v4174
  %v4176 = vsel %vm198, %v4174, %v4172
  %v4177 = vmul.f32 %v4176, %v205
  %v4178 = vmul.f32 %v4175, %v209
  %4179 = vrot.lane.b32.xlu0 %v4141, 127
  %v4180 = vpop.permute.xlu0 %4179
  %4181 = vrot.lane.b32.xlu0 %v4143, 127
  %v4182 = vpop.permute.xlu0 %4181
  %v4183 = vsel %vm218, %v4180, %v4182
  %v4184 = vsel %vm218, %v4182, %v4180
  %v4185 = vmul.f32 %v4183, %v225
  %v4186 = vmul.f32 %v4184, %v229
  %4187 = vrot.lane.b32.xlu0 %v4141, 113
  %v4188 = vpop.permute.xlu0 %4187
  %4189 = vrot.lane.b32.xlu0 %v4143, 113
  %v4190 = vpop.permute.xlu0 %4189
  %v4191 = vsel %vm238, %v4188, %v4190
  %v4192 = vsel %vm238, %v4190, %v4188
  %v4193 = vmul.f32 %v4191, %v245
  %v4194 = vmul.f32 %v4192, %v249
  %4195 = vrot.lane.b32.xlu0 %v4141, 112
  %v4196 = vpop.permute.xlu0 %4195
  %4197 = vrot.lane.b32.xlu0 %v4143, 112
  %v4198 = vpop.permute.xlu0 %4197
  %v4199 = vsel %vm258, %v4196, %v4198
  %v4200 = vsel %vm258, %v4198, %v4196
  %v4201 = vmul.f32 %v4199, %v265
  %v4202 = vmul.f32 %v4200, %v269
  %4203 = vrot.lane.b32.xlu0 %v4141, 111
  %v4204 = vpop.permute.xlu0 %4203
  %4205 = vrot.lane.b32.xlu0 %v4143, 111
  %v4206 = vpop.permute.xlu0 %4205
  %v4207 = vsel %vm278, %v4204, %v4206
  %v4208 = vsel %vm278, %v4206, %v4204
  %v4209 = vmul.f32 %v4207, %v285
  %v4210 = vmul.f32 %v4208, %v289
  %v4211 = vld [vmem:[%s31] sm:$0xff]
  %v4212 = vld [vmem:[%s31 + $0x8] sm:$0xff]
  %v4214 = vsel %vm295, %v4211, 0
  %v4217 = vsel %vm295, %v4212, 0
  %4219 = vmatprep.subr.mxu0 %v4154
  %4220 = vmatpush1.msra.mxu0 %v4153
  %4221 = vmatprep.subr.mxu0 %v4162
  %4222 = vmatpush1.msra.mxu0 %v4161
  %4223 = vmatprep.subr.mxu0 %v4170
  %4224 = vmatpush1.msra.mxu0 %v4169
  %4225 = vmatprep.subr.mxu0 %v4178
  %4226 = vmatpush1.msra.mxu0 %v4177
  %4227 = vmatprep.subr.mxu0 %v4143
  %4228 = vmatpush1.msra.mxu0 %v4141
  %4229 = vmatprep.subr.mxu0 %v4186
  %4230 = vmatpush1.msra.mxu0 %v4185
  %4231 = vmatprep.subr.mxu0 %v4194
  %4232 = vmatpush1.msra.mxu0 %v4193
  %4233 = vmatprep.subr.mxu0 %v4202
  %4234 = vmatpush1.msra.mxu0 %v4201
  %4235 = vmatprep.subr.mxu0 %v4210
  %4236 = vmatpush1.msra.mxu0 %v4209
  %4237 = vmatprep.subr.mxu0 %v301
  %4238 = vmatpush1.msra.mxu0 %v301
  %4239 = vmatprep.subr.mxu0 0.0
  %4240 = vmatpush1.msra.mxu0 0.0
  %4241 = vmatprep.subr.mxu0 0.0
  %4242 = vmatpush1.msra.mxu0 0.0
  %4243 = vmatprep.subr.mxu0 0.0
  %4244 = vmatpush1.msra.mxu0 0.0
  %4245 = vmatprep.subr.mxu0 0.0
  %4246 = vmatpush1.msra.mxu0 0.0
  %4247 = vmatprep.subr.mxu0 0.0
  %4248 = vmatpush1.msra.mxu0 0.0
  %4249 = vmatprep.subr.mxu0 0.0
  %4250 = vmatpush1.msra.mxu0 0.0
  %4251 = vmatprep.subr.mxu0 0.0
  %4252 = vmatpush1.msra.mxu0 0.0
  %4253 = vmatprep.subr.mxu0 0.0
  %4254 = vmatpush1.msra.mxu0 0.0
  %4255 = vmatprep.subr.mxu0 0.0
  %4256 = vmatpush1.msra.mxu0 0.0
  %4257 = vmatprep.subr.mxu0 0.0
  %4258 = vmatpush1.msra.mxu0 0.0
  %4259 = vmatprep.subr.mxu0 0.0
  %4260 = vmatpush1.msra.mxu0 0.0
  %4261 = vmatprep.subr.mxu0 0.0
  %4262 = vmatpush1.msra.mxu0 0.0
  %4263 = vmatprep.subr.mxu0 0.0
  %4264 = vmatpush1.msra.mxu0 0.0
  %4265 = vmatprep.subr.mxu0 0.0
  %4266 = vmatpush1.msra.mxu0 0.0
  %4267 = vmatprep.subr.mxu0 0.0
  %4268 = vmatpush1.msra.mxu0 0.0
  %4269 = vmatprep.subr.mxu0 0.0
  %4270 = vmatpush1.msra.mxu0 0.0
  %4271 = vmatprep.subr.mxu0 0.0
  %4272 = vmatpush1.msra.mxu0 0.0
  %4273 = vmatprep.subr.mxu0 0.0
  %4274 = vmatpush1.msra.mxu0 0.0
  %4275 = vmatprep.subr.mxu0 0.0
  %4276 = vmatpush1.msra.mxu0 0.0
  %4277 = vmatprep.subr.mxu0 0.0
  %4278 = vmatpush1.msra.mxu0 0.0
  %4279 = vmatprep.subr.mxu0 0.0
  %4280 = vmatpush1.msra.mxu0 0.0
  %4281 = vmatprep.subr.mxu0 0.0
  %4282 = vmatpush1.msra.mxu0 0.0
  %4283 = vmatprep.mubr.f32.mxu0 0.0
  %4284 = vmatmul.mubr.f32.gmra.mrb[0].mxu0 %v4214
  %v4285 = vpop.f32.mrb[0].mxu0
  %v4286 = vadd.f32 0.0, %v4285
  %v4287 = vpop.f32.mrb[0].mxu0
  %v4288 = vadd.f32 0.0, %v4287
  %4289 = vmatprep.mubr.f32.mxu0 0.0
  %4290 = vmatmul.mubr.f32.gmra.mrb[0].mxu0 %v4217
  %v4291 = vpop.f32.mrb[0].mxu0
  %v4292 = vadd.f32 0.0, %v4291
  %v4293 = vpop.f32.mrb[0].mxu0
  %v4294 = vadd.f32 0.0, %v4293
  %4295 = vdwg.mxu0
  %v4296 = vmax.f32 %v4286, 0.0
  %v4297 = vmax.f32 %v4288, 0.0
  %v4298 = vmax.f32 %v4292, 0.0
  %v4299 = vmax.f32 %v4294, 0.0
  %4300 = vrot.lane.b32.xlu0 %v4296, 17
  %v4301 = vpop.permute.xlu0 %4300
  %4302 = vrot.lane.b32.xlu0 %v4298, 17
  %v4303 = vpop.permute.xlu0 %4302
  %4304 = vrot.lane.b32.xlu0 %v4297, 17
  %v4305 = vpop.permute.xlu0 %4304
  %4306 = vrot.lane.b32.xlu0 %v4299, 17
  %v4307 = vpop.permute.xlu0 %4306
  %v4308 = vsel %vm138, %v4301, %v4305
  %v4309 = vsel %vm138, %v4303, %v4307
  %v4310 = vsel %vm138, %v4305, %v4301
  %v4311 = vsel %vm138, %v4307, %v4303
  %v4312 = vmul.f32 %v4310, %v145
  %v4313 = vmul.f32 %v4308, %v149
  %v4314 = vmul.f32 %v4311, %v145
  %v4315 = vmul.f32 %v4309, %v149
  %4316 = vrot.lane.b32.xlu0 %v4296, 16
  %v4317 = vpop.permute.xlu0 %4316
  %4318 = vrot.lane.b32.xlu0 %v4298, 16
  %v4319 = vpop.permute.xlu0 %4318
  %4320 = vrot.lane.b32.xlu0 %v4297, 16
  %v4321 = vpop.permute.xlu0 %4320
  %4322 = vrot.lane.b32.xlu0 %v4299, 16
  %v4323 = vpop.permute.xlu0 %4322
  %v4324 = vsel %vm158, %v4317, %v4321
  %v4325 = vsel %vm158, %v4319, %v4323
  %v4326 = vsel %vm158, %v4321, %v4317
  %v4327 = vsel %vm158, %v4323, %v4319
  %v4328 = vmul.f32 %v4326, %v165
  %v4329 = vmul.f32 %v4324, %v169
  %v4330 = vmul.f32 %v4327, %v165
  %v4331 = vmul.f32 %v4325, %v169
  %4332 = vrot.lane.b32.xlu0 %v4296, 15
  %v4333 = vpop.permute.xlu0 %4332
  %4334 = vrot.lane.b32.xlu0 %v4298, 15
  %v4335 = vpop.permute.xlu0 %4334
  %4336 = vrot.lane.b32.xlu0 %v4297, 15
  %v4337 = vpop.permute.xlu0 %4336
  %4338 = vrot.lane.b32.xlu0 %v4299, 15
  %v4339 = vpop.permute.xlu0 %4338
  %v4340 = vsel %vm178, %v4333, %v4337
  %v4341 = vsel %vm178, %v4335, %v4339
  %v4342 = vsel %vm178, %v4337, %v4333
  %v4343 = vsel %vm178, %v4339, %v4335
  %v4344 = vmul.f32 %v4342, %v185
  %v4345 = vmul.f32 %v4340, %v189
  %v4346 = vmul.f32 %v4343, %v185
  %v4347 = vmul.f32 %v4341, %v189
  %4348 = vrot.lane.b32.xlu0 %v4296, 1
  %v4349 = vpop.permute.xlu0 %4348
  %4350 = vrot.lane.b32.xlu0 %v4298, 1
  %v4351 = vpop.permute.xlu0 %4350
  %4352 = vrot.lane.b32.xlu0 %v4297, 1
  %v4353 = vpop.permute.xlu0 %4352
  %4354 = vrot.lane.b32.xlu0 %v4299, 1
  %v4355 = vpop.permute.xlu0 %4354
  %v4356 = vsel %vm198, %v4349, %v4353
  %v4357 = vsel %vm198, %v4351, %v4355
  %v4358 = vsel %vm198, %v4353, %v4349
  %v4359 = vsel %vm198, %v4355, %v4351
  %v4360 = vmul.f32 %v4358, %v205
  %v4361 = vmul.f32 %v4356, %v209
  %v4362 = vmul.f32 %v4359, %v205
  %v4363 = vmul.f32 %v4357, %v209
  %4364 = vrot.lane.b32.xlu0 %v4296, 127
  %v4365 = vpop.permute.xlu0 %4364
  %4366 = vrot.lane.b32.xlu0 %v4298, 127
  %v4367 = vpop.permute.xlu0 %4366
  %4368 = vrot.lane.b32.xlu0 %v4297, 127
  %v4369 = vpop.permute.xlu0 %4368
  %4370 = vrot.lane.b32.xlu0 %v4299, 127
  %v4371 = vpop.permute.xlu0 %4370
  %v4372 = vsel %vm218, %v4365, %v4369
  %v4373 = vsel %vm218, %v4367, %v4371
  %v4374 = vsel %vm218, %v4369, %v4365
  %v4375 = vsel %vm218, %v4371, %v4367
  %v4376 = vmul.f32 %v4372, %v225
  %v4377 = vmul.f32 %v4374, %v229
  %v4378 = vmul.f32 %v4373, %v225
  %v4379 = vmul.f32 %v4375, %v229
  %4380 = vrot.lane.b32.xlu0 %v4296, 113
  %v4381 = vpop.permute.xlu0 %4380
  %4382 = vrot.lane.b32.xlu0 %v4298, 113
  %v4383 = vpop.permute.xlu0 %4382
  %4384 = vrot.lane.b32.xlu0 %v4297, 113
  %v4385 = vpop.permute.xlu0 %4384
  %4386 = vrot.lane.b32.xlu0 %v4299, 113
  %v4387 = vpop.permute.xlu0 %4386
  %v4388 = vsel %vm238, %v4381, %v4385
  %v4389 = vsel %vm238, %v4383, %v4387
  %v4390 = vsel %vm238, %v4385, %v4381
  %v4391 = vsel %vm238, %v4387, %v4383
  %v4392 = vmul.f32 %v4388, %v245
  %v4393 = vmul.f32 %v4390, %v249
  %v4394 = vmul.f32 %v4389, %v245
  %v4395 = vmul.f32 %v4391, %v249
  %4396 = vrot.lane.b32.xlu0 %v4296, 112
  %v4397 = vpop.permute.xlu0 %4396
  %4398 = vrot.lane.b32.xlu0 %v4298, 112
  %v4399 = vpop.permute.xlu0 %4398
  %4400 = vrot.lane.b32.xlu0 %v4297, 112
  %v4401 = vpop.permute.xlu0 %4400
  %4402 = vrot.lane.b32.xlu0 %v4299, 112
  %v4403 = vpop.permute.xlu0 %4402
  %v4404 = vsel %vm258, %v4397, %v4401
  %v4405 = vsel %vm258, %v4399, %v4403
  %v4406 = vsel %vm258, %v4401, %v4397
  %v4407 = vsel %vm258, %v4403, %v4399
  %v4408 = vmul.f32 %v4404, %v265
  %v4409 = vmul.f32 %v4406, %v269
  %v4410 = vmul.f32 %v4405, %v265
  %v4411 = vmul.f32 %v4407, %v269
  %4412 = vrot.lane.b32.xlu0 %v4296, 111
  %v4413 = vpop.permute.xlu0 %4412
  %4414 = vrot.lane.b32.xlu0 %v4298, 111
  %v4415 = vpop.permute.xlu0 %4414
  %4416 = vrot.lane.b32.xlu0 %v4297, 111
  %v4417 = vpop.permute.xlu0 %4416
  %4418 = vrot.lane.b32.xlu0 %v4299, 111
  %v4419 = vpop.permute.xlu0 %4418
  %v4420 = vsel %vm278, %v4413, %v4417
  %v4421 = vsel %vm278, %v4415, %v4419
  %v4422 = vsel %vm278, %v4417, %v4413
  %v4423 = vsel %vm278, %v4419, %v4415
  %v4424 = vmul.f32 %v4420, %v285
  %v4425 = vmul.f32 %v4422, %v289
  %v4426 = vmul.f32 %v4421, %v285
  %v4427 = vmul.f32 %v4423, %v289
  %v4428 = vld [vmem:[%s33] sm:$0xf]
  %v4431 = vunpack.c.l.s4 1983009808
  %v4432 = vunpack.c.0.s8 %v4431
  %v4433 = vlaneseq
  %v4434 = vshrl.u32 %v4433, 7
  %v4435 = vsub.s32 %v4432, %v4434
  %v4436 = vrot.slane %v4428, %v4435
  %v4437 = vcombine.high %v4436, %v4436
  %v4439 = vsel %vm942, %v4437, 0
  %4441 = vmatprep.subr.mxu0 %v4313
  %4442 = vmatpush1.msra.mxu0 %v4312
  %4443 = vmatprep.subr.mxu0 %v4315
  %4444 = vmatpush1.msra.mxu0 %v4314
  %4445 = vmatprep.subr.mxu0 %v4329
  %4446 = vmatpush1.msra.mxu0 %v4328
  %4447 = vmatprep.subr.mxu0 %v4331
  %4448 = vmatpush1.msra.mxu0 %v4330
  %4449 = vmatprep.subr.mxu0 %v4345
  %4450 = vmatpush1.msra.mxu0 %v4344
  %4451 = vmatprep.subr.mxu0 %v4347
  %4452 = vmatpush1.msra.mxu0 %v4346
  %4453 = vmatprep.subr.mxu0 %v4361
  %4454 = vmatpush1.msra.mxu0 %v4360
  %4455 = vmatprep.subr.mxu0 %v4363
  %4456 = vmatpush1.msra.mxu0 %v4362
  %4457 = vmatprep.subr.mxu0 %v4297
  %4458 = vmatpush1.msra.mxu0 %v4296
  %4459 = vmatprep.subr.mxu0 %v4299
  %4460 = vmatpush1.msra.mxu0 %v4298
  %4461 = vmatprep.subr.mxu0 %v4377
  %4462 = vmatpush1.msra.mxu0 %v4376
  %4463 = vmatprep.subr.mxu0 %v4379
  %4464 = vmatpush1.msra.mxu0 %v4378
  %4465 = vmatprep.subr.mxu0 %v4393
  %4466 = vmatpush1.msra.mxu0 %v4392
  %4467 = vmatprep.subr.mxu0 %v4395
  %4468 = vmatpush1.msra.mxu0 %v4394
  %4469 = vmatprep.subr.mxu0 %v4409
  %4470 = vmatpush1.msra.mxu0 %v4408
  %4471 = vmatprep.subr.mxu0 %v4411
  %4472 = vmatpush1.msra.mxu0 %v4410
  %4473 = vmatprep.subr.mxu0 %v4425
  %4474 = vmatpush1.msra.mxu0 %v4424
  %4475 = vmatprep.subr.mxu0 %v4427
  %4476 = vmatpush1.msra.mxu0 %v4426
  %4477 = vmatprep.subr.mxu0 %v301
  %4478 = vmatpush1.msra.mxu0 %v301
  %4479 = vmatprep.subr.mxu0 0.0
  %4480 = vmatpush1.msra.mxu0 0.0
  %4481 = vmatprep.subr.mxu0 0.0
  %4482 = vmatpush1.msra.mxu0 0.0
  %4483 = vmatprep.subr.mxu0 0.0
  %4484 = vmatpush1.msra.mxu0 0.0
  %4485 = vmatprep.subr.mxu0 0.0
  %4486 = vmatpush1.msra.mxu0 0.0
  %4487 = vmatprep.subr.mxu0 0.0
  %4488 = vmatpush1.msra.mxu0 0.0
  %4489 = vmatprep.subr.mxu0 0.0
  %4490 = vmatpush1.msra.mxu0 0.0
  %4491 = vmatprep.subr.mxu0 0.0
  %4492 = vmatpush1.msra.mxu0 0.0
  %4493 = vmatprep.subr.mxu0 0.0
  %4494 = vmatpush1.msra.mxu0 0.0
  %4495 = vmatprep.subr.mxu0 0.0
  %4496 = vmatpush1.msra.mxu0 0.0
  %4497 = vmatprep.subr.mxu0 0.0
  %4498 = vmatpush1.msra.mxu0 0.0
  %4499 = vmatprep.subr.mxu0 0.0
  %4500 = vmatpush1.msra.mxu0 0.0
  %4501 = vmatprep.subr.mxu0 0.0
  %4502 = vmatpush1.msra.mxu0 0.0
  %4503 = vmatprep.subr.mxu0 0.0
  %4504 = vmatpush1.msra.mxu0 0.0
  %4505 = vmatprep.mubr.f32.mxu0 %v4439
  %4506 = vmatmul.mubr.f32.gmra.mrb[0].mxu0 %v4436
  %v4507 = vpop.f32.mrb[0].mxu0
  %v4508 = vadd.f32 0.0, %v4507
  %v4509 = vpop.f32.mrb[0].mxu0
  %v4510 = vadd.f32 0.0, %v4509
  %4511 = vdwg.mxu0
  %v4514 = vcombine.low %v4508, %v4510
  %v4516 = vunpack.c.l.s4 1983009808
  %v4517 = vunpack.c.0.s8 %v4516
  %v4518 = vlaneseq
  %v4519 = vshrl.u32 %v4518, 7
  %v4520 = vsub.s32 %v4517, %v4519
  %v4521 = vrot.slane %v4514, %v4520
  %4523 = vst [vmem:[%s59] sm:$0xf] %v4521
  %v4524 = vld [vmem:[%s27] sm:$0xff]
  %v4526 = vsel %vm295, %v4524, 0
  %4528 = vmatprep.subr.mxu0 %v3479
  %4529 = vmatpush1.msra.mxu0 %v3478
  %4530 = vmatprep.subr.mxu0 %v3487
  %4531 = vmatpush1.msra.mxu0 %v3486
  %4532 = vmatprep.subr.mxu0 %v3495
  %4533 = vmatpush1.msra.mxu0 %v3494
  %4534 = vmatprep.subr.mxu0 %v3503
  %4535 = vmatpush1.msra.mxu0 %v3502
  %4536 = vmatprep.subr.mxu0 %v3468
  %4537 = vmatpush1.msra.mxu0 %v3467
  %4538 = vmatprep.subr.mxu0 %v3511
  %4539 = vmatpush1.msra.mxu0 %v3510
  %4540 = vmatprep.subr.mxu0 %v3519
  %4541 = vmatpush1.msra.mxu0 %v3518
  %4542 = vmatprep.subr.mxu0 %v3527
  %4543 = vmatpush1.msra.mxu0 %v3526
  %4544 = vmatprep.subr.mxu0 %v3535
  %4545 = vmatpush1.msra.mxu0 %v3534
  %4546 = vmatprep.subr.mxu0 %v301
  %4547 = vmatpush1.msra.mxu0 %v301
  %4548 = vmatprep.subr.mxu0 0.0
  %4549 = vmatpush1.msra.mxu0 0.0
  %4550 = vmatprep.subr.mxu0 0.0
  %4551 = vmatpush1.msra.mxu0 0.0
  %4552 = vmatprep.subr.mxu0 0.0
  %4553 = vmatpush1.msra.mxu0 0.0
  %4554 = vmatprep.subr.mxu0 0.0
  %4555 = vmatpush1.msra.mxu0 0.0
  %4556 = vmatprep.subr.mxu0 0.0
  %4557 = vmatpush1.msra.mxu0 0.0
  %4558 = vmatprep.subr.mxu0 0.0
  %4559 = vmatpush1.msra.mxu0 0.0
  %4560 = vmatprep.subr.mxu0 0.0
  %4561 = vmatpush1.msra.mxu0 0.0
  %4562 = vmatprep.subr.mxu0 0.0
  %4563 = vmatpush1.msra.mxu0 0.0
  %4564 = vmatprep.subr.mxu0 0.0
  %4565 = vmatpush1.msra.mxu0 0.0
  %4566 = vmatprep.subr.mxu0 0.0
  %4567 = vmatpush1.msra.mxu0 0.0
  %4568 = vmatprep.subr.mxu0 0.0
  %4569 = vmatpush1.msra.mxu0 0.0
  %4570 = vmatprep.subr.mxu0 0.0
  %4571 = vmatpush1.msra.mxu0 0.0
  %4572 = vmatprep.subr.mxu0 0.0
  %4573 = vmatpush1.msra.mxu0 0.0
  %4574 = vmatprep.subr.mxu0 0.0
  %4575 = vmatpush1.msra.mxu0 0.0
  %4576 = vmatprep.subr.mxu0 0.0
  %4577 = vmatpush1.msra.mxu0 0.0
  %4578 = vmatprep.subr.mxu0 0.0
  %4579 = vmatpush1.msra.mxu0 0.0
  %4580 = vmatprep.subr.mxu0 0.0
  %4581 = vmatpush1.msra.mxu0 0.0
  %4582 = vmatprep.subr.mxu0 0.0
  %4583 = vmatpush1.msra.mxu0 0.0
  %4584 = vmatprep.subr.mxu0 0.0
  %4585 = vmatpush1.msra.mxu0 0.0
  %4586 = vmatprep.subr.mxu0 0.0
  %4587 = vmatpush1.msra.mxu0 0.0
  %4588 = vmatprep.subr.mxu0 0.0
  %4589 = vmatpush1.msra.mxu0 0.0
  %4590 = vmatprep.subr.mxu0 0.0
  %4591 = vmatpush1.msra.mxu0 0.0
  %4592 = vmatprep.mubr.f32.mxu0 0.0
  %4593 = vmatmul.mubr.f32.gmra.mrb[0].mxu0 %v4526
  %v4594 = vpop.f32.mrb[0].mxu0
  %v4595 = vadd.f32 0.0, %v4594
  %v4596 = vpop.f32.mrb[0].mxu0
  %v4597 = vadd.f32 0.0, %v4596
  %4598 = vdwg.mxu0
  %vm4599 = vcmp.gt.f32.partialorder %v4595, 0.0
  %vm4600 = vcmp.gt.f32.partialorder %v4597, 0.0
  %v4601 = vmul.f32 %v4595, 0.2
  %v4602 = vmul.f32 %v4597, 0.2
  %v4603 = vsel %vm4599, %v4595, %v4601
  %v4604 = vsel %vm4600, %v4597, %v4602
  %4605 = vrot.lane.b32.xlu0 %v4603, 17
  %v4606 = vpop.permute.xlu0 %4605
  %4607 = vrot.lane.b32.xlu0 %v4604, 17
  %v4608 = vpop.permute.xlu0 %4607
  %v4609 = vsel %vm138, %v4606, %v4608
  %v4610 = vsel %vm138, %v4608, %v4606
  %v4611 = vmul.f32 %v4610, %v145
  %v4612 = vmul.f32 %v4609, %v149
  %4613 = vrot.lane.b32.xlu0 %v4603, 16
  %v4614 = vpop.permute.xlu0 %4613
  %4615 = vrot.lane.b32.xlu0 %v4604, 16
  %v4616 = vpop.permute.xlu0 %4615
  %v4617 = vsel %vm158, %v4614, %v4616
  %v4618 = vsel %vm158, %v4616, %v4614
  %v4619 = vmul.f32 %v4618, %v165
  %v4620 = vmul.f32 %v4617, %v169
  %4621 = vrot.lane.b32.xlu0 %v4603, 15
  %v4622 = vpop.permute.xlu0 %4621
  %4623 = vrot.lane.b32.xlu0 %v4604, 15
  %v4624 = vpop.permute.xlu0 %4623
  %v4625 = vsel %vm178, %v4622, %v4624
  %v4626 = vsel %vm178, %v4624, %v4622
  %v4627 = vmul.f32 %v4626, %v185
  %v4628 = vmul.f32 %v4625, %v189
  %4629 = vrot.lane.b32.xlu0 %v4603, 1
  %v4630 = vpop.permute.xlu0 %4629
  %4631 = vrot.lane.b32.xlu0 %v4604, 1
  %v4632 = vpop.permute.xlu0 %4631
  %v4633 = vsel %vm198, %v4630, %v4632
  %v4634 = vsel %vm198, %v4632, %v4630
  %v4635 = vmul.f32 %v4634, %v205
  %v4636 = vmul.f32 %v4633, %v209
  %4637 = vrot.lane.b32.xlu0 %v4603, 127
  %v4638 = vpop.permute.xlu0 %4637
  %4639 = vrot.lane.b32.xlu0 %v4604, 127
  %v4640 = vpop.permute.xlu0 %4639
  %v4641 = vsel %vm218, %v4638, %v4640
  %v4642 = vsel %vm218, %v4640, %v4638
  %v4643 = vmul.f32 %v4641, %v225
  %v4644 = vmul.f32 %v4642, %v229
  %4645 = vrot.lane.b32.xlu0 %v4603, 113
  %v4646 = vpop.permute.xlu0 %4645
  %4647 = vrot.lane.b32.xlu0 %v4604, 113
  %v4648 = vpop.permute.xlu0 %4647
  %v4649 = vsel %vm238, %v4646, %v4648
  %v4650 = vsel %vm238, %v4648, %v4646
  %v4651 = vmul.f32 %v4649, %v245
  %v4652 = vmul.f32 %v4650, %v249
  %4653 = vrot.lane.b32.xlu0 %v4603, 112
  %v4654 = vpop.permute.xlu0 %4653
  %4655 = vrot.lane.b32.xlu0 %v4604, 112
  %v4656 = vpop.permute.xlu0 %4655
  %v4657 = vsel %vm258, %v4654, %v4656
  %v4658 = vsel %vm258, %v4656, %v4654
  %v4659 = vmul.f32 %v4657, %v265
  %v4660 = vmul.f32 %v4658, %v269
  %4661 = vrot.lane.b32.xlu0 %v4603, 111
  %v4662 = vpop.permute.xlu0 %4661
  %4663 = vrot.lane.b32.xlu0 %v4604, 111
  %v4664 = vpop.permute.xlu0 %4663
  %v4665 = vsel %vm278, %v4662, %v4664
  %v4666 = vsel %vm278, %v4664, %v4662
  %v4667 = vmul.f32 %v4665, %v285
  %v4668 = vmul.f32 %v4666, %v289
  %v4669 = vld [vmem:[%s29] sm:$0xff]
  %v4671 = vsel %vm295, %v4669, 0
  %4673 = vmatprep.subr.mxu0 %v4612
  %4674 = vmatpush1.msra.mxu0 %v4611
  %4675 = vmatprep.subr.mxu0 %v4620
  %4676 = vmatpush1.msra.mxu0 %v4619
  %4677 = vmatprep.subr.mxu0 %v4628
  %4678 = vmatpush1.msra.mxu0 %v4627
  %4679 = vmatprep.subr.mxu0 %v4636
  %4680 = vmatpush1.msra.mxu0 %v4635
  %4681 = vmatprep.subr.mxu0 %v4604
  %4682 = vmatpush1.msra.mxu0 %v4603
  %4683 = vmatprep.subr.mxu0 %v4644
  %4684 = vmatpush1.msra.mxu0 %v4643
  %4685 = vmatprep.subr.mxu0 %v4652
  %4686 = vmatpush1.msra.mxu0 %v4651
  %4687 = vmatprep.subr.mxu0 %v4660
  %4688 = vmatpush1.msra.mxu0 %v4659
  %4689 = vmatprep.subr.mxu0 %v4668
  %4690 = vmatpush1.msra.mxu0 %v4667
  %4691 = vmatprep.subr.mxu0 %v301
  %4692 = vmatpush1.msra.mxu0 %v301
  %4693 = vmatprep.subr.mxu0 0.0
  %4694 = vmatpush1.msra.mxu0 0.0
  %4695 = vmatprep.subr.mxu0 0.0
  %4696 = vmatpush1.msra.mxu0 0.0
  %4697 = vmatprep.subr.mxu0 0.0
  %4698 = vmatpush1.msra.mxu0 0.0
  %4699 = vmatprep.subr.mxu0 0.0
  %4700 = vmatpush1.msra.mxu0 0.0
  %4701 = vmatprep.subr.mxu0 0.0
  %4702 = vmatpush1.msra.mxu0 0.0
  %4703 = vmatprep.subr.mxu0 0.0
  %4704 = vmatpush1.msra.mxu0 0.0
  %4705 = vmatprep.subr.mxu0 0.0
  %4706 = vmatpush1.msra.mxu0 0.0
  %4707 = vmatprep.subr.mxu0 0.0
  %4708 = vmatpush1.msra.mxu0 0.0
  %4709 = vmatprep.subr.mxu0 0.0
  %4710 = vmatpush1.msra.mxu0 0.0
  %4711 = vmatprep.subr.mxu0 0.0
  %4712 = vmatpush1.msra.mxu0 0.0
  %4713 = vmatprep.subr.mxu0 0.0
  %4714 = vmatpush1.msra.mxu0 0.0
  %4715 = vmatprep.subr.mxu0 0.0
  %4716 = vmatpush1.msra.mxu0 0.0
  %4717 = vmatprep.subr.mxu0 0.0
  %4718 = vmatpush1.msra.mxu0 0.0
  %4719 = vmatprep.subr.mxu0 0.0
  %4720 = vmatpush1.msra.mxu0 0.0
  %4721 = vmatprep.subr.mxu0 0.0
  %4722 = vmatpush1.msra.mxu0 0.0
  %4723 = vmatprep.subr.mxu0 0.0
  %4724 = vmatpush1.msra.mxu0 0.0
  %4725 = vmatprep.subr.mxu0 0.0
  %4726 = vmatpush1.msra.mxu0 0.0
  %4727 = vmatprep.subr.mxu0 0.0
  %4728 = vmatpush1.msra.mxu0 0.0
  %4729 = vmatprep.subr.mxu0 0.0
  %4730 = vmatpush1.msra.mxu0 0.0
  %4731 = vmatprep.subr.mxu0 0.0
  %4732 = vmatpush1.msra.mxu0 0.0
  %4733 = vmatprep.subr.mxu0 0.0
  %4734 = vmatpush1.msra.mxu0 0.0
  %4735 = vmatprep.subr.mxu0 0.0
  %4736 = vmatpush1.msra.mxu0 0.0
  %4737 = vmatprep.mubr.f32.mxu0 0.0
  %4738 = vmatmul.mubr.f32.gmra.mrb[0].mxu0 %v4671
  %v4739 = vpop.f32.mrb[0].mxu0
  %v4740 = vadd.f32 0.0, %v4739
  %v4741 = vpop.f32.mrb[0].mxu0
  %v4742 = vadd.f32 0.0, %v4741
  %4743 = vdwg.mxu0
  %s4744 = scalar_lea.vmem %s57, 16
  %4745 = vst [vmem:[%s4744] sm:$0xff] %v4740
  %4746 = vst [vmem:[%s4744 + $0x8] sm:$0xff] %v4742
  %4747 = vrot.lane.b32.xlu0 %v4740, 17
  %v4748 = vpop.permute.xlu0 %4747
  %4749 = vrot.lane.b32.xlu0 %v4742, 17
  %v4750 = vpop.permute.xlu0 %4749
  %v4751 = vsel %vm138, %v4748, %v4750
  %v4752 = vsel %vm138, %v4750, %v4748
  %v4753 = vmul.f32 %v4752, %v145
  %v4754 = vmul.f32 %v4751, %v149
  %4755 = vrot.lane.b32.xlu0 %v4740, 16
  %v4756 = vpop.permute.xlu0 %4755
  %4757 = vrot.lane.b32.xlu0 %v4742, 16
  %v4758 = vpop.permute.xlu0 %4757
  %v4759 = vsel %vm158, %v4756, %v4758
  %v4760 = vsel %vm158, %v4758, %v4756
  %v4761 = vmul.f32 %v4760, %v165
  %v4762 = vmul.f32 %v4759, %v169
  %4763 = vrot.lane.b32.xlu0 %v4740, 15
  %v4764 = vpop.permute.xlu0 %4763
  %4765 = vrot.lane.b32.xlu0 %v4742, 15
  %v4766 = vpop.permute.xlu0 %4765
  %v4767 = vsel %vm178, %v4764, %v4766
  %v4768 = vsel %vm178, %v4766, %v4764
  %v4769 = vmul.f32 %v4768, %v185
  %v4770 = vmul.f32 %v4767, %v189
  %4771 = vrot.lane.b32.xlu0 %v4740, 1
  %v4772 = vpop.permute.xlu0 %4771
  %4773 = vrot.lane.b32.xlu0 %v4742, 1
  %v4774 = vpop.permute.xlu0 %4773
  %v4775 = vsel %vm198, %v4772, %v4774
  %v4776 = vsel %vm198, %v4774, %v4772
  %v4777 = vmul.f32 %v4776, %v205
  %v4778 = vmul.f32 %v4775, %v209
  %4779 = vrot.lane.b32.xlu0 %v4740, 127
  %v4780 = vpop.permute.xlu0 %4779
  %4781 = vrot.lane.b32.xlu0 %v4742, 127
  %v4782 = vpop.permute.xlu0 %4781
  %v4783 = vsel %vm218, %v4780, %v4782
  %v4784 = vsel %vm218, %v4782, %v4780
  %v4785 = vmul.f32 %v4783, %v225
  %v4786 = vmul.f32 %v4784, %v229
  %4787 = vrot.lane.b32.xlu0 %v4740, 113
  %v4788 = vpop.permute.xlu0 %4787
  %4789 = vrot.lane.b32.xlu0 %v4742, 113
  %v4790 = vpop.permute.xlu0 %4789
  %v4791 = vsel %vm238, %v4788, %v4790
  %v4792 = vsel %vm238, %v4790, %v4788
  %v4793 = vmul.f32 %v4791, %v245
  %v4794 = vmul.f32 %v4792, %v249
  %4795 = vrot.lane.b32.xlu0 %v4740, 112
  %v4796 = vpop.permute.xlu0 %4795
  %4797 = vrot.lane.b32.xlu0 %v4742, 112
  %v4798 = vpop.permute.xlu0 %4797
  %v4799 = vsel %vm258, %v4796, %v4798
  %v4800 = vsel %vm258, %v4798, %v4796
  %v4801 = vmul.f32 %v4799, %v265
  %v4802 = vmul.f32 %v4800, %v269
  %4803 = vrot.lane.b32.xlu0 %v4740, 111
  %v4804 = vpop.permute.xlu0 %4803
  %4805 = vrot.lane.b32.xlu0 %v4742, 111
  %v4806 = vpop.permute.xlu0 %4805
  %v4807 = vsel %vm278, %v4804, %v4806
  %v4808 = vsel %vm278, %v4806, %v4804
  %v4809 = vmul.f32 %v4807, %v285
  %v4810 = vmul.f32 %v4808, %v289
  %v4811 = vld [vmem:[%s31] sm:$0xff]
  %v4812 = vld [vmem:[%s31 + $0x8] sm:$0xff]
  %v4814 = vsel %vm295, %v4811, 0
  %v4817 = vsel %vm295, %v4812, 0
  %4819 = vmatprep.subr.mxu0 %v4754
  %4820 = vmatpush1.msra.mxu0 %v4753
  %4821 = vmatprep.subr.mxu0 %v4762
  %4822 = vmatpush1.msra.mxu0 %v4761
  %4823 = vmatprep.subr.mxu0 %v4770
  %4824 = vmatpush1.msra.mxu0 %v4769
  %4825 = vmatprep.subr.mxu0 %v4778
  %4826 = vmatpush1.msra.mxu0 %v4777
  %4827 = vmatprep.subr.mxu0 %v4742
  %4828 = vmatpush1.msra.mxu0 %v4740
  %4829 = vmatprep.subr.mxu0 %v4786
  %4830 = vmatpush1.msra.mxu0 %v4785
  %4831 = vmatprep.subr.mxu0 %v4794
  %4832 = vmatpush1.msra.mxu0 %v4793
  %4833 = vmatprep.subr.mxu0 %v4802
  %4834 = vmatpush1.msra.mxu0 %v4801
  %4835 = vmatprep.subr.mxu0 %v4810
  %4836 = vmatpush1.msra.mxu0 %v4809
  %4837 = vmatprep.subr.mxu0 %v301
  %4838 = vmatpush1.msra.mxu0 %v301
  %4839 = vmatprep.subr.mxu0 0.0
  %4840 = vmatpush1.msra.mxu0 0.0
  %4841 = vmatprep.subr.mxu0 0.0
  %4842 = vmatpush1.msra.mxu0 0.0
  %4843 = vmatprep.subr.mxu0 0.0
  %4844 = vmatpush1.msra.mxu0 0.0
  %4845 = vmatprep.subr.mxu0 0.0
  %4846 = vmatpush1.msra.mxu0 0.0
  %4847 = vmatprep.subr.mxu0 0.0
  %4848 = vmatpush1.msra.mxu0 0.0
  %4849 = vmatprep.subr.mxu0 0.0
  %4850 = vmatpush1.msra.mxu0 0.0
  %4851 = vmatprep.subr.mxu0 0.0
  %4852 = vmatpush1.msra.mxu0 0.0
  %4853 = vmatprep.subr.mxu0 0.0
  %4854 = vmatpush1.msra.mxu0 0.0
  %4855 = vmatprep.subr.mxu0 0.0
  %4856 = vmatpush1.msra.mxu0 0.0
  %4857 = vmatprep.subr.mxu0 0.0
  %4858 = vmatpush1.msra.mxu0 0.0
  %4859 = vmatprep.subr.mxu0 0.0
  %4860 = vmatpush1.msra.mxu0 0.0
  %4861 = vmatprep.subr.mxu0 0.0
  %4862 = vmatpush1.msra.mxu0 0.0
  %4863 = vmatprep.subr.mxu0 0.0
  %4864 = vmatpush1.msra.mxu0 0.0
  %4865 = vmatprep.subr.mxu0 0.0
  %4866 = vmatpush1.msra.mxu0 0.0
  %4867 = vmatprep.subr.mxu0 0.0
  %4868 = vmatpush1.msra.mxu0 0.0
  %4869 = vmatprep.subr.mxu0 0.0
  %4870 = vmatpush1.msra.mxu0 0.0
  %4871 = vmatprep.subr.mxu0 0.0
  %4872 = vmatpush1.msra.mxu0 0.0
  %4873 = vmatprep.subr.mxu0 0.0
  %4874 = vmatpush1.msra.mxu0 0.0
  %4875 = vmatprep.subr.mxu0 0.0
  %4876 = vmatpush1.msra.mxu0 0.0
  %4877 = vmatprep.subr.mxu0 0.0
  %4878 = vmatpush1.msra.mxu0 0.0
  %4879 = vmatprep.subr.mxu0 0.0
  %4880 = vmatpush1.msra.mxu0 0.0
  %4881 = vmatprep.subr.mxu0 0.0
  %4882 = vmatpush1.msra.mxu0 0.0
  %4883 = vmatprep.mubr.f32.mxu0 0.0
  %4884 = vmatmul.mubr.f32.gmra.mrb[0].mxu0 %v4814
  %v4885 = vpop.f32.mrb[0].mxu0
  %v4886 = vadd.f32 0.0, %v4885
  %v4887 = vpop.f32.mrb[0].mxu0
  %v4888 = vadd.f32 0.0, %v4887
  %4889 = vmatprep.mubr.f32.mxu0 0.0
  %4890 = vmatmul.mubr.f32.gmra.mrb[0].mxu0 %v4817
  %v4891 = vpop.f32.mrb[0].mxu0
  %v4892 = vadd.f32 0.0, %v4891
  %v4893 = vpop.f32.mrb[0].mxu0
  %v4894 = vadd.f32 0.0, %v4893
  %4895 = vdwg.mxu0
  %v4896 = vmax.f32 %v4886, 0.0
  %v4897 = vmax.f32 %v4888, 0.0
  %v4898 = vmax.f32 %v4892, 0.0
  %v4899 = vmax.f32 %v4894, 0.0
  %4900 = vrot.lane.b32.xlu0 %v4896, 17
  %v4901 = vpop.permute.xlu0 %4900
  %4902 = vrot.lane.b32.xlu0 %v4898, 17
  %v4903 = vpop.permute.xlu0 %4902
  %4904 = vrot.lane.b32.xlu0 %v4897, 17
  %v4905 = vpop.permute.xlu0 %4904
  %4906 = vrot.lane.b32.xlu0 %v4899, 17
  %v4907 = vpop.permute.xlu0 %4906
  %v4908 = vsel %vm138, %v4901, %v4905
  %v4909 = vsel %vm138, %v4903, %v4907
  %v4910 = vsel %vm138, %v4905, %v4901
  %v4911 = vsel %vm138, %v4907, %v4903
  %v4912 = vmul.f32 %v4910, %v145
  %v4913 = vmul.f32 %v4908, %v149
  %v4914 = vmul.f32 %v4911, %v145
  %v4915 = vmul.f32 %v4909, %v149
  %4916 = vrot.lane.b32.xlu0 %v4896, 16
  %v4917 = vpop.permute.xlu0 %4916
  %4918 = vrot.lane.b32.xlu0 %v4898, 16
  %v4919 = vpop.permute.xlu0 %4918
  %4920 = vrot.lane.b32.xlu0 %v4897, 16
  %v4921 = vpop.permute.xlu0 %4920
  %4922 = vrot.lane.b32.xlu0 %v4899, 16
  %v4923 = vpop.permute.xlu0 %4922
  %v4924 = vsel %vm158, %v4917, %v4921
  %v4925 = vsel %vm158, %v4919, %v4923
  %v4926 = vsel %vm158, %v4921, %v4917
  %v4927 = vsel %vm158, %v4923, %v4919
  %v4928 = vmul.f32 %v4926, %v165
  %v4929 = vmul.f32 %v4924, %v169
  %v4930 = vmul.f32 %v4927, %v165
  %v4931 = vmul.f32 %v4925, %v169
  %4932 = vrot.lane.b32.xlu0 %v4896, 15
  %v4933 = vpop.permute.xlu0 %4932
  %4934 = vrot.lane.b32.xlu0 %v4898, 15
  %v4935 = vpop.permute.xlu0 %4934
  %4936 = vrot.lane.b32.xlu0 %v4897, 15
  %v4937 = vpop.permute.xlu0 %4936
  %4938 = vrot.lane.b32.xlu0 %v4899, 15
  %v4939 = vpop.permute.xlu0 %4938
  %v4940 = vsel %vm178, %v4933, %v4937
  %v4941 = vsel %vm178, %v4935, %v4939
  %v4942 = vsel %vm178, %v4937, %v4933
  %v4943 = vsel %vm178, %v4939, %v4935
  %v4944 = vmul.f32 %v4942, %v185
  %v4945 = vmul.f32 %v4940, %v189
  %v4946 = vmul.f32 %v4943, %v185
  %v4947 = vmul.f32 %v4941, %v189
  %4948 = vrot.lane.b32.xlu0 %v4896, 1
  %v4949 = vpop.permute.xlu0 %4948
  %4950 = vrot.lane.b32.xlu0 %v4898, 1
  %v4951 = vpop.permute.xlu0 %4950
  %4952 = vrot.lane.b32.xlu0 %v4897, 1
  %v4953 = vpop.permute.xlu0 %4952
  %4954 = vrot.lane.b32.xlu0 %v4899, 1
  %v4955 = vpop.permute.xlu0 %4954
  %v4956 = vsel %vm198, %v4949, %v4953
  %v4957 = vsel %vm198, %v4951, %v4955
  %v4958 = vsel %vm198, %v4953, %v4949
  %v4959 = vsel %vm198, %v4955, %v4951
  %v4960 = vmul.f32 %v4958, %v205
  %v4961 = vmul.f32 %v4956, %v209
  %v4962 = vmul.f32 %v4959, %v205
  %v4963 = vmul.f32 %v4957, %v209
  %4964 = vrot.lane.b32.xlu0 %v4896, 127
  %v4965 = vpop.permute.xlu0 %4964
  %4966 = vrot.lane.b32.xlu0 %v4898, 127
  %v4967 = vpop.permute.xlu0 %4966
  %4968 = vrot.lane.b32.xlu0 %v4897, 127
  %v4969 = vpop.permute.xlu0 %4968
  %4970 = vrot.lane.b32.xlu0 %v4899, 127
  %v4971 = vpop.permute.xlu0 %4970
  %v4972 = vsel %vm218, %v4965, %v4969
  %v4973 = vsel %vm218, %v4967, %v4971
  %v4974 = vsel %vm218, %v4969, %v4965
  %v4975 = vsel %vm218, %v4971, %v4967
  %v4976 = vmul.f32 %v4972, %v225
  %v4977 = vmul.f32 %v4974, %v229
  %v4978 = vmul.f32 %v4973, %v225
  %v4979 = vmul.f32 %v4975, %v229
  %4980 = vrot.lane.b32.xlu0 %v4896, 113
  %v4981 = vpop.permute.xlu0 %4980
  %4982 = vrot.lane.b32.xlu0 %v4898, 113
  %v4983 = vpop.permute.xlu0 %4982
  %4984 = vrot.lane.b32.xlu0 %v4897, 113
  %v4985 = vpop.permute.xlu0 %4984
  %4986 = vrot.lane.b32.xlu0 %v4899, 113
  %v4987 = vpop.permute.xlu0 %4986
  %v4988 = vsel %vm238, %v4981, %v4985
  %v4989 = vsel %vm238, %v4983, %v4987
  %v4990 = vsel %vm238, %v4985, %v4981
  %v4991 = vsel %vm238, %v4987, %v4983
  %v4992 = vmul.f32 %v4988, %v245
  %v4993 = vmul.f32 %v4990, %v249
  %v4994 = vmul.f32 %v4989, %v245
  %v4995 = vmul.f32 %v4991, %v249
  %4996 = vrot.lane.b32.xlu0 %v4896, 112
  %v4997 = vpop.permute.xlu0 %4996
  %4998 = vrot.lane.b32.xlu0 %v4898, 112
  %v4999 = vpop.permute.xlu0 %4998
  %5000 = vrot.lane.b32.xlu0 %v4897, 112
  %v5001 = vpop.permute.xlu0 %5000
  %5002 = vrot.lane.b32.xlu0 %v4899, 112
  %v5003 = vpop.permute.xlu0 %5002
  %v5004 = vsel %vm258, %v4997, %v5001
  %v5005 = vsel %vm258, %v4999, %v5003
  %v5006 = vsel %vm258, %v5001, %v4997
  %v5007 = vsel %vm258, %v5003, %v4999
  %v5008 = vmul.f32 %v5004, %v265
  %v5009 = vmul.f32 %v5006, %v269
  %v5010 = vmul.f32 %v5005, %v265
  %v5011 = vmul.f32 %v5007, %v269
  %5012 = vrot.lane.b32.xlu0 %v4896, 111
  %v5013 = vpop.permute.xlu0 %5012
  %5014 = vrot.lane.b32.xlu0 %v4898, 111
  %v5015 = vpop.permute.xlu0 %5014
  %5016 = vrot.lane.b32.xlu0 %v4897, 111
  %v5017 = vpop.permute.xlu0 %5016
  %5018 = vrot.lane.b32.xlu0 %v4899, 111
  %v5019 = vpop.permute.xlu0 %5018
  %v5020 = vsel %vm278, %v5013, %v5017
  %v5021 = vsel %vm278, %v5015, %v5019
  %v5022 = vsel %vm278, %v5017, %v5013
  %v5023 = vsel %vm278, %v5019, %v5015
  %v5024 = vmul.f32 %v5020, %v285
  %v5025 = vmul.f32 %v5022, %v289
  %v5026 = vmul.f32 %v5021, %v285
  %v5027 = vmul.f32 %v5023, %v289
  %v5028 = vld [vmem:[%s33] sm:$0xf]
  %v5031 = vunpack.c.l.s4 1983009808
  %v5032 = vunpack.c.0.s8 %v5031
  %v5033 = vlaneseq
  %v5034 = vshrl.u32 %v5033, 7
  %v5035 = vsub.s32 %v5032, %v5034
  %v5036 = vrot.slane %v5028, %v5035
  %v5037 = vcombine.high %v5036, %v5036
  %v5039 = vsel %vm942, %v5037, 0
  %5041 = vmatprep.subr.mxu0 %v4913
  %5042 = vmatpush1.msra.mxu0 %v4912
  %5043 = vmatprep.subr.mxu0 %v4915
  %5044 = vmatpush1.msra.mxu0 %v4914
  %5045 = vmatprep.subr.mxu0 %v4929
  %5046 = vmatpush1.msra.mxu0 %v4928
  %5047 = vmatprep.subr.mxu0 %v4931
  %5048 = vmatpush1.msra.mxu0 %v4930
  %5049 = vmatprep.subr.mxu0 %v4945
  %5050 = vmatpush1.msra.mxu0 %v4944
  %5051 = vmatprep.subr.mxu0 %v4947
  %5052 = vmatpush1.msra.mxu0 %v4946
  %5053 = vmatprep.subr.mxu0 %v4961
  %5054 = vmatpush1.msra.mxu0 %v4960
  %5055 = vmatprep.subr.mxu0 %v4963
  %5056 = vmatpush1.msra.mxu0 %v4962
  %5057 = vmatprep.subr.mxu0 %v4897
  %5058 = vmatpush1.msra.mxu0 %v4896
  %5059 = vmatprep.subr.mxu0 %v4899
  %5060 = vmatpush1.msra.mxu0 %v4898
  %5061 = vmatprep.subr.mxu0 %v4977
  %5062 = vmatpush1.msra.mxu0 %v4976
  %5063 = vmatprep.subr.mxu0 %v4979
  %5064 = vmatpush1.msra.mxu0 %v4978
  %5065 = vmatprep.subr.mxu0 %v4993
  %5066 = vmatpush1.msra.mxu0 %v4992
  %5067 = vmatprep.subr.mxu0 %v4995
  %5068 = vmatpush1.msra.mxu0 %v4994
  %5069 = vmatprep.subr.mxu0 %v5009
  %5070 = vmatpush1.msra.mxu0 %v5008
  %5071 = vmatprep.subr.mxu0 %v5011
  %5072 = vmatpush1.msra.mxu0 %v5010
  %5073 = vmatprep.subr.mxu0 %v5025
  %5074 = vmatpush1.msra.mxu0 %v5024
  %5075 = vmatprep.subr.mxu0 %v5027
  %5076 = vmatpush1.msra.mxu0 %v5026
  %5077 = vmatprep.subr.mxu0 %v301
  %5078 = vmatpush1.msra.mxu0 %v301
  %5079 = vmatprep.subr.mxu0 0.0
  %5080 = vmatpush1.msra.mxu0 0.0
  %5081 = vmatprep.subr.mxu0 0.0
  %5082 = vmatpush1.msra.mxu0 0.0
  %5083 = vmatprep.subr.mxu0 0.0
  %5084 = vmatpush1.msra.mxu0 0.0
  %5085 = vmatprep.subr.mxu0 0.0
  %5086 = vmatpush1.msra.mxu0 0.0
  %5087 = vmatprep.subr.mxu0 0.0
  %5088 = vmatpush1.msra.mxu0 0.0
  %5089 = vmatprep.subr.mxu0 0.0
  %5090 = vmatpush1.msra.mxu0 0.0
  %5091 = vmatprep.subr.mxu0 0.0
  %5092 = vmatpush1.msra.mxu0 0.0
  %5093 = vmatprep.subr.mxu0 0.0
  %5094 = vmatpush1.msra.mxu0 0.0
  %5095 = vmatprep.subr.mxu0 0.0
  %5096 = vmatpush1.msra.mxu0 0.0
  %5097 = vmatprep.subr.mxu0 0.0
  %5098 = vmatpush1.msra.mxu0 0.0
  %5099 = vmatprep.subr.mxu0 0.0
  %5100 = vmatpush1.msra.mxu0 0.0
  %5101 = vmatprep.subr.mxu0 0.0
  %5102 = vmatpush1.msra.mxu0 0.0
  %5103 = vmatprep.subr.mxu0 0.0
  %5104 = vmatpush1.msra.mxu0 0.0
  %5105 = vmatprep.mubr.f32.mxu0 %v5039
  %5106 = vmatmul.mubr.f32.gmra.mrb[0].mxu0 %v5036
  %v5107 = vpop.f32.mrb[0].mxu0
  %v5108 = vadd.f32 0.0, %v5107
  %v5109 = vpop.f32.mrb[0].mxu0
  %v5110 = vadd.f32 0.0, %v5109
  %5111 = vdwg.mxu0
  %v5114 = vcombine.low %v5108, %v5110
  %v5116 = vunpack.c.l.s4 1983009808
  %v5117 = vunpack.c.0.s8 %v5116
  %v5118 = vlaneseq
  %v5119 = vshrl.u32 %v5118, 7
  %v5120 = vsub.s32 %v5117, %v5119
  %v5121 = vrot.slane %v5114, %v5120
  %s5123 = scalar_lea.vmem %s59, 4
  %5124 = vst [vmem:[%s5123] sm:$0xf] %v5121
  %5125 = vrot.lane.b32.xlu0 %v3923, 17
  %v5126 = vpop.permute.xlu0 %5125
  %5127 = vrot.lane.b32.xlu0 %v3924, 17
  %v5128 = vpop.permute.xlu0 %5127
  %v5129 = vsel %vm138, %v5126, %v5128
  %v5130 = vsel %vm138, %v5128, %v5126
  %v5131 = vmul.f32 %v5130, %v145
  %v5132 = vmul.f32 %v5129, %v149
  %5133 = vrot.lane.b32.xlu0 %v3923, 16
  %v5134 = vpop.permute.xlu0 %5133
  %5135 = vrot.lane.b32.xlu0 %v3924, 16
  %v5136 = vpop.permute.xlu0 %5135
  %v5137 = vsel %vm158, %v5134, %v5136
  %v5138 = vsel %vm158, %v5136, %v5134
  %v5139 = vmul.f32 %v5138, %v165
  %v5140 = vmul.f32 %v5137, %v169
  %5141 = vrot.lane.b32.xlu0 %v3923, 15
  %v5142 = vpop.permute.xlu0 %5141
  %5143 = vrot.lane.b32.xlu0 %v3924, 15
  %v5144 = vpop.permute.xlu0 %5143
  %v5145 = vsel %vm178, %v5142, %v5144
  %v5146 = vsel %vm178, %v5144, %v5142
  %v5147 = vmul.f32 %v5146, %v185
  %v5148 = vmul.f32 %v5145, %v189
  %5149 = vrot.lane.b32.xlu0 %v3923, 1
  %v5150 = vpop.permute.xlu0 %5149
  %5151 = vrot.lane.b32.xlu0 %v3924, 1
  %v5152 = vpop.permute.xlu0 %5151
  %v5153 = vsel %vm198, %v5150, %v5152
  %v5154 = vsel %vm198, %v5152, %v5150
  %v5155 = vmul.f32 %v5154, %v205
  %v5156 = vmul.f32 %v5153, %v209
  %5157 = vrot.lane.b32.xlu0 %v3923, 127
  %v5158 = vpop.permute.xlu0 %5157
  %5159 = vrot.lane.b32.xlu0 %v3924, 127
  %v5160 = vpop.permute.xlu0 %5159
  %v5161 = vsel %vm218, %v5158, %v5160
  %v5162 = vsel %vm218, %v5160, %v5158
  %v5163 = vmul.f32 %v5161, %v225
  %v5164 = vmul.f32 %v5162, %v229
  %5165 = vrot.lane.b32.xlu0 %v3923, 113
  %v5166 = vpop.permute.xlu0 %5165
  %5167 = vrot.lane.b32.xlu0 %v3924, 113
  %v5168 = vpop.permute.xlu0 %5167
  %v5169 = vsel %vm238, %v5166, %v5168
  %v5170 = vsel %vm238, %v5168, %v5166
  %v5171 = vmul.f32 %v5169, %v245
  %v5172 = vmul.f32 %v5170, %v249
  %5173 = vrot.lane.b32.xlu0 %v3923, 112
  %v5174 = vpop.permute.xlu0 %5173
  %5175 = vrot.lane.b32.xlu0 %v3924, 112
  %v5176 = vpop.permute.xlu0 %5175
  %v5177 = vsel %vm258, %v5174, %v5176
  %v5178 = vsel %vm258, %v5176, %v5174
  %v5179 = vmul.f32 %v5177, %v265
  %v5180 = vmul.f32 %v5178, %v269
  %5181 = vrot.lane.b32.xlu0 %v3923, 111
  %v5182 = vpop.permute.xlu0 %5181
  %5183 = vrot.lane.b32.xlu0 %v3924, 111
  %v5184 = vpop.permute.xlu0 %5183
  %v5185 = vsel %vm278, %v5182, %v5184
  %v5186 = vsel %vm278, %v5184, %v5182
  %v5187 = vmul.f32 %v5185, %v285
  %v5188 = vmul.f32 %v5186, %v289
  %v5189 = vld [vmem:[%s27] sm:$0xff]
  %v5191 = vsel %vm295, %v5189, 0
  %5193 = vmatprep.subr.mxu0 %v5132
  %5194 = vmatpush1.msra.mxu0 %v5131
  %5195 = vmatprep.subr.mxu0 %v5140
  %5196 = vmatpush1.msra.mxu0 %v5139
  %5197 = vmatprep.subr.mxu0 %v5148
  %5198 = vmatpush1.msra.mxu0 %v5147
  %5199 = vmatprep.subr.mxu0 %v5156
  %5200 = vmatpush1.msra.mxu0 %v5155
  %5201 = vmatprep.subr.mxu0 %v3924
  %5202 = vmatpush1.msra.mxu0 %v3923
  %5203 = vmatprep.subr.mxu0 %v5164
  %5204 = vmatpush1.msra.mxu0 %v5163
  %5205 = vmatprep.subr.mxu0 %v5172
  %5206 = vmatpush1.msra.mxu0 %v5171
  %5207 = vmatprep.subr.mxu0 %v5180
  %5208 = vmatpush1.msra.mxu0 %v5179
  %5209 = vmatprep.subr.mxu0 %v5188
  %5210 = vmatpush1.msra.mxu0 %v5187
  %5211 = vmatprep.subr.mxu0 %v301
  %5212 = vmatpush1.msra.mxu0 %v301
  %5213 = vmatprep.subr.mxu0 0.0
  %5214 = vmatpush1.msra.mxu0 0.0
  %5215 = vmatprep.subr.mxu0 0.0
  %5216 = vmatpush1.msra.mxu0 0.0
  %5217 = vmatprep.subr.mxu0 0.0
  %5218 = vmatpush1.msra.mxu0 0.0
  %5219 = vmatprep.subr.mxu0 0.0
  %5220 = vmatpush1.msra.mxu0 0.0
  %5221 = vmatprep.subr.mxu0 0.0
  %5222 = vmatpush1.msra.mxu0 0.0
  %5223 = vmatprep.subr.mxu0 0.0
  %5224 = vmatpush1.msra.mxu0 0.0
  %5225 = vmatprep.subr.mxu0 0.0
  %5226 = vmatpush1.msra.mxu0 0.0
  %5227 = vmatprep.subr.mxu0 0.0
  %5228 = vmatpush1.msra.mxu0 0.0
  %5229 = vmatprep.subr.mxu0 0.0
  %5230 = vmatpush1.msra.mxu0 0.0
  %5231 = vmatprep.subr.mxu0 0.0
  %5232 = vmatpush1.msra.mxu0 0.0
  %5233 = vmatprep.subr.mxu0 0.0
  %5234 = vmatpush1.msra.mxu0 0.0
  %5235 = vmatprep.subr.mxu0 0.0
  %5236 = vmatpush1.msra.mxu0 0.0
  %5237 = vmatprep.subr.mxu0 0.0
  %5238 = vmatpush1.msra.mxu0 0.0
  %5239 = vmatprep.subr.mxu0 0.0
  %5240 = vmatpush1.msra.mxu0 0.0
  %5241 = vmatprep.subr.mxu0 0.0
  %5242 = vmatpush1.msra.mxu0 0.0
  %5243 = vmatprep.subr.mxu0 0.0
  %5244 = vmatpush1.msra.mxu0 0.0
  %5245 = vmatprep.subr.mxu0 0.0
  %5246 = vmatpush1.msra.mxu0 0.0
  %5247 = vmatprep.subr.mxu0 0.0
  %5248 = vmatpush1.msra.mxu0 0.0
  %5249 = vmatprep.subr.mxu0 0.0
  %5250 = vmatpush1.msra.mxu0 0.0
  %5251 = vmatprep.subr.mxu0 0.0
  %5252 = vmatpush1.msra.mxu0 0.0
  %5253 = vmatprep.subr.mxu0 0.0
  %5254 = vmatpush1.msra.mxu0 0.0
  %5255 = vmatprep.subr.mxu0 0.0
  %5256 = vmatpush1.msra.mxu0 0.0
  %5257 = vmatprep.mubr.f32.mxu0 0.0
  %5258 = vmatmul.mubr.f32.gmra.mrb[0].mxu0 %v5191
  %v5259 = vpop.f32.mrb[0].mxu0
  %v5260 = vadd.f32 0.0, %v5259
  %v5261 = vpop.f32.mrb[0].mxu0
  %v5262 = vadd.f32 0.0, %v5261
  %5263 = vdwg.mxu0
  %vm5264 = vcmp.gt.f32.partialorder %v5260, 0.0
  %vm5265 = vcmp.gt.f32.partialorder %v5262, 0.0
  %v5266 = vmul.f32 %v5260, 0.2
  %v5267 = vmul.f32 %v5262, 0.2
  %v5268 = vsel %vm5264, %v5260, %v5266
  %v5269 = vsel %vm5265, %v5262, %v5267
  %5270 = vrot.lane.b32.xlu0 %v5268, 17
  %v5271 = vpop.permute.xlu0 %5270
  %5272 = vrot.lane.b32.xlu0 %v5269, 17
  %v5273 = vpop.permute.xlu0 %5272
  %v5274 = vsel %vm138, %v5271, %v5273
  %v5275 = vsel %vm138, %v5273, %v5271
  %v5276 = vmul.f32 %v5275, %v145
  %v5277 = vmul.f32 %v5274, %v149
  %5278 = vrot.lane.b32.xlu0 %v5268, 16
  %v5279 = vpop.permute.xlu0 %5278
  %5280 = vrot.lane.b32.xlu0 %v5269, 16
  %v5281 = vpop.permute.xlu0 %5280
  %v5282 = vsel %vm158, %v5279, %v5281
  %v5283 = vsel %vm158, %v5281, %v5279
  %v5284 = vmul.f32 %v5283, %v165
  %v5285 = vmul.f32 %v5282, %v169
  %5286 = vrot.lane.b32.xlu0 %v5268, 15
  %v5287 = vpop.permute.xlu0 %5286
  %5288 = vrot.lane.b32.xlu0 %v5269, 15
  %v5289 = vpop.permute.xlu0 %5288
  %v5290 = vsel %vm178, %v5287, %v5289
  %v5291 = vsel %vm178, %v5289, %v5287
  %v5292 = vmul.f32 %v5291, %v185
  %v5293 = vmul.f32 %v5290, %v189
  %5294 = vrot.lane.b32.xlu0 %v5268, 1
  %v5295 = vpop.permute.xlu0 %5294
  %5296 = vrot.lane.b32.xlu0 %v5269, 1
  %v5297 = vpop.permute.xlu0 %5296
  %v5298 = vsel %vm198, %v5295, %v5297
  %v5299 = vsel %vm198, %v5297, %v5295
  %v5300 = vmul.f32 %v5299, %v205
  %v5301 = vmul.f32 %v5298, %v209
  %5302 = vrot.lane.b32.xlu0 %v5268, 127
  %v5303 = vpop.permute.xlu0 %5302
  %5304 = vrot.lane.b32.xlu0 %v5269, 127
  %v5305 = vpop.permute.xlu0 %5304
  %v5306 = vsel %vm218, %v5303, %v5305
  %v5307 = vsel %vm218, %v5305, %v5303
  %v5308 = vmul.f32 %v5306, %v225
  %v5309 = vmul.f32 %v5307, %v229
  %5310 = vrot.lane.b32.xlu0 %v5268, 113
  %v5311 = vpop.permute.xlu0 %5310
  %5312 = vrot.lane.b32.xlu0 %v5269, 113
  %v5313 = vpop.permute.xlu0 %5312
  %v5314 = vsel %vm238, %v5311, %v5313
  %v5315 = vsel %vm238, %v5313, %v5311
  %v5316 = vmul.f32 %v5314, %v245
  %v5317 = vmul.f32 %v5315, %v249
  %5318 = vrot.lane.b32.xlu0 %v5268, 112
  %v5319 = vpop.permute.xlu0 %5318
  %5320 = vrot.lane.b32.xlu0 %v5269, 112
  %v5321 = vpop.permute.xlu0 %5320
  %v5322 = vsel %vm258, %v5319, %v5321
  %v5323 = vsel %vm258, %v5321, %v5319
  %v5324 = vmul.f32 %v5322, %v265
  %v5325 = vmul.f32 %v5323, %v269
  %5326 = vrot.lane.b32.xlu0 %v5268, 111
  %v5327 = vpop.permute.xlu0 %5326
  %5328 = vrot.lane.b32.xlu0 %v5269, 111
  %v5329 = vpop.permute.xlu0 %5328
  %v5330 = vsel %vm278, %v5327, %v5329
  %v5331 = vsel %vm278, %v5329, %v5327
  %v5332 = vmul.f32 %v5330, %v285
  %v5333 = vmul.f32 %v5331, %v289
  %v5334 = vld [vmem:[%s29] sm:$0xff]
  %v5336 = vsel %vm295, %v5334, 0
  %5338 = vmatprep.subr.mxu0 %v5277
  %5339 = vmatpush1.msra.mxu0 %v5276
  %5340 = vmatprep.subr.mxu0 %v5285
  %5341 = vmatpush1.msra.mxu0 %v5284
  %5342 = vmatprep.subr.mxu0 %v5293
  %5343 = vmatpush1.msra.mxu0 %v5292
  %5344 = vmatprep.subr.mxu0 %v5301
  %5345 = vmatpush1.msra.mxu0 %v5300
  %5346 = vmatprep.subr.mxu0 %v5269
  %5347 = vmatpush1.msra.mxu0 %v5268
  %5348 = vmatprep.subr.mxu0 %v5309
  %5349 = vmatpush1.msra.mxu0 %v5308
  %5350 = vmatprep.subr.mxu0 %v5317
  %5351 = vmatpush1.msra.mxu0 %v5316
  %5352 = vmatprep.subr.mxu0 %v5325
  %5353 = vmatpush1.msra.mxu0 %v5324
  %5354 = vmatprep.subr.mxu0 %v5333
  %5355 = vmatpush1.msra.mxu0 %v5332
  %5356 = vmatprep.subr.mxu0 %v301
  %5357 = vmatpush1.msra.mxu0 %v301
  %5358 = vmatprep.subr.mxu0 0.0
  %5359 = vmatpush1.msra.mxu0 0.0
  %5360 = vmatprep.subr.mxu0 0.0
  %5361 = vmatpush1.msra.mxu0 0.0
  %5362 = vmatprep.subr.mxu0 0.0
  %5363 = vmatpush1.msra.mxu0 0.0
  %5364 = vmatprep.subr.mxu0 0.0
  %5365 = vmatpush1.msra.mxu0 0.0
  %5366 = vmatprep.subr.mxu0 0.0
  %5367 = vmatpush1.msra.mxu0 0.0
  %5368 = vmatprep.subr.mxu0 0.0
  %5369 = vmatpush1.msra.mxu0 0.0
  %5370 = vmatprep.subr.mxu0 0.0
  %5371 = vmatpush1.msra.mxu0 0.0
  %5372 = vmatprep.subr.mxu0 0.0
  %5373 = vmatpush1.msra.mxu0 0.0
  %5374 = vmatprep.subr.mxu0 0.0
  %5375 = vmatpush1.msra.mxu0 0.0
  %5376 = vmatprep.subr.mxu0 0.0
  %5377 = vmatpush1.msra.mxu0 0.0
  %5378 = vmatprep.subr.mxu0 0.0
  %5379 = vmatpush1.msra.mxu0 0.0
  %5380 = vmatprep.subr.mxu0 0.0
  %5381 = vmatpush1.msra.mxu0 0.0
  %5382 = vmatprep.subr.mxu0 0.0
  %5383 = vmatpush1.msra.mxu0 0.0
  %5384 = vmatprep.subr.mxu0 0.0
  %5385 = vmatpush1.msra.mxu0 0.0
  %5386 = vmatprep.subr.mxu0 0.0
  %5387 = vmatpush1.msra.mxu0 0.0
  %5388 = vmatprep.subr.mxu0 0.0
  %5389 = vmatpush1.msra.mxu0 0.0
  %5390 = vmatprep.subr.mxu0 0.0
  %5391 = vmatpush1.msra.mxu0 0.0
  %5392 = vmatprep.subr.mxu0 0.0
  %5393 = vmatpush1.msra.mxu0 0.0
  %5394 = vmatprep.subr.mxu0 0.0
  %5395 = vmatpush1.msra.mxu0 0.0
  %5396 = vmatprep.subr.mxu0 0.0
  %5397 = vmatpush1.msra.mxu0 0.0
  %5398 = vmatprep.subr.mxu0 0.0
  %5399 = vmatpush1.msra.mxu0 0.0
  %5400 = vmatprep.subr.mxu0 0.0
  %5401 = vmatpush1.msra.mxu0 0.0
  %5402 = vmatprep.mubr.f32.mxu0 0.0
  %5403 = vmatmul.mubr.f32.gmra.mrb[0].mxu0 %v5336
  %v5404 = vpop.f32.mrb[0].mxu0
  %v5405 = vadd.f32 0.0, %v5404
  %v5406 = vpop.f32.mrb[0].mxu0
  %v5407 = vadd.f32 0.0, %v5406
  %5408 = vdwg.mxu0
  %s5409 = scalar_lea.vmem %s57, 32
  %5410 = vst [vmem:[%s5409] sm:$0xff] %v5405
  %5411 = vst [vmem:[%s5409 + $0x8] sm:$0xff] %v5407
  %5412 = vrot.lane.b32.xlu0 %v5405, 17
  %v5413 = vpop.permute.xlu0 %5412
  %5414 = vrot.lane.b32.xlu0 %v5407, 17
  %v5415 = vpop.permute.xlu0 %5414
  %v5416 = vsel %vm138, %v5413, %v5415
  %v5417 = vsel %vm138, %v5415, %v5413
  %v5418 = vmul.f32 %v5417, %v145
  %v5419 = vmul.f32 %v5416, %v149
  %5420 = vrot.lane.b32.xlu0 %v5405, 16
  %v5421 = vpop.permute.xlu0 %5420
  %5422 = vrot.lane.b32.xlu0 %v5407, 16
  %v5423 = vpop.permute.xlu0 %5422
  %v5424 = vsel %vm158, %v5421, %v5423
  %v5425 = vsel %vm158, %v5423, %v5421
  %v5426 = vmul.f32 %v5425, %v165
  %v5427 = vmul.f32 %v5424, %v169
  %5428 = vrot.lane.b32.xlu0 %v5405, 15
  %v5429 = vpop.permute.xlu0 %5428
  %5430 = vrot.lane.b32.xlu0 %v5407, 15
  %v5431 = vpop.permute.xlu0 %5430
  %v5432 = vsel %vm178, %v5429, %v5431
  %v5433 = vsel %vm178, %v5431, %v5429
  %v5434 = vmul.f32 %v5433, %v185
  %v5435 = vmul.f32 %v5432, %v189
  %5436 = vrot.lane.b32.xlu0 %v5405, 1
  %v5437 = vpop.permute.xlu0 %5436
  %5438 = vrot.lane.b32.xlu0 %v5407, 1
  %v5439 = vpop.permute.xlu0 %5438
  %v5440 = vsel %vm198, %v5437, %v5439
  %v5441 = vsel %vm198, %v5439, %v5437
  %v5442 = vmul.f32 %v5441, %v205
  %v5443 = vmul.f32 %v5440, %v209
  %5444 = vrot.lane.b32.xlu0 %v5405, 127
  %v5445 = vpop.permute.xlu0 %5444
  %5446 = vrot.lane.b32.xlu0 %v5407, 127
  %v5447 = vpop.permute.xlu0 %5446
  %v5448 = vsel %vm218, %v5445, %v5447
  %v5449 = vsel %vm218, %v5447, %v5445
  %v5450 = vmul.f32 %v5448, %v225
  %v5451 = vmul.f32 %v5449, %v229
  %5452 = vrot.lane.b32.xlu0 %v5405, 113
  %v5453 = vpop.permute.xlu0 %5452
  %5454 = vrot.lane.b32.xlu0 %v5407, 113
  %v5455 = vpop.permute.xlu0 %5454
  %v5456 = vsel %vm238, %v5453, %v5455
  %v5457 = vsel %vm238, %v5455, %v5453
  %v5458 = vmul.f32 %v5456, %v245
  %v5459 = vmul.f32 %v5457, %v249
  %5460 = vrot.lane.b32.xlu0 %v5405, 112
  %v5461 = vpop.permute.xlu0 %5460
  %5462 = vrot.lane.b32.xlu0 %v5407, 112
  %v5463 = vpop.permute.xlu0 %5462
  %v5464 = vsel %vm258, %v5461, %v5463
  %v5465 = vsel %vm258, %v5463, %v5461
  %v5466 = vmul.f32 %v5464, %v265
  %v5467 = vmul.f32 %v5465, %v269
  %5468 = vrot.lane.b32.xlu0 %v5405, 111
  %v5469 = vpop.permute.xlu0 %5468
  %5470 = vrot.lane.b32.xlu0 %v5407, 111
  %v5471 = vpop.permute.xlu0 %5470
  %v5472 = vsel %vm278, %v5469, %v5471
  %v5473 = vsel %vm278, %v5471, %v5469
  %v5474 = vmul.f32 %v5472, %v285
  %v5475 = vmul.f32 %v5473, %v289
  %v5476 = vld [vmem:[%s31] sm:$0xff]
  %v5477 = vld [vmem:[%s31 + $0x8] sm:$0xff]
  %v5479 = vsel %vm295, %v5476, 0
  %v5482 = vsel %vm295, %v5477, 0
  %5484 = vmatprep.subr.mxu0 %v5419
  %5485 = vmatpush1.msra.mxu0 %v5418
  %5486 = vmatprep.subr.mxu0 %v5427
  %5487 = vmatpush1.msra.mxu0 %v5426
  %5488 = vmatprep.subr.mxu0 %v5435
  %5489 = vmatpush1.msra.mxu0 %v5434
  %5490 = vmatprep.subr.mxu0 %v5443
  %5491 = vmatpush1.msra.mxu0 %v5442
  %5492 = vmatprep.subr.mxu0 %v5407
  %5493 = vmatpush1.msra.mxu0 %v5405
  %5494 = vmatprep.subr.mxu0 %v5451
  %5495 = vmatpush1.msra.mxu0 %v5450
  %5496 = vmatprep.subr.mxu0 %v5459
  %5497 = vmatpush1.msra.mxu0 %v5458
  %5498 = vmatprep.subr.mxu0 %v5467
  %5499 = vmatpush1.msra.mxu0 %v5466
  %5500 = vmatprep.subr.mxu0 %v5475
  %5501 = vmatpush1.msra.mxu0 %v5474
  %5502 = vmatprep.subr.mxu0 %v301
  %5503 = vmatpush1.msra.mxu0 %v301
  %5504 = vmatprep.subr.mxu0 0.0
  %5505 = vmatpush1.msra.mxu0 0.0
  %5506 = vmatprep.subr.mxu0 0.0
  %5507 = vmatpush1.msra.mxu0 0.0
  %5508 = vmatprep.subr.mxu0 0.0
  %5509 = vmatpush1.msra.mxu0 0.0
  %5510 = vmatprep.subr.mxu0 0.0
  %5511 = vmatpush1.msra.mxu0 0.0
  %5512 = vmatprep.subr.mxu0 0.0
  %5513 = vmatpush1.msra.mxu0 0.0
  %5514 = vmatprep.subr.mxu0 0.0
  %5515 = vmatpush1.msra.mxu0 0.0
  %5516 = vmatprep.subr.mxu0 0.0
  %5517 = vmatpush1.msra.mxu0 0.0
  %5518 = vmatprep.subr.mxu0 0.0
  %5519 = vmatpush1.msra.mxu0 0.0
  %5520 = vmatprep.subr.mxu0 0.0
  %5521 = vmatpush1.msra.mxu0 0.0
  %5522 = vmatprep.subr.mxu0 0.0
  %5523 = vmatpush1.msra.mxu0 0.0
  %5524 = vmatprep.subr.mxu0 0.0
  %5525 = vmatpush1.msra.mxu0 0.0
  %5526 = vmatprep.subr.mxu0 0.0
  %5527 = vmatpush1.msra.mxu0 0.0
  %5528 = vmatprep.subr.mxu0 0.0
  %5529 = vmatpush1.msra.mxu0 0.0
  %5530 = vmatprep.subr.mxu0 0.0
  %5531 = vmatpush1.msra.mxu0 0.0
  %5532 = vmatprep.subr.mxu0 0.0
  %5533 = vmatpush1.msra.mxu0 0.0
  %5534 = vmatprep.subr.mxu0 0.0
  %5535 = vmatpush1.msra.mxu0 0.0
  %5536 = vmatprep.subr.mxu0 0.0
  %5537 = vmatpush1.msra.mxu0 0.0
  %5538 = vmatprep.subr.mxu0 0.0
  %5539 = vmatpush1.msra.mxu0 0.0
  %5540 = vmatprep.subr.mxu0 0.0
  %5541 = vmatpush1.msra.mxu0 0.0
  %5542 = vmatprep.subr.mxu0 0.0
  %5543 = vmatpush1.msra.mxu0 0.0
  %5544 = vmatprep.subr.mxu0 0.0
  %5545 = vmatpush1.msra.mxu0 0.0
  %5546 = vmatprep.subr.mxu0 0.0
  %5547 = vmatpush1.msra.mxu0 0.0
  %5548 = vmatprep.mubr.f32.mxu0 0.0
  %5549 = vmatmul.mubr.f32.gmra.mrb[0].mxu0 %v5479
  %v5550 = vpop.f32.mrb[0].mxu0
  %v5551 = vadd.f32 0.0, %v5550
  %v5552 = vpop.f32.mrb[0].mxu0
  %v5553 = vadd.f32 0.0, %v5552
  %5554 = vmatprep.mubr.f32.mxu0 0.0
  %5555 = vmatmul.mubr.f32.gmra.mrb[0].mxu0 %v5482
  %v5556 = vpop.f32.mrb[0].mxu0
  %v5557 = vadd.f32 0.0, %v5556
  %v5558 = vpop.f32.mrb[0].mxu0
  %v5559 = vadd.f32 0.0, %v5558
  %5560 = vdwg.mxu0
  %v5561 = vmax.f32 %v5551, 0.0
  %v5562 = vmax.f32 %v5553, 0.0
  %v5563 = vmax.f32 %v5557, 0.0
  %v5564 = vmax.f32 %v5559, 0.0
  %5565 = vrot.lane.b32.xlu0 %v5561, 17
  %v5566 = vpop.permute.xlu0 %5565
  %5567 = vrot.lane.b32.xlu0 %v5563, 17
  %v5568 = vpop.permute.xlu0 %5567
  %5569 = vrot.lane.b32.xlu0 %v5562, 17
  %v5570 = vpop.permute.xlu0 %5569
  %5571 = vrot.lane.b32.xlu0 %v5564, 17
  %v5572 = vpop.permute.xlu0 %5571
  %v5573 = vsel %vm138, %v5566, %v5570
  %v5574 = vsel %vm138, %v5568, %v5572
  %v5575 = vsel %vm138, %v5570, %v5566
  %v5576 = vsel %vm138, %v5572, %v5568
  %v5577 = vmul.f32 %v5575, %v145
  %v5578 = vmul.f32 %v5573, %v149
  %v5579 = vmul.f32 %v5576, %v145
  %v5580 = vmul.f32 %v5574, %v149
  %5581 = vrot.lane.b32.xlu0 %v5561, 16
  %v5582 = vpop.permute.xlu0 %5581
  %5583 = vrot.lane.b32.xlu0 %v5563, 16
  %v5584 = vpop.permute.xlu0 %5583
  %5585 = vrot.lane.b32.xlu0 %v5562, 16
  %v5586 = vpop.permute.xlu0 %5585
  %5587 = vrot.lane.b32.xlu0 %v5564, 16
  %v5588 = vpop.permute.xlu0 %5587
  %v5589 = vsel %vm158, %v5582, %v5586
  %v5590 = vsel %vm158, %v5584, %v5588
  %v5591 = vsel %vm158, %v5586, %v5582
  %v5592 = vsel %vm158, %v5588, %v5584
  %v5593 = vmul.f32 %v5591, %v165
  %v5594 = vmul.f32 %v5589, %v169
  %v5595 = vmul.f32 %v5592, %v165
  %v5596 = vmul.f32 %v5590, %v169
  %5597 = vrot.lane.b32.xlu0 %v5561, 15
  %v5598 = vpop.permute.xlu0 %5597
  %5599 = vrot.lane.b32.xlu0 %v5563, 15
  %v5600 = vpop.permute.xlu0 %5599
  %5601 = vrot.lane.b32.xlu0 %v5562, 15
  %v5602 = vpop.permute.xlu0 %5601
  %5603 = vrot.lane.b32.xlu0 %v5564, 15
  %v5604 = vpop.permute.xlu0 %5603
  %v5605 = vsel %vm178, %v5598, %v5602
  %v5606 = vsel %vm178, %v5600, %v5604
  %v5607 = vsel %vm178, %v5602, %v5598
  %v5608 = vsel %vm178, %v5604, %v5600
  %v5609 = vmul.f32 %v5607, %v185
  %v5610 = vmul.f32 %v5605, %v189
  %v5611 = vmul.f32 %v5608, %v185
  %v5612 = vmul.f32 %v5606, %v189
  %5613 = vrot.lane.b32.xlu0 %v5561, 1
  %v5614 = vpop.permute.xlu0 %5613
  %5615 = vrot.lane.b32.xlu0 %v5563, 1
  %v5616 = vpop.permute.xlu0 %5615
  %5617 = vrot.lane.b32.xlu0 %v5562, 1
  %v5618 = vpop.permute.xlu0 %5617
  %5619 = vrot.lane.b32.xlu0 %v5564, 1
  %v5620 = vpop.permute.xlu0 %5619
  %v5621 = vsel %vm198, %v5614, %v5618
  %v5622 = vsel %vm198, %v5616, %v5620
  %v5623 = vsel %vm198, %v5618, %v5614
  %v5624 = vsel %vm198, %v5620, %v5616
  %v5625 = vmul.f32 %v5623, %v205
  %v5626 = vmul.f32 %v5621, %v209
  %v5627 = vmul.f32 %v5624, %v205
  %v5628 = vmul.f32 %v5622, %v209
  %5629 = vrot.lane.b32.xlu0 %v5561, 127
  %v5630 = vpop.permute.xlu0 %5629
  %5631 = vrot.lane.b32.xlu0 %v5563, 127
  %v5632 = vpop.permute.xlu0 %5631
  %5633 = vrot.lane.b32.xlu0 %v5562, 127
  %v5634 = vpop.permute.xlu0 %5633
  %5635 = vrot.lane.b32.xlu0 %v5564, 127
  %v5636 = vpop.permute.xlu0 %5635
  %v5637 = vsel %vm218, %v5630, %v5634
  %v5638 = vsel %vm218, %v5632, %v5636
  %v5639 = vsel %vm218, %v5634, %v5630
  %v5640 = vsel %vm218, %v5636, %v5632
  %v5641 = vmul.f32 %v5637, %v225
  %v5642 = vmul.f32 %v5639, %v229
  %v5643 = vmul.f32 %v5638, %v225
  %v5644 = vmul.f32 %v5640, %v229
  %5645 = vrot.lane.b32.xlu0 %v5561, 113
  %v5646 = vpop.permute.xlu0 %5645
  %5647 = vrot.lane.b32.xlu0 %v5563, 113
  %v5648 = vpop.permute.xlu0 %5647
  %5649 = vrot.lane.b32.xlu0 %v5562, 113
  %v5650 = vpop.permute.xlu0 %5649
  %5651 = vrot.lane.b32.xlu0 %v5564, 113
  %v5652 = vpop.permute.xlu0 %5651
  %v5653 = vsel %vm238, %v5646, %v5650
  %v5654 = vsel %vm238, %v5648, %v5652
  %v5655 = vsel %vm238, %v5650, %v5646
  %v5656 = vsel %vm238, %v5652, %v5648
  %v5657 = vmul.f32 %v5653, %v245
  %v5658 = vmul.f32 %v5655, %v249
  %v5659 = vmul.f32 %v5654, %v245
  %v5660 = vmul.f32 %v5656, %v249
  %5661 = vrot.lane.b32.xlu0 %v5561, 112
  %v5662 = vpop.permute.xlu0 %5661
  %5663 = vrot.lane.b32.xlu0 %v5563, 112
  %v5664 = vpop.permute.xlu0 %5663
  %5665 = vrot.lane.b32.xlu0 %v5562, 112
  %v5666 = vpop.permute.xlu0 %5665
  %5667 = vrot.lane.b32.xlu0 %v5564, 112
  %v5668 = vpop.permute.xlu0 %5667
  %v5669 = vsel %vm258, %v5662, %v5666
  %v5670 = vsel %vm258, %v5664, %v5668
  %v5671 = vsel %vm258, %v5666, %v5662
  %v5672 = vsel %vm258, %v5668, %v5664
  %v5673 = vmul.f32 %v5669, %v265
  %v5674 = vmul.f32 %v5671, %v269
  %v5675 = vmul.f32 %v5670, %v265
  %v5676 = vmul.f32 %v5672, %v269
  %5677 = vrot.lane.b32.xlu0 %v5561, 111
  %v5678 = vpop.permute.xlu0 %5677
  %5679 = vrot.lane.b32.xlu0 %v5563, 111
  %v5680 = vpop.permute.xlu0 %5679
  %5681 = vrot.lane.b32.xlu0 %v5562, 111
  %v5682 = vpop.permute.xlu0 %5681
  %5683 = vrot.lane.b32.xlu0 %v5564, 111
  %v5684 = vpop.permute.xlu0 %5683
  %v5685 = vsel %vm278, %v5678, %v5682
  %v5686 = vsel %vm278, %v5680, %v5684
  %v5687 = vsel %vm278, %v5682, %v5678
  %v5688 = vsel %vm278, %v5684, %v5680
  %v5689 = vmul.f32 %v5685, %v285
  %v5690 = vmul.f32 %v5687, %v289
  %v5691 = vmul.f32 %v5686, %v285
  %v5692 = vmul.f32 %v5688, %v289
  %v5693 = vld [vmem:[%s33] sm:$0xf]
  %v5696 = vunpack.c.l.s4 1983009808
  %v5697 = vunpack.c.0.s8 %v5696
  %v5698 = vlaneseq
  %v5699 = vshrl.u32 %v5698, 7
  %v5700 = vsub.s32 %v5697, %v5699
  %v5701 = vrot.slane %v5693, %v5700
  %v5702 = vcombine.high %v5701, %v5701
  %v5704 = vsel %vm942, %v5702, 0
  %5706 = vmatprep.subr.mxu0 %v5578
  %5707 = vmatpush1.msra.mxu0 %v5577
  %5708 = vmatprep.subr.mxu0 %v5580
  %5709 = vmatpush1.msra.mxu0 %v5579
  %5710 = vmatprep.subr.mxu0 %v5594
  %5711 = vmatpush1.msra.mxu0 %v5593
  %5712 = vmatprep.subr.mxu0 %v5596
  %5713 = vmatpush1.msra.mxu0 %v5595
  %5714 = vmatprep.subr.mxu0 %v5610
  %5715 = vmatpush1.msra.mxu0 %v5609
  %5716 = vmatprep.subr.mxu0 %v5612
  %5717 = vmatpush1.msra.mxu0 %v5611
  %5718 = vmatprep.subr.mxu0 %v5626
  %5719 = vmatpush1.msra.mxu0 %v5625
  %5720 = vmatprep.subr.mxu0 %v5628
  %5721 = vmatpush1.msra.mxu0 %v5627
  %5722 = vmatprep.subr.mxu0 %v5562
  %5723 = vmatpush1.msra.mxu0 %v5561
  %5724 = vmatprep.subr.mxu0 %v5564
  %5725 = vmatpush1.msra.mxu0 %v5563
  %5726 = vmatprep.subr.mxu0 %v5642
  %5727 = vmatpush1.msra.mxu0 %v5641
  %5728 = vmatprep.subr.mxu0 %v5644
  %5729 = vmatpush1.msra.mxu0 %v5643
  %5730 = vmatprep.subr.mxu0 %v5658
  %5731 = vmatpush1.msra.mxu0 %v5657
  %5732 = vmatprep.subr.mxu0 %v5660
  %5733 = vmatpush1.msra.mxu0 %v5659
  %5734 = vmatprep.subr.mxu0 %v5674
  %5735 = vmatpush1.msra.mxu0 %v5673
  %5736 = vmatprep.subr.mxu0 %v5676
  %5737 = vmatpush1.msra.mxu0 %v5675
  %5738 = vmatprep.subr.mxu0 %v5690
  %5739 = vmatpush1.msra.mxu0 %v5689
  %5740 = vmatprep.subr.mxu0 %v5692
  %5741 = vmatpush1.msra.mxu0 %v5691
  %5742 = vmatprep.subr.mxu0 %v301
  %5743 = vmatpush1.msra.mxu0 %v301
  %5744 = vmatprep.subr.mxu0 0.0
  %5745 = vmatpush1.msra.mxu0 0.0
  %5746 = vmatprep.subr.mxu0 0.0
  %5747 = vmatpush1.msra.mxu0 0.0
  %5748 = vmatprep.subr.mxu0 0.0
  %5749 = vmatpush1.msra.mxu0 0.0
  %5750 = vmatprep.subr.mxu0 0.0
  %5751 = vmatpush1.msra.mxu0 0.0
  %5752 = vmatprep.subr.mxu0 0.0
  %5753 = vmatpush1.msra.mxu0 0.0
  %5754 = vmatprep.subr.mxu0 0.0
  %5755 = vmatpush1.msra.mxu0 0.0
  %5756 = vmatprep.subr.mxu0 0.0
  %5757 = vmatpush1.msra.mxu0 0.0
  %5758 = vmatprep.subr.mxu0 0.0
  %5759 = vmatpush1.msra.mxu0 0.0
  %5760 = vmatprep.subr.mxu0 0.0
  %5761 = vmatpush1.msra.mxu0 0.0
  %5762 = vmatprep.subr.mxu0 0.0
  %5763 = vmatpush1.msra.mxu0 0.0
  %5764 = vmatprep.subr.mxu0 0.0
  %5765 = vmatpush1.msra.mxu0 0.0
  %5766 = vmatprep.subr.mxu0 0.0
  %5767 = vmatpush1.msra.mxu0 0.0
  %5768 = vmatprep.subr.mxu0 0.0
  %5769 = vmatpush1.msra.mxu0 0.0
  %5770 = vmatprep.mubr.f32.mxu0 %v5704
  %5771 = vmatmul.mubr.f32.gmra.mrb[0].mxu0 %v5701
  %v5772 = vpop.f32.mrb[0].mxu0
  %v5773 = vadd.f32 0.0, %v5772
  %v5774 = vpop.f32.mrb[0].mxu0
  %v5775 = vadd.f32 0.0, %v5774
  %5776 = vdwg.mxu0
  %v5779 = vcombine.low %v5773, %v5775
  %v5781 = vunpack.c.l.s4 1983009808
  %v5782 = vunpack.c.0.s8 %v5781
  %v5783 = vlaneseq
  %v5784 = vshrl.u32 %v5783, 7
  %v5785 = vsub.s32 %v5782, %v5784
  %v5786 = vrot.slane %v5779, %v5785
  %s5788 = scalar_lea.vmem %s59, 8
  %5789 = vst [vmem:[%s5788] sm:$0xf] %v5786
  // Predicated region
  $region102: #{fiery_forward.5} parent=0 // pred_check
    _
  $region103: #{fiery_forward.5} parent=0 // pred_check_branch
    %5791 = sbr.rel (0) target = $region105
  $region104: #{fiery_forward.5} parent=0 // pred_region
    _
  $region105: #{fiery_forward.5} parent=0 // pred_fallthru
    _
  // Predicated region
  $region106: #{fiery_forward.5} parent=0 // pred_check
    _
  $region107: #{fiery_forward.5} parent=0 // pred_check_branch
    %5793 = sbr.rel (0) target = $region109
  $region108: #{fiery_forward.5} parent=0 // pred_region
    _
  $region109: #{fiery_forward.5} parent=0 // pred_fallthru
    _
  // Predicated region
  $region110: #{fiery_forward.5} parent=0 // pred_check
    _
  $region111: #{fiery_forward.5} parent=0 // pred_check_branch
    %5795 = sbr.rel (0) target = $region113
  $region112: #{fiery_forward.5} parent=0 // pred_region
    _
  $region113: #{fiery_forward.5} parent=0 // pred_fallthru
    _
  // Predicated region
  $region114: #{fiery_forward.5} parent=0 // pred_check
    _
  $region115: #{fiery_forward.5} parent=0 // pred_check_branch
    %5797 = sbr.rel (0) target = $region117
  $region116: #{fiery_forward.5} parent=0 // pred_region
    _
  $region117: #{fiery_forward.5} parent=0 // pred_fallthru
    _
  // Predicated region
  $region118: #{fiery_forward.5} parent=0 // pred_check
    _
  $region119: #{fiery_forward.5} parent=0 // pred_check_branch
    %5799 = sbr.rel (0) target = $region121
  $region120: #{fiery_forward.5} parent=0 // pred_region
    _
  $region121: #{fiery_forward.5} parent=0 // pred_fallthru
    _
  // Predicated region
  $region122: #{fiery_forward.5} parent=0 // pred_check
    _
  $region123: #{fiery_forward.5} parent=0 // pred_check_branch
    %5801 = sbr.rel (0) target = $region125
  $region124: #{fiery_forward.5} parent=0 // pred_region
    _
  $region125: #{fiery_forward.5} parent=0 // pred_fallthru
    _
  // Predicated region
  $region126: #{fiery_forward.5} parent=0 // pred_check
    _
  $region127: #{fiery_forward.5} parent=0 // pred_check_branch
    %5803 = sbr.rel (0) target = $region129
  $region128: #{fiery_forward.5} parent=0 // pred_region
    _
  $region129: #{fiery_forward.5} parent=0 // pred_fallthru
    _
  // Predicated region
  $region130: #{fiery_forward.5} parent=0 // pred_check
    _
  $region131: #{fiery_forward.5} parent=0 // pred_check_branch
    %5805 = sbr.rel (0) target = $region133
  $region132: #{fiery_forward.5} parent=0 // pred_region
    _
  $region133: #{fiery_forward.5} parent=0 // pred_fallthru
    _
  // Predicated region
  $region134: #{fiery_forward.5} parent=0 // pred_check
    _
  $region135: #{fiery_forward.5} parent=0 // pred_check_branch
    %5807 = sbr.rel (0) target = $region137
  $region136: #{fiery_forward.5} parent=0 // pred_region
    _
  $region137: #{fiery_forward.5} parent=0 // pred_fallthru
    _
  // Predicated region
  $region138: #{fiery_forward.5} parent=0 // pred_check
    _
  $region139: #{fiery_forward.5} parent=0 // pred_check_branch
    %5809 = sbr.rel (0) target = $region141
  $region140: #{fiery_forward.5} parent=0 // pred_region
    _
  $region141: #{fiery_forward.5} parent=0 // pred_fallthru
    _

</llo_original>
